<compile_context>
chip_gen: v7x
topology: tpu7x:2x2x1
jax: 0.10.0
libtpu: 0.0.40
codegen_flags: <defaults>
</compile_context>

<pallas_src>
import functools
import math

import jax
import jax.numpy as jnp
from jax import lax
from jax.experimental import pallas as pl
from jax.experimental.pallas import tpu as pltpu


def _layernorm(z, gamma, beta, eps=1e-5):
    mu = jnp.mean(z, axis=-1, keepdims=True)
    var = jnp.mean((z - mu) ** 2, axis=-1, keepdims=True)
    return (z - mu) * lax.rsqrt(var + eps) * gamma + beta


def ml_decoder_kernel(nhead, n_groups, dup_factor, tokens_per_img, block_bs,
                      x_ref, w_emb_ref, b_emb_ref, q_emb_ref,
                      wq_ref, bq_ref, wkv_ref, bkv_ref, wo_ref, bo_ref,
                      ln1g_ref, ln1b_ref, ln2g_ref, ln2b_ref, ln3g_ref, ln3b_ref,
                      w1_ref, b1_ref, w2_ref, b2_ref,
                      dpool_ref, dbias_ref, out_ref):
    f32, bf16 = jnp.float32, jnp.bfloat16
    K = n_groups
    g = dup_factor
    HW = tokens_per_img
    BB = block_bs
    D = wq_ref.shape[0]
    dh = D // nhead
    kgp = dpool_ref.shape[1]                      # K*g padded to multiple of 128
    scale = 1.0 / math.sqrt(dh)

    # ---- hoisted reads (once per grid step) --------------------------------
    wo, bo = wo_ref[...], bo_ref[...]
    w1, b1 = w1_ref[...], b1_ref[...]
    w2, b2 = w2_ref[...], b2_ref[...]
    ln2g, ln2b = ln2g_ref[...], ln2b_ref[...]
    ln3g, ln3b = ln3g_ref[...], ln3b_ref[...]
    dpool = dpool_ref[...]                        # [D, kgp] bf16
    dbias = dbias_ref[...]                        # [1, kgp] f32

    # ---- batch-independent query path --------------------------------------
    # TODO(synk): dropout layers are eval-mode identities; tgt + dropout1(tgt) == 2*tgt.
    q0 = q_emb_ref[...].astype(f32)                                         # [K, D]
    tgt = _layernorm(q0 + q0, ln1g_ref[...], ln1b_ref[...])                 # [K, D] f32
    q_proj = (jnp.dot(tgt.astype(bf16), wq_ref[...],
                      preferred_element_type=f32) + bq_ref[...]).astype(bf16)   # [K, D] bf16

    # ---- embed_standart + ReLU and fused K|V projection over BB*HW tokens --
    memb = jnp.dot(x_ref[...], w_emb_ref[...],
                   preferred_element_type=f32) + b_emb_ref[...]             # [BB*HW, D] f32
    memb = jnp.maximum(memb, 0.0)
    kv = (jnp.dot(memb.astype(bf16), wkv_ref[...],
                  preferred_element_type=f32) + bkv_ref[...]).astype(bf16)  # [BB*HW, 2D] bf16

    kb = kv[:, :D].reshape(BB, HW, D)                                       # bf16
    vb = kv[:, D:].reshape(BB, HW, D)                                       # bf16
    q3 = jnp.broadcast_to(q_proj[None], (BB, K, D))                         # bf16 (hoisted)

    # ---- multi-head cross attention: per-head loop, image-batched einsums --
    ctx_heads = []
    for h in range(nhead):
        sl = slice(h * dh, (h + 1) * dh)
        s = jnp.einsum('bkd,bnd->bkn', q3[:, :, sl], kb[:, :, sl],
                       preferred_element_type=f32) * scale                  # [BB, K, HW]
        s = s - jnp.max(s, axis=-1, keepdims=True)
        p = jnp.exp(s)
        p = p * pl.reciprocal(jnp.sum(p, axis=-1, keepdims=True), approx=True)
        ctx_heads.append(jnp.einsum('bkn,bnd->bkd', p.astype(bf16), vb[:, :, sl],
                                    preferred_element_type=f32))            # [BB, K, dh]
    ctx = jnp.concatenate(ctx_heads, axis=-1).reshape(BB * K, D)            # [BB*K, D] f32

    # ---- out-proj / LN2 / FFN / LN3 batched over all BB*K query rows -------
    attn = jnp.dot(ctx.astype(bf16), wo, preferred_element_type=f32) + bo   # [BB*K, D]
    tgt_rows = jnp.broadcast_to(tgt[None], (BB, K, D)).reshape(BB * K, D)   # f32
    tgt2 = _layernorm(tgt_rows + attn, ln2g, ln2b)                          # [BB*K, D]
    ff = jnp.maximum(jnp.dot(tgt2.astype(bf16), w1,
                             preferred_element_type=f32) + b1, 0.0)
    ff = jnp.dot(ff.astype(bf16), w2, preferred_element_type=f32) + b2
    hdec = _layernorm(tgt2 + ff, ln3g, ln3b)                                # [BB*K, D]

    # ---- GroupFC: one dense matmul over BB*K rows + block-diag mask --------
    # TODO(synk): for production class counts (kgp >= ~2048) tile kgp with an
    # inner loop / extra grid axis (or use the exact per-group VPU contraction)
    # instead of this masked-dense form; exact and cheap while kgp is small.
    prod = jnp.dot(hdec.astype(bf16), dpool, preferred_element_type=f32)    # [BB*K, kgp]
    row = lax.broadcasted_iota(jnp.int32, (K, kgp), 0)
    col = lax.broadcasted_iota(jnp.int32, (K, kgp), 1)
    gmask = (col >= row * g) & (col < (row + 1) * g)
    prod3 = prod.reshape(BB, K, kgp)
    out_ref[...] = jnp.sum(jnp.where(gmask[None, :, :], prod3, 0.0), axis=1) + dbias


def ml_decoder_forward(x_nchw, params, *, nhead=8, batch_block=8, vmem_limit_bytes=None):
    bs, C, H, W = x_nchw.shape
    HW = H * W
    bf16, f32 = jnp.bfloat16, jnp.float32

    K, D = params["query_embed"].shape
    g = params["duplicate_pooling"].shape[-1]
    F = params["w1"].shape[1]
    num_classes = params["duplicate_pooling_bias"].shape[-1]
    kg = K * g
    kgp = ((kg + 127) // 128) * 128               # lane-dense padded class dim

    # batch block: largest divisor of bs <= batch_block, constrained so the
    # grid has >= 2 steps whenever bs >= 2 (keeps both v7x TensorCores busy
    # under dimension_semantics=("parallel",) and never collapses to a single
    # whole-batch step when bs % batch_block != 0).
    bb_cap = min(batch_block, bs)
    if bs >= 2:
        bb_cap = min(bb_cap, max(1, bs // 2))
    bb = max(d for d in range(1, bb_cap + 1) if bs % d == 0)
    n_blk = bs // bb
    grid = (n_blk,)

    # glue: NCHW -> [n_blk, bb*HW, C] tokens, bf16 for the MXU.
    # TODO(synk): this transpose still round-trips HBM in XLA; an in-kernel
    # dot_general contracting the middle C axis would remove it but that
    # lowering is not validated here.
    x_tok = jnp.transpose(x_nchw.reshape(bs, C, HW), (0, 2, 1)) \
               .reshape(n_blk, bb * HW, C).astype(bf16)

    # fused K|V projection weights
    w_kv = jnp.concatenate([params["wk"], params["wv"]], axis=1).astype(bf16)   # [D, 2D]
    b_kv = jnp.concatenate([params["bk"], params["bv"]], axis=1).astype(f32)    # [1, 2D]

    # GroupFC weights rearranged to a single [D, K*g] slab, zero-padded to kgp
    dpool2 = jnp.transpose(params["duplicate_pooling"], (1, 0, 2)).reshape(D, kg)
    dpool2 = jnp.pad(dpool2, ((0, 0), (0, kgp - kg))).astype(bf16)
    dbias = jnp.pad(params["duplicate_pooling_bias"].astype(f32),
                    ((0, 0), (0, kgp - num_classes)))

    inputs = (
        x_tok,
        params["w_embed"].astype(bf16), params["b_embed"].astype(f32),
        params["query_embed"].astype(f32),
        params["wq"].astype(bf16), params["bq"].astype(f32),
        w_kv, b_kv,
        params["wo"].astype(bf16), params["bo"].astype(f32),
        params["ln1_g"], params["ln1_b"], params["ln2_g"], params["ln2_b"],
        params["ln3_g"], params["ln3_b"],
        params["w1"].astype(bf16), params["b1"].astype(f32),
        params["w2"].astype(bf16), params["b2"].astype(f32),
        dpool2, dbias,
    )

    # VMEM budget: 1x single-buffered weights + 2x per-step x/out blocks +
    # ~2x in-kernel intermediates, clamped to [32, 64] MiB so the same limit
    # is legal on v7x's 64 MiB/TC VMEM (v6e/v5e can afford a larger bb/limit;
    # re-sweep per generation at production shapes).
    if vmem_limit_bytes is None:
        weight_bytes = sum(int(a.size) * a.dtype.itemsize for a in inputs[1:])
        block_bytes = bb * HW * C * 2 + bb * kgp * 4
        act_bytes = (bb * HW * (4 * D + 4 * D)                # memb f32 + kv bf16(2D)
                     + bb * K * (4 * HW + 12 * D + 4 * F + 8 * kgp))
        est = weight_bytes + 2 * block_bytes + 2 * act_bytes
        vmem_limit_bytes = int(min(max(est, 32 * 1024 * 1024), 64 * 1024 * 1024))

    kernel = functools.partial(ml_decoder_kernel, nhead, K, g, HW, bb)
    out_shape = jax.ShapeDtypeStruct((n_blk, bb, kgp), f32)
    out_spec = pl.BlockSpec((None, bb, kgp), lambda i: (i, 0, 0))
    cparams = pltpu.CompilerParams(dimension_semantics=("parallel",),
                                   vmem_limit_bytes=vmem_limit_bytes)

    def _build(weight_mode):
        def _full(a):
            zeros = (0,) * a.ndim
            if weight_mode is None:
                return pl.BlockSpec(a.shape, lambda i, _z=zeros: _z)
            return pl.BlockSpec(a.shape, lambda i, _z=zeros: _z,
                                pipeline_mode=weight_mode)
        in_specs = [pl.BlockSpec((None, bb * HW, C), lambda i: (i, 0, 0))] \
                   + [_full(a) for a in inputs[1:]]
        return pl.pallas_call(kernel, grid=grid, in_specs=in_specs,
                              out_specs=out_spec, out_shape=out_shape,
                              compiler_params=cparams)

    try:
        # grid-invariant weights: single-buffer to halve their VMEM footprint
        out3 = _build(pl.Buffered(1))(*inputs)
    except Exception:
        # TODO(synk): pl.Buffered(1) single-buffering not supported by this jax
        # version; fall back to default (double-buffered) weight blocks.
        out3 = _build(None)(*inputs)

    # out_extrap.flatten(1)[:, :num_classes]  (bias already folded in-kernel)
    return out3.reshape(bs, kgp)[:, :num_classes]


def init_params(key, *, num_classes, num_of_groups, decoder_embedding,
                initial_num_features, dim_feedforward):
    K = 100 if num_of_groups < 0 else num_of_groups
    K = min(K, num_classes)
    D, C, F = decoder_embedding, initial_num_features, dim_feedforward
    g = int(num_classes / K + 0.999)

    keys = jax.random.split(key, 10)

    def lin(k, fan_in, shape):
        return jax.random.normal(k, shape, jnp.float32) / math.sqrt(fan_in)

    xavier_std = math.sqrt(2.0 / (D * g + K * g))
    return dict(
        w_embed=lin(keys[0], C, (C, D)), b_embed=jnp.zeros((1, D), jnp.float32),
        query_embed=jax.random.normal(keys[1], (K, D), jnp.float32),   # nn.Embedding ~ N(0,1)
        wq=lin(keys[2], D, (D, D)), bq=jnp.zeros((1, D), jnp.float32),
        wk=lin(keys[3], D, (D, D)), bk=jnp.zeros((1, D), jnp.float32),
        wv=lin(keys[4], D, (D, D)), bv=jnp.zeros((1, D), jnp.float32),
        wo=lin(keys[5], D, (D, D)), bo=jnp.zeros((1, D), jnp.float32),
        ln1_g=jnp.ones((1, D), jnp.float32), ln1_b=jnp.zeros((1, D), jnp.float32),
        ln2_g=jnp.ones((1, D), jnp.float32), ln2_b=jnp.zeros((1, D), jnp.float32),
        ln3_g=jnp.ones((1, D), jnp.float32), ln3_b=jnp.zeros((1, D), jnp.float32),
        w1=lin(keys[6], D, (D, F)), b1=jnp.zeros((1, F), jnp.float32),
        w2=lin(keys[7], F, (F, D)), b2=jnp.zeros((1, D), jnp.float32),
        duplicate_pooling=jax.random.normal(keys[8], (K, D, g), jnp.float32) * xavier_std,
        duplicate_pooling_bias=jnp.zeros((1, num_classes), jnp.float32),
    )


if __name__ == "__main__":
    key = jax.random.PRNGKey(0)
    kx, kp = jax.random.split(key)

    # small shapes consistent with the module's forward
    bs, C, H, W = 2, 32, 4, 4            # backbone features (NCHW), HW = 16 tokens
    num_classes = 11                     # forces GroupFC truncation (K*g = 12 > 11)
    num_of_groups = 6                    # K
    decoder_embedding = 32               # D (nhead=8 -> head_dim=4)
    dim_feedforward = 64

    x = jax.random.normal(kx, (bs, C, H, W), jnp.float32)
    params = init_params(kp, num_classes=num_classes, num_of_groups=num_of_groups,
                         decoder_embedding=decoder_embedding,
                         initial_num_features=C, dim_feedforward=dim_feedforward)

    logits = ml_decoder_forward(x, params, nhead=8)
    jax.block_until_ready(logits)
    assert logits.shape == (bs, num_classes) and logits.dtype == jnp.float32
    print("KERNEL_OK")
</pallas_src>

<mosaic_0001>
module attributes {stable_mosaic.version = 11 : i64} {
  func.func @ml_decoder_kernel(%arg0: i32, %arg1: memref<1x16x32xbf16, #tpu.memory_space<vmem>>, %arg2: memref<32x32xbf16, #tpu.memory_space<vmem>>, %arg3: memref<1x32xf32, #tpu.memory_space<vmem>>, %arg4: memref<6x32xf32, #tpu.memory_space<vmem>>, %arg5: memref<32x32xbf16, #tpu.memory_space<vmem>>, %arg6: memref<1x32xf32, #tpu.memory_space<vmem>>, %arg7: memref<32x64xbf16, #tpu.memory_space<vmem>>, %arg8: memref<1x64xf32, #tpu.memory_space<vmem>>, %arg9: memref<32x32xbf16, #tpu.memory_space<vmem>>, %arg10: memref<1x32xf32, #tpu.memory_space<vmem>>, %arg11: memref<1x32xf32, #tpu.memory_space<vmem>>, %arg12: memref<1x32xf32, #tpu.memory_space<vmem>>, %arg13: memref<1x32xf32, #tpu.memory_space<vmem>>, %arg14: memref<1x32xf32, #tpu.memory_space<vmem>>, %arg15: memref<1x32xf32, #tpu.memory_space<vmem>>, %arg16: memref<1x32xf32, #tpu.memory_space<vmem>>, %arg17: memref<32x64xbf16, #tpu.memory_space<vmem>>, %arg18: memref<1x64xf32, #tpu.memory_space<vmem>>, %arg19: memref<64x32xbf16, #tpu.memory_space<vmem>>, %arg20: memref<1x32xf32, #tpu.memory_space<vmem>>, %arg21: memref<32x128xbf16, #tpu.memory_space<vmem>>, %arg22: memref<1x128xf32, #tpu.memory_space<vmem>>, %arg23: memref<1x1x128xf32, #tpu.memory_space<vmem>>) attributes {dimension_semantics = [#tpu.dimension_semantics<parallel>], iteration_bounds = array<i64: 2>, scalar_prefetch = 0 : i64, scratch_operands = 0 : i64, tpu.core_type = #tpu.core_type<tc>, window_params = [{transform_indices = @transform_0, window_bounds = array<i64: 1, 16, 32>}, {pipeline_mode = #tpu.pipeline_mode<synchronous>, transform_indices = @transform_1, window_bounds = array<i64: 32, 32>}, {pipeline_mode = #tpu.pipeline_mode<synchronous>, transform_indices = @transform_2, window_bounds = array<i64: 1, 32>}, {pipeline_mode = #tpu.pipeline_mode<synchronous>, transform_indices = @transform_3, window_bounds = array<i64: 6, 32>}, {pipeline_mode = #tpu.pipeline_mode<synchronous>, transform_indices = @transform_4, window_bounds = array<i64: 32, 32>}, {pipeline_mode = #tpu.pipeline_mode<synchronous>, transform_indices = @transform_5, window_bounds = array<i64: 1, 32>}, {pipeline_mode = #tpu.pipeline_mode<synchronous>, transform_indices = @transform_6, window_bounds = array<i64: 32, 64>}, {pipeline_mode = #tpu.pipeline_mode<synchronous>, transform_indices = @transform_7, window_bounds = array<i64: 1, 64>}, {pipeline_mode = #tpu.pipeline_mode<synchronous>, transform_indices = @transform_8, window_bounds = array<i64: 32, 32>}, {pipeline_mode = #tpu.pipeline_mode<synchronous>, transform_indices = @transform_9, window_bounds = array<i64: 1, 32>}, {pipeline_mode = #tpu.pipeline_mode<synchronous>, transform_indices = @transform_10, window_bounds = array<i64: 1, 32>}, {pipeline_mode = #tpu.pipeline_mode<synchronous>, transform_indices = @transform_11, window_bounds = array<i64: 1, 32>}, {pipeline_mode = #tpu.pipeline_mode<synchronous>, transform_indices = @transform_12, window_bounds = array<i64: 1, 32>}, {pipeline_mode = #tpu.pipeline_mode<synchronous>, transform_indices = @transform_13, window_bounds = array<i64: 1, 32>}, {pipeline_mode = #tpu.pipeline_mode<synchronous>, transform_indices = @transform_14, window_bounds = array<i64: 1, 32>}, {pipeline_mode = #tpu.pipeline_mode<synchronous>, transform_indices = @transform_15, window_bounds = array<i64: 1, 32>}, {pipeline_mode = #tpu.pipeline_mode<synchronous>, transform_indices = @transform_16, window_bounds = array<i64: 32, 64>}, {pipeline_mode = #tpu.pipeline_mode<synchronous>, transform_indices = @transform_17, window_bounds = array<i64: 1, 64>}, {pipeline_mode = #tpu.pipeline_mode<synchronous>, transform_indices = @transform_18, window_bounds = array<i64: 64, 32>}, {pipeline_mode = #tpu.pipeline_mode<synchronous>, transform_indices = @transform_19, window_bounds = array<i64: 1, 32>}, {pipeline_mode = #tpu.pipeline_mode<synchronous>, transform_indices = @transform_20, window_bounds = array<i64: 32, 128>}, {pipeline_mode = #tpu.pipeline_mode<synchronous>, transform_indices = @transform_21, window_bounds = array<i64: 1, 128>}, {transform_indices = @transform_22, window_bounds = array<i64: 1, 1, 128>}]} {
    %c0 = arith.constant 0 : index
    %c0_0 = arith.constant 0 : index
    %0 = vector.load %arg9[%c0, %c0_0] : memref<32x32xbf16, #tpu.memory_space<vmem>>, vector<32x32xbf16>
    %c0_1 = arith.constant 0 : index
    %c0_2 = arith.constant 0 : index
    %1 = vector.load %arg10[%c0_1, %c0_2] : memref<1x32xf32, #tpu.memory_space<vmem>>, vector<1x32xf32>
    %c0_3 = arith.constant 0 : index
    %c0_4 = arith.constant 0 : index
    %2 = vector.load %arg17[%c0_3, %c0_4] : memref<32x64xbf16, #tpu.memory_space<vmem>>, vector<32x64xbf16>
    %c0_5 = arith.constant 0 : index
    %c0_6 = arith.constant 0 : index
    %3 = vector.load %arg18[%c0_5, %c0_6] : memref<1x64xf32, #tpu.memory_space<vmem>>, vector<1x64xf32>
    %c0_7 = arith.constant 0 : index
    %c0_8 = arith.constant 0 : index
    %4 = vector.load %arg19[%c0_7, %c0_8] : memref<64x32xbf16, #tpu.memory_space<vmem>>, vector<64x32xbf16>
    %c0_9 = arith.constant 0 : index
    %c0_10 = arith.constant 0 : index
    %5 = vector.load %arg20[%c0_9, %c0_10] : memref<1x32xf32, #tpu.memory_space<vmem>>, vector<1x32xf32>
    %c0_11 = arith.constant 0 : index
    %c0_12 = arith.constant 0 : index
    %6 = vector.load %arg13[%c0_11, %c0_12] : memref<1x32xf32, #tpu.memory_space<vmem>>, vector<1x32xf32>
    %c0_13 = arith.constant 0 : index
    %c0_14 = arith.constant 0 : index
    %7 = vector.load %arg14[%c0_13, %c0_14] : memref<1x32xf32, #tpu.memory_space<vmem>>, vector<1x32xf32>
    %c0_15 = arith.constant 0 : index
    %c0_16 = arith.constant 0 : index
    %8 = vector.load %arg15[%c0_15, %c0_16] : memref<1x32xf32, #tpu.memory_space<vmem>>, vector<1x32xf32>
    %c0_17 = arith.constant 0 : index
    %c0_18 = arith.constant 0 : index
    %9 = vector.load %arg16[%c0_17, %c0_18] : memref<1x32xf32, #tpu.memory_space<vmem>>, vector<1x32xf32>
    %c0_19 = arith.constant 0 : index
    %c0_20 = arith.constant 0 : index
    %10 = vector.load %arg21[%c0_19, %c0_20] : memref<32x128xbf16, #tpu.memory_space<vmem>>, vector<32x128xbf16>
    %c0_21 = arith.constant 0 : index
    %c0_22 = arith.constant 0 : index
    %11 = vector.load %arg22[%c0_21, %c0_22] : memref<1x128xf32, #tpu.memory_space<vmem>>, vector<1x128xf32>
    %c0_23 = arith.constant 0 : index
    %c0_24 = arith.constant 0 : index
    %12 = vector.load %arg4[%c0_23, %c0_24] : memref<6x32xf32, #tpu.memory_space<vmem>>, vector<6x32xf32>
    %13 = arith.addf %12, %12 : vector<6x32xf32>
    %c0_25 = arith.constant 0 : index
    %c0_26 = arith.constant 0 : index
    %14 = vector.load %arg11[%c0_25, %c0_26] : memref<1x32xf32, #tpu.memory_space<vmem>>, vector<1x32xf32>
    %c0_27 = arith.constant 0 : index
    %c0_28 = arith.constant 0 : index
    %15 = vector.load %arg12[%c0_27, %c0_28] : memref<1x32xf32, #tpu.memory_space<vmem>>, vector<1x32xf32>
    %cst = arith.constant dense<0.000000e+00> : vector<6xf32>
    %16 = vector.multi_reduction <add>, %13, %cst [1] : vector<6x32xf32> to vector<6xf32>
    %17 = vector.shape_cast %16 : vector<6xf32> to vector<6x1xf32>
    %cst_29 = arith.constant 3.200000e+01 : f32
    %18 = vector.broadcast %cst_29 : f32 to vector<6x1xf32>
    %19 = arith.divf %17, %18 : vector<6x1xf32>
    %20 = vector.broadcast %19 : vector<6x1xf32> to vector<6x32xf32>
    %21 = arith.subf %13, %20 : vector<6x32xf32>
    %22 = arith.mulf %21, %21 : vector<6x32xf32>
    %cst_30 = arith.constant dense<0.000000e+00> : vector<6xf32>
    %23 = vector.multi_reduction <add>, %22, %cst_30 [1] : vector<6x32xf32> to vector<6xf32>
    %24 = vector.shape_cast %23 : vector<6xf32> to vector<6x1xf32>
    %cst_31 = arith.constant 3.200000e+01 : f32
    %25 = vector.broadcast %cst_31 : f32 to vector<6x1xf32>
    %26 = arith.divf %24, %25 : vector<6x1xf32>
    %27 = vector.broadcast %19 : vector<6x1xf32> to vector<6x32xf32>
    %28 = arith.subf %13, %27 : vector<6x32xf32>
    %cst_32 = arith.constant 9.99999974E-6 : f32
    %29 = vector.broadcast %cst_32 : f32 to vector<6x1xf32>
    %30 = arith.addf %26, %29 : vector<6x1xf32>
    %31 = math.rsqrt %30 : vector<6x1xf32>
    %32 = vector.broadcast %31 : vector<6x1xf32> to vector<6x32xf32>
    %33 = arith.mulf %28, %32 : vector<6x32xf32>
    %34 = vector.broadcast %14 : vector<1x32xf32> to vector<6x32xf32>
    %35 = arith.mulf %33, %34 : vector<6x32xf32>
    %36 = vector.broadcast %15 : vector<1x32xf32> to vector<6x32xf32>
    %37 = arith.addf %35, %36 : vector<6x32xf32>
    %38 = arith.truncf %37 : vector<6x32xf32> to vector<6x32xbf16>
    %c0_33 = arith.constant 0 : index
    %c0_34 = arith.constant 0 : index
    %39 = vector.load %arg5[%c0_33, %c0_34] : memref<32x32xbf16, #tpu.memory_space<vmem>>, vector<32x32xbf16>
    %cst_35 = arith.constant dense<0.000000e+00> : vector<6x32xf32>
    %40 = tpu.matmul %38, %39, %cst_35 {dimension_numbers = #tpu.dot_dimension_numbers<[1], [0], [0], [1], [0, 0, 1, 1], [], []>} : vector<6x32xbf16>, vector<32x32xbf16>, vector<6x32xf32> -> vector<6x32xf32>
    %c0_36 = arith.constant 0 : index
    %c0_37 = arith.constant 0 : index
    %41 = vector.load %arg6[%c0_36, %c0_37] : memref<1x32xf32, #tpu.memory_space<vmem>>, vector<1x32xf32>
    %42 = vector.broadcast %41 : vector<1x32xf32> to vector<6x32xf32>
    %43 = arith.addf %40, %42 : vector<6x32xf32>
    %44 = arith.truncf %43 : vector<6x32xf32> to vector<6x32xbf16>
    %c0_38 = arith.constant 0 : index
    %c0_39 = arith.constant 0 : index
    %c0_40 = arith.constant 0 : index
    %45 = vector.load %arg1[%c0_38, %c0_39, %c0_40] : memref<1x16x32xbf16, #tpu.memory_space<vmem>>, vector<1x16x32xbf16>
    %46 = vector.shape_cast %45 : vector<1x16x32xbf16> to vector<16x32xbf16>
    %c0_41 = arith.constant 0 : index
    %c0_42 = arith.constant 0 : index
    %47 = vector.load %arg2[%c0_41, %c0_42] : memref<32x32xbf16, #tpu.memory_space<vmem>>, vector<32x32xbf16>
    %cst_43 = arith.constant dense<0.000000e+00> : vector<16x32xf32>
    %48 = tpu.matmul %46, %47, %cst_43 {dimension_numbers = #tpu.dot_dimension_numbers<[1], [0], [0], [1], [0, 0, 1, 1], [], []>} : vector<16x32xbf16>, vector<32x32xbf16>, vector<16x32xf32> -> vector<16x32xf32>
    %c0_44 = arith.constant 0 : index
    %c0_45 = arith.constant 0 : index
    %49 = vector.load %arg3[%c0_44, %c0_45] : memref<1x32xf32, #tpu.memory_space<vmem>>, vector<1x32xf32>
    %50 = vector.broadcast %49 : vector<1x32xf32> to vector<16x32xf32>
    %51 = arith.addf %48, %50 : vector<16x32xf32>
    %cst_46 = arith.constant 0.000000e+00 : f32
    %52 = vector.broadcast %cst_46 : f32 to vector<16x32xf32>
    %53 = arith.maximumf %51, %52 : vector<16x32xf32>
    %54 = arith.truncf %53 : vector<16x32xf32> to vector<16x32xbf16>
    %c0_47 = arith.constant 0 : index
    %c0_48 = arith.constant 0 : index
    %55 = vector.load %arg7[%c0_47, %c0_48] : memref<32x64xbf16, #tpu.memory_space<vmem>>, vector<32x64xbf16>
    %cst_49 = arith.constant dense<0.000000e+00> : vector<16x64xf32>
    %56 = tpu.matmul %54, %55, %cst_49 {dimension_numbers = #tpu.dot_dimension_numbers<[1], [0], [0], [1], [0, 0, 1, 1], [], []>} : vector<16x32xbf16>, vector<32x64xbf16>, vector<16x64xf32> -> vector<16x64xf32>
    %c0_50 = arith.constant 0 : index
    %c0_51 = arith.constant 0 : index
    %57 = vector.load %arg8[%c0_50, %c0_51] : memref<1x64xf32, #tpu.memory_space<vmem>>, vector<1x64xf32>
    %58 = vector.broadcast %57 : vector<1x64xf32> to vector<16x64xf32>
    %59 = arith.addf %56, %58 : vector<16x64xf32>
    %60 = arith.truncf %59 : vector<16x64xf32> to vector<16x64xbf16>
    %61 = vector.extract_strided_slice %60 {offsets = [0, 0], sizes = [16, 32], strides = [1, 1]} : vector<16x64xbf16> to vector<16x32xbf16>
    %62 = vector.shape_cast %61 : vector<16x32xbf16> to vector<1x16x32xbf16>
    %63 = vector.extract_strided_slice %60 {offsets = [0, 32], sizes = [16, 32], strides = [1, 1]} : vector<16x64xbf16> to vector<16x32xbf16>
    %64 = vector.shape_cast %63 : vector<16x32xbf16> to vector<1x16x32xbf16>
    %65 = vector.shape_cast %44 : vector<6x32xbf16> to vector<1x6x32xbf16>
    %66 = vector.extract_strided_slice %65 {offsets = [0, 0, 0], sizes = [1, 6, 4], strides = [1, 1, 1]} : vector<1x6x32xbf16> to vector<1x6x4xbf16>
    %67 = vector.extract_strided_slice %62 {offsets = [0, 0, 0], sizes = [1, 16, 4], strides = [1, 1, 1]} : vector<1x16x32xbf16> to vector<1x16x4xbf16>
    "tpu.trace_start"() <{level = 10 : i32, message = "bkd,bnd->bkn"}> : () -> ()
    %cst_52 = arith.constant dense<0.000000e+00> : vector<1x6x16xf32>
    %68 = tpu.matmul %66, %67, %cst_52 {dimension_numbers = #tpu.dot_dimension_numbers<[2], [2], [1], [1], [0, 0, 0, 1, 1, 1], [0], [0]>} : vector<1x6x4xbf16>, vector<1x16x4xbf16>, vector<1x6x16xf32> -> vector<1x6x16xf32>
    "tpu.trace_stop"() : () -> ()
    %cst_53 = arith.constant 5.000000e-01 : f32
    %69 = vector.broadcast %cst_53 : f32 to vector<1x6x16xf32>
    %70 = arith.mulf %68, %69 : vector<1x6x16xf32>
    %cst_54 = arith.constant dense<0xFF800000> : vector<1x6xf32>
    %71 = vector.multi_reduction <maximumf>, %70, %cst_54 [2] : vector<1x6x16xf32> to vector<1x6xf32>
    %72 = vector.shape_cast %71 : vector<1x6xf32> to vector<1x6x1xf32>
    %73 = vector.broadcast %72 : vector<1x6x1xf32> to vector<1x6x16xf32>
    %74 = arith.subf %70, %73 : vector<1x6x16xf32>
    %75 = math.exp %74 : vector<1x6x16xf32>
    %cst_55 = arith.constant dense<0.000000e+00> : vector<1x6xf32>
    %76 = vector.multi_reduction <add>, %75, %cst_55 [2] : vector<1x6x16xf32> to vector<1x6xf32>
    %77 = vector.shape_cast %76 : vector<1x6xf32> to vector<1x6x1xf32>
    %78 = tpu.reciprocal %77 {approx = true} : vector<1x6x1xf32> -> vector<1x6x1xf32>
    %79 = vector.broadcast %78 : vector<1x6x1xf32> to vector<1x6x16xf32>
    %80 = arith.mulf %75, %79 : vector<1x6x16xf32>
    %81 = arith.truncf %80 : vector<1x6x16xf32> to vector<1x6x16xbf16>
    %82 = vector.extract_strided_slice %64 {offsets = [0, 0, 0], sizes = [1, 16, 4], strides = [1, 1, 1]} : vector<1x16x32xbf16> to vector<1x16x4xbf16>
    "tpu.trace_start"() <{level = 10 : i32, message = "bkn,bnd->bkd"}> : () -> ()
    %cst_56 = arith.constant dense<0.000000e+00> : vector<1x6x4xf32>
    %83 = tpu.matmul %81, %82, %cst_56 {dimension_numbers = #tpu.dot_dimension_numbers<[2], [1], [1], [2], [0, 0, 0, 1, 1, 2], [0], [0]>} : vector<1x6x16xbf16>, vector<1x16x4xbf16>, vector<1x6x4xf32> -> vector<1x6x4xf32>
    "tpu.trace_stop"() : () -> ()
    %84 = vector.extract_strided_slice %65 {offsets = [0, 0, 4], sizes = [1, 6, 4], strides = [1, 1, 1]} : vector<1x6x32xbf16> to vector<1x6x4xbf16>
    %85 = vector.extract_strided_slice %62 {offsets = [0, 0, 4], sizes = [1, 16, 4], strides = [1, 1, 1]} : vector<1x16x32xbf16> to vector<1x16x4xbf16>
    "tpu.trace_start"() <{level = 10 : i32, message = "bkd,bnd->bkn"}> : () -> ()
    %cst_57 = arith.constant dense<0.000000e+00> : vector<1x6x16xf32>
    %86 = tpu.matmul %84, %85, %cst_57 {dimension_numbers = #tpu.dot_dimension_numbers<[2], [2], [1], [1], [0, 0, 0, 1, 1, 1], [0], [0]>} : vector<1x6x4xbf16>, vector<1x16x4xbf16>, vector<1x6x16xf32> -> vector<1x6x16xf32>
    "tpu.trace_stop"() : () -> ()
    %cst_58 = arith.constant 5.000000e-01 : f32
    %87 = vector.broadcast %cst_58 : f32 to vector<1x6x16xf32>
    %88 = arith.mulf %86, %87 : vector<1x6x16xf32>
    %cst_59 = arith.constant dense<0xFF800000> : vector<1x6xf32>
    %89 = vector.multi_reduction <maximumf>, %88, %cst_59 [2] : vector<1x6x16xf32> to vector<1x6xf32>
    %90 = vector.shape_cast %89 : vector<1x6xf32> to vector<1x6x1xf32>
    %91 = vector.broadcast %90 : vector<1x6x1xf32> to vector<1x6x16xf32>
    %92 = arith.subf %88, %91 : vector<1x6x16xf32>
    %93 = math.exp %92 : vector<1x6x16xf32>
    %cst_60 = arith.constant dense<0.000000e+00> : vector<1x6xf32>
    %94 = vector.multi_reduction <add>, %93, %cst_60 [2] : vector<1x6x16xf32> to vector<1x6xf32>
    %95 = vector.shape_cast %94 : vector<1x6xf32> to vector<1x6x1xf32>
    %96 = tpu.reciprocal %95 {approx = true} : vector<1x6x1xf32> -> vector<1x6x1xf32>
    %97 = vector.broadcast %96 : vector<1x6x1xf32> to vector<1x6x16xf32>
    %98 = arith.mulf %93, %97 : vector<1x6x16xf32>
    %99 = arith.truncf %98 : vector<1x6x16xf32> to vector<1x6x16xbf16>
    %100 = vector.extract_strided_slice %64 {offsets = [0, 0, 4], sizes = [1, 16, 4], strides = [1, 1, 1]} : vector<1x16x32xbf16> to vector<1x16x4xbf16>
    "tpu.trace_start"() <{level = 10 : i32, message = "bkn,bnd->bkd"}> : () -> ()
    %cst_61 = arith.constant dense<0.000000e+00> : vector<1x6x4xf32>
    %101 = tpu.matmul %99, %100, %cst_61 {dimension_numbers = #tpu.dot_dimension_numbers<[2], [1], [1], [2], [0, 0, 0, 1, 1, 2], [0], [0]>} : vector<1x6x16xbf16>, vector<1x16x4xbf16>, vector<1x6x4xf32> -> vector<1x6x4xf32>
    "tpu.trace_stop"() : () -> ()
    %102 = vector.extract_strided_slice %65 {offsets = [0, 0, 8], sizes = [1, 6, 4], strides = [1, 1, 1]} : vector<1x6x32xbf16> to vector<1x6x4xbf16>
    %103 = vector.extract_strided_slice %62 {offsets = [0, 0, 8], sizes = [1, 16, 4], strides = [1, 1, 1]} : vector<1x16x32xbf16> to vector<1x16x4xbf16>
    "tpu.trace_start"() <{level = 10 : i32, message = "bkd,bnd->bkn"}> : () -> ()
    %cst_62 = arith.constant dense<0.000000e+00> : vector<1x6x16xf32>
    %104 = tpu.matmul %102, %103, %cst_62 {dimension_numbers = #tpu.dot_dimension_numbers<[2], [2], [1], [1], [0, 0, 0, 1, 1, 1], [0], [0]>} : vector<1x6x4xbf16>, vector<1x16x4xbf16>, vector<1x6x16xf32> -> vector<1x6x16xf32>
    "tpu.trace_stop"() : () -> ()
    %cst_63 = arith.constant 5.000000e-01 : f32
    %105 = vector.broadcast %cst_63 : f32 to vector<1x6x16xf32>
    %106 = arith.mulf %104, %105 : vector<1x6x16xf32>
    %cst_64 = arith.constant dense<0xFF800000> : vector<1x6xf32>
    %107 = vector.multi_reduction <maximumf>, %106, %cst_64 [2] : vector<1x6x16xf32> to vector<1x6xf32>
    %108 = vector.shape_cast %107 : vector<1x6xf32> to vector<1x6x1xf32>
    %109 = vector.broadcast %108 : vector<1x6x1xf32> to vector<1x6x16xf32>
    %110 = arith.subf %106, %109 : vector<1x6x16xf32>
    %111 = math.exp %110 : vector<1x6x16xf32>
    %cst_65 = arith.constant dense<0.000000e+00> : vector<1x6xf32>
    %112 = vector.multi_reduction <add>, %111, %cst_65 [2] : vector<1x6x16xf32> to vector<1x6xf32>
    %113 = vector.shape_cast %112 : vector<1x6xf32> to vector<1x6x1xf32>
    %114 = tpu.reciprocal %113 {approx = true} : vector<1x6x1xf32> -> vector<1x6x1xf32>
    %115 = vector.broadcast %114 : vector<1x6x1xf32> to vector<1x6x16xf32>
    %116 = arith.mulf %111, %115 : vector<1x6x16xf32>
    %117 = arith.truncf %116 : vector<1x6x16xf32> to vector<1x6x16xbf16>
    %118 = vector.extract_strided_slice %64 {offsets = [0, 0, 8], sizes = [1, 16, 4], strides = [1, 1, 1]} : vector<1x16x32xbf16> to vector<1x16x4xbf16>
    "tpu.trace_start"() <{level = 10 : i32, message = "bkn,bnd->bkd"}> : () -> ()
    %cst_66 = arith.constant dense<0.000000e+00> : vector<1x6x4xf32>
    %119 = tpu.matmul %117, %118, %cst_66 {dimension_numbers = #tpu.dot_dimension_numbers<[2], [1], [1], [2], [0, 0, 0, 1, 1, 2], [0], [0]>} : vector<1x6x16xbf16>, vector<1x16x4xbf16>, vector<1x6x4xf32> -> vector<1x6x4xf32>
    "tpu.trace_stop"() : () -> ()
    %120 = vector.extract_strided_slice %65 {offsets = [0, 0, 12], sizes = [1, 6, 4], strides = [1, 1, 1]} : vector<1x6x32xbf16> to vector<1x6x4xbf16>
    %121 = vector.extract_strided_slice %62 {offsets = [0, 0, 12], sizes = [1, 16, 4], strides = [1, 1, 1]} : vector<1x16x32xbf16> to vector<1x16x4xbf16>
    "tpu.trace_start"() <{level = 10 : i32, message = "bkd,bnd->bkn"}> : () -> ()
    %cst_67 = arith.constant dense<0.000000e+00> : vector<1x6x16xf32>
    %122 = tpu.matmul %120, %121, %cst_67 {dimension_numbers = #tpu.dot_dimension_numbers<[2], [2], [1], [1], [0, 0, 0, 1, 1, 1], [0], [0]>} : vector<1x6x4xbf16>, vector<1x16x4xbf16>, vector<1x6x16xf32> -> vector<1x6x16xf32>
    "tpu.trace_stop"() : () -> ()
    %cst_68 = arith.constant 5.000000e-01 : f32
    %123 = vector.broadcast %cst_68 : f32 to vector<1x6x16xf32>
    %124 = arith.mulf %122, %123 : vector<1x6x16xf32>
    %cst_69 = arith.constant dense<0xFF800000> : vector<1x6xf32>
    %125 = vector.multi_reduction <maximumf>, %124, %cst_69 [2] : vector<1x6x16xf32> to vector<1x6xf32>
    %126 = vector.shape_cast %125 : vector<1x6xf32> to vector<1x6x1xf32>
    %127 = vector.broadcast %126 : vector<1x6x1xf32> to vector<1x6x16xf32>
    %128 = arith.subf %124, %127 : vector<1x6x16xf32>
    %129 = math.exp %128 : vector<1x6x16xf32>
    %cst_70 = arith.constant dense<0.000000e+00> : vector<1x6xf32>
    %130 = vector.multi_reduction <add>, %129, %cst_70 [2] : vector<1x6x16xf32> to vector<1x6xf32>
    %131 = vector.shape_cast %130 : vector<1x6xf32> to vector<1x6x1xf32>
    %132 = tpu.reciprocal %131 {approx = true} : vector<1x6x1xf32> -> vector<1x6x1xf32>
    %133 = vector.broadcast %132 : vector<1x6x1xf32> to vector<1x6x16xf32>
    %134 = arith.mulf %129, %133 : vector<1x6x16xf32>
    %135 = arith.truncf %134 : vector<1x6x16xf32> to vector<1x6x16xbf16>
    %136 = vector.extract_strided_slice %64 {offsets = [0, 0, 12], sizes = [1, 16, 4], strides = [1, 1, 1]} : vector<1x16x32xbf16> to vector<1x16x4xbf16>
    "tpu.trace_start"() <{level = 10 : i32, message = "bkn,bnd->bkd"}> : () -> ()
    %cst_71 = arith.constant dense<0.000000e+00> : vector<1x6x4xf32>
    %137 = tpu.matmul %135, %136, %cst_71 {dimension_numbers = #tpu.dot_dimension_numbers<[2], [1], [1], [2], [0, 0, 0, 1, 1, 2], [0], [0]>} : vector<1x6x16xbf16>, vector<1x16x4xbf16>, vector<1x6x4xf32> -> vector<1x6x4xf32>
    "tpu.trace_stop"() : () -> ()
    %138 = vector.extract_strided_slice %65 {offsets = [0, 0, 16], sizes = [1, 6, 4], strides = [1, 1, 1]} : vector<1x6x32xbf16> to vector<1x6x4xbf16>
    %139 = vector.extract_strided_slice %62 {offsets = [0, 0, 16], sizes = [1, 16, 4], strides = [1, 1, 1]} : vector<1x16x32xbf16> to vector<1x16x4xbf16>
    "tpu.trace_start"() <{level = 10 : i32, message = "bkd,bnd->bkn"}> : () -> ()
    %cst_72 = arith.constant dense<0.000000e+00> : vector<1x6x16xf32>
    %140 = tpu.matmul %138, %139, %cst_72 {dimension_numbers = #tpu.dot_dimension_numbers<[2], [2], [1], [1], [0, 0, 0, 1, 1, 1], [0], [0]>} : vector<1x6x4xbf16>, vector<1x16x4xbf16>, vector<1x6x16xf32> -> vector<1x6x16xf32>
    "tpu.trace_stop"() : () -> ()
    %cst_73 = arith.constant 5.000000e-01 : f32
    %141 = vector.broadcast %cst_73 : f32 to vector<1x6x16xf32>
    %142 = arith.mulf %140, %141 : vector<1x6x16xf32>
    %cst_74 = arith.constant dense<0xFF800000> : vector<1x6xf32>
    %143 = vector.multi_reduction <maximumf>, %142, %cst_74 [2] : vector<1x6x16xf32> to vector<1x6xf32>
    %144 = vector.shape_cast %143 : vector<1x6xf32> to vector<1x6x1xf32>
    %145 = vector.broadcast %144 : vector<1x6x1xf32> to vector<1x6x16xf32>
    %146 = arith.subf %142, %145 : vector<1x6x16xf32>
    %147 = math.exp %146 : vector<1x6x16xf32>
    %cst_75 = arith.constant dense<0.000000e+00> : vector<1x6xf32>
    %148 = vector.multi_reduction <add>, %147, %cst_75 [2] : vector<1x6x16xf32> to vector<1x6xf32>
    %149 = vector.shape_cast %148 : vector<1x6xf32> to vector<1x6x1xf32>
    %150 = tpu.reciprocal %149 {approx = true} : vector<1x6x1xf32> -> vector<1x6x1xf32>
    %151 = vector.broadcast %150 : vector<1x6x1xf32> to vector<1x6x16xf32>
    %152 = arith.mulf %147, %151 : vector<1x6x16xf32>
    %153 = arith.truncf %152 : vector<1x6x16xf32> to vector<1x6x16xbf16>
    %154 = vector.extract_strided_slice %64 {offsets = [0, 0, 16], sizes = [1, 16, 4], strides = [1, 1, 1]} : vector<1x16x32xbf16> to vector<1x16x4xbf16>
    "tpu.trace_start"() <{level = 10 : i32, message = "bkn,bnd->bkd"}> : () -> ()
    %cst_76 = arith.constant dense<0.000000e+00> : vector<1x6x4xf32>
    %155 = tpu.matmul %153, %154, %cst_76 {dimension_numbers = #tpu.dot_dimension_numbers<[2], [1], [1], [2], [0, 0, 0, 1, 1, 2], [0], [0]>} : vector<1x6x16xbf16>, vector<1x16x4xbf16>, vector<1x6x4xf32> -> vector<1x6x4xf32>
    "tpu.trace_stop"() : () -> ()
    %156 = vector.extract_strided_slice %65 {offsets = [0, 0, 20], sizes = [1, 6, 4], strides = [1, 1, 1]} : vector<1x6x32xbf16> to vector<1x6x4xbf16>
    %157 = vector.extract_strided_slice %62 {offsets = [0, 0, 20], sizes = [1, 16, 4], strides = [1, 1, 1]} : vector<1x16x32xbf16> to vector<1x16x4xbf16>
    "tpu.trace_start"() <{level = 10 : i32, message = "bkd,bnd->bkn"}> : () -> ()
    %cst_77 = arith.constant dense<0.000000e+00> : vector<1x6x16xf32>
    %158 = tpu.matmul %156, %157, %cst_77 {dimension_numbers = #tpu.dot_dimension_numbers<[2], [2], [1], [1], [0, 0, 0, 1, 1, 1], [0], [0]>} : vector<1x6x4xbf16>, vector<1x16x4xbf16>, vector<1x6x16xf32> -> vector<1x6x16xf32>
    "tpu.trace_stop"() : () -> ()
    %cst_78 = arith.constant 5.000000e-01 : f32
    %159 = vector.broadcast %cst_78 : f32 to vector<1x6x16xf32>
    %160 = arith.mulf %158, %159 : vector<1x6x16xf32>
    %cst_79 = arith.constant dense<0xFF800000> : vector<1x6xf32>
    %161 = vector.multi_reduction <maximumf>, %160, %cst_79 [2] : vector<1x6x16xf32> to vector<1x6xf32>
    %162 = vector.shape_cast %161 : vector<1x6xf32> to vector<1x6x1xf32>
    %163 = vector.broadcast %162 : vector<1x6x1xf32> to vector<1x6x16xf32>
    %164 = arith.subf %160, %163 : vector<1x6x16xf32>
    %165 = math.exp %164 : vector<1x6x16xf32>
    %cst_80 = arith.constant dense<0.000000e+00> : vector<1x6xf32>
    %166 = vector.multi_reduction <add>, %165, %cst_80 [2] : vector<1x6x16xf32> to vector<1x6xf32>
    %167 = vector.shape_cast %166 : vector<1x6xf32> to vector<1x6x1xf32>
    %168 = tpu.reciprocal %167 {approx = true} : vector<1x6x1xf32> -> vector<1x6x1xf32>
    %169 = vector.broadcast %168 : vector<1x6x1xf32> to vector<1x6x16xf32>
    %170 = arith.mulf %165, %169 : vector<1x6x16xf32>
    %171 = arith.truncf %170 : vector<1x6x16xf32> to vector<1x6x16xbf16>
    %172 = vector.extract_strided_slice %64 {offsets = [0, 0, 20], sizes = [1, 16, 4], strides = [1, 1, 1]} : vector<1x16x32xbf16> to vector<1x16x4xbf16>
    "tpu.trace_start"() <{level = 10 : i32, message = "bkn,bnd->bkd"}> : () -> ()
    %cst_81 = arith.constant dense<0.000000e+00> : vector<1x6x4xf32>
    %173 = tpu.matmul %171, %172, %cst_81 {dimension_numbers = #tpu.dot_dimension_numbers<[2], [1], [1], [2], [0, 0, 0, 1, 1, 2], [0], [0]>} : vector<1x6x16xbf16>, vector<1x16x4xbf16>, vector<1x6x4xf32> -> vector<1x6x4xf32>
    "tpu.trace_stop"() : () -> ()
    %174 = vector.extract_strided_slice %65 {offsets = [0, 0, 24], sizes = [1, 6, 4], strides = [1, 1, 1]} : vector<1x6x32xbf16> to vector<1x6x4xbf16>
    %175 = vector.extract_strided_slice %62 {offsets = [0, 0, 24], sizes = [1, 16, 4], strides = [1, 1, 1]} : vector<1x16x32xbf16> to vector<1x16x4xbf16>
    "tpu.trace_start"() <{level = 10 : i32, message = "bkd,bnd->bkn"}> : () -> ()
    %cst_82 = arith.constant dense<0.000000e+00> : vector<1x6x16xf32>
    %176 = tpu.matmul %174, %175, %cst_82 {dimension_numbers = #tpu.dot_dimension_numbers<[2], [2], [1], [1], [0, 0, 0, 1, 1, 1], [0], [0]>} : vector<1x6x4xbf16>, vector<1x16x4xbf16>, vector<1x6x16xf32> -> vector<1x6x16xf32>
    "tpu.trace_stop"() : () -> ()
    %cst_83 = arith.constant 5.000000e-01 : f32
    %177 = vector.broadcast %cst_83 : f32 to vector<1x6x16xf32>
    %178 = arith.mulf %176, %177 : vector<1x6x16xf32>
    %cst_84 = arith.constant dense<0xFF800000> : vector<1x6xf32>
    %179 = vector.multi_reduction <maximumf>, %178, %cst_84 [2] : vector<1x6x16xf32> to vector<1x6xf32>
    %180 = vector.shape_cast %179 : vector<1x6xf32> to vector<1x6x1xf32>
    %181 = vector.broadcast %180 : vector<1x6x1xf32> to vector<1x6x16xf32>
    %182 = arith.subf %178, %181 : vector<1x6x16xf32>
    %183 = math.exp %182 : vector<1x6x16xf32>
    %cst_85 = arith.constant dense<0.000000e+00> : vector<1x6xf32>
    %184 = vector.multi_reduction <add>, %183, %cst_85 [2] : vector<1x6x16xf32> to vector<1x6xf32>
    %185 = vector.shape_cast %184 : vector<1x6xf32> to vector<1x6x1xf32>
    %186 = tpu.reciprocal %185 {approx = true} : vector<1x6x1xf32> -> vector<1x6x1xf32>
    %187 = vector.broadcast %186 : vector<1x6x1xf32> to vector<1x6x16xf32>
    %188 = arith.mulf %183, %187 : vector<1x6x16xf32>
    %189 = arith.truncf %188 : vector<1x6x16xf32> to vector<1x6x16xbf16>
    %190 = vector.extract_strided_slice %64 {offsets = [0, 0, 24], sizes = [1, 16, 4], strides = [1, 1, 1]} : vector<1x16x32xbf16> to vector<1x16x4xbf16>
    "tpu.trace_start"() <{level = 10 : i32, message = "bkn,bnd->bkd"}> : () -> ()
    %cst_86 = arith.constant dense<0.000000e+00> : vector<1x6x4xf32>
    %191 = tpu.matmul %189, %190, %cst_86 {dimension_numbers = #tpu.dot_dimension_numbers<[2], [1], [1], [2], [0, 0, 0, 1, 1, 2], [0], [0]>} : vector<1x6x16xbf16>, vector<1x16x4xbf16>, vector<1x6x4xf32> -> vector<1x6x4xf32>
    "tpu.trace_stop"() : () -> ()
    %192 = vector.extract_strided_slice %65 {offsets = [0, 0, 28], sizes = [1, 6, 4], strides = [1, 1, 1]} : vector<1x6x32xbf16> to vector<1x6x4xbf16>
    %193 = vector.extract_strided_slice %62 {offsets = [0, 0, 28], sizes = [1, 16, 4], strides = [1, 1, 1]} : vector<1x16x32xbf16> to vector<1x16x4xbf16>
    "tpu.trace_start"() <{level = 10 : i32, message = "bkd,bnd->bkn"}> : () -> ()
    %cst_87 = arith.constant dense<0.000000e+00> : vector<1x6x16xf32>
    %194 = tpu.matmul %192, %193, %cst_87 {dimension_numbers = #tpu.dot_dimension_numbers<[2], [2], [1], [1], [0, 0, 0, 1, 1, 1], [0], [0]>} : vector<1x6x4xbf16>, vector<1x16x4xbf16>, vector<1x6x16xf32> -> vector<1x6x16xf32>
    "tpu.trace_stop"() : () -> ()
    %cst_88 = arith.constant 5.000000e-01 : f32
    %195 = vector.broadcast %cst_88 : f32 to vector<1x6x16xf32>
    %196 = arith.mulf %194, %195 : vector<1x6x16xf32>
    %cst_89 = arith.constant dense<0xFF800000> : vector<1x6xf32>
    %197 = vector.multi_reduction <maximumf>, %196, %cst_89 [2] : vector<1x6x16xf32> to vector<1x6xf32>
    %198 = vector.shape_cast %197 : vector<1x6xf32> to vector<1x6x1xf32>
    %199 = vector.broadcast %198 : vector<1x6x1xf32> to vector<1x6x16xf32>
    %200 = arith.subf %196, %199 : vector<1x6x16xf32>
    %201 = math.exp %200 : vector<1x6x16xf32>
    %cst_90 = arith.constant dense<0.000000e+00> : vector<1x6xf32>
    %202 = vector.multi_reduction <add>, %201, %cst_90 [2] : vector<1x6x16xf32> to vector<1x6xf32>
    %203 = vector.shape_cast %202 : vector<1x6xf32> to vector<1x6x1xf32>
    %204 = tpu.reciprocal %203 {approx = true} : vector<1x6x1xf32> -> vector<1x6x1xf32>
    %205 = vector.broadcast %204 : vector<1x6x1xf32> to vector<1x6x16xf32>
    %206 = arith.mulf %201, %205 : vector<1x6x16xf32>
    %207 = arith.truncf %206 : vector<1x6x16xf32> to vector<1x6x16xbf16>
    %208 = vector.extract_strided_slice %64 {offsets = [0, 0, 28], sizes = [1, 16, 4], strides = [1, 1, 1]} : vector<1x16x32xbf16> to vector<1x16x4xbf16>
    "tpu.trace_start"() <{level = 10 : i32, message = "bkn,bnd->bkd"}> : () -> ()
    %cst_91 = arith.constant dense<0.000000e+00> : vector<1x6x4xf32>
    %209 = tpu.matmul %207, %208, %cst_91 {dimension_numbers = #tpu.dot_dimension_numbers<[2], [1], [1], [2], [0, 0, 0, 1, 1, 2], [0], [0]>} : vector<1x6x16xbf16>, vector<1x16x4xbf16>, vector<1x6x4xf32> -> vector<1x6x4xf32>
    "tpu.trace_stop"() : () -> ()
    %210 = tpu.concatenate %83, %101, %119, %137, %155, %173, %191, %209 in 2 : vector<1x6x4xf32>, vector<1x6x4xf32>, vector<1x6x4xf32>, vector<1x6x4xf32>, vector<1x6x4xf32>, vector<1x6x4xf32>, vector<1x6x4xf32>, vector<1x6x4xf32> -> vector<1x6x32xf32>
    %211 = vector.shape_cast %210 : vector<1x6x32xf32> to vector<6x32xf32>
    %212 = arith.truncf %211 : vector<6x32xf32> to vector<6x32xbf16>
    %cst_92 = arith.constant dense<0.000000e+00> : vector<6x32xf32>
    %213 = tpu.matmul %212, %0, %cst_92 {dimension_numbers = #tpu.dot_dimension_numbers<[1], [0], [0], [1], [0, 0, 1, 1], [], []>} : vector<6x32xbf16>, vector<32x32xbf16>, vector<6x32xf32> -> vector<6x32xf32>
    %214 = vector.broadcast %1 : vector<1x32xf32> to vector<6x32xf32>
    %215 = arith.addf %213, %214 : vector<6x32xf32>
    %216 = vector.shape_cast %37 : vector<6x32xf32> to vector<1x6x32xf32>
    %217 = vector.shape_cast %216 : vector<1x6x32xf32> to vector<6x32xf32>
    %218 = arith.addf %217, %215 : vector<6x32xf32>
    %cst_93 = arith.constant dense<0.000000e+00> : vector<6xf32>
    %219 = vector.multi_reduction <add>, %218, %cst_93 [1] : vector<6x32xf32> to vector<6xf32>
    %220 = vector.shape_cast %219 : vector<6xf32> to vector<6x1xf32>
    %cst_94 = arith.constant 3.200000e+01 : f32
    %221 = vector.broadcast %cst_94 : f32 to vector<6x1xf32>
    %222 = arith.divf %220, %221 : vector<6x1xf32>
    %223 = vector.broadcast %222 : vector<6x1xf32> to vector<6x32xf32>
    %224 = arith.subf %218, %223 : vector<6x32xf32>
    %225 = arith.mulf %224, %224 : vector<6x32xf32>
    %cst_95 = arith.constant dense<0.000000e+00> : vector<6xf32>
    %226 = vector.multi_reduction <add>, %225, %cst_95 [1] : vector<6x32xf32> to vector<6xf32>
    %227 = vector.shape_cast %226 : vector<6xf32> to vector<6x1xf32>
    %cst_96 = arith.constant 3.200000e+01 : f32
    %228 = vector.broadcast %cst_96 : f32 to vector<6x1xf32>
    %229 = arith.divf %227, %228 : vector<6x1xf32>
    %230 = vector.broadcast %222 : vector<6x1xf32> to vector<6x32xf32>
    %231 = arith.subf %218, %230 : vector<6x32xf32>
    %cst_97 = arith.constant 9.99999974E-6 : f32
    %232 = vector.broadcast %cst_97 : f32 to vector<6x1xf32>
    %233 = arith.addf %229, %232 : vector<6x1xf32>
    %234 = math.rsqrt %233 : vector<6x1xf32>
    %235 = vector.broadcast %234 : vector<6x1xf32> to vector<6x32xf32>
    %236 = arith.mulf %231, %235 : vector<6x32xf32>
    %237 = vector.broadcast %6 : vector<1x32xf32> to vector<6x32xf32>
    %238 = arith.mulf %236, %237 : vector<6x32xf32>
    %239 = vector.broadcast %7 : vector<1x32xf32> to vector<6x32xf32>
    %240 = arith.addf %238, %239 : vector<6x32xf32>
    %241 = arith.truncf %240 : vector<6x32xf32> to vector<6x32xbf16>
    %cst_98 = arith.constant dense<0.000000e+00> : vector<6x64xf32>
    %242 = tpu.matmul %241, %2, %cst_98 {dimension_numbers = #tpu.dot_dimension_numbers<[1], [0], [0], [1], [0, 0, 1, 1], [], []>} : vector<6x32xbf16>, vector<32x64xbf16>, vector<6x64xf32> -> vector<6x64xf32>
    %243 = vector.broadcast %3 : vector<1x64xf32> to vector<6x64xf32>
    %244 = arith.addf %242, %243 : vector<6x64xf32>
    %cst_99 = arith.constant 0.000000e+00 : f32
    %245 = vector.broadcast %cst_99 : f32 to vector<6x64xf32>
    %246 = arith.maximumf %244, %245 : vector<6x64xf32>
    %247 = arith.truncf %246 : vector<6x64xf32> to vector<6x64xbf16>
    %cst_100 = arith.constant dense<0.000000e+00> : vector<6x32xf32>
    %248 = tpu.matmul %247, %4, %cst_100 {dimension_numbers = #tpu.dot_dimension_numbers<[1], [0], [0], [1], [0, 0, 1, 1], [], []>} : vector<6x64xbf16>, vector<64x32xbf16>, vector<6x32xf32> -> vector<6x32xf32>
    %249 = vector.broadcast %5 : vector<1x32xf32> to vector<6x32xf32>
    %250 = arith.addf %248, %249 : vector<6x32xf32>
    %251 = arith.addf %240, %250 : vector<6x32xf32>
    %cst_101 = arith.constant dense<0.000000e+00> : vector<6xf32>
    %252 = vector.multi_reduction <add>, %251, %cst_101 [1] : vector<6x32xf32> to vector<6xf32>
    %253 = vector.shape_cast %252 : vector<6xf32> to vector<6x1xf32>
    %cst_102 = arith.constant 3.200000e+01 : f32
    %254 = vector.broadcast %cst_102 : f32 to vector<6x1xf32>
    %255 = arith.divf %253, %254 : vector<6x1xf32>
    %256 = vector.broadcast %255 : vector<6x1xf32> to vector<6x32xf32>
    %257 = arith.subf %251, %256 : vector<6x32xf32>
    %258 = arith.mulf %257, %257 : vector<6x32xf32>
    %cst_103 = arith.constant dense<0.000000e+00> : vector<6xf32>
    %259 = vector.multi_reduction <add>, %258, %cst_103 [1] : vector<6x32xf32> to vector<6xf32>
    %260 = vector.shape_cast %259 : vector<6xf32> to vector<6x1xf32>
    %cst_104 = arith.constant 3.200000e+01 : f32
    %261 = vector.broadcast %cst_104 : f32 to vector<6x1xf32>
    %262 = arith.divf %260, %261 : vector<6x1xf32>
    %263 = vector.broadcast %255 : vector<6x1xf32> to vector<6x32xf32>
    %264 = arith.subf %251, %263 : vector<6x32xf32>
    %cst_105 = arith.constant 9.99999974E-6 : f32
    %265 = vector.broadcast %cst_105 : f32 to vector<6x1xf32>
    %266 = arith.addf %262, %265 : vector<6x1xf32>
    %267 = math.rsqrt %266 : vector<6x1xf32>
    %268 = vector.broadcast %267 : vector<6x1xf32> to vector<6x32xf32>
    %269 = arith.mulf %264, %268 : vector<6x32xf32>
    %270 = vector.broadcast %8 : vector<1x32xf32> to vector<6x32xf32>
    %271 = arith.mulf %269, %270 : vector<6x32xf32>
    %272 = vector.broadcast %9 : vector<1x32xf32> to vector<6x32xf32>
    %273 = arith.addf %271, %272 : vector<6x32xf32>
    %274 = arith.truncf %273 : vector<6x32xf32> to vector<6x32xbf16>
    %cst_106 = arith.constant dense<0.000000e+00> : vector<6x128xf32>
    %275 = tpu.matmul %274, %10, %cst_106 {dimension_numbers = #tpu.dot_dimension_numbers<[1], [0], [0], [1], [0, 0, 1, 1], [], []>} : vector<6x32xbf16>, vector<32x128xbf16>, vector<6x128xf32> -> vector<6x128xf32>
    %276 = tpu.iota {dimensions = array<i32: 0>} : vector<6x128xi32>
    %277 = tpu.iota {dimensions = array<i32: 1>} : vector<6x128xi32>
    %c2_i32 = arith.constant 2 : i32
    %278 = vector.broadcast %c2_i32 : i32 to vector<6x128xi32>
    %279 = arith.muli %276, %278 : vector<6x128xi32>
    %280 = arith.cmpi sge, %277, %279 : vector<6x128xi32>
    %c1_i32 = arith.constant 1 : i32
    %281 = vector.broadcast %c1_i32 : i32 to vector<6x128xi32>
    %282 = arith.addi %276, %281 : vector<6x128xi32>
    %c2_i32_107 = arith.constant 2 : i32
    %283 = vector.broadcast %c2_i32_107 : i32 to vector<6x128xi32>
    %284 = arith.muli %282, %283 : vector<6x128xi32>
    %285 = arith.cmpi slt, %277, %284 : vector<6x128xi32>
    %286 = arith.andi %280, %285 : vector<6x128xi1>
    %287 = vector.shape_cast %275 : vector<6x128xf32> to vector<1x6x128xf32>
    %288 = vector.shape_cast %286 : vector<6x128xi1> to vector<1x6x128xi1>
    %cst_108 = arith.constant 0.000000e+00 : f32
    %289 = vector.broadcast %cst_108 : f32 to vector<1x6x128xf32>
    %290 = arith.select %288, %287, %289 : vector<1x6x128xi1>, vector<1x6x128xf32>
    %cst_109 = arith.constant dense<0.000000e+00> : vector<1x128xf32>
    %291 = vector.multi_reduction <add>, %290, %cst_109 [1] : vector<1x6x128xf32> to vector<1x128xf32>
    %292 = arith.addf %291, %11 : vector<1x128xf32>
    %c0_110 = arith.constant 0 : index
    %c0_111 = arith.constant 0 : index
    %c0_112 = arith.constant 0 : index
    %293 = vector.load %arg23[%c0_110, %c0_111, %c0_112] : memref<1x1x128xf32, #tpu.memory_space<vmem>>, vector<1x1x128xf32>
    %294 = vector.shape_cast %293 : vector<1x1x128xf32> to vector<1x128xf32>
    %295 = vector.shape_cast %292 : vector<1x128xf32> to vector<1x1x128xf32>
    tpu.vector_store %arg23[%c0_110, %c0_111, %c0_112], %295 {strides = array<i32>} : memref<1x1x128xf32, #tpu.memory_space<vmem>>, vector<1x1x128xf32>,
    return
  }
  func.func @transform_0(%arg0: i32) -> (i32, i32, i32) {
    %c0_i32 = arith.constant 0 : i32
    %c0_i32_0 = arith.constant 0 : i32
    %c0_i32_1 = arith.constant 0 : i32
    return %arg0, %c0_i32, %c0_i32_0 : i32, i32, i32
  }
  func.func @transform_1(%arg0: i32) -> (i32, i32) {
    %c0_i32 = arith.constant 0 : i32
    %c0_i32_0 = arith.constant 0 : i32
    %c0_i32_1 = arith.constant 0 : i32
    return %c0_i32, %c0_i32_0 : i32, i32
  }
  func.func @transform_2(%arg0: i32) -> (i32, i32) {
    %c0_i32 = arith.constant 0 : i32
    %c0_i32_0 = arith.constant 0 : i32
    %c0_i32_1 = arith.constant 0 : i32
    return %c0_i32, %c0_i32_0 : i32, i32
  }
  func.func @transform_3(%arg0: i32) -> (i32, i32) {
    %c0_i32 = arith.constant 0 : i32
    %c0_i32_0 = arith.constant 0 : i32
    %c0_i32_1 = arith.constant 0 : i32
    return %c0_i32, %c0_i32_0 : i32, i32
  }
  func.func @transform_4(%arg0: i32) -> (i32, i32) {
    %c0_i32 = arith.constant 0 : i32
    %c0_i32_0 = arith.constant 0 : i32
    %c0_i32_1 = arith.constant 0 : i32
    return %c0_i32, %c0_i32_0 : i32, i32
  }
  func.func @transform_5(%arg0: i32) -> (i32, i32) {
    %c0_i32 = arith.constant 0 : i32
    %c0_i32_0 = arith.constant 0 : i32
    %c0_i32_1 = arith.constant 0 : i32
    return %c0_i32, %c0_i32_0 : i32, i32
  }
  func.func @transform_6(%arg0: i32) -> (i32, i32) {
    %c0_i32 = arith.constant 0 : i32
    %c0_i32_0 = arith.constant 0 : i32
    %c0_i32_1 = arith.constant 0 : i32
    return %c0_i32, %c0_i32_0 : i32, i32
  }
  func.func @transform_7(%arg0: i32) -> (i32, i32) {
    %c0_i32 = arith.constant 0 : i32
    %c0_i32_0 = arith.constant 0 : i32
    %c0_i32_1 = arith.constant 0 : i32
    return %c0_i32, %c0_i32_0 : i32, i32
  }
  func.func @transform_8(%arg0: i32) -> (i32, i32) {
    %c0_i32 = arith.constant 0 : i32
    %c0_i32_0 = arith.constant 0 : i32
    %c0_i32_1 = arith.constant 0 : i32
    return %c0_i32, %c0_i32_0 : i32, i32
  }
  func.func @transform_9(%arg0: i32) -> (i32, i32) {
    %c0_i32 = arith.constant 0 : i32
    %c0_i32_0 = arith.constant 0 : i32
    %c0_i32_1 = arith.constant 0 : i32
    return %c0_i32, %c0_i32_0 : i32, i32
  }
  func.func @transform_10(%arg0: i32) -> (i32, i32) {
    %c0_i32 = arith.constant 0 : i32
    %c0_i32_0 = arith.constant 0 : i32
    %c0_i32_1 = arith.constant 0 : i32
    return %c0_i32, %c0_i32_0 : i32, i32
  }
  func.func @transform_11(%arg0: i32) -> (i32, i32) {
    %c0_i32 = arith.constant 0 : i32
    %c0_i32_0 = arith.constant 0 : i32
    %c0_i32_1 = arith.constant 0 : i32
    return %c0_i32, %c0_i32_0 : i32, i32
  }
  func.func @transform_12(%arg0: i32) -> (i32, i32) {
    %c0_i32 = arith.constant 0 : i32
    %c0_i32_0 = arith.constant 0 : i32
    %c0_i32_1 = arith.constant 0 : i32
    return %c0_i32, %c0_i32_0 : i32, i32
  }
  func.func @transform_13(%arg0: i32) -> (i32, i32) {
    %c0_i32 = arith.constant 0 : i32
    %c0_i32_0 = arith.constant 0 : i32
    %c0_i32_1 = arith.constant 0 : i32
    return %c0_i32, %c0_i32_0 : i32, i32
  }
  func.func @transform_14(%arg0: i32) -> (i32, i32) {
    %c0_i32 = arith.constant 0 : i32
    %c0_i32_0 = arith.constant 0 : i32
    %c0_i32_1 = arith.constant 0 : i32
    return %c0_i32, %c0_i32_0 : i32, i32
  }
  func.func @transform_15(%arg0: i32) -> (i32, i32) {
    %c0_i32 = arith.constant 0 : i32
    %c0_i32_0 = arith.constant 0 : i32
    %c0_i32_1 = arith.constant 0 : i32
    return %c0_i32, %c0_i32_0 : i32, i32
  }
  func.func @transform_16(%arg0: i32) -> (i32, i32) {
    %c0_i32 = arith.constant 0 : i32
    %c0_i32_0 = arith.constant 0 : i32
    %c0_i32_1 = arith.constant 0 : i32
    return %c0_i32, %c0_i32_0 : i32, i32
  }
  func.func @transform_17(%arg0: i32) -> (i32, i32) {
    %c0_i32 = arith.constant 0 : i32
    %c0_i32_0 = arith.constant 0 : i32
    %c0_i32_1 = arith.constant 0 : i32
    return %c0_i32, %c0_i32_0 : i32, i32
  }
  func.func @transform_18(%arg0: i32) -> (i32, i32) {
    %c0_i32 = arith.constant 0 : i32
    %c0_i32_0 = arith.constant 0 : i32
    %c0_i32_1 = arith.constant 0 : i32
    return %c0_i32, %c0_i32_0 : i32, i32
  }
  func.func @transform_19(%arg0: i32) -> (i32, i32) {
    %c0_i32 = arith.constant 0 : i32
    %c0_i32_0 = arith.constant 0 : i32
    %c0_i32_1 = arith.constant 0 : i32
    return %c0_i32, %c0_i32_0 : i32, i32
  }
  func.func @transform_20(%arg0: i32) -> (i32, i32) {
    %c0_i32 = arith.constant 0 : i32
    %c0_i32_0 = arith.constant 0 : i32
    %c0_i32_1 = arith.constant 0 : i32
    return %c0_i32, %c0_i32_0 : i32, i32
  }
  func.func @transform_21(%arg0: i32) -> (i32, i32) {
    %c0_i32 = arith.constant 0 : i32
    %c0_i32_0 = arith.constant 0 : i32
    %c0_i32_1 = arith.constant 0 : i32
    return %c0_i32, %c0_i32_0 : i32, i32
  }
  func.func @transform_22(%arg0: i32) -> (i32, i32, i32) {
    %c0_i32 = arith.constant 0 : i32
    %c0_i32_0 = arith.constant 0 : i32
    %c0_i32_1 = arith.constant 0 : i32
    return %arg0, %c0_i32, %c0_i32_0 : i32, i32, i32
  }
}

module attributes {stable_mosaic.version = 11 : i64} {
  func.func @ml_decoder_kernel(%arg0: i32, %arg1: memref<1x16x32xbf16, #tpu.memory_space<vmem>>, %arg2: memref<32x32xbf16, #tpu.memory_space<vmem>>, %arg3: memref<1x32xf32, #tpu.memory_space<vmem>>, %arg4: memref<6x32xf32, #tpu.memory_space<vmem>>, %arg5: memref<32x32xbf16, #tpu.memory_space<vmem>>, %arg6: memref<1x32xf32, #tpu.memory_space<vmem>>, %arg7: memref<32x64xbf16, #tpu.memory_space<vmem>>, %arg8: memref<1x64xf32, #tpu.memory_space<vmem>>, %arg9: memref<32x32xbf16, #tpu.memory_space<vmem>>, %arg10: memref<1x32xf32, #tpu.memory_space<vmem>>, %arg11: memref<1x32xf32, #tpu.memory_space<vmem>>, %arg12: memref<1x32xf32, #tpu.memory_space<vmem>>, %arg13: memref<1x32xf32, #tpu.memory_space<vmem>>, %arg14: memref<1x32xf32, #tpu.memory_space<vmem>>, %arg15: memref<1x32xf32, #tpu.memory_space<vmem>>, %arg16: memref<1x32xf32, #tpu.memory_space<vmem>>, %arg17: memref<32x64xbf16, #tpu.memory_space<vmem>>, %arg18: memref<1x64xf32, #tpu.memory_space<vmem>>, %arg19: memref<64x32xbf16, #tpu.memory_space<vmem>>, %arg20: memref<1x32xf32, #tpu.memory_space<vmem>>, %arg21: memref<32x128xbf16, #tpu.memory_space<vmem>>, %arg22: memref<1x128xf32, #tpu.memory_space<vmem>>, %arg23: memref<1x1x128xf32, #tpu.memory_space<vmem>>) attributes {dimension_semantics = [#tpu.dimension_semantics<parallel>], iteration_bounds = array<i64: 2>, scalar_prefetch = 0 : i64, scratch_operands = 0 : i64, tpu.core_type = #tpu.core_type<tc>, window_params = [{transform_indices = @transform_0, window_bounds = array<i64: 1, 16, 32>}, {pipeline_mode = #tpu.pipeline_mode<synchronous>, transform_indices = @transform_1, window_bounds = array<i64: 32, 32>}, {pipeline_mode = #tpu.pipeline_mode<synchronous>, transform_indices = @transform_2, window_bounds = array<i64: 1, 32>}, {pipeline_mode = #tpu.pipeline_mode<synchronous>, transform_indices = @transform_3, window_bounds = array<i64: 6, 32>}, {pipeline_mode = #tpu.pipeline_mode<synchronous>, transform_indices = @transform_4, window_bounds = array<i64: 32, 32>}, {pipeline_mode = #tpu.pipeline_mode<synchronous>, transform_indices = @transform_5, window_bounds = array<i64: 1, 32>}, {pipeline_mode = #tpu.pipeline_mode<synchronous>, transform_indices = @transform_6, window_bounds = array<i64: 32, 64>}, {pipeline_mode = #tpu.pipeline_mode<synchronous>, transform_indices = @transform_7, window_bounds = array<i64: 1, 64>}, {pipeline_mode = #tpu.pipeline_mode<synchronous>, transform_indices = @transform_8, window_bounds = array<i64: 32, 32>}, {pipeline_mode = #tpu.pipeline_mode<synchronous>, transform_indices = @transform_9, window_bounds = array<i64: 1, 32>}, {pipeline_mode = #tpu.pipeline_mode<synchronous>, transform_indices = @transform_10, window_bounds = array<i64: 1, 32>}, {pipeline_mode = #tpu.pipeline_mode<synchronous>, transform_indices = @transform_11, window_bounds = array<i64: 1, 32>}, {pipeline_mode = #tpu.pipeline_mode<synchronous>, transform_indices = @transform_12, window_bounds = array<i64: 1, 32>}, {pipeline_mode = #tpu.pipeline_mode<synchronous>, transform_indices = @transform_13, window_bounds = array<i64: 1, 32>}, {pipeline_mode = #tpu.pipeline_mode<synchronous>, transform_indices = @transform_14, window_bounds = array<i64: 1, 32>}, {pipeline_mode = #tpu.pipeline_mode<synchronous>, transform_indices = @transform_15, window_bounds = array<i64: 1, 32>}, {pipeline_mode = #tpu.pipeline_mode<synchronous>, transform_indices = @transform_16, window_bounds = array<i64: 32, 64>}, {pipeline_mode = #tpu.pipeline_mode<synchronous>, transform_indices = @transform_17, window_bounds = array<i64: 1, 64>}, {pipeline_mode = #tpu.pipeline_mode<synchronous>, transform_indices = @transform_18, window_bounds = array<i64: 64, 32>}, {pipeline_mode = #tpu.pipeline_mode<synchronous>, transform_indices = @transform_19, window_bounds = array<i64: 1, 32>}, {pipeline_mode = #tpu.pipeline_mode<synchronous>, transform_indices = @transform_20, window_bounds = array<i64: 32, 128>}, {pipeline_mode = #tpu.pipeline_mode<synchronous>, transform_indices = @transform_21, window_bounds = array<i64: 1, 128>}, {transform_indices = @transform_22, window_bounds = array<i64: 1, 1, 128>}]} {
    %c0 = arith.constant 0 : index
    %c0_0 = arith.constant 0 : index
    %0 = vector.load %arg9[%c0, %c0_0] : memref<32x32xbf16, #tpu.memory_space<vmem>>, vector<32x32xbf16>
    %c0_1 = arith.constant 0 : index
    %c0_2 = arith.constant 0 : index
    %1 = vector.load %arg10[%c0_1, %c0_2] : memref<1x32xf32, #tpu.memory_space<vmem>>, vector<1x32xf32>
    %c0_3 = arith.constant 0 : index
    %c0_4 = arith.constant 0 : index
    %2 = vector.load %arg17[%c0_3, %c0_4] : memref<32x64xbf16, #tpu.memory_space<vmem>>, vector<32x64xbf16>
    %c0_5 = arith.constant 0 : index
    %c0_6 = arith.constant 0 : index
    %3 = vector.load %arg18[%c0_5, %c0_6] : memref<1x64xf32, #tpu.memory_space<vmem>>, vector<1x64xf32>
    %c0_7 = arith.constant 0 : index
    %c0_8 = arith.constant 0 : index
    %4 = vector.load %arg19[%c0_7, %c0_8] : memref<64x32xbf16, #tpu.memory_space<vmem>>, vector<64x32xbf16>
    %c0_9 = arith.constant 0 : index
    %c0_10 = arith.constant 0 : index
    %5 = vector.load %arg20[%c0_9, %c0_10] : memref<1x32xf32, #tpu.memory_space<vmem>>, vector<1x32xf32>
    %c0_11 = arith.constant 0 : index
    %c0_12 = arith.constant 0 : index
    %6 = vector.load %arg13[%c0_11, %c0_12] : memref<1x32xf32, #tpu.memory_space<vmem>>, vector<1x32xf32>
    %c0_13 = arith.constant 0 : index
    %c0_14 = arith.constant 0 : index
    %7 = vector.load %arg14[%c0_13, %c0_14] : memref<1x32xf32, #tpu.memory_space<vmem>>, vector<1x32xf32>
    %c0_15 = arith.constant 0 : index
    %c0_16 = arith.constant 0 : index
    %8 = vector.load %arg15[%c0_15, %c0_16] : memref<1x32xf32, #tpu.memory_space<vmem>>, vector<1x32xf32>
    %c0_17 = arith.constant 0 : index
    %c0_18 = arith.constant 0 : index
    %9 = vector.load %arg16[%c0_17, %c0_18] : memref<1x32xf32, #tpu.memory_space<vmem>>, vector<1x32xf32>
    %c0_19 = arith.constant 0 : index
    %c0_20 = arith.constant 0 : index
    %10 = vector.load %arg21[%c0_19, %c0_20] : memref<32x128xbf16, #tpu.memory_space<vmem>>, vector<32x128xbf16>
    %c0_21 = arith.constant 0 : index
    %c0_22 = arith.constant 0 : index
    %11 = vector.load %arg22[%c0_21, %c0_22] : memref<1x128xf32, #tpu.memory_space<vmem>>, vector<1x128xf32>
    %c0_23 = arith.constant 0 : index
    %c0_24 = arith.constant 0 : index
    %12 = vector.load %arg4[%c0_23, %c0_24] : memref<6x32xf32, #tpu.memory_space<vmem>>, vector<6x32xf32>
    %13 = arith.addf %12, %12 : vector<6x32xf32>
    %c0_25 = arith.constant 0 : index
    %c0_26 = arith.constant 0 : index
    %14 = vector.load %arg11[%c0_25, %c0_26] : memref<1x32xf32, #tpu.memory_space<vmem>>, vector<1x32xf32>
    %c0_27 = arith.constant 0 : index
    %c0_28 = arith.constant 0 : index
    %15 = vector.load %arg12[%c0_27, %c0_28] : memref<1x32xf32, #tpu.memory_space<vmem>>, vector<1x32xf32>
    %cst = arith.constant dense<0.000000e+00> : vector<6xf32>
    %16 = vector.multi_reduction <add>, %13, %cst [1] : vector<6x32xf32> to vector<6xf32>
    %17 = vector.shape_cast %16 : vector<6xf32> to vector<6x1xf32>
    %cst_29 = arith.constant 3.200000e+01 : f32
    %18 = vector.broadcast %cst_29 : f32 to vector<6x1xf32>
    %19 = arith.divf %17, %18 : vector<6x1xf32>
    %20 = vector.broadcast %19 : vector<6x1xf32> to vector<6x32xf32>
    %21 = arith.subf %13, %20 : vector<6x32xf32>
    %22 = arith.mulf %21, %21 : vector<6x32xf32>
    %cst_30 = arith.constant dense<0.000000e+00> : vector<6xf32>
    %23 = vector.multi_reduction <add>, %22, %cst_30 [1] : vector<6x32xf32> to vector<6xf32>
    %24 = vector.shape_cast %23 : vector<6xf32> to vector<6x1xf32>
    %cst_31 = arith.constant 3.200000e+01 : f32
    %25 = vector.broadcast %cst_31 : f32 to vector<6x1xf32>
    %26 = arith.divf %24, %25 : vector<6x1xf32>
    %27 = vector.broadcast %19 : vector<6x1xf32> to vector<6x32xf32>
    %28 = arith.subf %13, %27 : vector<6x32xf32>
    %cst_32 = arith.constant 9.99999974E-6 : f32
    %29 = vector.broadcast %cst_32 : f32 to vector<6x1xf32>
    %30 = arith.addf %26, %29 : vector<6x1xf32>
    %31 = math.rsqrt %30 : vector<6x1xf32>
    %32 = vector.broadcast %31 : vector<6x1xf32> to vector<6x32xf32>
    %33 = arith.mulf %28, %32 : vector<6x32xf32>
    %34 = vector.broadcast %14 : vector<1x32xf32> to vector<6x32xf32>
    %35 = arith.mulf %33, %34 : vector<6x32xf32>
    %36 = vector.broadcast %15 : vector<1x32xf32> to vector<6x32xf32>
    %37 = arith.addf %35, %36 : vector<6x32xf32>
    %38 = arith.truncf %37 : vector<6x32xf32> to vector<6x32xbf16>
    %c0_33 = arith.constant 0 : index
    %c0_34 = arith.constant 0 : index
    %39 = vector.load %arg5[%c0_33, %c0_34] : memref<32x32xbf16, #tpu.memory_space<vmem>>, vector<32x32xbf16>
    %cst_35 = arith.constant dense<0.000000e+00> : vector<6x32xf32>
    %40 = tpu.matmul %38, %39, %cst_35 {dimension_numbers = #tpu.dot_dimension_numbers<[1], [0], [0], [1], [0, 0, 1, 1], [], []>} : vector<6x32xbf16>, vector<32x32xbf16>, vector<6x32xf32> -> vector<6x32xf32>
    %c0_36 = arith.constant 0 : index
    %c0_37 = arith.constant 0 : index
    %41 = vector.load %arg6[%c0_36, %c0_37] : memref<1x32xf32, #tpu.memory_space<vmem>>, vector<1x32xf32>
    %42 = vector.broadcast %41 : vector<1x32xf32> to vector<6x32xf32>
    %43 = arith.addf %40, %42 : vector<6x32xf32>
    %44 = arith.truncf %43 : vector<6x32xf32> to vector<6x32xbf16>
    %c0_38 = arith.constant 0 : index
    %c0_39 = arith.constant 0 : index
    %c0_40 = arith.constant 0 : index
    %45 = vector.load %arg1[%c0_38, %c0_39, %c0_40] : memref<1x16x32xbf16, #tpu.memory_space<vmem>>, vector<1x16x32xbf16>
    %46 = vector.shape_cast %45 : vector<1x16x32xbf16> to vector<16x32xbf16>
    %c0_41 = arith.constant 0 : index
    %c0_42 = arith.constant 0 : index
    %47 = vector.load %arg2[%c0_41, %c0_42] : memref<32x32xbf16, #tpu.memory_space<vmem>>, vector<32x32xbf16>
    %cst_43 = arith.constant dense<0.000000e+00> : vector<16x32xf32>
    %48 = tpu.matmul %46, %47, %cst_43 {dimension_numbers = #tpu.dot_dimension_numbers<[1], [0], [0], [1], [0, 0, 1, 1], [], []>} : vector<16x32xbf16>, vector<32x32xbf16>, vector<16x32xf32> -> vector<16x32xf32>
    %c0_44 = arith.constant 0 : index
    %c0_45 = arith.constant 0 : index
    %49 = vector.load %arg3[%c0_44, %c0_45] : memref<1x32xf32, #tpu.memory_space<vmem>>, vector<1x32xf32>
    %50 = vector.broadcast %49 : vector<1x32xf32> to vector<16x32xf32>
    %51 = arith.addf %48, %50 : vector<16x32xf32>
    %cst_46 = arith.constant 0.000000e+00 : f32
    %52 = vector.broadcast %cst_46 : f32 to vector<16x32xf32>
    %53 = arith.maximumf %51, %52 : vector<16x32xf32>
    %54 = arith.truncf %53 : vector<16x32xf32> to vector<16x32xbf16>
    %c0_47 = arith.constant 0 : index
    %c0_48 = arith.constant 0 : index
    %55 = vector.load %arg7[%c0_47, %c0_48] : memref<32x64xbf16, #tpu.memory_space<vmem>>, vector<32x64xbf16>
    %cst_49 = arith.constant dense<0.000000e+00> : vector<16x64xf32>
    %56 = tpu.matmul %54, %55, %cst_49 {dimension_numbers = #tpu.dot_dimension_numbers<[1], [0], [0], [1], [0, 0, 1, 1], [], []>} : vector<16x32xbf16>, vector<32x64xbf16>, vector<16x64xf32> -> vector<16x64xf32>
    %c0_50 = arith.constant 0 : index
    %c0_51 = arith.constant 0 : index
    %57 = vector.load %arg8[%c0_50, %c0_51] : memref<1x64xf32, #tpu.memory_space<vmem>>, vector<1x64xf32>
    %58 = vector.broadcast %57 : vector<1x64xf32> to vector<16x64xf32>
    %59 = arith.addf %56, %58 : vector<16x64xf32>
    %60 = arith.truncf %59 : vector<16x64xf32> to vector<16x64xbf16>
    %61 = vector.extract_strided_slice %60 {offsets = [0, 0], sizes = [16, 32], strides = [1, 1]} : vector<16x64xbf16> to vector<16x32xbf16>
    %62 = vector.shape_cast %61 : vector<16x32xbf16> to vector<1x16x32xbf16>
    %63 = vector.extract_strided_slice %60 {offsets = [0, 32], sizes = [16, 32], strides = [1, 1]} : vector<16x64xbf16> to vector<16x32xbf16>
    %64 = vector.shape_cast %63 : vector<16x32xbf16> to vector<1x16x32xbf16>
    %65 = vector.shape_cast %44 : vector<6x32xbf16> to vector<1x6x32xbf16>
    %66 = vector.extract_strided_slice %65 {offsets = [0, 0, 0], sizes = [1, 6, 4], strides = [1, 1, 1]} : vector<1x6x32xbf16> to vector<1x6x4xbf16>
    %67 = vector.extract_strided_slice %62 {offsets = [0, 0, 0], sizes = [1, 16, 4], strides = [1, 1, 1]} : vector<1x16x32xbf16> to vector<1x16x4xbf16>
    "tpu.trace_start"() <{level = 10 : i32, message = "bkd,bnd->bkn"}> : () -> ()
    %cst_52 = arith.constant dense<0.000000e+00> : vector<1x6x16xf32>
    %68 = tpu.matmul %66, %67, %cst_52 {dimension_numbers = #tpu.dot_dimension_numbers<[2], [2], [1], [1], [0, 0, 0, 1, 1, 1], [0], [0]>} : vector<1x6x4xbf16>, vector<1x16x4xbf16>, vector<1x6x16xf32> -> vector<1x6x16xf32>
    "tpu.trace_stop"() : () -> ()
    %cst_53 = arith.constant 5.000000e-01 : f32
    %69 = vector.broadcast %cst_53 : f32 to vector<1x6x16xf32>
    %70 = arith.mulf %68, %69 : vector<1x6x16xf32>
    %cst_54 = arith.constant dense<0xFF800000> : vector<1x6xf32>
    %71 = vector.multi_reduction <maximumf>, %70, %cst_54 [2] : vector<1x6x16xf32> to vector<1x6xf32>
    %72 = vector.shape_cast %71 : vector<1x6xf32> to vector<1x6x1xf32>
    %73 = vector.broadcast %72 : vector<1x6x1xf32> to vector<1x6x16xf32>
    %74 = arith.subf %70, %73 : vector<1x6x16xf32>
    %75 = math.exp %74 : vector<1x6x16xf32>
    %cst_55 = arith.constant dense<0.000000e+00> : vector<1x6xf32>
    %76 = vector.multi_reduction <add>, %75, %cst_55 [2] : vector<1x6x16xf32> to vector<1x6xf32>
    %77 = vector.shape_cast %76 : vector<1x6xf32> to vector<1x6x1xf32>
    %78 = tpu.reciprocal %77 {approx = true} : vector<1x6x1xf32> -> vector<1x6x1xf32>
    %79 = vector.broadcast %78 : vector<1x6x1xf32> to vector<1x6x16xf32>
    %80 = arith.mulf %75, %79 : vector<1x6x16xf32>
    %81 = arith.truncf %80 : vector<1x6x16xf32> to vector<1x6x16xbf16>
    %82 = vector.extract_strided_slice %64 {offsets = [0, 0, 0], sizes = [1, 16, 4], strides = [1, 1, 1]} : vector<1x16x32xbf16> to vector<1x16x4xbf16>
    "tpu.trace_start"() <{level = 10 : i32, message = "bkn,bnd->bkd"}> : () -> ()
    %cst_56 = arith.constant dense<0.000000e+00> : vector<1x6x4xf32>
    %83 = tpu.matmul %81, %82, %cst_56 {dimension_numbers = #tpu.dot_dimension_numbers<[2], [1], [1], [2], [0, 0, 0, 1, 1, 2], [0], [0]>} : vector<1x6x16xbf16>, vector<1x16x4xbf16>, vector<1x6x4xf32> -> vector<1x6x4xf32>
    "tpu.trace_stop"() : () -> ()
    %84 = vector.extract_strided_slice %65 {offsets = [0, 0, 4], sizes = [1, 6, 4], strides = [1, 1, 1]} : vector<1x6x32xbf16> to vector<1x6x4xbf16>
    %85 = vector.extract_strided_slice %62 {offsets = [0, 0, 4], sizes = [1, 16, 4], strides = [1, 1, 1]} : vector<1x16x32xbf16> to vector<1x16x4xbf16>
    "tpu.trace_start"() <{level = 10 : i32, message = "bkd,bnd->bkn"}> : () -> ()
    %cst_57 = arith.constant dense<0.000000e+00> : vector<1x6x16xf32>
    %86 = tpu.matmul %84, %85, %cst_57 {dimension_numbers = #tpu.dot_dimension_numbers<[2], [2], [1], [1], [0, 0, 0, 1, 1, 1], [0], [0]>} : vector<1x6x4xbf16>, vector<1x16x4xbf16>, vector<1x6x16xf32> -> vector<1x6x16xf32>
    "tpu.trace_stop"() : () -> ()
    %cst_58 = arith.constant 5.000000e-01 : f32
    %87 = vector.broadcast %cst_58 : f32 to vector<1x6x16xf32>
    %88 = arith.mulf %86, %87 : vector<1x6x16xf32>
    %cst_59 = arith.constant dense<0xFF800000> : vector<1x6xf32>
    %89 = vector.multi_reduction <maximumf>, %88, %cst_59 [2] : vector<1x6x16xf32> to vector<1x6xf32>
    %90 = vector.shape_cast %89 : vector<1x6xf32> to vector<1x6x1xf32>
    %91 = vector.broadcast %90 : vector<1x6x1xf32> to vector<1x6x16xf32>
    %92 = arith.subf %88, %91 : vector<1x6x16xf32>
    %93 = math.exp %92 : vector<1x6x16xf32>
    %cst_60 = arith.constant dense<0.000000e+00> : vector<1x6xf32>
    %94 = vector.multi_reduction <add>, %93, %cst_60 [2] : vector<1x6x16xf32> to vector<1x6xf32>
    %95 = vector.shape_cast %94 : vector<1x6xf32> to vector<1x6x1xf32>
    %96 = tpu.reciprocal %95 {approx = true} : vector<1x6x1xf32> -> vector<1x6x1xf32>
    %97 = vector.broadcast %96 : vector<1x6x1xf32> to vector<1x6x16xf32>
    %98 = arith.mulf %93, %97 : vector<1x6x16xf32>
    %99 = arith.truncf %98 : vector<1x6x16xf32> to vector<1x6x16xbf16>
    %100 = vector.extract_strided_slice %64 {offsets = [0, 0, 4], sizes = [1, 16, 4], strides = [1, 1, 1]} : vector<1x16x32xbf16> to vector<1x16x4xbf16>
    "tpu.trace_start"() <{level = 10 : i32, message = "bkn,bnd->bkd"}> : () -> ()
    %cst_61 = arith.constant dense<0.000000e+00> : vector<1x6x4xf32>
    %101 = tpu.matmul %99, %100, %cst_61 {dimension_numbers = #tpu.dot_dimension_numbers<[2], [1], [1], [2], [0, 0, 0, 1, 1, 2], [0], [0]>} : vector<1x6x16xbf16>, vector<1x16x4xbf16>, vector<1x6x4xf32> -> vector<1x6x4xf32>
    "tpu.trace_stop"() : () -> ()
    %102 = vector.extract_strided_slice %65 {offsets = [0, 0, 8], sizes = [1, 6, 4], strides = [1, 1, 1]} : vector<1x6x32xbf16> to vector<1x6x4xbf16>
    %103 = vector.extract_strided_slice %62 {offsets = [0, 0, 8], sizes = [1, 16, 4], strides = [1, 1, 1]} : vector<1x16x32xbf16> to vector<1x16x4xbf16>
    "tpu.trace_start"() <{level = 10 : i32, message = "bkd,bnd->bkn"}> : () -> ()
    %cst_62 = arith.constant dense<0.000000e+00> : vector<1x6x16xf32>
    %104 = tpu.matmul %102, %103, %cst_62 {dimension_numbers = #tpu.dot_dimension_numbers<[2], [2], [1], [1], [0, 0, 0, 1, 1, 1], [0], [0]>} : vector<1x6x4xbf16>, vector<1x16x4xbf16>, vector<1x6x16xf32> -> vector<1x6x16xf32>
    "tpu.trace_stop"() : () -> ()
    %cst_63 = arith.constant 5.000000e-01 : f32
    %105 = vector.broadcast %cst_63 : f32 to vector<1x6x16xf32>
    %106 = arith.mulf %104, %105 : vector<1x6x16xf32>
    %cst_64 = arith.constant dense<0xFF800000> : vector<1x6xf32>
    %107 = vector.multi_reduction <maximumf>, %106, %cst_64 [2] : vector<1x6x16xf32> to vector<1x6xf32>
    %108 = vector.shape_cast %107 : vector<1x6xf32> to vector<1x6x1xf32>
    %109 = vector.broadcast %108 : vector<1x6x1xf32> to vector<1x6x16xf32>
    %110 = arith.subf %106, %109 : vector<1x6x16xf32>
    %111 = math.exp %110 : vector<1x6x16xf32>
    %cst_65 = arith.constant dense<0.000000e+00> : vector<1x6xf32>
    %112 = vector.multi_reduction <add>, %111, %cst_65 [2] : vector<1x6x16xf32> to vector<1x6xf32>
    %113 = vector.shape_cast %112 : vector<1x6xf32> to vector<1x6x1xf32>
    %114 = tpu.reciprocal %113 {approx = true} : vector<1x6x1xf32> -> vector<1x6x1xf32>
    %115 = vector.broadcast %114 : vector<1x6x1xf32> to vector<1x6x16xf32>
    %116 = arith.mulf %111, %115 : vector<1x6x16xf32>
    %117 = arith.truncf %116 : vector<1x6x16xf32> to vector<1x6x16xbf16>
    %118 = vector.extract_strided_slice %64 {offsets = [0, 0, 8], sizes = [1, 16, 4], strides = [1, 1, 1]} : vector<1x16x32xbf16> to vector<1x16x4xbf16>
    "tpu.trace_start"() <{level = 10 : i32, message = "bkn,bnd->bkd"}> : () -> ()
    %cst_66 = arith.constant dense<0.000000e+00> : vector<1x6x4xf32>
    %119 = tpu.matmul %117, %118, %cst_66 {dimension_numbers = #tpu.dot_dimension_numbers<[2], [1], [1], [2], [0, 0, 0, 1, 1, 2], [0], [0]>} : vector<1x6x16xbf16>, vector<1x16x4xbf16>, vector<1x6x4xf32> -> vector<1x6x4xf32>
    "tpu.trace_stop"() : () -> ()
    %120 = vector.extract_strided_slice %65 {offsets = [0, 0, 12], sizes = [1, 6, 4], strides = [1, 1, 1]} : vector<1x6x32xbf16> to vector<1x6x4xbf16>
    %121 = vector.extract_strided_slice %62 {offsets = [0, 0, 12], sizes = [1, 16, 4], strides = [1, 1, 1]} : vector<1x16x32xbf16> to vector<1x16x4xbf16>
    "tpu.trace_start"() <{level = 10 : i32, message = "bkd,bnd->bkn"}> : () -> ()
    %cst_67 = arith.constant dense<0.000000e+00> : vector<1x6x16xf32>
    %122 = tpu.matmul %120, %121, %cst_67 {dimension_numbers = #tpu.dot_dimension_numbers<[2], [2], [1], [1], [0, 0, 0, 1, 1, 1], [0], [0]>} : vector<1x6x4xbf16>, vector<1x16x4xbf16>, vector<1x6x16xf32> -> vector<1x6x16xf32>
    "tpu.trace_stop"() : () -> ()
    %cst_68 = arith.constant 5.000000e-01 : f32
    %123 = vector.broadcast %cst_68 : f32 to vector<1x6x16xf32>
    %124 = arith.mulf %122, %123 : vector<1x6x16xf32>
    %cst_69 = arith.constant dense<0xFF800000> : vector<1x6xf32>
    %125 = vector.multi_reduction <maximumf>, %124, %cst_69 [2] : vector<1x6x16xf32> to vector<1x6xf32>
    %126 = vector.shape_cast %125 : vector<1x6xf32> to vector<1x6x1xf32>
    %127 = vector.broadcast %126 : vector<1x6x1xf32> to vector<1x6x16xf32>
    %128 = arith.subf %124, %127 : vector<1x6x16xf32>
    %129 = math.exp %128 : vector<1x6x16xf32>
    %cst_70 = arith.constant dense<0.000000e+00> : vector<1x6xf32>
    %130 = vector.multi_reduction <add>, %129, %cst_70 [2] : vector<1x6x16xf32> to vector<1x6xf32>
    %131 = vector.shape_cast %130 : vector<1x6xf32> to vector<1x6x1xf32>
    %132 = tpu.reciprocal %131 {approx = true} : vector<1x6x1xf32> -> vector<1x6x1xf32>
    %133 = vector.broadcast %132 : vector<1x6x1xf32> to vector<1x6x16xf32>
    %134 = arith.mulf %129, %133 : vector<1x6x16xf32>
    %135 = arith.truncf %134 : vector<1x6x16xf32> to vector<1x6x16xbf16>
    %136 = vector.extract_strided_slice %64 {offsets = [0, 0, 12], sizes = [1, 16, 4], strides = [1, 1, 1]} : vector<1x16x32xbf16> to vector<1x16x4xbf16>
    "tpu.trace_start"() <{level = 10 : i32, message = "bkn,bnd->bkd"}> : () -> ()
    %cst_71 = arith.constant dense<0.000000e+00> : vector<1x6x4xf32>
    %137 = tpu.matmul %135, %136, %cst_71 {dimension_numbers = #tpu.dot_dimension_numbers<[2], [1], [1], [2], [0, 0, 0, 1, 1, 2], [0], [0]>} : vector<1x6x16xbf16>, vector<1x16x4xbf16>, vector<1x6x4xf32> -> vector<1x6x4xf32>
    "tpu.trace_stop"() : () -> ()
    %138 = vector.extract_strided_slice %65 {offsets = [0, 0, 16], sizes = [1, 6, 4], strides = [1, 1, 1]} : vector<1x6x32xbf16> to vector<1x6x4xbf16>
    %139 = vector.extract_strided_slice %62 {offsets = [0, 0, 16], sizes = [1, 16, 4], strides = [1, 1, 1]} : vector<1x16x32xbf16> to vector<1x16x4xbf16>
    "tpu.trace_start"() <{level = 10 : i32, message = "bkd,bnd->bkn"}> : () -> ()
    %cst_72 = arith.constant dense<0.000000e+00> : vector<1x6x16xf32>
    %140 = tpu.matmul %138, %139, %cst_72 {dimension_numbers = #tpu.dot_dimension_numbers<[2], [2], [1], [1], [0, 0, 0, 1, 1, 1], [0], [0]>} : vector<1x6x4xbf16>, vector<1x16x4xbf16>, vector<1x6x16xf32> -> vector<1x6x16xf32>
    "tpu.trace_stop"() : () -> ()
    %cst_73 = arith.constant 5.000000e-01 : f32
    %141 = vector.broadcast %cst_73 : f32 to vector<1x6x16xf32>
    %142 = arith.mulf %140, %141 : vector<1x6x16xf32>
    %cst_74 = arith.constant dense<0xFF800000> : vector<1x6xf32>
    %143 = vector.multi_reduction <maximumf>, %142, %cst_74 [2] : vector<1x6x16xf32> to vector<1x6xf32>
    %144 = vector.shape_cast %143 : vector<1x6xf32> to vector<1x6x1xf32>
    %145 = vector.broadcast %144 : vector<1x6x1xf32> to vector<1x6x16xf32>
    %146 = arith.subf %142, %145 : vector<1x6x16xf32>
    %147 = math.exp %146 : vector<1x6x16xf32>
    %cst_75 = arith.constant dense<0.000000e+00> : vector<1x6xf32>
    %148 = vector.multi_reduction <add>, %147, %cst_75 [2] : vector<1x6x16xf32> to vector<1x6xf32>
    %149 = vector.shape_cast %148 : vector<1x6xf32> to vector<1x6x1xf32>
    %150 = tpu.reciprocal %149 {approx = true} : vector<1x6x1xf32> -> vector<1x6x1xf32>
    %151 = vector.broadcast %150 : vector<1x6x1xf32> to vector<1x6x16xf32>
    %152 = arith.mulf %147, %151 : vector<1x6x16xf32>
    %153 = arith.truncf %152 : vector<1x6x16xf32> to vector<1x6x16xbf16>
    %154 = vector.extract_strided_slice %64 {offsets = [0, 0, 16], sizes = [1, 16, 4], strides = [1, 1, 1]} : vector<1x16x32xbf16> to vector<1x16x4xbf16>
    "tpu.trace_start"() <{level = 10 : i32, message = "bkn,bnd->bkd"}> : () -> ()
    %cst_76 = arith.constant dense<0.000000e+00> : vector<1x6x4xf32>
    %155 = tpu.matmul %153, %154, %cst_76 {dimension_numbers = #tpu.dot_dimension_numbers<[2], [1], [1], [2], [0, 0, 0, 1, 1, 2], [0], [0]>} : vector<1x6x16xbf16>, vector<1x16x4xbf16>, vector<1x6x4xf32> -> vector<1x6x4xf32>
    "tpu.trace_stop"() : () -> ()
    %156 = vector.extract_strided_slice %65 {offsets = [0, 0, 20], sizes = [1, 6, 4], strides = [1, 1, 1]} : vector<1x6x32xbf16> to vector<1x6x4xbf16>
    %157 = vector.extract_strided_slice %62 {offsets = [0, 0, 20], sizes = [1, 16, 4], strides = [1, 1, 1]} : vector<1x16x32xbf16> to vector<1x16x4xbf16>
    "tpu.trace_start"() <{level = 10 : i32, message = "bkd,bnd->bkn"}> : () -> ()
    %cst_77 = arith.constant dense<0.000000e+00> : vector<1x6x16xf32>
    %158 = tpu.matmul %156, %157, %cst_77 {dimension_numbers = #tpu.dot_dimension_numbers<[2], [2], [1], [1], [0, 0, 0, 1, 1, 1], [0], [0]>} : vector<1x6x4xbf16>, vector<1x16x4xbf16>, vector<1x6x16xf32> -> vector<1x6x16xf32>
    "tpu.trace_stop"() : () -> ()
    %cst_78 = arith.constant 5.000000e-01 : f32
    %159 = vector.broadcast %cst_78 : f32 to vector<1x6x16xf32>
    %160 = arith.mulf %158, %159 : vector<1x6x16xf32>
    %cst_79 = arith.constant dense<0xFF800000> : vector<1x6xf32>
    %161 = vector.multi_reduction <maximumf>, %160, %cst_79 [2] : vector<1x6x16xf32> to vector<1x6xf32>
    %162 = vector.shape_cast %161 : vector<1x6xf32> to vector<1x6x1xf32>
    %163 = vector.broadcast %162 : vector<1x6x1xf32> to vector<1x6x16xf32>
    %164 = arith.subf %160, %163 : vector<1x6x16xf32>
    %165 = math.exp %164 : vector<1x6x16xf32>
    %cst_80 = arith.constant dense<0.000000e+00> : vector<1x6xf32>
    %166 = vector.multi_reduction <add>, %165, %cst_80 [2] : vector<1x6x16xf32> to vector<1x6xf32>
    %167 = vector.shape_cast %166 : vector<1x6xf32> to vector<1x6x1xf32>
    %168 = tpu.reciprocal %167 {approx = true} : vector<1x6x1xf32> -> vector<1x6x1xf32>
    %169 = vector.broadcast %168 : vector<1x6x1xf32> to vector<1x6x16xf32>
    %170 = arith.mulf %165, %169 : vector<1x6x16xf32>
    %171 = arith.truncf %170 : vector<1x6x16xf32> to vector<1x6x16xbf16>
    %172 = vector.extract_strided_slice %64 {offsets = [0, 0, 20], sizes = [1, 16, 4], strides = [1, 1, 1]} : vector<1x16x32xbf16> to vector<1x16x4xbf16>
    "tpu.trace_start"() <{level = 10 : i32, message = "bkn,bnd->bkd"}> : () -> ()
    %cst_81 = arith.constant dense<0.000000e+00> : vector<1x6x4xf32>
    %173 = tpu.matmul %171, %172, %cst_81 {dimension_numbers = #tpu.dot_dimension_numbers<[2], [1], [1], [2], [0, 0, 0, 1, 1, 2], [0], [0]>} : vector<1x6x16xbf16>, vector<1x16x4xbf16>, vector<1x6x4xf32> -> vector<1x6x4xf32>
    "tpu.trace_stop"() : () -> ()
    %174 = vector.extract_strided_slice %65 {offsets = [0, 0, 24], sizes = [1, 6, 4], strides = [1, 1, 1]} : vector<1x6x32xbf16> to vector<1x6x4xbf16>
    %175 = vector.extract_strided_slice %62 {offsets = [0, 0, 24], sizes = [1, 16, 4], strides = [1, 1, 1]} : vector<1x16x32xbf16> to vector<1x16x4xbf16>
    "tpu.trace_start"() <{level = 10 : i32, message = "bkd,bnd->bkn"}> : () -> ()
    %cst_82 = arith.constant dense<0.000000e+00> : vector<1x6x16xf32>
    %176 = tpu.matmul %174, %175, %cst_82 {dimension_numbers = #tpu.dot_dimension_numbers<[2], [2], [1], [1], [0, 0, 0, 1, 1, 1], [0], [0]>} : vector<1x6x4xbf16>, vector<1x16x4xbf16>, vector<1x6x16xf32> -> vector<1x6x16xf32>
    "tpu.trace_stop"() : () -> ()
    %cst_83 = arith.constant 5.000000e-01 : f32
    %177 = vector.broadcast %cst_83 : f32 to vector<1x6x16xf32>
    %178 = arith.mulf %176, %177 : vector<1x6x16xf32>
    %cst_84 = arith.constant dense<0xFF800000> : vector<1x6xf32>
    %179 = vector.multi_reduction <maximumf>, %178, %cst_84 [2] : vector<1x6x16xf32> to vector<1x6xf32>
    %180 = vector.shape_cast %179 : vector<1x6xf32> to vector<1x6x1xf32>
    %181 = vector.broadcast %180 : vector<1x6x1xf32> to vector<1x6x16xf32>
    %182 = arith.subf %178, %181 : vector<1x6x16xf32>
    %183 = math.exp %182 : vector<1x6x16xf32>
    %cst_85 = arith.constant dense<0.000000e+00> : vector<1x6xf32>
    %184 = vector.multi_reduction <add>, %183, %cst_85 [2] : vector<1x6x16xf32> to vector<1x6xf32>
    %185 = vector.shape_cast %184 : vector<1x6xf32> to vector<1x6x1xf32>
    %186 = tpu.reciprocal %185 {approx = true} : vector<1x6x1xf32> -> vector<1x6x1xf32>
    %187 = vector.broadcast %186 : vector<1x6x1xf32> to vector<1x6x16xf32>
    %188 = arith.mulf %183, %187 : vector<1x6x16xf32>
    %189 = arith.truncf %188 : vector<1x6x16xf32> to vector<1x6x16xbf16>
    %190 = vector.extract_strided_slice %64 {offsets = [0, 0, 24], sizes = [1, 16, 4], strides = [1, 1, 1]} : vector<1x16x32xbf16> to vector<1x16x4xbf16>
    "tpu.trace_start"() <{level = 10 : i32, message = "bkn,bnd->bkd"}> : () -> ()
    %cst_86 = arith.constant dense<0.000000e+00> : vector<1x6x4xf32>
    %191 = tpu.matmul %189, %190, %cst_86 {dimension_numbers = #tpu.dot_dimension_numbers<[2], [1], [1], [2], [0, 0, 0, 1, 1, 2], [0], [0]>} : vector<1x6x16xbf16>, vector<1x16x4xbf16>, vector<1x6x4xf32> -> vector<1x6x4xf32>
    "tpu.trace_stop"() : () -> ()
    %192 = vector.extract_strided_slice %65 {offsets = [0, 0, 28], sizes = [1, 6, 4], strides = [1, 1, 1]} : vector<1x6x32xbf16> to vector<1x6x4xbf16>
    %193 = vector.extract_strided_slice %62 {offsets = [0, 0, 28], sizes = [1, 16, 4], strides = [1, 1, 1]} : vector<1x16x32xbf16> to vector<1x16x4xbf16>
    "tpu.trace_start"() <{level = 10 : i32, message = "bkd,bnd->bkn"}> : () -> ()
    %cst_87 = arith.constant dense<0.000000e+00> : vector<1x6x16xf32>
    %194 = tpu.matmul %192, %193, %cst_87 {dimension_numbers = #tpu.dot_dimension_numbers<[2], [2], [1], [1], [0, 0, 0, 1, 1, 1], [0], [0]>} : vector<1x6x4xbf16>, vector<1x16x4xbf16>, vector<1x6x16xf32> -> vector<1x6x16xf32>
    "tpu.trace_stop"() : () -> ()
    %cst_88 = arith.constant 5.000000e-01 : f32
    %195 = vector.broadcast %cst_88 : f32 to vector<1x6x16xf32>
    %196 = arith.mulf %194, %195 : vector<1x6x16xf32>
    %cst_89 = arith.constant dense<0xFF800000> : vector<1x6xf32>
    %197 = vector.multi_reduction <maximumf>, %196, %cst_89 [2] : vector<1x6x16xf32> to vector<1x6xf32>
    %198 = vector.shape_cast %197 : vector<1x6xf32> to vector<1x6x1xf32>
    %199 = vector.broadcast %198 : vector<1x6x1xf32> to vector<1x6x16xf32>
    %200 = arith.subf %196, %199 : vector<1x6x16xf32>
    %201 = math.exp %200 : vector<1x6x16xf32>
    %cst_90 = arith.constant dense<0.000000e+00> : vector<1x6xf32>
    %202 = vector.multi_reduction <add>, %201, %cst_90 [2] : vector<1x6x16xf32> to vector<1x6xf32>
    %203 = vector.shape_cast %202 : vector<1x6xf32> to vector<1x6x1xf32>
    %204 = tpu.reciprocal %203 {approx = true} : vector<1x6x1xf32> -> vector<1x6x1xf32>
    %205 = vector.broadcast %204 : vector<1x6x1xf32> to vector<1x6x16xf32>
    %206 = arith.mulf %201, %205 : vector<1x6x16xf32>
    %207 = arith.truncf %206 : vector<1x6x16xf32> to vector<1x6x16xbf16>
    %208 = vector.extract_strided_slice %64 {offsets = [0, 0, 28], sizes = [1, 16, 4], strides = [1, 1, 1]} : vector<1x16x32xbf16> to vector<1x16x4xbf16>
    "tpu.trace_start"() <{level = 10 : i32, message = "bkn,bnd->bkd"}> : () -> ()
    %cst_91 = arith.constant dense<0.000000e+00> : vector<1x6x4xf32>
    %209 = tpu.matmul %207, %208, %cst_91 {dimension_numbers = #tpu.dot_dimension_numbers<[2], [1], [1], [2], [0, 0, 0, 1, 1, 2], [0], [0]>} : vector<1x6x16xbf16>, vector<1x16x4xbf16>, vector<1x6x4xf32> -> vector<1x6x4xf32>
    "tpu.trace_stop"() : () -> ()
    %210 = tpu.concatenate %83, %101, %119, %137, %155, %173, %191, %209 in 2 : vector<1x6x4xf32>, vector<1x6x4xf32>, vector<1x6x4xf32>, vector<1x6x4xf32>, vector<1x6x4xf32>, vector<1x6x4xf32>, vector<1x6x4xf32>, vector<1x6x4xf32> -> vector<1x6x32xf32>
    %211 = vector.shape_cast %210 : vector<1x6x32xf32> to vector<6x32xf32>
    %212 = arith.truncf %211 : vector<6x32xf32> to vector<6x32xbf16>
    %cst_92 = arith.constant dense<0.000000e+00> : vector<6x32xf32>
    %213 = tpu.matmul %212, %0, %cst_92 {dimension_numbers = #tpu.dot_dimension_numbers<[1], [0], [0], [1], [0, 0, 1, 1], [], []>} : vector<6x32xbf16>, vector<32x32xbf16>, vector<6x32xf32> -> vector<6x32xf32>
    %214 = vector.broadcast %1 : vector<1x32xf32> to vector<6x32xf32>
    %215 = arith.addf %213, %214 : vector<6x32xf32>
    %216 = vector.shape_cast %37 : vector<6x32xf32> to vector<1x6x32xf32>
    %217 = vector.shape_cast %216 : vector<1x6x32xf32> to vector<6x32xf32>
    %218 = arith.addf %217, %215 : vector<6x32xf32>
    %cst_93 = arith.constant dense<0.000000e+00> : vector<6xf32>
    %219 = vector.multi_reduction <add>, %218, %cst_93 [1] : vector<6x32xf32> to vector<6xf32>
    %220 = vector.shape_cast %219 : vector<6xf32> to vector<6x1xf32>
    %cst_94 = arith.constant 3.200000e+01 : f32
    %221 = vector.broadcast %cst_94 : f32 to vector<6x1xf32>
    %222 = arith.divf %220, %221 : vector<6x1xf32>
    %223 = vector.broadcast %222 : vector<6x1xf32> to vector<6x32xf32>
    %224 = arith.subf %218, %223 : vector<6x32xf32>
    %225 = arith.mulf %224, %224 : vector<6x32xf32>
    %cst_95 = arith.constant dense<0.000000e+00> : vector<6xf32>
    %226 = vector.multi_reduction <add>, %225, %cst_95 [1] : vector<6x32xf32> to vector<6xf32>
    %227 = vector.shape_cast %226 : vector<6xf32> to vector<6x1xf32>
    %cst_96 = arith.constant 3.200000e+01 : f32
    %228 = vector.broadcast %cst_96 : f32 to vector<6x1xf32>
    %229 = arith.divf %227, %228 : vector<6x1xf32>
    %230 = vector.broadcast %222 : vector<6x1xf32> to vector<6x32xf32>
    %231 = arith.subf %218, %230 : vector<6x32xf32>
    %cst_97 = arith.constant 9.99999974E-6 : f32
    %232 = vector.broadcast %cst_97 : f32 to vector<6x1xf32>
    %233 = arith.addf %229, %232 : vector<6x1xf32>
    %234 = math.rsqrt %233 : vector<6x1xf32>
    %235 = vector.broadcast %234 : vector<6x1xf32> to vector<6x32xf32>
    %236 = arith.mulf %231, %235 : vector<6x32xf32>
    %237 = vector.broadcast %6 : vector<1x32xf32> to vector<6x32xf32>
    %238 = arith.mulf %236, %237 : vector<6x32xf32>
    %239 = vector.broadcast %7 : vector<1x32xf32> to vector<6x32xf32>
    %240 = arith.addf %238, %239 : vector<6x32xf32>
    %241 = arith.truncf %240 : vector<6x32xf32> to vector<6x32xbf16>
    %cst_98 = arith.constant dense<0.000000e+00> : vector<6x64xf32>
    %242 = tpu.matmul %241, %2, %cst_98 {dimension_numbers = #tpu.dot_dimension_numbers<[1], [0], [0], [1], [0, 0, 1, 1], [], []>} : vector<6x32xbf16>, vector<32x64xbf16>, vector<6x64xf32> -> vector<6x64xf32>
    %243 = vector.broadcast %3 : vector<1x64xf32> to vector<6x64xf32>
    %244 = arith.addf %242, %243 : vector<6x64xf32>
    %cst_99 = arith.constant 0.000000e+00 : f32
    %245 = vector.broadcast %cst_99 : f32 to vector<6x64xf32>
    %246 = arith.maximumf %244, %245 : vector<6x64xf32>
    %247 = arith.truncf %246 : vector<6x64xf32> to vector<6x64xbf16>
    %cst_100 = arith.constant dense<0.000000e+00> : vector<6x32xf32>
    %248 = tpu.matmul %247, %4, %cst_100 {dimension_numbers = #tpu.dot_dimension_numbers<[1], [0], [0], [1], [0, 0, 1, 1], [], []>} : vector<6x64xbf16>, vector<64x32xbf16>, vector<6x32xf32> -> vector<6x32xf32>
    %249 = vector.broadcast %5 : vector<1x32xf32> to vector<6x32xf32>
    %250 = arith.addf %248, %249 : vector<6x32xf32>
    %251 = arith.addf %240, %250 : vector<6x32xf32>
    %cst_101 = arith.constant dense<0.000000e+00> : vector<6xf32>
    %252 = vector.multi_reduction <add>, %251, %cst_101 [1] : vector<6x32xf32> to vector<6xf32>
    %253 = vector.shape_cast %252 : vector<6xf32> to vector<6x1xf32>
    %cst_102 = arith.constant 3.200000e+01 : f32
    %254 = vector.broadcast %cst_102 : f32 to vector<6x1xf32>
    %255 = arith.divf %253, %254 : vector<6x1xf32>
    %256 = vector.broadcast %255 : vector<6x1xf32> to vector<6x32xf32>
    %257 = arith.subf %251, %256 : vector<6x32xf32>
    %258 = arith.mulf %257, %257 : vector<6x32xf32>
    %cst_103 = arith.constant dense<0.000000e+00> : vector<6xf32>
    %259 = vector.multi_reduction <add>, %258, %cst_103 [1] : vector<6x32xf32> to vector<6xf32>
    %260 = vector.shape_cast %259 : vector<6xf32> to vector<6x1xf32>
    %cst_104 = arith.constant 3.200000e+01 : f32
    %261 = vector.broadcast %cst_104 : f32 to vector<6x1xf32>
    %262 = arith.divf %260, %261 : vector<6x1xf32>
    %263 = vector.broadcast %255 : vector<6x1xf32> to vector<6x32xf32>
    %264 = arith.subf %251, %263 : vector<6x32xf32>
    %cst_105 = arith.constant 9.99999974E-6 : f32
    %265 = vector.broadcast %cst_105 : f32 to vector<6x1xf32>
    %266 = arith.addf %262, %265 : vector<6x1xf32>
    %267 = math.rsqrt %266 : vector<6x1xf32>
    %268 = vector.broadcast %267 : vector<6x1xf32> to vector<6x32xf32>
    %269 = arith.mulf %264, %268 : vector<6x32xf32>
    %270 = vector.broadcast %8 : vector<1x32xf32> to vector<6x32xf32>
    %271 = arith.mulf %269, %270 : vector<6x32xf32>
    %272 = vector.broadcast %9 : vector<1x32xf32> to vector<6x32xf32>
    %273 = arith.addf %271, %272 : vector<6x32xf32>
    %274 = arith.truncf %273 : vector<6x32xf32> to vector<6x32xbf16>
    %cst_106 = arith.constant dense<0.000000e+00> : vector<6x128xf32>
    %275 = tpu.matmul %274, %10, %cst_106 {dimension_numbers = #tpu.dot_dimension_numbers<[1], [0], [0], [1], [0, 0, 1, 1], [], []>} : vector<6x32xbf16>, vector<32x128xbf16>, vector<6x128xf32> -> vector<6x128xf32>
    %276 = tpu.iota {dimensions = array<i32: 0>} : vector<6x128xi32>
    %277 = tpu.iota {dimensions = array<i32: 1>} : vector<6x128xi32>
    %c2_i32 = arith.constant 2 : i32
    %278 = vector.broadcast %c2_i32 : i32 to vector<6x128xi32>
    %279 = arith.muli %276, %278 : vector<6x128xi32>
    %280 = arith.cmpi sge, %277, %279 : vector<6x128xi32>
    %c1_i32 = arith.constant 1 : i32
    %281 = vector.broadcast %c1_i32 : i32 to vector<6x128xi32>
    %282 = arith.addi %276, %281 : vector<6x128xi32>
    %c2_i32_107 = arith.constant 2 : i32
    %283 = vector.broadcast %c2_i32_107 : i32 to vector<6x128xi32>
    %284 = arith.muli %282, %283 : vector<6x128xi32>
    %285 = arith.cmpi slt, %277, %284 : vector<6x128xi32>
    %286 = arith.andi %280, %285 : vector<6x128xi1>
    %287 = vector.shape_cast %275 : vector<6x128xf32> to vector<1x6x128xf32>
    %288 = vector.shape_cast %286 : vector<6x128xi1> to vector<1x6x128xi1>
    %cst_108 = arith.constant 0.000000e+00 : f32
    %289 = vector.broadcast %cst_108 : f32 to vector<1x6x128xf32>
    %290 = arith.select %288, %287, %289 : vector<1x6x128xi1>, vector<1x6x128xf32>
    %cst_109 = arith.constant dense<0.000000e+00> : vector<1x128xf32>
    %291 = vector.multi_reduction <add>, %290, %cst_109 [1] : vector<1x6x128xf32> to vector<1x128xf32>
    %292 = arith.addf %291, %11 : vector<1x128xf32>
    %c0_110 = arith.constant 0 : index
    %c0_111 = arith.constant 0 : index
    %c0_112 = arith.constant 0 : index
    %293 = vector.load %arg23[%c0_110, %c0_111, %c0_112] : memref<1x1x128xf32, #tpu.memory_space<vmem>>, vector<1x1x128xf32>
    %294 = vector.shape_cast %293 : vector<1x1x128xf32> to vector<1x128xf32>
    %295 = vector.shape_cast %292 : vector<1x128xf32> to vector<1x1x128xf32>
    tpu.vector_store %arg23[%c0_110, %c0_111, %c0_112], %295 {strides = array<i32>} : memref<1x1x128xf32, #tpu.memory_space<vmem>>, vector<1x1x128xf32>,
    return
  }
  func.func @transform_0(%arg0: i32) -> (i32, i32, i32) {
    %c0_i32 = arith.constant 0 : i32
    %c0_i32_0 = arith.constant 0 : i32
    %c0_i32_1 = arith.constant 0 : i32
    return %arg0, %c0_i32, %c0_i32_0 : i32, i32, i32
  }
  func.func @transform_1(%arg0: i32) -> (i32, i32) {
    %c0_i32 = arith.constant 0 : i32
    %c0_i32_0 = arith.constant 0 : i32
    %c0_i32_1 = arith.constant 0 : i32
    return %c0_i32, %c0_i32_0 : i32, i32
  }
  func.func @transform_2(%arg0: i32) -> (i32, i32) {
    %c0_i32 = arith.constant 0 : i32
    %c0_i32_0 = arith.constant 0 : i32
    %c0_i32_1 = arith.constant 0 : i32
    return %c0_i32, %c0_i32_0 : i32, i32
  }
  func.func @transform_3(%arg0: i32) -> (i32, i32) {
    %c0_i32 = arith.constant 0 : i32
    %c0_i32_0 = arith.constant 0 : i32
    %c0_i32_1 = arith.constant 0 : i32
    return %c0_i32, %c0_i32_0 : i32, i32
  }
  func.func @transform_4(%arg0: i32) -> (i32, i32) {
    %c0_i32 = arith.constant 0 : i32
    %c0_i32_0 = arith.constant 0 : i32
    %c0_i32_1 = arith.constant 0 : i32
    return %c0_i32, %c0_i32_0 : i32, i32
  }
  func.func @transform_5(%arg0: i32) -> (i32, i32) {
    %c0_i32 = arith.constant 0 : i32
    %c0_i32_0 = arith.constant 0 : i32
    %c0_i32_1 = arith.constant 0 : i32
    return %c0_i32, %c0_i32_0 : i32, i32
  }
  func.func @transform_6(%arg0: i32) -> (i32, i32) {
    %c0_i32 = arith.constant 0 : i32
    %c0_i32_0 = arith.constant 0 : i32
    %c0_i32_1 = arith.constant 0 : i32
    return %c0_i32, %c0_i32_0 : i32, i32
  }
  func.func @transform_7(%arg0: i32) -> (i32, i32) {
    %c0_i32 = arith.constant 0 : i32
    %c0_i32_0 = arith.constant 0 : i32
    %c0_i32_1 = arith.constant 0 : i32
    return %c0_i32, %c0_i32_0 : i32, i32
  }
  func.func @transform_8(%arg0: i32) -> (i32, i32) {
    %c0_i32 = arith.constant 0 : i32
    %c0_i32_0 = arith.constant 0 : i32
    %c0_i32_1 = arith.constant 0 : i32
    return %c0_i32, %c0_i32_0 : i32, i32
  }
  func.func @transform_9(%arg0: i32) -> (i32, i32) {
    %c0_i32 = arith.constant 0 : i32
    %c0_i32_0 = arith.constant 0 : i32
    %c0_i32_1 = arith.constant 0 : i32
    return %c0_i32, %c0_i32_0 : i32, i32
  }
  func.func @transform_10(%arg0: i32) -> (i32, i32) {
    %c0_i32 = arith.constant 0 : i32
    %c0_i32_0 = arith.constant 0 : i32
    %c0_i32_1 = arith.constant 0 : i32
    return %c0_i32, %c0_i32_0 : i32, i32
  }
  func.func @transform_11(%arg0: i32) -> (i32, i32) {
    %c0_i32 = arith.constant 0 : i32
    %c0_i32_0 = arith.constant 0 : i32
    %c0_i32_1 = arith.constant 0 : i32
    return %c0_i32, %c0_i32_0 : i32, i32
  }
  func.func @transform_12(%arg0: i32) -> (i32, i32) {
    %c0_i32 = arith.constant 0 : i32
    %c0_i32_0 = arith.constant 0 : i32
    %c0_i32_1 = arith.constant 0 : i32
    return %c0_i32, %c0_i32_0 : i32, i32
  }
  func.func @transform_13(%arg0: i32) -> (i32, i32) {
    %c0_i32 = arith.constant 0 : i32
    %c0_i32_0 = arith.constant 0 : i32
    %c0_i32_1 = arith.constant 0 : i32
    return %c0_i32, %c0_i32_0 : i32, i32
  }
  func.func @transform_14(%arg0: i32) -> (i32, i32) {
    %c0_i32 = arith.constant 0 : i32
    %c0_i32_0 = arith.constant 0 : i32
    %c0_i32_1 = arith.constant 0 : i32
    return %c0_i32, %c0_i32_0 : i32, i32
  }
  func.func @transform_15(%arg0: i32) -> (i32, i32) {
    %c0_i32 = arith.constant 0 : i32
    %c0_i32_0 = arith.constant 0 : i32
    %c0_i32_1 = arith.constant 0 : i32
    return %c0_i32, %c0_i32_0 : i32, i32
  }
  func.func @transform_16(%arg0: i32) -> (i32, i32) {
    %c0_i32 = arith.constant 0 : i32
    %c0_i32_0 = arith.constant 0 : i32
    %c0_i32_1 = arith.constant 0 : i32
    return %c0_i32, %c0_i32_0 : i32, i32
  }
  func.func @transform_17(%arg0: i32) -> (i32, i32) {
    %c0_i32 = arith.constant 0 : i32
    %c0_i32_0 = arith.constant 0 : i32
    %c0_i32_1 = arith.constant 0 : i32
    return %c0_i32, %c0_i32_0 : i32, i32
  }
  func.func @transform_18(%arg0: i32) -> (i32, i32) {
    %c0_i32 = arith.constant 0 : i32
    %c0_i32_0 = arith.constant 0 : i32
    %c0_i32_1 = arith.constant 0 : i32
    return %c0_i32, %c0_i32_0 : i32, i32
  }
  func.func @transform_19(%arg0: i32) -> (i32, i32) {
    %c0_i32 = arith.constant 0 : i32
    %c0_i32_0 = arith.constant 0 : i32
    %c0_i32_1 = arith.constant 0 : i32
    return %c0_i32, %c0_i32_0 : i32, i32
  }
  func.func @transform_20(%arg0: i32) -> (i32, i32) {
    %c0_i32 = arith.constant 0 : i32
    %c0_i32_0 = arith.constant 0 : i32
    %c0_i32_1 = arith.constant 0 : i32
    return %c0_i32, %c0_i32_0 : i32, i32
  }
  func.func @transform_21(%arg0: i32) -> (i32, i32) {
    %c0_i32 = arith.constant 0 : i32
    %c0_i32_0 = arith.constant 0 : i32
    %c0_i32_1 = arith.constant 0 : i32
    return %c0_i32, %c0_i32_0 : i32, i32
  }
  func.func @transform_22(%arg0: i32) -> (i32, i32, i32) {
    %c0_i32 = arith.constant 0 : i32
    %c0_i32_0 = arith.constant 0 : i32
    %c0_i32_1 = arith.constant 0 : i32
    return %arg0, %c0_i32, %c0_i32_0 : i32, i32, i32
  }
}

</mosaic_0001>

<llo_original>
// kernel: tpu_custom_call.1
$region0: #{tpu_custom_call.1}
  #allocation0 [shape = 'u32[]', space=smem, size = 0x4, offset = 0x4, fixed_abs, tag = 'smem constant byte address 0x4 - core index']
  #allocation1 [shape = 'u32[144,128]{1,0:T(1,128)}', space=vmem, size = 0x12000, scoped, tag = 'internal scratch']
  %s0 = inlined_call_operand.vmem [shape: bf16[2,16,32], index: 0, kind: input, shape index: {}]
  %s1 = inlined_call_operand.vmem [shape: bf16[32,32], index: 1, kind: input, shape index: {}]
  %s2 = inlined_call_operand.vmem [shape: f32[1,32], index: 2, kind: input, shape index: {}]
  %s3 = inlined_call_operand.hbm [shape: f32[6,32], index: 3, kind: input, shape index: {}]
  %s4 = inlined_call_operand.vmem [shape: bf16[32,32], index: 4, kind: input, shape index: {}]
  %s5 = inlined_call_operand.hbm [shape: f32[1,32], index: 5, kind: input, shape index: {}]
  %s6 = inlined_call_operand.hbm [shape: bf16[32,64], index: 6, kind: input, shape index: {}]
  %s7 = inlined_call_operand.hbm [shape: f32[1,64], index: 7, kind: input, shape index: {}]
  %s8 = inlined_call_operand.hbm [shape: bf16[32,32], index: 8, kind: input, shape index: {}]
  %s9 = inlined_call_operand.hbm [shape: f32[1,32], index: 9, kind: input, shape index: {}]
  %s10 = inlined_call_operand.hbm [shape: f32[1,32], index: 10, kind: input, shape index: {}]
  %s11 = inlined_call_operand.hbm [shape: f32[1,32], index: 11, kind: input, shape index: {}]
  %s12 = inlined_call_operand.hbm [shape: f32[1,32], index: 12, kind: input, shape index: {}]
  %s13 = inlined_call_operand.hbm [shape: f32[1,32], index: 13, kind: input, shape index: {}]
  %s14 = inlined_call_operand.vmem [shape: f32[1,32], index: 14, kind: input, shape index: {}]
  %s15 = inlined_call_operand.vmem [shape: f32[1,32], index: 15, kind: input, shape index: {}]
  %s16 = inlined_call_operand.vmem [shape: bf16[32,64], index: 16, kind: input, shape index: {}]
  %s17 = inlined_call_operand.vmem [shape: f32[1,64], index: 17, kind: input, shape index: {}]
  %s18 = inlined_call_operand.vmem [shape: bf16[64,32], index: 18, kind: input, shape index: {}]
  %s19 = inlined_call_operand.vmem [shape: f32[1,32], index: 19, kind: input, shape index: {}]
  %s20 = inlined_call_operand.vmem [shape: bf16[32,128], index: 20, kind: input, shape index: {}]
  %s21 = inlined_call_operand.vmem [shape: f32[1,128], index: 21, kind: input, shape index: {}]
  %s22 = inlined_call_operand.hbm [shape: f32[2,1,128], index: 22, kind: output, shape index: {}]
  %s23 = sld [smem:[#allocation0]]
  $region161: #{tpu_custom_call.1} parent=0
    _
  %s25 = ssub.s32 1, %s23
  %s26 = scalar_select 0, %s25, %s23
  $region1: #{tpu_custom_call.1} parent=0
    #allocation2 [shape = 'u8[4096]{0}', space=vmem, size = 0x1000, scoped, tag = 'input window, operand 3, single buffered']
    #allocation3 [shape = 's32[2]{0}', space=sflag, size = 0x8, scoped, tag = 'scoped memory for tpu_custom_call.1']
    #allocation4 [shape = 's32[2]{0}', space=sflag, size = 0x8, scoped, tag = 'scoped memory for tpu_custom_call.1']
    #allocation5 [shape = 'u8[512]{0}', space=vmem, size = 0x400, scoped, tag = 'input window, operand 5, single buffered']
    #allocation6 [shape = 's32[1]{0}', space=sflag, size = 0x4, scoped, tag = 'scoped memory for tpu_custom_call.1']
    #allocation7 [shape = 'u8[8192]{0}', space=vmem, size = 0x2000, scoped, tag = 'input window, operand 6, single buffered']
    #allocation8 [shape = 'u8[512]{0}', space=vmem, size = 0x400, scoped, tag = 'input window, operand 7, single buffered']
    #allocation9 [shape = 's32[1]{0}', space=sflag, size = 0x4, scoped, tag = 'scoped memory for tpu_custom_call.1']
    #allocation10 [shape = 'u8[8192]{0}', space=vmem, size = 0x2000, scoped, tag = 'input window, operand 8, single buffered']
    #allocation11 [shape = 'u8[512]{0}', space=vmem, size = 0x400, scoped, tag = 'input window, operand 9, single buffered']
    #allocation12 [shape = 's32[1]{0}', space=sflag, size = 0x4, scoped, tag = 'scoped memory for tpu_custom_call.1']
    #allocation13 [shape = 'u8[512]{0}', space=vmem, size = 0x400, scoped, tag = 'input window, operand 10, single buffered']
    #allocation14 [shape = 'u8[512]{0}', space=vmem, size = 0x400, scoped, tag = 'input window, operand 11, single buffered']
    #allocation15 [shape = 's32[1]{0}', space=sflag, size = 0x4, scoped, tag = 'scoped memory for tpu_custom_call.1']
    #allocation16 [shape = 'u8[512]{0}', space=vmem, size = 0x400, scoped, tag = 'input window, operand 12, single buffered']
    #allocation17 [shape = 'u8[512]{0}', space=vmem, size = 0x400, scoped, tag = 'input window, operand 13, single buffered']
    #allocation18 [shape = 's32[1]{0}', space=sflag, size = 0x4, scoped, tag = 'scoped memory for tpu_custom_call.1']
    #allocation19 [shape = 'u8[1024]{0}', space=vmem, size = 0x400, scoped, tag = 'output window, operand 0']
    %27 = vsyncpa [#allocation3], 0
    %28 = vsyncpa [#allocation6], 0
    %29 = vsyncpa [#allocation9], 0
    %30 = vsyncpa [#allocation12], 0
    %31 = vsyncpa [#allocation15], 0
    %32 = vsyncpa [#allocation18], 0
    %33 = vsyncpa [#allocation4], 0
    %s34 = scalar_lea.sflag [#allocation4], 1
    %35 = vsyncpa %s34, 0
    loop: start=0, step=1, limit=4
    $region2: #{tpu_custom_call.1} parent=1 // loop_pre_header
      _
    $region3: #{tpu_custom_call.1} parent=1 // loop_header
      %s37 = sphi 0, %s41
      %p38 = scmp.ge.s32.totalorder %s37, 4
      %s47 = sphi 0, %s49
      %s50 = sphi 0, %s47
      %s51 = sphi 0, %s50
      %s67 = sphi 0, %s51
      %s71 = sphi 0, %s71
      %s73 = sphi 0, %s71
      %s74 = sphi 0, %s73
      %s88 = sphi 0, %s74
      %s92 = sphi 0, %s92
      %s94 = sphi 0, %s92
      %s95 = sphi 0, %s94
      %s109 = sphi 0, %s95
      %s113 = sphi 0, %s113
      %s115 = sphi 0, %s113
      %s116 = sphi 0, %s115
      %s130 = sphi 0, %s116
      %s134 = sphi 0, %s134
      %s136 = sphi 0, %s134
      %s137 = sphi 0, %s136
      %s151 = sphi 0, %s137
      %s155 = sphi 0, %s155
      %s157 = sphi 0, %s155
      %s158 = sphi 0, %s157
      %s172 = sphi 0, %s158
      %s176 = sphi 0, %s176
      %s178 = sphi 0, %s176
      %s179 = sphi 0, %s178
      %s193 = sphi 0, %s179
      %s197 = sphi 0, %s197
      %s199 = sphi 0, %s197
      %s200 = sphi 0, %s199
      %s214 = sphi 0, %s200
      %s218 = sphi 0, %s218
      %s220 = sphi 0, %s218
      %s221 = sphi 0, %s220
      %s235 = sphi 0, %s221
      %s239 = sphi 0, %s239
      %s241 = sphi 0, %s239
      %s242 = sphi 0, %s241
      %s256 = sphi 0, %s242
      %s260 = sphi 0, %s260
      %s262 = sphi 0, %s260
      %s263 = sphi 0, %s262
      %s277 = sphi 0, %s263
      %s281 = sphi 0, %s281
      %s283 = sphi 0, %s281
      %s284 = sphi 0, %s283
      %s298 = sphi 0, %s284
      %s302 = sphi 0, %s302
      %s304 = sphi 0, %s302
      %s305 = sphi 0, %s304
      %s319 = sphi 0, %s305
      %s323 = sphi 0, %s323
      %s325 = sphi 0, %s323
      %s326 = sphi 0, %s325
      %s340 = sphi 0, %s326
      %s344 = sphi 0, %s344
      %s346 = sphi 0, %s344
      %s347 = sphi 0, %s346
      %s361 = sphi 0, %s347
      %s365 = sphi 0, %s365
      %s367 = sphi 0, %s365
      %s368 = sphi 0, %s367
      %s382 = sphi 0, %s368
      %s386 = sphi 0, %s386
      %s388 = sphi 0, %s386
      %s389 = sphi 0, %s388
      %s403 = sphi 0, %s389
      %s407 = sphi 0, %s407
      %s409 = sphi 0, %s407
      %s410 = sphi 0, %s409
      %s424 = sphi 0, %s410
      %s428 = sphi 0, %s428
      %s430 = sphi 0, %s428
      %s431 = sphi 0, %s430
      %s445 = sphi 0, %s431
      %s449 = sphi 0, %s449
      %s451 = sphi 0, %s449
      %s452 = sphi 0, %s451
      %s466 = sphi 0, %s452
      %s470 = sphi 0, %s470
      %s472 = sphi 0, %s470
      %s473 = sphi 0, %s472
      %s487 = sphi 0, %s473
      %s491 = sphi 0, %s491
      %s493 = sphi 0, %s491
      %s494 = sphi 0, %s493
      %s508 = sphi 0, %s494
      %s514 = sphi 0, %s516
      %s517 = sphi 0, %s514
      %s518 = sphi 0, %s517
      %s534 = sphi 0, %s518
    $region4: #{tpu_custom_call.1} parent=1 // loop_header_branch
      %40 = sbr.rel (%p38) target = $region8
    $region5: #{tpu_custom_call.1} parent=1 // loop_body
      %s42 = ssub.s32 %s37, 1
      %s43 = ssub.s32 %s37, 2
      %s44 = sadd.s32 %s37, 1
      %s45 = ssub.s32 %s37, %s44
      %p46 = scmp.eq.s32.totalorder %s45, 0
      %s48 = sadd.s32 %s47, 1
      %s49 = scalar_select %p46, %s47, %s48
      %p52 = pneg %p46
      %p53 = scmp.eq.s32.totalorder %s37, 1
      %p54 = por %p52, %p53
      %p55 = scmp.ne.s32.totalorder %s47, %s50
      %p56 = scmp.eq.s32.totalorder %s37, 0
      %p57 = por %p55, %p56
      %p58 = scmp.ne.s32.totalorder %s47, %s50
      %p59 = scmp.eq.s32.totalorder %s42, 1
      %p60 = por %p58, %p59
      %p61 = scmp.ne.s32.totalorder %s50, %s51
      %p62 = scmp.eq.s32.totalorder %s42, 0
      %p63 = por %p61, %p62
      %p64 = scmp.ne.s32.totalorder %s50, %s51
      %p65 = scmp.eq.s32.totalorder %s43, 1
      %p66 = por %p64, %p65
      %p68 = scmp.ne.s32.totalorder %s51, %s67
      %p69 = scmp.eq.s32.totalorder %s43, 0
      %p70 = por %p68, %p69
      %s72 = sadd.s32 %s71, 1
      %p75 = scmp.eq.s32.totalorder %s37, 1
      %p76 = scmp.ne.s32.totalorder %s71, %s73
      %p77 = scmp.eq.s32.totalorder %s37, 0
      %p78 = por %p76, %p77
      %p79 = scmp.ne.s32.totalorder %s71, %s73
      %p80 = scmp.eq.s32.totalorder %s42, 1
      %p81 = por %p79, %p80
      %p82 = scmp.ne.s32.totalorder %s73, %s74
      %p83 = scmp.eq.s32.totalorder %s42, 0
      %p84 = por %p82, %p83
      %p85 = scmp.ne.s32.totalorder %s73, %s74
      %p86 = scmp.eq.s32.totalorder %s43, 1
      %p87 = por %p85, %p86
      %p89 = scmp.ne.s32.totalorder %s74, %s88
      %p90 = scmp.eq.s32.totalorder %s43, 0
      %p91 = por %p89, %p90
      %s93 = sadd.s32 %s92, 1
      %p96 = scmp.eq.s32.totalorder %s37, 1
      %p97 = scmp.ne.s32.totalorder %s92, %s94
      %p98 = scmp.eq.s32.totalorder %s37, 0
      %p99 = por %p97, %p98
      %p100 = scmp.ne.s32.totalorder %s92, %s94
      %p101 = scmp.eq.s32.totalorder %s42, 1
      %p102 = por %p100, %p101
      %p103 = scmp.ne.s32.totalorder %s94, %s95
      %p104 = scmp.eq.s32.totalorder %s42, 0
      %p105 = por %p103, %p104
      %p106 = scmp.ne.s32.totalorder %s94, %s95
      %p107 = scmp.eq.s32.totalorder %s43, 1
      %p108 = por %p106, %p107
      %p110 = scmp.ne.s32.totalorder %s95, %s109
      %p111 = scmp.eq.s32.totalorder %s43, 0
      %p112 = por %p110, %p111
      %s114 = sadd.s32 %s113, 1
      %p117 = scmp.eq.s32.totalorder %s37, 1
      %p118 = scmp.ne.s32.totalorder %s113, %s115
      %p119 = scmp.eq.s32.totalorder %s37, 0
      %p120 = por %p118, %p119
      %p121 = scmp.ne.s32.totalorder %s113, %s115
      %p122 = scmp.eq.s32.totalorder %s42, 1
      %p123 = por %p121, %p122
      %p124 = scmp.ne.s32.totalorder %s115, %s116
      %p125 = scmp.eq.s32.totalorder %s42, 0
      %p126 = por %p124, %p125
      %p127 = scmp.ne.s32.totalorder %s115, %s116
      %p128 = scmp.eq.s32.totalorder %s43, 1
      %p129 = por %p127, %p128
      %p131 = scmp.ne.s32.totalorder %s116, %s130
      %p132 = scmp.eq.s32.totalorder %s43, 0
      %p133 = por %p131, %p132
      %s135 = sadd.s32 %s134, 1
      %p138 = scmp.eq.s32.totalorder %s37, 1
      %p139 = scmp.ne.s32.totalorder %s134, %s136
      %p140 = scmp.eq.s32.totalorder %s37, 0
      %p141 = por %p139, %p140
      %p142 = scmp.ne.s32.totalorder %s134, %s136
      %p143 = scmp.eq.s32.totalorder %s42, 1
      %p144 = por %p142, %p143
      %p145 = scmp.ne.s32.totalorder %s136, %s137
      %p146 = scmp.eq.s32.totalorder %s42, 0
      %p147 = por %p145, %p146
      %p148 = scmp.ne.s32.totalorder %s136, %s137
      %p149 = scmp.eq.s32.totalorder %s43, 1
      %p150 = por %p148, %p149
      %p152 = scmp.ne.s32.totalorder %s137, %s151
      %p153 = scmp.eq.s32.totalorder %s43, 0
      %p154 = por %p152, %p153
      %s156 = sadd.s32 %s155, 1
      %p159 = scmp.eq.s32.totalorder %s37, 1
      %p160 = scmp.ne.s32.totalorder %s155, %s157
      %p161 = scmp.eq.s32.totalorder %s37, 0
      %p162 = por %p160, %p161
      %p163 = scmp.ne.s32.totalorder %s155, %s157
      %p164 = scmp.eq.s32.totalorder %s42, 1
      %p165 = por %p163, %p164
      %p166 = scmp.ne.s32.totalorder %s157, %s158
      %p167 = scmp.eq.s32.totalorder %s42, 0
      %p168 = por %p166, %p167
      %p169 = scmp.ne.s32.totalorder %s157, %s158
      %p170 = scmp.eq.s32.totalorder %s43, 1
      %p171 = por %p169, %p170
      %p173 = scmp.ne.s32.totalorder %s158, %s172
      %p174 = scmp.eq.s32.totalorder %s43, 0
      %p175 = por %p173, %p174
      %s177 = sadd.s32 %s176, 1
      %p180 = scmp.eq.s32.totalorder %s37, 1
      %p181 = scmp.ne.s32.totalorder %s176, %s178
      %p182 = scmp.eq.s32.totalorder %s37, 0
      %p183 = por %p181, %p182
      %p184 = scmp.ne.s32.totalorder %s176, %s178
      %p185 = scmp.eq.s32.totalorder %s42, 1
      %p186 = por %p184, %p185
      %p187 = scmp.ne.s32.totalorder %s178, %s179
      %p188 = scmp.eq.s32.totalorder %s42, 0
      %p189 = por %p187, %p188
      %p190 = scmp.ne.s32.totalorder %s178, %s179
      %p191 = scmp.eq.s32.totalorder %s43, 1
      %p192 = por %p190, %p191
      %p194 = scmp.ne.s32.totalorder %s179, %s193
      %p195 = scmp.eq.s32.totalorder %s43, 0
      %p196 = por %p194, %p195
      %s198 = sadd.s32 %s197, 1
      %p201 = scmp.eq.s32.totalorder %s37, 1
      %p202 = scmp.ne.s32.totalorder %s197, %s199
      %p203 = scmp.eq.s32.totalorder %s37, 0
      %p204 = por %p202, %p203
      %p205 = scmp.ne.s32.totalorder %s197, %s199
      %p206 = scmp.eq.s32.totalorder %s42, 1
      %p207 = por %p205, %p206
      %p208 = scmp.ne.s32.totalorder %s199, %s200
      %p209 = scmp.eq.s32.totalorder %s42, 0
      %p210 = por %p208, %p209
      %p211 = scmp.ne.s32.totalorder %s199, %s200
      %p212 = scmp.eq.s32.totalorder %s43, 1
      %p213 = por %p211, %p212
      %p215 = scmp.ne.s32.totalorder %s200, %s214
      %p216 = scmp.eq.s32.totalorder %s43, 0
      %p217 = por %p215, %p216
      %s219 = sadd.s32 %s218, 1
      %p222 = scmp.eq.s32.totalorder %s37, 1
      %p223 = scmp.ne.s32.totalorder %s218, %s220
      %p224 = scmp.eq.s32.totalorder %s37, 0
      %p225 = por %p223, %p224
      %p226 = scmp.ne.s32.totalorder %s218, %s220
      %p227 = scmp.eq.s32.totalorder %s42, 1
      %p228 = por %p226, %p227
      %p229 = scmp.ne.s32.totalorder %s220, %s221
      %p230 = scmp.eq.s32.totalorder %s42, 0
      %p231 = por %p229, %p230
      %p232 = scmp.ne.s32.totalorder %s220, %s221
      %p233 = scmp.eq.s32.totalorder %s43, 1
      %p234 = por %p232, %p233
      %p236 = scmp.ne.s32.totalorder %s221, %s235
      %p237 = scmp.eq.s32.totalorder %s43, 0
      %p238 = por %p236, %p237
      %s240 = sadd.s32 %s239, 1
      %p243 = scmp.eq.s32.totalorder %s37, 1
      %p244 = scmp.ne.s32.totalorder %s239, %s241
      %p245 = scmp.eq.s32.totalorder %s37, 0
      %p246 = por %p244, %p245
      %p247 = scmp.ne.s32.totalorder %s239, %s241
      %p248 = scmp.eq.s32.totalorder %s42, 1
      %p249 = por %p247, %p248
      %p250 = scmp.ne.s32.totalorder %s241, %s242
      %p251 = scmp.eq.s32.totalorder %s42, 0
      %p252 = por %p250, %p251
      %p253 = scmp.ne.s32.totalorder %s241, %s242
      %p254 = scmp.eq.s32.totalorder %s43, 1
      %p255 = por %p253, %p254
      %p257 = scmp.ne.s32.totalorder %s242, %s256
      %p258 = scmp.eq.s32.totalorder %s43, 0
      %p259 = por %p257, %p258
      %s261 = sadd.s32 %s260, 1
      %p264 = scmp.eq.s32.totalorder %s37, 1
      %p265 = scmp.ne.s32.totalorder %s260, %s262
      %p266 = scmp.eq.s32.totalorder %s37, 0
      %p267 = por %p265, %p266
      %p268 = scmp.ne.s32.totalorder %s260, %s262
      %p269 = scmp.eq.s32.totalorder %s42, 1
      %p270 = por %p268, %p269
      %p271 = scmp.ne.s32.totalorder %s262, %s263
      %p272 = scmp.eq.s32.totalorder %s42, 0
      %p273 = por %p271, %p272
      %p274 = scmp.ne.s32.totalorder %s262, %s263
      %p275 = scmp.eq.s32.totalorder %s43, 1
      %p276 = por %p274, %p275
      %p278 = scmp.ne.s32.totalorder %s263, %s277
      %p279 = scmp.eq.s32.totalorder %s43, 0
      %p280 = por %p278, %p279
      %s282 = sadd.s32 %s281, 1
      %p285 = scmp.eq.s32.totalorder %s37, 1
      %p286 = scmp.ne.s32.totalorder %s281, %s283
      %p287 = scmp.eq.s32.totalorder %s37, 0
      %p288 = por %p286, %p287
      %p289 = scmp.ne.s32.totalorder %s281, %s283
      %p290 = scmp.eq.s32.totalorder %s42, 1
      %p291 = por %p289, %p290
      %p292 = scmp.ne.s32.totalorder %s283, %s284
      %p293 = scmp.eq.s32.totalorder %s42, 0
      %p294 = por %p292, %p293
      %p295 = scmp.ne.s32.totalorder %s283, %s284
      %p296 = scmp.eq.s32.totalorder %s43, 1
      %p297 = por %p295, %p296
      %p299 = scmp.ne.s32.totalorder %s284, %s298
      %p300 = scmp.eq.s32.totalorder %s43, 0
      %p301 = por %p299, %p300
      %s303 = sadd.s32 %s302, 1
      %p306 = scmp.eq.s32.totalorder %s37, 1
      %p307 = scmp.ne.s32.totalorder %s302, %s304
      %p308 = scmp.eq.s32.totalorder %s37, 0
      %p309 = por %p307, %p308
      %p310 = scmp.ne.s32.totalorder %s302, %s304
      %p311 = scmp.eq.s32.totalorder %s42, 1
      %p312 = por %p310, %p311
      %p313 = scmp.ne.s32.totalorder %s304, %s305
      %p314 = scmp.eq.s32.totalorder %s42, 0
      %p315 = por %p313, %p314
      %p316 = scmp.ne.s32.totalorder %s304, %s305
      %p317 = scmp.eq.s32.totalorder %s43, 1
      %p318 = por %p316, %p317
      %p320 = scmp.ne.s32.totalorder %s305, %s319
      %p321 = scmp.eq.s32.totalorder %s43, 0
      %p322 = por %p320, %p321
      %s324 = sadd.s32 %s323, 1
      %p327 = scmp.eq.s32.totalorder %s37, 1
      %p328 = scmp.ne.s32.totalorder %s323, %s325
      %p329 = scmp.eq.s32.totalorder %s37, 0
      %p330 = por %p328, %p329
      %p331 = scmp.ne.s32.totalorder %s323, %s325
      %p332 = scmp.eq.s32.totalorder %s42, 1
      %p333 = por %p331, %p332
      %p334 = scmp.ne.s32.totalorder %s325, %s326
      %p335 = scmp.eq.s32.totalorder %s42, 0
      %p336 = por %p334, %p335
      %p337 = scmp.ne.s32.totalorder %s325, %s326
      %p338 = scmp.eq.s32.totalorder %s43, 1
      %p339 = por %p337, %p338
      %p341 = scmp.ne.s32.totalorder %s326, %s340
      %p342 = scmp.eq.s32.totalorder %s43, 0
      %p343 = por %p341, %p342
      %s345 = sadd.s32 %s344, 1
      %p348 = scmp.eq.s32.totalorder %s37, 1
      %p349 = scmp.ne.s32.totalorder %s344, %s346
      %p350 = scmp.eq.s32.totalorder %s37, 0
      %p351 = por %p349, %p350
      %p352 = scmp.ne.s32.totalorder %s344, %s346
      %p353 = scmp.eq.s32.totalorder %s42, 1
      %p354 = por %p352, %p353
      %p355 = scmp.ne.s32.totalorder %s346, %s347
      %p356 = scmp.eq.s32.totalorder %s42, 0
      %p357 = por %p355, %p356
      %p358 = scmp.ne.s32.totalorder %s346, %s347
      %p359 = scmp.eq.s32.totalorder %s43, 1
      %p360 = por %p358, %p359
      %p362 = scmp.ne.s32.totalorder %s347, %s361
      %p363 = scmp.eq.s32.totalorder %s43, 0
      %p364 = por %p362, %p363
      %s366 = sadd.s32 %s365, 1
      %p369 = scmp.eq.s32.totalorder %s37, 1
      %p370 = scmp.ne.s32.totalorder %s365, %s367
      %p371 = scmp.eq.s32.totalorder %s37, 0
      %p372 = por %p370, %p371
      %p373 = scmp.ne.s32.totalorder %s365, %s367
      %p374 = scmp.eq.s32.totalorder %s42, 1
      %p375 = por %p373, %p374
      %p376 = scmp.ne.s32.totalorder %s367, %s368
      %p377 = scmp.eq.s32.totalorder %s42, 0
      %p378 = por %p376, %p377
      %p379 = scmp.ne.s32.totalorder %s367, %s368
      %p380 = scmp.eq.s32.totalorder %s43, 1
      %p381 = por %p379, %p380
      %p383 = scmp.ne.s32.totalorder %s368, %s382
      %p384 = scmp.eq.s32.totalorder %s43, 0
      %p385 = por %p383, %p384
      %s387 = sadd.s32 %s386, 1
      %p390 = scmp.eq.s32.totalorder %s37, 1
      %p391 = scmp.ne.s32.totalorder %s386, %s388
      %p392 = scmp.eq.s32.totalorder %s37, 0
      %p393 = por %p391, %p392
      %p394 = scmp.ne.s32.totalorder %s386, %s388
      %p395 = scmp.eq.s32.totalorder %s42, 1
      %p396 = por %p394, %p395
      %p397 = scmp.ne.s32.totalorder %s388, %s389
      %p398 = scmp.eq.s32.totalorder %s42, 0
      %p399 = por %p397, %p398
      %p400 = scmp.ne.s32.totalorder %s388, %s389
      %p401 = scmp.eq.s32.totalorder %s43, 1
      %p402 = por %p400, %p401
      %p404 = scmp.ne.s32.totalorder %s389, %s403
      %p405 = scmp.eq.s32.totalorder %s43, 0
      %p406 = por %p404, %p405
      %s408 = sadd.s32 %s407, 1
      %p411 = scmp.eq.s32.totalorder %s37, 1
      %p412 = scmp.ne.s32.totalorder %s407, %s409
      %p413 = scmp.eq.s32.totalorder %s37, 0
      %p414 = por %p412, %p413
      %p415 = scmp.ne.s32.totalorder %s407, %s409
      %p416 = scmp.eq.s32.totalorder %s42, 1
      %p417 = por %p415, %p416
      %p418 = scmp.ne.s32.totalorder %s409, %s410
      %p419 = scmp.eq.s32.totalorder %s42, 0
      %p420 = por %p418, %p419
      %p421 = scmp.ne.s32.totalorder %s409, %s410
      %p422 = scmp.eq.s32.totalorder %s43, 1
      %p423 = por %p421, %p422
      %p425 = scmp.ne.s32.totalorder %s410, %s424
      %p426 = scmp.eq.s32.totalorder %s43, 0
      %p427 = por %p425, %p426
      %s429 = sadd.s32 %s428, 1
      %p432 = scmp.eq.s32.totalorder %s37, 1
      %p433 = scmp.ne.s32.totalorder %s428, %s430
      %p434 = scmp.eq.s32.totalorder %s37, 0
      %p435 = por %p433, %p434
      %p436 = scmp.ne.s32.totalorder %s428, %s430
      %p437 = scmp.eq.s32.totalorder %s42, 1
      %p438 = por %p436, %p437
      %p439 = scmp.ne.s32.totalorder %s430, %s431
      %p440 = scmp.eq.s32.totalorder %s42, 0
      %p441 = por %p439, %p440
      %p442 = scmp.ne.s32.totalorder %s430, %s431
      %p443 = scmp.eq.s32.totalorder %s43, 1
      %p444 = por %p442, %p443
      %p446 = scmp.ne.s32.totalorder %s431, %s445
      %p447 = scmp.eq.s32.totalorder %s43, 0
      %p448 = por %p446, %p447
      %s450 = sadd.s32 %s449, 1
      %p453 = scmp.eq.s32.totalorder %s37, 1
      %p454 = scmp.ne.s32.totalorder %s449, %s451
      %p455 = scmp.eq.s32.totalorder %s37, 0
      %p456 = por %p454, %p455
      %p457 = scmp.ne.s32.totalorder %s449, %s451
      %p458 = scmp.eq.s32.totalorder %s42, 1
      %p459 = por %p457, %p458
      %p460 = scmp.ne.s32.totalorder %s451, %s452
      %p461 = scmp.eq.s32.totalorder %s42, 0
      %p462 = por %p460, %p461
      %p463 = scmp.ne.s32.totalorder %s451, %s452
      %p464 = scmp.eq.s32.totalorder %s43, 1
      %p465 = por %p463, %p464
      %p467 = scmp.ne.s32.totalorder %s452, %s466
      %p468 = scmp.eq.s32.totalorder %s43, 0
      %p469 = por %p467, %p468
      %s471 = sadd.s32 %s470, 1
      %p474 = scmp.eq.s32.totalorder %s37, 1
      %p475 = scmp.ne.s32.totalorder %s470, %s472
      %p476 = scmp.eq.s32.totalorder %s37, 0
      %p477 = por %p475, %p476
      %p478 = scmp.ne.s32.totalorder %s470, %s472
      %p479 = scmp.eq.s32.totalorder %s42, 1
      %p480 = por %p478, %p479
      %p481 = scmp.ne.s32.totalorder %s472, %s473
      %p482 = scmp.eq.s32.totalorder %s42, 0
      %p483 = por %p481, %p482
      %p484 = scmp.ne.s32.totalorder %s472, %s473
      %p485 = scmp.eq.s32.totalorder %s43, 1
      %p486 = por %p484, %p485
      %p488 = scmp.ne.s32.totalorder %s473, %s487
      %p489 = scmp.eq.s32.totalorder %s43, 0
      %p490 = por %p488, %p489
      %s492 = sadd.s32 %s491, 1
      %p495 = scmp.eq.s32.totalorder %s37, 1
      %p496 = scmp.ne.s32.totalorder %s491, %s493
      %p497 = scmp.eq.s32.totalorder %s37, 0
      %p498 = por %p496, %p497
      %p499 = scmp.ne.s32.totalorder %s491, %s493
      %p500 = scmp.eq.s32.totalorder %s42, 1
      %p501 = por %p499, %p500
      %p502 = scmp.ne.s32.totalorder %s493, %s494
      %p503 = scmp.eq.s32.totalorder %s42, 0
      %p504 = por %p502, %p503
      %p505 = scmp.ne.s32.totalorder %s493, %s494
      %p506 = scmp.eq.s32.totalorder %s43, 1
      %p507 = por %p505, %p506
      %p509 = scmp.ne.s32.totalorder %s494, %s508
      %p510 = scmp.eq.s32.totalorder %s43, 0
      %p511 = por %p509, %p510
      %s512 = ssub.s32 %s37, %s44
      %p513 = scmp.eq.s32.totalorder %s512, 0
      %s515 = sadd.s32 %s514, 1
      %s516 = scalar_select %p513, %s514, %s515
      %p519 = pneg %p513
      %p520 = scmp.eq.s32.totalorder %s37, 1
      %p521 = por %p519, %p520
      %p522 = scmp.ne.s32.totalorder %s514, %s517
      %p523 = scmp.eq.s32.totalorder %s37, 0
      %p524 = por %p522, %p523
      %p525 = scmp.ne.s32.totalorder %s514, %s517
      %p526 = scmp.eq.s32.totalorder %s42, 1
      %p527 = por %p525, %p526
      %p528 = scmp.ne.s32.totalorder %s517, %s518
      %p529 = scmp.eq.s32.totalorder %s42, 0
      %p530 = por %p528, %p529
      %p531 = scmp.ne.s32.totalorder %s517, %s518
      %p532 = scmp.eq.s32.totalorder %s43, 1
      %p533 = por %p531, %p532
      %p535 = scmp.ne.s32.totalorder %s518, %s534
      %p536 = scmp.eq.s32.totalorder %s43, 0
      %p537 = por %p535, %p536
      %p538 = scmp.le.s32.totalorder 1, %s37
      %p539 = scmp.lt.s32.totalorder %s37, 3
      %p540 = pnand %p538, %p539
      %p541 = pneg %p540
      // Predicated region
      $region9: #{tpu_custom_call.1} parent=5 // pred_check
        _
      $region10: #{tpu_custom_call.1} parent=5 // pred_check_branch
        %543 = sbr.rel (%p540) target = $region12
      $region11: #{tpu_custom_call.1} parent=5 // pred_region
        %s544 = ssub.s32 %s37, 1
        // Predicated region
        $region13: #{tpu_custom_call.1} parent=11 // pred_check
          %p545 = pneg %p84
        $region14: #{tpu_custom_call.1} parent=11 // pred_check_branch
          %547 = sbr.rel (%p545) target = $region16
        $region15: #{tpu_custom_call.1} parent=11 // pred_region
          _
        $region16: #{tpu_custom_call.1} parent=11 // pred_fallthru
          _
        // Predicated region
        $region17: #{tpu_custom_call.1} parent=11 // pred_check
          %p548 = pneg %p105
        $region18: #{tpu_custom_call.1} parent=11 // pred_check_branch
          %550 = sbr.rel (%p548) target = $region20
        $region19: #{tpu_custom_call.1} parent=11 // pred_region
          _
        $region20: #{tpu_custom_call.1} parent=11 // pred_fallthru
          _
        // Predicated region
        $region21: #{tpu_custom_call.1} parent=11 // pred_check
          %p551 = pneg %p126
        $region22: #{tpu_custom_call.1} parent=11 // pred_check_branch
          %553 = sbr.rel (%p551) target = $region24
        $region23: #{tpu_custom_call.1} parent=11 // pred_region
          %s555 = ssub.s32 128, 128
          %556 = vsyncadd [#allocation3], %s555
          %s558 = sshll.u32 [#allocation2], 4
          %s559 = int_to_ptr.vmem [resolvable:$true] %s558
          %561 = dma.hbm_to_vmem [thread:$0]  %s3, 128, %s559, [#allocation3]
        $region24: #{tpu_custom_call.1} parent=11 // pred_fallthru
          _
        // Predicated region
        $region25: #{tpu_custom_call.1} parent=11 // pred_check
          %p562 = pneg %p147
        $region26: #{tpu_custom_call.1} parent=11 // pred_check_branch
          %564 = sbr.rel (%p562) target = $region28
        $region27: #{tpu_custom_call.1} parent=11 // pred_region
          _
        $region28: #{tpu_custom_call.1} parent=11 // pred_fallthru
          _
        // Predicated region
        $region29: #{tpu_custom_call.1} parent=11 // pred_check
          %p565 = pneg %p168
        $region30: #{tpu_custom_call.1} parent=11 // pred_check_branch
          %567 = sbr.rel (%p565) target = $region32
        $region31: #{tpu_custom_call.1} parent=11 // pred_region
          %s569 = ssub.s32 16, 16
          %570 = vsyncadd [#allocation6], %s569
          %s572 = sshll.u32 [#allocation5], 4
          %s573 = int_to_ptr.vmem [resolvable:$true] %s572
          %575 = dma.hbm_to_vmem [thread:$0]  %s5, 16, %s573, [#allocation6]
        $region32: #{tpu_custom_call.1} parent=11 // pred_fallthru
          _
        // Predicated region
        $region33: #{tpu_custom_call.1} parent=11 // pred_check
          %p576 = pneg %p189
        $region34: #{tpu_custom_call.1} parent=11 // pred_check_branch
          %578 = sbr.rel (%p576) target = $region36
        $region35: #{tpu_custom_call.1} parent=11 // pred_region
          %s580 = ssub.s32 256, 256
          %581 = vsyncadd [#allocation6], %s580
          %s582 = sshll.u32 [#allocation7], 4
          %s583 = int_to_ptr.vmem [resolvable:$true] %s582
          %588 = dma.hbm_to_vmem [thread:$0]  %s6, 256, %s583, [#allocation6], 64, 64, 4
        $region36: #{tpu_custom_call.1} parent=11 // pred_fallthru
          _
        // Predicated region
        $region37: #{tpu_custom_call.1} parent=11 // pred_check
          %p589 = pneg %p210
        $region38: #{tpu_custom_call.1} parent=11 // pred_check_branch
          %591 = sbr.rel (%p589) target = $region40
        $region39: #{tpu_custom_call.1} parent=11 // pred_region
          %s593 = ssub.s32 16, 16
          %594 = vsyncadd [#allocation9], %s593
          %s596 = sshll.u32 [#allocation8], 4
          %s597 = int_to_ptr.vmem [resolvable:$true] %s596
          %599 = dma.hbm_to_vmem [thread:$0]  %s7, 16, %s597, [#allocation9]
        $region40: #{tpu_custom_call.1} parent=11 // pred_fallthru
          _
        // Predicated region
        $region41: #{tpu_custom_call.1} parent=11 // pred_check
          %p600 = pneg %p231
        $region42: #{tpu_custom_call.1} parent=11 // pred_check_branch
          %602 = sbr.rel (%p600) target = $region44
        $region43: #{tpu_custom_call.1} parent=11 // pred_region
          %s604 = ssub.s32 256, 256
          %605 = vsyncadd [#allocation9], %s604
          %s606 = sshll.u32 [#allocation10], 4
          %s607 = int_to_ptr.vmem [resolvable:$true] %s606
          %612 = dma.hbm_to_vmem [thread:$0]  %s8, 256, %s607, [#allocation9], 64, 64, 4
        $region44: #{tpu_custom_call.1} parent=11 // pred_fallthru
          _
        // Predicated region
        $region45: #{tpu_custom_call.1} parent=11 // pred_check
          %p613 = pneg %p252
        $region46: #{tpu_custom_call.1} parent=11 // pred_check_branch
          %615 = sbr.rel (%p613) target = $region48
        $region47: #{tpu_custom_call.1} parent=11 // pred_region
          %s617 = ssub.s32 16, 16
          %618 = vsyncadd [#allocation12], %s617
          %s620 = sshll.u32 [#allocation11], 4
          %s621 = int_to_ptr.vmem [resolvable:$true] %s620
          %623 = dma.hbm_to_vmem [thread:$0]  %s9, 16, %s621, [#allocation12]
        $region48: #{tpu_custom_call.1} parent=11 // pred_fallthru
          _
        // Predicated region
        $region49: #{tpu_custom_call.1} parent=11 // pred_check
          %p624 = pneg %p273
        $region50: #{tpu_custom_call.1} parent=11 // pred_check_branch
          %626 = sbr.rel (%p624) target = $region52
        $region51: #{tpu_custom_call.1} parent=11 // pred_region
          %s628 = ssub.s32 16, 16
          %629 = vsyncadd [#allocation12], %s628
          %s631 = sshll.u32 [#allocation13], 4
          %s632 = int_to_ptr.vmem [resolvable:$true] %s631
          %634 = dma.hbm_to_vmem [thread:$0]  %s10, 16, %s632, [#allocation12]
        $region52: #{tpu_custom_call.1} parent=11 // pred_fallthru
          _
        // Predicated region
        $region53: #{tpu_custom_call.1} parent=11 // pred_check
          %p635 = pneg %p294
        $region54: #{tpu_custom_call.1} parent=11 // pred_check_branch
          %637 = sbr.rel (%p635) target = $region56
        $region55: #{tpu_custom_call.1} parent=11 // pred_region
          %s639 = ssub.s32 16, 16
          %640 = vsyncadd [#allocation15], %s639
          %s642 = sshll.u32 [#allocation14], 4
          %s643 = int_to_ptr.vmem [resolvable:$true] %s642
          %645 = dma.hbm_to_vmem [thread:$0]  %s11, 16, %s643, [#allocation15]
        $region56: #{tpu_custom_call.1} parent=11 // pred_fallthru
          _
        // Predicated region
        $region57: #{tpu_custom_call.1} parent=11 // pred_check
          %p646 = pneg %p315
        $region58: #{tpu_custom_call.1} parent=11 // pred_check_branch
          %648 = sbr.rel (%p646) target = $region60
        $region59: #{tpu_custom_call.1} parent=11 // pred_region
          %s650 = ssub.s32 16, 16
          %651 = vsyncadd [#allocation15], %s650
          %s653 = sshll.u32 [#allocation16], 4
          %s654 = int_to_ptr.vmem [resolvable:$true] %s653
          %656 = dma.hbm_to_vmem [thread:$0]  %s12, 16, %s654, [#allocation15]
        $region60: #{tpu_custom_call.1} parent=11 // pred_fallthru
          _
        // Predicated region
        $region61: #{tpu_custom_call.1} parent=11 // pred_check
          %p657 = pneg %p336
        $region62: #{tpu_custom_call.1} parent=11 // pred_check_branch
          %659 = sbr.rel (%p657) target = $region64
        $region63: #{tpu_custom_call.1} parent=11 // pred_region
          %s661 = ssub.s32 16, 16
          %662 = vsyncadd [#allocation18], %s661
          %s664 = sshll.u32 [#allocation17], 4
          %s665 = int_to_ptr.vmem [resolvable:$true] %s664
          %667 = dma.hbm_to_vmem [thread:$0]  %s13, 16, %s665, [#allocation18]
        $region64: #{tpu_custom_call.1} parent=11 // pred_fallthru
          _
        // Predicated region
        $region65: #{tpu_custom_call.1} parent=11 // pred_check
          %p668 = pneg %p357
        $region66: #{tpu_custom_call.1} parent=11 // pred_check_branch
          %670 = sbr.rel (%p668) target = $region68
        $region67: #{tpu_custom_call.1} parent=11 // pred_region
          _
        $region68: #{tpu_custom_call.1} parent=11 // pred_fallthru
          _
        // Predicated region
        $region69: #{tpu_custom_call.1} parent=11 // pred_check
          %p671 = pneg %p378
        $region70: #{tpu_custom_call.1} parent=11 // pred_check_branch
          %673 = sbr.rel (%p671) target = $region72
        $region71: #{tpu_custom_call.1} parent=11 // pred_region
          _
        $region72: #{tpu_custom_call.1} parent=11 // pred_fallthru
          _
        // Predicated region
        $region73: #{tpu_custom_call.1} parent=11 // pred_check
          %p674 = pneg %p399
        $region74: #{tpu_custom_call.1} parent=11 // pred_check_branch
          %676 = sbr.rel (%p674) target = $region76
        $region75: #{tpu_custom_call.1} parent=11 // pred_region
          _
        $region76: #{tpu_custom_call.1} parent=11 // pred_fallthru
          _
        // Predicated region
        $region77: #{tpu_custom_call.1} parent=11 // pred_check
          %p677 = pneg %p420
        $region78: #{tpu_custom_call.1} parent=11 // pred_check_branch
          %679 = sbr.rel (%p677) target = $region80
        $region79: #{tpu_custom_call.1} parent=11 // pred_region
          _
        $region80: #{tpu_custom_call.1} parent=11 // pred_fallthru
          _
        // Predicated region
        $region81: #{tpu_custom_call.1} parent=11 // pred_check
          %p680 = pneg %p441
        $region82: #{tpu_custom_call.1} parent=11 // pred_check_branch
          %682 = sbr.rel (%p680) target = $region84
        $region83: #{tpu_custom_call.1} parent=11 // pred_region
          _
        $region84: #{tpu_custom_call.1} parent=11 // pred_fallthru
          _
        // Predicated region
        $region85: #{tpu_custom_call.1} parent=11 // pred_check
          %p683 = pneg %p462
        $region86: #{tpu_custom_call.1} parent=11 // pred_check_branch
          %685 = sbr.rel (%p683) target = $region88
        $region87: #{tpu_custom_call.1} parent=11 // pred_region
          _
        $region88: #{tpu_custom_call.1} parent=11 // pred_fallthru
          _
        // Predicated region
        $region89: #{tpu_custom_call.1} parent=11 // pred_check
          %p686 = pneg %p483
        $region90: #{tpu_custom_call.1} parent=11 // pred_check_branch
          %688 = sbr.rel (%p686) target = $region92
        $region91: #{tpu_custom_call.1} parent=11 // pred_region
          _
        $region92: #{tpu_custom_call.1} parent=11 // pred_fallthru
          _
        // Predicated region
        $region93: #{tpu_custom_call.1} parent=11 // pred_check
          %p689 = pneg %p504
        $region94: #{tpu_custom_call.1} parent=11 // pred_check_branch
          %691 = sbr.rel (%p689) target = $region96
        $region95: #{tpu_custom_call.1} parent=11 // pred_region
          _
        $region96: #{tpu_custom_call.1} parent=11 // pred_fallthru
          _
      $region12: #{tpu_custom_call.1} parent=5 // pred_fallthru
        _
      %p692 = scmp.lt.s32.totalorder %s37, 2
      // Predicated region
      $region97: #{tpu_custom_call.1} parent=5 // pred_check
        %p693 = pneg %p692
      $region98: #{tpu_custom_call.1} parent=5 // pred_check_branch
        %695 = sbr.rel (%p693) target = $region100
      $region99: #{tpu_custom_call.1} parent=5 // pred_region
        // Predicated region
        $region101: #{tpu_custom_call.1} parent=99 // pred_check
          %p696 = pneg %p57
        $region102: #{tpu_custom_call.1} parent=99 // pred_check_branch
          %698 = sbr.rel (%p696) target = $region104
        $region103: #{tpu_custom_call.1} parent=99 // pred_region
          %p699 = scmp.lt.s32.totalorder %s37, 1
          %s700 = scalar_select %p699, %s37, 1
          %s701 = smul.addr %s700, 2
          %s702 = smul.addr %s701, 4
          %s703 = scalar_lea.vmem %s0, %s702
        $region104: #{tpu_custom_call.1} parent=99 // pred_fallthru
          _
      $region100: #{tpu_custom_call.1} parent=5 // pred_fallthru
        _
      %p704 = scmp.le.s32.totalorder 1, %s37
      %p705 = scmp.lt.s32.totalorder %s37, 3
      %p706 = pnand %p704, %p705
      %p707 = pneg %p706
      // Predicated region
      $region105: #{tpu_custom_call.1} parent=5 // pred_check
        _
      $region106: #{tpu_custom_call.1} parent=5 // pred_check_branch
        %709 = sbr.rel (%p706) target = $region108
      $region107: #{tpu_custom_call.1} parent=5 // pred_region
        %s710 = ssub.s32 %s37, 1
        // Predicated region
        $region109: #{tpu_custom_call.1} parent=107 // pred_check
          %p711 = pneg %p126
        $region110: #{tpu_custom_call.1} parent=107 // pred_check_branch
          %713 = sbr.rel (%p711) target = $region112
        $region111: #{tpu_custom_call.1} parent=107 // pred_region
          %714 = dma.done [#allocation3], 128
        $region112: #{tpu_custom_call.1} parent=107 // pred_fallthru
          _
        // Predicated region
        $region113: #{tpu_custom_call.1} parent=107 // pred_check
          %p715 = pneg %p168
        $region114: #{tpu_custom_call.1} parent=107 // pred_check_branch
          %717 = sbr.rel (%p715) target = $region116
        $region115: #{tpu_custom_call.1} parent=107 // pred_region
          %718 = dma.done [#allocation6], 16
        $region116: #{tpu_custom_call.1} parent=107 // pred_fallthru
          _
        // Predicated region
        $region117: #{tpu_custom_call.1} parent=107 // pred_check
          %p719 = pneg %p189
        $region118: #{tpu_custom_call.1} parent=107 // pred_check_branch
          %721 = sbr.rel (%p719) target = $region120
        $region119: #{tpu_custom_call.1} parent=107 // pred_region
          %722 = dma.done [#allocation6], 256
        $region120: #{tpu_custom_call.1} parent=107 // pred_fallthru
          _
        // Predicated region
        $region121: #{tpu_custom_call.1} parent=107 // pred_check
          %p723 = pneg %p210
        $region122: #{tpu_custom_call.1} parent=107 // pred_check_branch
          %725 = sbr.rel (%p723) target = $region124
        $region123: #{tpu_custom_call.1} parent=107 // pred_region
          %726 = dma.done [#allocation9], 16
        $region124: #{tpu_custom_call.1} parent=107 // pred_fallthru
          _
        // Predicated region
        $region125: #{tpu_custom_call.1} parent=107 // pred_check
          %p727 = pneg %p231
        $region126: #{tpu_custom_call.1} parent=107 // pred_check_branch
          %729 = sbr.rel (%p727) target = $region128
        $region127: #{tpu_custom_call.1} parent=107 // pred_region
          %730 = dma.done [#allocation9], 256
        $region128: #{tpu_custom_call.1} parent=107 // pred_fallthru
          _
        // Predicated region
        $region129: #{tpu_custom_call.1} parent=107 // pred_check
          %p731 = pneg %p252
        $region130: #{tpu_custom_call.1} parent=107 // pred_check_branch
          %733 = sbr.rel (%p731) target = $region132
        $region131: #{tpu_custom_call.1} parent=107 // pred_region
          %734 = dma.done [#allocation12], 16
        $region132: #{tpu_custom_call.1} parent=107 // pred_fallthru
          _
        // Predicated region
        $region133: #{tpu_custom_call.1} parent=107 // pred_check
          %p735 = pneg %p273
        $region134: #{tpu_custom_call.1} parent=107 // pred_check_branch
          %737 = sbr.rel (%p735) target = $region136
        $region135: #{tpu_custom_call.1} parent=107 // pred_region
          %738 = dma.done [#allocation12], 16
        $region136: #{tpu_custom_call.1} parent=107 // pred_fallthru
          _
        // Predicated region
        $region137: #{tpu_custom_call.1} parent=107 // pred_check
          %p739 = pneg %p294
        $region138: #{tpu_custom_call.1} parent=107 // pred_check_branch
          %741 = sbr.rel (%p739) target = $region140
        $region139: #{tpu_custom_call.1} parent=107 // pred_region
          %742 = dma.done [#allocation15], 16
        $region140: #{tpu_custom_call.1} parent=107 // pred_fallthru
          _
        // Predicated region
        $region141: #{tpu_custom_call.1} parent=107 // pred_check
          %p743 = pneg %p315
        $region142: #{tpu_custom_call.1} parent=107 // pred_check_branch
          %745 = sbr.rel (%p743) target = $region144
        $region143: #{tpu_custom_call.1} parent=107 // pred_region
          %746 = dma.done [#allocation15], 16
        $region144: #{tpu_custom_call.1} parent=107 // pred_fallthru
          _
        // Predicated region
        $region145: #{tpu_custom_call.1} parent=107 // pred_check
          %p747 = pneg %p336
        $region146: #{tpu_custom_call.1} parent=107 // pred_check_branch
          %749 = sbr.rel (%p747) target = $region148
        $region147: #{tpu_custom_call.1} parent=107 // pred_region
          %750 = dma.done [#allocation18], 16
        $region148: #{tpu_custom_call.1} parent=107 // pred_fallthru
          _
        %p751 = scmp.lt.s32.totalorder %s42, 1
        %s752 = scalar_select %p751, %s42, 1
        %s753 = smul.addr %s752, 2
        %s754 = smul.addr %s753, 4
        %s755 = scalar_lea.vmem %s0, %s754
        %p756 = pneg %p63
        %p757 = pneg %p60
        %p758 = pneg %p84
        %p759 = pneg %p81
        %p760 = pneg %p105
        %p761 = pneg %p102
        %p762 = pneg %p126
        %p763 = pneg %p123
        %p764 = pneg %p147
        %p765 = pneg %p144
        %p766 = pneg %p168
        %p767 = pneg %p165
        %p768 = pneg %p189
        %p769 = pneg %p186
        %p770 = pneg %p210
        %p771 = pneg %p207
        %p772 = pneg %p231
        %p773 = pneg %p228
        %p774 = pneg %p252
        %p775 = pneg %p249
        %p776 = pneg %p273
        %p777 = pneg %p270
        %p778 = pneg %p294
        %p779 = pneg %p291
        %p780 = pneg %p315
        %p781 = pneg %p312
        %p782 = pneg %p336
        %p783 = pneg %p333
        %p784 = pneg %p357
        %p785 = pneg %p354
        %p786 = pneg %p378
        %p787 = pneg %p375
        %p788 = pneg %p399
        %p789 = pneg %p396
        %p790 = pneg %p420
        %p791 = pneg %p417
        %p792 = pneg %p441
        %p793 = pneg %p438
        %p794 = pneg %p462
        %p795 = pneg %p459
        %p796 = pneg %p483
        %p797 = pneg %p480
        %p798 = pneg %p504
        %p799 = pneg %p501
        %p800 = pneg %p530
        %p801 = pneg %p527
        %s802 = sand.u32 %s517, 1
        %s803 = scalar_lea.sflag [#allocation4], %s802
        %s804 = sand.u32 %s517, 1
        %s805 = scalar_lea.vmem [#allocation19], %s804
        %p806 = scmp.lt.s32.totalorder %s42, 1
        %s807 = scalar_select %p806, %s42, 1
        %s808 = smul.addr %s807, 2
        %s809 = smul.addr %s808, 4
        %s810 = scalar_lea.vmem %s0, %s809
        %v812 = vld [vmem:[#allocation10] sm:$0xf]
        %v813 = vld [vmem:[#allocation10 + $0x4] sm:$0xf]
        %v814 = vld [vmem:[#allocation10 + $0x8] sm:$0xf]
        %v815 = vld [vmem:[#allocation10 + $0xc] sm:$0xf]
        %v816 = vld [vmem:[#allocation11] sm:$0x1]
        %v817 = vld [vmem:[%s16] sm:$0xf]
        %v818 = vld [vmem:[%s16 + $0x4] sm:$0xf]
        %v819 = vld [vmem:[%s16 + $0x8] sm:$0xf]
        %v820 = vld [vmem:[%s16 + $0xc] sm:$0xf]
        %v821 = vld [vmem:[%s17] sm:$0x1]
        %v822 = vld [vmem:[%s18] sm:$0xf]
        %v823 = vld [vmem:[%s18 + $0x4] sm:$0xf]
        %v824 = vld [vmem:[%s18 + $0x8] sm:$0xf]
        %v825 = vld [vmem:[%s18 + $0xc] sm:$0xf]
        %v826 = vld [vmem:[%s18 + $0x10] sm:$0xf]
        %v827 = vld [vmem:[%s18 + $0x14] sm:$0xf]
        %v828 = vld [vmem:[%s18 + $0x18] sm:$0xf]
        %v829 = vld [vmem:[%s18 + $0x1c] sm:$0xf]
        %v830 = vld [vmem:[%s19] sm:$0x1]
        %v831 = vld [vmem:[#allocation16] sm:$0x1]
        %v832 = vld [vmem:[#allocation17] sm:$0x1]
        %v833 = vld [vmem:[%s14] sm:$0x1]
        %v834 = vld [vmem:[%s15] sm:$0x1]
        %v835 = vld [vmem:[%s20] sm:$0xf]
        %v836 = vld [vmem:[%s20 + $0x4] sm:$0xf]
        %v837 = vld [vmem:[%s20 + $0x8] sm:$0xf]
        %v838 = vld [vmem:[%s20 + $0xc] sm:$0xf]
        %v839 = vld [vmem:[%s21] sm:$0x1]
        %v840 = vld [vmem:[#allocation2] sm:$0x3f]
        %v841 = vadd.f32 %v840, %v840
        %v842 = vld [vmem:[#allocation13] sm:$0x1]
        %v843 = vld [vmem:[#allocation14] sm:$0x1]
        %vm844 = vcmask 259072
        %v845 = vsel %vm844, %v841, 0.0
        %846 = vadd.xlane.f32.xlu0 %v845
        %v847 = vpop.xlane.xlu0 %846
        %v848 = vrcp.pop 32.0
        %v849 = vmul.f32 %v847, %v848
        %v850 = vsub.f32 %v841, %v849
        %v851 = vmul.f32 %v850, %v850
        %v852 = vsel %vm844, %v851, 0.0
        %853 = vadd.xlane.f32.xlu0 %v852
        %v854 = vpop.xlane.xlu0 %853
        %v855 = vmul.f32 %v854, %v848
        %v856 = vadd.f32 %v855, 1e-05
        %v857 = vrsqrt.pop %v856
        %v858 = vmul.f32 %v850, %v857
        %v860 = vlaneseq
        %v861 = vshrl.u32 %v860, 7
        %v862 = vsub.s32 0, %v861
        %v863 = vrot.slane %v842, %v862
        %v865 = vmul.f32 %v858, %v863
        %v867 = vlaneseq
        %v868 = vshrl.u32 %v867, 7
        %v869 = vsub.s32 0, %v868
        %v870 = vrot.slane %v843, %v869
        %v872 = vadd.f32 %v865, %v870
        %v873 = vpack.c.bf16 %v872, %v872
        %v874 = vld [vmem:[%s4] sm:$0xf]
        %v875 = vld [vmem:[%s4 + $0x4] sm:$0xf]
        %v876 = vld [vmem:[%s4 + $0x8] sm:$0xf]
        %v877 = vld [vmem:[%s4 + $0xc] sm:$0xf]
        %v878 = vld [vmem:[#allocation5] sm:$0x1]
        %v880 = vlaneseq
        %v881 = vshrl.u32 %v880, 7
        %v882 = vsub.s32 0, %v881
        %v883 = vrot.slane %v878, %v882
        %v889 = vunpack.c.l.b16 %v874
        %v890 = vunpack.c.l.b16 %v875
        %v891 = vunpack.c.l.b16 %v876
        %v892 = vunpack.c.l.b16 %v877
        %v893 = vpack.c.b16 %v890, %v889
        %v894 = vpack.c.b16 %v892, %v891
        %vm897 = vcmask 261120
        %v899 = vsel %vm897, %v873, 0
        %901 = vmatprep.subr.bf16.mxu0 0
        %902 = vmatpush1.bf16.msra.mxu0 %v893
        %903 = vmatprep.subr.bf16.mxu0 0
        %904 = vmatpush1.bf16.msra.mxu0 %v894
        %905 = vmatprep.subr.bf16.mxu0 0
        %906 = vmatpush1.bf16.msra.mxu0 0
        %907 = vmatprep.subr.bf16.mxu0 0
        %908 = vmatpush1.bf16.msra.mxu0 0
        %909 = vmatprep.subr.bf16.mxu0 0
        %910 = vmatpush1.bf16.msra.mxu0 0
        %911 = vmatprep.subr.bf16.mxu0 0
        %912 = vmatpush1.bf16.msra.mxu0 0
        %913 = vmatprep.subr.bf16.mxu0 0
        %914 = vmatpush1.bf16.msra.mxu0 0
        %915 = vmatprep.subr.bf16.mxu0 0
        %916 = vmatpush1.bf16.msra.mxu0 0
        %917 = vmatprep.subr.bf16.mxu0 0
        %918 = vmatpush1.bf16.msra.mxu0 0
        %919 = vmatprep.subr.bf16.mxu0 0
        %920 = vmatpush1.bf16.msra.mxu0 0
        %921 = vmatprep.subr.bf16.mxu0 0
        %922 = vmatpush1.bf16.msra.mxu0 0
        %923 = vmatprep.subr.bf16.mxu0 0
        %924 = vmatpush1.bf16.msra.mxu0 0
        %925 = vmatprep.subr.bf16.mxu0 0
        %926 = vmatpush1.bf16.msra.mxu0 0
        %927 = vmatprep.subr.bf16.mxu0 0
        %928 = vmatpush1.bf16.msra.mxu0 0
        %929 = vmatprep.subr.bf16.mxu0 0
        %930 = vmatpush1.bf16.msra.mxu0 0
        %931 = vmatprep.subr.bf16.mxu0 0
        %932 = vmatpush1.bf16.msra.mxu0 0
        %933 = vmatprep.mubr.bf16.mxu0 0
        %934 = vmatmul.mubr.bf16.gmra.mrb[0].mxu0 %v899
        %v935 = vpop.f32.mrb[0].mxu0
        %v936 = vadd.f32 %v883, %v935
        %v937 = vpop.f32.mrb[0].mxu0
        %v938 = vpop.f32.mrb[0].mxu0
        %v939 = vpop.f32.mrb[0].mxu0
        %940 = vdwg.mxu0
        %v941 = vpack.c.bf16 %v936, %v936
        %v942 = vld [vmem:[%s810] sm:$0xf]
        %v943 = vld [vmem:[%s810 + $0x4] sm:$0xf]
        %v944 = vld [vmem:[%s1] sm:$0xf]
        %v945 = vld [vmem:[%s1 + $0x4] sm:$0xf]
        %v946 = vld [vmem:[%s1 + $0x8] sm:$0xf]
        %v947 = vld [vmem:[%s1 + $0xc] sm:$0xf]
        %v948 = vld [vmem:[%s2] sm:$0x1]
        %v950 = vlaneseq
        %v951 = vshrl.u32 %v950, 7
        %v952 = vsub.s32 0, %v951
        %v953 = vrot.slane %v948, %v952
        %v957 = vunpack.c.l.b16 %v942
        %v958 = vunpack.c.l.b16 %v943
        %v959 = vpack.c.b16 %v958, %v957
        %v964 = vunpack.c.l.b16 %v944
        %v965 = vunpack.c.l.b16 %v945
        %v966 = vunpack.c.l.b16 %v946
        %v967 = vunpack.c.l.b16 %v947
        %v968 = vpack.c.b16 %v965, %v964
        %v969 = vpack.c.b16 %v967, %v966
        %v973 = vsel %vm897, %v959, 0
        %975 = vmatprep.subr.bf16.mxu0 0
        %976 = vmatpush1.bf16.msra.mxu0 %v968
        %977 = vmatprep.subr.bf16.mxu0 0
        %978 = vmatpush1.bf16.msra.mxu0 %v969
        %979 = vmatprep.subr.bf16.mxu0 0
        %980 = vmatpush1.bf16.msra.mxu0 0
        %981 = vmatprep.subr.bf16.mxu0 0
        %982 = vmatpush1.bf16.msra.mxu0 0
        %983 = vmatprep.subr.bf16.mxu0 0
        %984 = vmatpush1.bf16.msra.mxu0 0
        %985 = vmatprep.subr.bf16.mxu0 0
        %986 = vmatpush1.bf16.msra.mxu0 0
        %987 = vmatprep.subr.bf16.mxu0 0
        %988 = vmatpush1.bf16.msra.mxu0 0
        %989 = vmatprep.subr.bf16.mxu0 0
        %990 = vmatpush1.bf16.msra.mxu0 0
        %991 = vmatprep.subr.bf16.mxu0 0
        %992 = vmatpush1.bf16.msra.mxu0 0
        %993 = vmatprep.subr.bf16.mxu0 0
        %994 = vmatpush1.bf16.msra.mxu0 0
        %995 = vmatprep.subr.bf16.mxu0 0
        %996 = vmatpush1.bf16.msra.mxu0 0
        %997 = vmatprep.subr.bf16.mxu0 0
        %998 = vmatpush1.bf16.msra.mxu0 0
        %999 = vmatprep.subr.bf16.mxu0 0
        %1000 = vmatpush1.bf16.msra.mxu0 0
        %1001 = vmatprep.subr.bf16.mxu0 0
        %1002 = vmatpush1.bf16.msra.mxu0 0
        %1003 = vmatprep.subr.bf16.mxu0 0
        %1004 = vmatpush1.bf16.msra.mxu0 0
        %1005 = vmatprep.subr.bf16.mxu0 0
        %1006 = vmatpush1.bf16.msra.mxu0 0
        %1007 = vmatprep.mubr.bf16.mxu0 0
        %1008 = vmatmul.mubr.bf16.gmra.mrb[0].mxu0 %v973
        %v1009 = vpop.f32.mrb[0].mxu0
        %v1010 = vadd.f32 %v953, %v1009
        %v1011 = vpop.f32.mrb[0].mxu0
        %v1012 = vpop.f32.mrb[0].mxu0
        %v1013 = vadd.f32 %v953, %v1012
        %v1014 = vpop.f32.mrb[0].mxu0
        %1015 = vdwg.mxu0
        %v1016 = vmax.f32 %v1010, 0.0
        %v1017 = vmax.f32 %v1013, 0.0
        %v1018 = vpack.c.bf16 %v1017, %v1016
        %v1019 = vld [vmem:[#allocation7] sm:$0xf]
        %v1020 = vld [vmem:[#allocation7 + $0x4] sm:$0xf]
        %v1021 = vld [vmem:[#allocation7 + $0x8] sm:$0xf]
        %v1022 = vld [vmem:[#allocation7 + $0xc] sm:$0xf]
        %v1023 = vld [vmem:[#allocation8] sm:$0x1]
        %v1025 = vlaneseq
        %v1026 = vshrl.u32 %v1025, 7
        %v1027 = vsub.s32 0, %v1026
        %v1028 = vrot.slane %v1023, %v1027
        %v1034 = vunpack.c.l.b16 %v1019
        %v1035 = vunpack.c.l.b16 %v1020
        %v1036 = vunpack.c.l.b16 %v1021
        %v1037 = vunpack.c.l.b16 %v1022
        %v1038 = vpack.c.b16 %v1035, %v1034
        %v1039 = vpack.c.b16 %v1037, %v1036
        %v1043 = vsel %vm897, %v1018, 0
        %1045 = vmatprep.subr.bf16.mxu0 0
        %1046 = vmatpush1.bf16.msra.mxu0 %v1038
        %1047 = vmatprep.subr.bf16.mxu0 0
        %1048 = vmatpush1.bf16.msra.mxu0 %v1039
        %1049 = vmatprep.subr.bf16.mxu0 0
        %1050 = vmatpush1.bf16.msra.mxu0 0
        %1051 = vmatprep.subr.bf16.mxu0 0
        %1052 = vmatpush1.bf16.msra.mxu0 0
        %1053 = vmatprep.subr.bf16.mxu0 0
        %1054 = vmatpush1.bf16.msra.mxu0 0
        %1055 = vmatprep.subr.bf16.mxu0 0
        %1056 = vmatpush1.bf16.msra.mxu0 0
        %1057 = vmatprep.subr.bf16.mxu0 0
        %1058 = vmatpush1.bf16.msra.mxu0 0
        %1059 = vmatprep.subr.bf16.mxu0 0
        %1060 = vmatpush1.bf16.msra.mxu0 0
        %1061 = vmatprep.subr.bf16.mxu0 0
        %1062 = vmatpush1.bf16.msra.mxu0 0
        %1063 = vmatprep.subr.bf16.mxu0 0
        %1064 = vmatpush1.bf16.msra.mxu0 0
        %1065 = vmatprep.subr.bf16.mxu0 0
        %1066 = vmatpush1.bf16.msra.mxu0 0
        %1067 = vmatprep.subr.bf16.mxu0 0
        %1068 = vmatpush1.bf16.msra.mxu0 0
        %1069 = vmatprep.subr.bf16.mxu0 0
        %1070 = vmatpush1.bf16.msra.mxu0 0
        %1071 = vmatprep.subr.bf16.mxu0 0
        %1072 = vmatpush1.bf16.msra.mxu0 0
        %1073 = vmatprep.subr.bf16.mxu0 0
        %1074 = vmatpush1.bf16.msra.mxu0 0
        %1075 = vmatprep.subr.bf16.mxu0 0
        %1076 = vmatpush1.bf16.msra.mxu0 0
        %1077 = vmatprep.mubr.bf16.mxu0 0
        %1078 = vmatmul.mubr.bf16.gmra.mrb[0].mxu0 %v1043
        %v1079 = vpop.f32.mrb[0].mxu0
        %v1080 = vadd.f32 %v1028, %v1079
        %v1081 = vpop.f32.mrb[0].mxu0
        %v1082 = vpop.f32.mrb[0].mxu0
        %v1083 = vadd.f32 %v1028, %v1082
        %v1084 = vpop.f32.mrb[0].mxu0
        %1085 = vdwg.mxu0
        %v1086 = vpack.c.bf16 %v1083, %v1080
        %vm1087 = vcmask 31744
        %v1089 = vsel %vm1087, %v941, 0
        %v1092 = vsel %vm1087, %v1086, 0
        %1094 = vmatprep.subr.bf16.mxu0 0
        %1095 = vmatpush1.bf16.xpose.msra.mxu0 %v1092
        %1096 = vmatprep.subr.bf16.mxu0 0
        %1097 = vmatpush1.bf16.xpose.msra.mxu0 0
        %1098 = vmatprep.subr.bf16.mxu0 0
        %1099 = vmatpush1.bf16.xpose.msra.mxu0 0
        %1100 = vmatprep.subr.bf16.mxu0 0
        %1101 = vmatpush1.bf16.xpose.msra.mxu0 0
        %1102 = vmatprep.subr.bf16.mxu0 0
        %1103 = vmatpush1.bf16.xpose.msra.mxu0 0
        %1104 = vmatprep.subr.bf16.mxu0 0
        %1105 = vmatpush1.bf16.xpose.msra.mxu0 0
        %1106 = vmatprep.subr.bf16.mxu0 0
        %1107 = vmatpush1.bf16.xpose.msra.mxu0 0
        %1108 = vmatprep.subr.bf16.mxu0 0
        %1109 = vmatpush1.bf16.xpose.msra.mxu0 0
        %1110 = vmatprep.subr.bf16.mxu0 0
        %1111 = vmatpush1.bf16.xpose.msra.mxu0 0
        %1112 = vmatprep.subr.bf16.mxu0 0
        %1113 = vmatpush1.bf16.xpose.msra.mxu0 0
        %1114 = vmatprep.subr.bf16.mxu0 0
        %1115 = vmatpush1.bf16.xpose.msra.mxu0 0
        %1116 = vmatprep.subr.bf16.mxu0 0
        %1117 = vmatpush1.bf16.xpose.msra.mxu0 0
        %1118 = vmatprep.subr.bf16.mxu0 0
        %1119 = vmatpush1.bf16.xpose.msra.mxu0 0
        %1120 = vmatprep.subr.bf16.mxu0 0
        %1121 = vmatpush1.bf16.xpose.msra.mxu0 0
        %1122 = vmatprep.subr.bf16.mxu0 0
        %1123 = vmatpush1.bf16.xpose.msra.mxu0 0
        %1124 = vmatprep.subr.bf16.mxu0 0
        %1125 = vmatpush1.bf16.xpose.msra.mxu0 0
        %1126 = vmatprep.mubr.bf16.mxu0 0
        %1127 = vmatmul.mubr.bf16.gmra.mrb[0].mxu0 %v1089
        %v1128 = vpop.f32.mrb[0].mxu0
        %v1129 = vadd.f32 0.0, %v1128
        %v1130 = vpop.f32.mrb[0].mxu0
        %v1131 = vpop.f32.mrb[0].mxu0
        %v1132 = vpop.f32.mrb[0].mxu0
        %1133 = vdwg.mxu0
        %v1134 = vmul.f32 %v1129, 0.5
        %vm1135 = vcmask 128000
        %v1136 = vsel %vm1135, %v1134, -inf
        %1137 = vmax.xlane.f32.xlu0 %v1136
        %v1138 = vpop.xlane.xlu0 %1137
        %v1139 = vsub.f32 %v1134, %v1138
        %v1140 = vmul.f32 %v1139, 1.442695
        %v1141 = vpow.pop %v1140
        %v1142 = vsel %vm1135, %v1141, 0.0
        %1143 = vadd.xlane.f32.xlu0 %v1142
        %v1144 = vpop.xlane.xlu0 %1143
        %v1145 = vrcp.pop %v1144
        %v1146 = vmul.f32 %v1141, %v1145
        %v1147 = vpack.c.bf16 %v1146, %v1146
        %1149 = vrot.lane.b32.xlu0 %v1086, 96
        %v1150 = vpop.permute.xlu0 %1149
        %vm1152 = vcmask 130048
        %v1154 = vsel %vm1152, %v1147, 0
        %1156 = vmatprep.subr.bf16.mxu0 0
        %1157 = vmatpush1.bf16.msra.mxu0 %v1150
        %1158 = vmatprep.subr.bf16.mxu0 0
        %1159 = vmatpush1.bf16.msra.mxu0 0
        %1160 = vmatprep.subr.bf16.mxu0 0
        %1161 = vmatpush1.bf16.msra.mxu0 0
        %1162 = vmatprep.subr.bf16.mxu0 0
        %1163 = vmatpush1.bf16.msra.mxu0 0
        %1164 = vmatprep.subr.bf16.mxu0 0
        %1165 = vmatpush1.bf16.msra.mxu0 0
        %1166 = vmatprep.subr.bf16.mxu0 0
        %1167 = vmatpush1.bf16.msra.mxu0 0
        %1168 = vmatprep.subr.bf16.mxu0 0
        %1169 = vmatpush1.bf16.msra.mxu0 0
        %1170 = vmatprep.subr.bf16.mxu0 0
        %1171 = vmatpush1.bf16.msra.mxu0 0
        %1172 = vmatprep.subr.bf16.mxu0 0
        %1173 = vmatpush1.bf16.msra.mxu0 0
        %1174 = vmatprep.subr.bf16.mxu0 0
        %1175 = vmatpush1.bf16.msra.mxu0 0
        %1176 = vmatprep.subr.bf16.mxu0 0
        %1177 = vmatpush1.bf16.msra.mxu0 0
        %1178 = vmatprep.subr.bf16.mxu0 0
        %1179 = vmatpush1.bf16.msra.mxu0 0
        %1180 = vmatprep.subr.bf16.mxu0 0
        %1181 = vmatpush1.bf16.msra.mxu0 0
        %1182 = vmatprep.subr.bf16.mxu0 0
        %1183 = vmatpush1.bf16.msra.mxu0 0
        %1184 = vmatprep.subr.bf16.mxu0 0
        %1185 = vmatpush1.bf16.msra.mxu0 0
        %1186 = vmatprep.subr.bf16.mxu0 0
        %1187 = vmatpush1.bf16.msra.mxu0 0
        %1188 = vmatprep.mubr.bf16.mxu0 0
        %1189 = vmatmul.mubr.bf16.gmra.mrb[0].mxu0 %v1154
        %v1190 = vpop.f32.mrb[0].mxu0
        %v1191 = vadd.f32 0.0, %v1190
        %v1192 = vpop.f32.mrb[0].mxu0
        %v1193 = vpop.f32.mrb[0].mxu0
        %v1194 = vpop.f32.mrb[0].mxu0
        %1195 = vdwg.mxu0
        %1197 = vrot.lane.b32.xlu0 %v941, 124
        %v1198 = vpop.permute.xlu0 %1197
        %1199 = vrot.lane.b32.xlu0 %v1086, 124
        %v1200 = vpop.permute.xlu0 %1199
        %v1202 = vsel %vm1087, %v1198, 0
        %v1205 = vsel %vm1087, %v1200, 0
        %1207 = vmatprep.subr.bf16.mxu0 0
        %1208 = vmatpush1.bf16.xpose.msra.mxu0 %v1205
        %1209 = vmatprep.subr.bf16.mxu0 0
        %1210 = vmatpush1.bf16.xpose.msra.mxu0 0
        %1211 = vmatprep.subr.bf16.mxu0 0
        %1212 = vmatpush1.bf16.xpose.msra.mxu0 0
        %1213 = vmatprep.subr.bf16.mxu0 0
        %1214 = vmatpush1.bf16.xpose.msra.mxu0 0
        %1215 = vmatprep.subr.bf16.mxu0 0
        %1216 = vmatpush1.bf16.xpose.msra.mxu0 0
        %1217 = vmatprep.subr.bf16.mxu0 0
        %1218 = vmatpush1.bf16.xpose.msra.mxu0 0
        %1219 = vmatprep.subr.bf16.mxu0 0
        %1220 = vmatpush1.bf16.xpose.msra.mxu0 0
        %1221 = vmatprep.subr.bf16.mxu0 0
        %1222 = vmatpush1.bf16.xpose.msra.mxu0 0
        %1223 = vmatprep.subr.bf16.mxu0 0
        %1224 = vmatpush1.bf16.xpose.msra.mxu0 0
        %1225 = vmatprep.subr.bf16.mxu0 0
        %1226 = vmatpush1.bf16.xpose.msra.mxu0 0
        %1227 = vmatprep.subr.bf16.mxu0 0
        %1228 = vmatpush1.bf16.xpose.msra.mxu0 0
        %1229 = vmatprep.subr.bf16.mxu0 0
        %1230 = vmatpush1.bf16.xpose.msra.mxu0 0
        %1231 = vmatprep.subr.bf16.mxu0 0
        %1232 = vmatpush1.bf16.xpose.msra.mxu0 0
        %1233 = vmatprep.subr.bf16.mxu0 0
        %1234 = vmatpush1.bf16.xpose.msra.mxu0 0
        %1235 = vmatprep.subr.bf16.mxu0 0
        %1236 = vmatpush1.bf16.xpose.msra.mxu0 0
        %1237 = vmatprep.subr.bf16.mxu0 0
        %1238 = vmatpush1.bf16.xpose.msra.mxu0 0
        %1239 = vmatprep.mubr.bf16.mxu0 0
        %1240 = vmatmul.mubr.bf16.gmra.mrb[0].mxu0 %v1202
        %v1241 = vpop.f32.mrb[0].mxu0
        %v1242 = vadd.f32 0.0, %v1241
        %v1243 = vpop.f32.mrb[0].mxu0
        %v1244 = vpop.f32.mrb[0].mxu0
        %v1245 = vpop.f32.mrb[0].mxu0
        %1246 = vdwg.mxu0
        %v1247 = vmul.f32 %v1242, 0.5
        %v1248 = vsel %vm1135, %v1247, -inf
        %1249 = vmax.xlane.f32.xlu0 %v1248
        %v1250 = vpop.xlane.xlu0 %1249
        %v1251 = vsub.f32 %v1247, %v1250
        %v1252 = vmul.f32 %v1251, 1.442695
        %v1253 = vpow.pop %v1252
        %v1254 = vsel %vm1135, %v1253, 0.0
        %1255 = vadd.xlane.f32.xlu0 %v1254
        %v1256 = vpop.xlane.xlu0 %1255
        %v1257 = vrcp.pop %v1256
        %v1258 = vmul.f32 %v1253, %v1257
        %v1259 = vpack.c.bf16 %v1258, %v1258
        %1260 = vrot.lane.b32.xlu0 %v1086, 92
        %v1261 = vpop.permute.xlu0 %1260
        %v1264 = vsel %vm1152, %v1259, 0
        %1266 = vmatprep.subr.bf16.mxu0 0
        %1267 = vmatpush1.bf16.msra.mxu0 %v1261
        %1268 = vmatprep.subr.bf16.mxu0 0
        %1269 = vmatpush1.bf16.msra.mxu0 0
        %1270 = vmatprep.subr.bf16.mxu0 0
        %1271 = vmatpush1.bf16.msra.mxu0 0
        %1272 = vmatprep.subr.bf16.mxu0 0
        %1273 = vmatpush1.bf16.msra.mxu0 0
        %1274 = vmatprep.subr.bf16.mxu0 0
        %1275 = vmatpush1.bf16.msra.mxu0 0
        %1276 = vmatprep.subr.bf16.mxu0 0
        %1277 = vmatpush1.bf16.msra.mxu0 0
        %1278 = vmatprep.subr.bf16.mxu0 0
        %1279 = vmatpush1.bf16.msra.mxu0 0
        %1280 = vmatprep.subr.bf16.mxu0 0
        %1281 = vmatpush1.bf16.msra.mxu0 0
        %1282 = vmatprep.subr.bf16.mxu0 0
        %1283 = vmatpush1.bf16.msra.mxu0 0
        %1284 = vmatprep.subr.bf16.mxu0 0
        %1285 = vmatpush1.bf16.msra.mxu0 0
        %1286 = vmatprep.subr.bf16.mxu0 0
        %1287 = vmatpush1.bf16.msra.mxu0 0
        %1288 = vmatprep.subr.bf16.mxu0 0
        %1289 = vmatpush1.bf16.msra.mxu0 0
        %1290 = vmatprep.subr.bf16.mxu0 0
        %1291 = vmatpush1.bf16.msra.mxu0 0
        %1292 = vmatprep.subr.bf16.mxu0 0
        %1293 = vmatpush1.bf16.msra.mxu0 0
        %1294 = vmatprep.subr.bf16.mxu0 0
        %1295 = vmatpush1.bf16.msra.mxu0 0
        %1296 = vmatprep.subr.bf16.mxu0 0
        %1297 = vmatpush1.bf16.msra.mxu0 0
        %1298 = vmatprep.mubr.bf16.mxu0 0
        %1299 = vmatmul.mubr.bf16.gmra.mrb[0].mxu0 %v1264
        %v1300 = vpop.f32.mrb[0].mxu0
        %v1301 = vadd.f32 0.0, %v1300
        %v1302 = vpop.f32.mrb[0].mxu0
        %v1303 = vpop.f32.mrb[0].mxu0
        %v1304 = vpop.f32.mrb[0].mxu0
        %1305 = vdwg.mxu0
        %1306 = vrot.lane.b32.xlu0 %v941, 120
        %v1307 = vpop.permute.xlu0 %1306
        %1308 = vrot.lane.b32.xlu0 %v1086, 120
        %v1309 = vpop.permute.xlu0 %1308
        %v1311 = vsel %vm1087, %v1307, 0
        %v1314 = vsel %vm1087, %v1309, 0
        %1316 = vmatprep.subr.bf16.mxu0 0
        %1317 = vmatpush1.bf16.xpose.msra.mxu0 %v1314
        %1318 = vmatprep.subr.bf16.mxu0 0
        %1319 = vmatpush1.bf16.xpose.msra.mxu0 0
        %1320 = vmatprep.subr.bf16.mxu0 0
        %1321 = vmatpush1.bf16.xpose.msra.mxu0 0
        %1322 = vmatprep.subr.bf16.mxu0 0
        %1323 = vmatpush1.bf16.xpose.msra.mxu0 0
        %1324 = vmatprep.subr.bf16.mxu0 0
        %1325 = vmatpush1.bf16.xpose.msra.mxu0 0
        %1326 = vmatprep.subr.bf16.mxu0 0
        %1327 = vmatpush1.bf16.xpose.msra.mxu0 0
        %1328 = vmatprep.subr.bf16.mxu0 0
        %1329 = vmatpush1.bf16.xpose.msra.mxu0 0
        %1330 = vmatprep.subr.bf16.mxu0 0
        %1331 = vmatpush1.bf16.xpose.msra.mxu0 0
        %1332 = vmatprep.subr.bf16.mxu0 0
        %1333 = vmatpush1.bf16.xpose.msra.mxu0 0
        %1334 = vmatprep.subr.bf16.mxu0 0
        %1335 = vmatpush1.bf16.xpose.msra.mxu0 0
        %1336 = vmatprep.subr.bf16.mxu0 0
        %1337 = vmatpush1.bf16.xpose.msra.mxu0 0
        %1338 = vmatprep.subr.bf16.mxu0 0
        %1339 = vmatpush1.bf16.xpose.msra.mxu0 0
        %1340 = vmatprep.subr.bf16.mxu0 0
        %1341 = vmatpush1.bf16.xpose.msra.mxu0 0
        %1342 = vmatprep.subr.bf16.mxu0 0
        %1343 = vmatpush1.bf16.xpose.msra.mxu0 0
        %1344 = vmatprep.subr.bf16.mxu0 0
        %1345 = vmatpush1.bf16.xpose.msra.mxu0 0
        %1346 = vmatprep.subr.bf16.mxu0 0
        %1347 = vmatpush1.bf16.xpose.msra.mxu0 0
        %1348 = vmatprep.mubr.bf16.mxu0 0
        %1349 = vmatmul.mubr.bf16.gmra.mrb[0].mxu0 %v1311
        %v1350 = vpop.f32.mrb[0].mxu0
        %v1351 = vadd.f32 0.0, %v1350
        %v1352 = vpop.f32.mrb[0].mxu0
        %v1353 = vpop.f32.mrb[0].mxu0
        %v1354 = vpop.f32.mrb[0].mxu0
        %1355 = vdwg.mxu0
        %v1356 = vmul.f32 %v1351, 0.5
        %v1357 = vsel %vm1135, %v1356, -inf
        %1358 = vmax.xlane.f32.xlu0 %v1357
        %v1359 = vpop.xlane.xlu0 %1358
        %v1360 = vsub.f32 %v1356, %v1359
        %v1361 = vmul.f32 %v1360, 1.442695
        %v1362 = vpow.pop %v1361
        %v1363 = vsel %vm1135, %v1362, 0.0
        %1364 = vadd.xlane.f32.xlu0 %v1363
        %v1365 = vpop.xlane.xlu0 %1364
        %v1366 = vrcp.pop %v1365
        %v1367 = vmul.f32 %v1362, %v1366
        %v1368 = vpack.c.bf16 %v1367, %v1367
        %1369 = vrot.lane.b32.xlu0 %v1086, 88
        %v1370 = vpop.permute.xlu0 %1369
        %v1373 = vsel %vm1152, %v1368, 0
        %1375 = vmatprep.subr.bf16.mxu0 0
        %1376 = vmatpush1.bf16.msra.mxu0 %v1370
        %1377 = vmatprep.subr.bf16.mxu0 0
        %1378 = vmatpush1.bf16.msra.mxu0 0
        %1379 = vmatprep.subr.bf16.mxu0 0
        %1380 = vmatpush1.bf16.msra.mxu0 0
        %1381 = vmatprep.subr.bf16.mxu0 0
        %1382 = vmatpush1.bf16.msra.mxu0 0
        %1383 = vmatprep.subr.bf16.mxu0 0
        %1384 = vmatpush1.bf16.msra.mxu0 0
        %1385 = vmatprep.subr.bf16.mxu0 0
        %1386 = vmatpush1.bf16.msra.mxu0 0
        %1387 = vmatprep.subr.bf16.mxu0 0
        %1388 = vmatpush1.bf16.msra.mxu0 0
        %1389 = vmatprep.subr.bf16.mxu0 0
        %1390 = vmatpush1.bf16.msra.mxu0 0
        %1391 = vmatprep.subr.bf16.mxu0 0
        %1392 = vmatpush1.bf16.msra.mxu0 0
        %1393 = vmatprep.subr.bf16.mxu0 0
        %1394 = vmatpush1.bf16.msra.mxu0 0
        %1395 = vmatprep.subr.bf16.mxu0 0
        %1396 = vmatpush1.bf16.msra.mxu0 0
        %1397 = vmatprep.subr.bf16.mxu0 0
        %1398 = vmatpush1.bf16.msra.mxu0 0
        %1399 = vmatprep.subr.bf16.mxu0 0
        %1400 = vmatpush1.bf16.msra.mxu0 0
        %1401 = vmatprep.subr.bf16.mxu0 0
        %1402 = vmatpush1.bf16.msra.mxu0 0
        %1403 = vmatprep.subr.bf16.mxu0 0
        %1404 = vmatpush1.bf16.msra.mxu0 0
        %1405 = vmatprep.subr.bf16.mxu0 0
        %1406 = vmatpush1.bf16.msra.mxu0 0
        %1407 = vmatprep.mubr.bf16.mxu0 0
        %1408 = vmatmul.mubr.bf16.gmra.mrb[0].mxu0 %v1373
        %v1409 = vpop.f32.mrb[0].mxu0
        %v1410 = vadd.f32 0.0, %v1409
        %v1411 = vpop.f32.mrb[0].mxu0
        %v1412 = vpop.f32.mrb[0].mxu0
        %v1413 = vpop.f32.mrb[0].mxu0
        %1414 = vdwg.mxu0
        %1415 = vrot.lane.b32.xlu0 %v941, 116
        %v1416 = vpop.permute.xlu0 %1415
        %1417 = vrot.lane.b32.xlu0 %v1086, 116
        %v1418 = vpop.permute.xlu0 %1417
        %v1420 = vsel %vm1087, %v1416, 0
        %v1423 = vsel %vm1087, %v1418, 0
        %1425 = vmatprep.subr.bf16.mxu0 0
        %1426 = vmatpush1.bf16.xpose.msra.mxu0 %v1423
        %1427 = vmatprep.subr.bf16.mxu0 0
        %1428 = vmatpush1.bf16.xpose.msra.mxu0 0
        %1429 = vmatprep.subr.bf16.mxu0 0
        %1430 = vmatpush1.bf16.xpose.msra.mxu0 0
        %1431 = vmatprep.subr.bf16.mxu0 0
        %1432 = vmatpush1.bf16.xpose.msra.mxu0 0
        %1433 = vmatprep.subr.bf16.mxu0 0
        %1434 = vmatpush1.bf16.xpose.msra.mxu0 0
        %1435 = vmatprep.subr.bf16.mxu0 0
        %1436 = vmatpush1.bf16.xpose.msra.mxu0 0
        %1437 = vmatprep.subr.bf16.mxu0 0
        %1438 = vmatpush1.bf16.xpose.msra.mxu0 0
        %1439 = vmatprep.subr.bf16.mxu0 0
        %1440 = vmatpush1.bf16.xpose.msra.mxu0 0
        %1441 = vmatprep.subr.bf16.mxu0 0
        %1442 = vmatpush1.bf16.xpose.msra.mxu0 0
        %1443 = vmatprep.subr.bf16.mxu0 0
        %1444 = vmatpush1.bf16.xpose.msra.mxu0 0
        %1445 = vmatprep.subr.bf16.mxu0 0
        %1446 = vmatpush1.bf16.xpose.msra.mxu0 0
        %1447 = vmatprep.subr.bf16.mxu0 0
        %1448 = vmatpush1.bf16.xpose.msra.mxu0 0
        %1449 = vmatprep.subr.bf16.mxu0 0
        %1450 = vmatpush1.bf16.xpose.msra.mxu0 0
        %1451 = vmatprep.subr.bf16.mxu0 0
        %1452 = vmatpush1.bf16.xpose.msra.mxu0 0
        %1453 = vmatprep.subr.bf16.mxu0 0
        %1454 = vmatpush1.bf16.xpose.msra.mxu0 0
        %1455 = vmatprep.subr.bf16.mxu0 0
        %1456 = vmatpush1.bf16.xpose.msra.mxu0 0
        %1457 = vmatprep.mubr.bf16.mxu0 0
        %1458 = vmatmul.mubr.bf16.gmra.mrb[0].mxu0 %v1420
        %v1459 = vpop.f32.mrb[0].mxu0
        %v1460 = vadd.f32 0.0, %v1459
        %v1461 = vpop.f32.mrb[0].mxu0
        %v1462 = vpop.f32.mrb[0].mxu0
        %v1463 = vpop.f32.mrb[0].mxu0
        %1464 = vdwg.mxu0
        %v1465 = vmul.f32 %v1460, 0.5
        %v1466 = vsel %vm1135, %v1465, -inf
        %1467 = vmax.xlane.f32.xlu0 %v1466
        %v1468 = vpop.xlane.xlu0 %1467
        %v1469 = vsub.f32 %v1465, %v1468
        %v1470 = vmul.f32 %v1469, 1.442695
        %v1471 = vpow.pop %v1470
        %v1472 = vsel %vm1135, %v1471, 0.0
        %1473 = vadd.xlane.f32.xlu0 %v1472
        %v1474 = vpop.xlane.xlu0 %1473
        %v1475 = vrcp.pop %v1474
        %v1476 = vmul.f32 %v1471, %v1475
        %v1477 = vpack.c.bf16 %v1476, %v1476
        %1478 = vrot.lane.b32.xlu0 %v1086, 84
        %v1479 = vpop.permute.xlu0 %1478
        %v1482 = vsel %vm1152, %v1477, 0
        %1484 = vmatprep.subr.bf16.mxu0 0
        %1485 = vmatpush1.bf16.msra.mxu0 %v1479
        %1486 = vmatprep.subr.bf16.mxu0 0
        %1487 = vmatpush1.bf16.msra.mxu0 0
        %1488 = vmatprep.subr.bf16.mxu0 0
        %1489 = vmatpush1.bf16.msra.mxu0 0
        %1490 = vmatprep.subr.bf16.mxu0 0
        %1491 = vmatpush1.bf16.msra.mxu0 0
        %1492 = vmatprep.subr.bf16.mxu0 0
        %1493 = vmatpush1.bf16.msra.mxu0 0
        %1494 = vmatprep.subr.bf16.mxu0 0
        %1495 = vmatpush1.bf16.msra.mxu0 0
        %1496 = vmatprep.subr.bf16.mxu0 0
        %1497 = vmatpush1.bf16.msra.mxu0 0
        %1498 = vmatprep.subr.bf16.mxu0 0
        %1499 = vmatpush1.bf16.msra.mxu0 0
        %1500 = vmatprep.subr.bf16.mxu0 0
        %1501 = vmatpush1.bf16.msra.mxu0 0
        %1502 = vmatprep.subr.bf16.mxu0 0
        %1503 = vmatpush1.bf16.msra.mxu0 0
        %1504 = vmatprep.subr.bf16.mxu0 0
        %1505 = vmatpush1.bf16.msra.mxu0 0
        %1506 = vmatprep.subr.bf16.mxu0 0
        %1507 = vmatpush1.bf16.msra.mxu0 0
        %1508 = vmatprep.subr.bf16.mxu0 0
        %1509 = vmatpush1.bf16.msra.mxu0 0
        %1510 = vmatprep.subr.bf16.mxu0 0
        %1511 = vmatpush1.bf16.msra.mxu0 0
        %1512 = vmatprep.subr.bf16.mxu0 0
        %1513 = vmatpush1.bf16.msra.mxu0 0
        %1514 = vmatprep.subr.bf16.mxu0 0
        %1515 = vmatpush1.bf16.msra.mxu0 0
        %1516 = vmatprep.mubr.bf16.mxu0 0
        %1517 = vmatmul.mubr.bf16.gmra.mrb[0].mxu0 %v1482
        %v1518 = vpop.f32.mrb[0].mxu0
        %v1519 = vadd.f32 0.0, %v1518
        %v1520 = vpop.f32.mrb[0].mxu0
        %v1521 = vpop.f32.mrb[0].mxu0
        %v1522 = vpop.f32.mrb[0].mxu0
        %1523 = vdwg.mxu0
        %1524 = vrot.lane.b32.xlu0 %v941, 112
        %v1525 = vpop.permute.xlu0 %1524
        %1526 = vrot.lane.b32.xlu0 %v1086, 112
        %v1527 = vpop.permute.xlu0 %1526
        %v1529 = vsel %vm1087, %v1525, 0
        %v1532 = vsel %vm1087, %v1527, 0
        %1534 = vmatprep.subr.bf16.mxu0 0
        %1535 = vmatpush1.bf16.xpose.msra.mxu0 %v1532
        %1536 = vmatprep.subr.bf16.mxu0 0
        %1537 = vmatpush1.bf16.xpose.msra.mxu0 0
        %1538 = vmatprep.subr.bf16.mxu0 0
        %1539 = vmatpush1.bf16.xpose.msra.mxu0 0
        %1540 = vmatprep.subr.bf16.mxu0 0
        %1541 = vmatpush1.bf16.xpose.msra.mxu0 0
        %1542 = vmatprep.subr.bf16.mxu0 0
        %1543 = vmatpush1.bf16.xpose.msra.mxu0 0
        %1544 = vmatprep.subr.bf16.mxu0 0
        %1545 = vmatpush1.bf16.xpose.msra.mxu0 0
        %1546 = vmatprep.subr.bf16.mxu0 0
        %1547 = vmatpush1.bf16.xpose.msra.mxu0 0
        %1548 = vmatprep.subr.bf16.mxu0 0
        %1549 = vmatpush1.bf16.xpose.msra.mxu0 0
        %1550 = vmatprep.subr.bf16.mxu0 0
        %1551 = vmatpush1.bf16.xpose.msra.mxu0 0
        %1552 = vmatprep.subr.bf16.mxu0 0
        %1553 = vmatpush1.bf16.xpose.msra.mxu0 0
        %1554 = vmatprep.subr.bf16.mxu0 0
        %1555 = vmatpush1.bf16.xpose.msra.mxu0 0
        %1556 = vmatprep.subr.bf16.mxu0 0
        %1557 = vmatpush1.bf16.xpose.msra.mxu0 0
        %1558 = vmatprep.subr.bf16.mxu0 0
        %1559 = vmatpush1.bf16.xpose.msra.mxu0 0
        %1560 = vmatprep.subr.bf16.mxu0 0
        %1561 = vmatpush1.bf16.xpose.msra.mxu0 0
        %1562 = vmatprep.subr.bf16.mxu0 0
        %1563 = vmatpush1.bf16.xpose.msra.mxu0 0
        %1564 = vmatprep.subr.bf16.mxu0 0
        %1565 = vmatpush1.bf16.xpose.msra.mxu0 0
        %1566 = vmatprep.mubr.bf16.mxu0 0
        %1567 = vmatmul.mubr.bf16.gmra.mrb[0].mxu0 %v1529
        %v1568 = vpop.f32.mrb[0].mxu0
        %v1569 = vadd.f32 0.0, %v1568
        %v1570 = vpop.f32.mrb[0].mxu0
        %v1571 = vpop.f32.mrb[0].mxu0
        %v1572 = vpop.f32.mrb[0].mxu0
        %1573 = vdwg.mxu0
        %v1574 = vmul.f32 %v1569, 0.5
        %v1575 = vsel %vm1135, %v1574, -inf
        %1576 = vmax.xlane.f32.xlu0 %v1575
        %v1577 = vpop.xlane.xlu0 %1576
        %v1578 = vsub.f32 %v1574, %v1577
        %v1579 = vmul.f32 %v1578, 1.442695
        %v1580 = vpow.pop %v1579
        %v1581 = vsel %vm1135, %v1580, 0.0
        %1582 = vadd.xlane.f32.xlu0 %v1581
        %v1583 = vpop.xlane.xlu0 %1582
        %v1584 = vrcp.pop %v1583
        %v1585 = vmul.f32 %v1580, %v1584
        %v1586 = vpack.c.bf16 %v1585, %v1585
        %1587 = vrot.lane.b32.xlu0 %v1086, 80
        %v1588 = vpop.permute.xlu0 %1587
        %v1591 = vsel %vm1152, %v1586, 0
        %1593 = vmatprep.subr.bf16.mxu0 0
        %1594 = vmatpush1.bf16.msra.mxu0 %v1588
        %1595 = vmatprep.subr.bf16.mxu0 0
        %1596 = vmatpush1.bf16.msra.mxu0 0
        %1597 = vmatprep.subr.bf16.mxu0 0
        %1598 = vmatpush1.bf16.msra.mxu0 0
        %1599 = vmatprep.subr.bf16.mxu0 0
        %1600 = vmatpush1.bf16.msra.mxu0 0
        %1601 = vmatprep.subr.bf16.mxu0 0
        %1602 = vmatpush1.bf16.msra.mxu0 0
        %1603 = vmatprep.subr.bf16.mxu0 0
        %1604 = vmatpush1.bf16.msra.mxu0 0
        %1605 = vmatprep.subr.bf16.mxu0 0
        %1606 = vmatpush1.bf16.msra.mxu0 0
        %1607 = vmatprep.subr.bf16.mxu0 0
        %1608 = vmatpush1.bf16.msra.mxu0 0
        %1609 = vmatprep.subr.bf16.mxu0 0
        %1610 = vmatpush1.bf16.msra.mxu0 0
        %1611 = vmatprep.subr.bf16.mxu0 0
        %1612 = vmatpush1.bf16.msra.mxu0 0
        %1613 = vmatprep.subr.bf16.mxu0 0
        %1614 = vmatpush1.bf16.msra.mxu0 0
        %1615 = vmatprep.subr.bf16.mxu0 0
        %1616 = vmatpush1.bf16.msra.mxu0 0
        %1617 = vmatprep.subr.bf16.mxu0 0
        %1618 = vmatpush1.bf16.msra.mxu0 0
        %1619 = vmatprep.subr.bf16.mxu0 0
        %1620 = vmatpush1.bf16.msra.mxu0 0
        %1621 = vmatprep.subr.bf16.mxu0 0
        %1622 = vmatpush1.bf16.msra.mxu0 0
        %1623 = vmatprep.subr.bf16.mxu0 0
        %1624 = vmatpush1.bf16.msra.mxu0 0
        %1625 = vmatprep.mubr.bf16.mxu0 0
        %1626 = vmatmul.mubr.bf16.gmra.mrb[0].mxu0 %v1591
        %v1627 = vpop.f32.mrb[0].mxu0
        %v1628 = vadd.f32 0.0, %v1627
        %v1629 = vpop.f32.mrb[0].mxu0
        %v1630 = vpop.f32.mrb[0].mxu0
        %v1631 = vpop.f32.mrb[0].mxu0
        %1632 = vdwg.mxu0
        %1633 = vrot.lane.b32.xlu0 %v941, 108
        %v1634 = vpop.permute.xlu0 %1633
        %1635 = vrot.lane.b32.xlu0 %v1086, 108
        %v1636 = vpop.permute.xlu0 %1635
        %v1638 = vsel %vm1087, %v1634, 0
        %v1641 = vsel %vm1087, %v1636, 0
        %1643 = vmatprep.subr.bf16.mxu0 0
        %1644 = vmatpush1.bf16.xpose.msra.mxu0 %v1641
        %1645 = vmatprep.subr.bf16.mxu0 0
        %1646 = vmatpush1.bf16.xpose.msra.mxu0 0
        %1647 = vmatprep.subr.bf16.mxu0 0
        %1648 = vmatpush1.bf16.xpose.msra.mxu0 0
        %1649 = vmatprep.subr.bf16.mxu0 0
        %1650 = vmatpush1.bf16.xpose.msra.mxu0 0
        %1651 = vmatprep.subr.bf16.mxu0 0
        %1652 = vmatpush1.bf16.xpose.msra.mxu0 0
        %1653 = vmatprep.subr.bf16.mxu0 0
        %1654 = vmatpush1.bf16.xpose.msra.mxu0 0
        %1655 = vmatprep.subr.bf16.mxu0 0
        %1656 = vmatpush1.bf16.xpose.msra.mxu0 0
        %1657 = vmatprep.subr.bf16.mxu0 0
        %1658 = vmatpush1.bf16.xpose.msra.mxu0 0
        %1659 = vmatprep.subr.bf16.mxu0 0
        %1660 = vmatpush1.bf16.xpose.msra.mxu0 0
        %1661 = vmatprep.subr.bf16.mxu0 0
        %1662 = vmatpush1.bf16.xpose.msra.mxu0 0
        %1663 = vmatprep.subr.bf16.mxu0 0
        %1664 = vmatpush1.bf16.xpose.msra.mxu0 0
        %1665 = vmatprep.subr.bf16.mxu0 0
        %1666 = vmatpush1.bf16.xpose.msra.mxu0 0
        %1667 = vmatprep.subr.bf16.mxu0 0
        %1668 = vmatpush1.bf16.xpose.msra.mxu0 0
        %1669 = vmatprep.subr.bf16.mxu0 0
        %1670 = vmatpush1.bf16.xpose.msra.mxu0 0
        %1671 = vmatprep.subr.bf16.mxu0 0
        %1672 = vmatpush1.bf16.xpose.msra.mxu0 0
        %1673 = vmatprep.subr.bf16.mxu0 0
        %1674 = vmatpush1.bf16.xpose.msra.mxu0 0
        %1675 = vmatprep.mubr.bf16.mxu0 0
        %1676 = vmatmul.mubr.bf16.gmra.mrb[0].mxu0 %v1638
        %v1677 = vpop.f32.mrb[0].mxu0
        %v1678 = vadd.f32 0.0, %v1677
        %v1679 = vpop.f32.mrb[0].mxu0
        %v1680 = vpop.f32.mrb[0].mxu0
        %v1681 = vpop.f32.mrb[0].mxu0
        %1682 = vdwg.mxu0
        %v1683 = vmul.f32 %v1678, 0.5
        %v1684 = vsel %vm1135, %v1683, -inf
        %1685 = vmax.xlane.f32.xlu0 %v1684
        %v1686 = vpop.xlane.xlu0 %1685
        %v1687 = vsub.f32 %v1683, %v1686
        %v1688 = vmul.f32 %v1687, 1.442695
        %v1689 = vpow.pop %v1688
        %v1690 = vsel %vm1135, %v1689, 0.0
        %1691 = vadd.xlane.f32.xlu0 %v1690
        %v1692 = vpop.xlane.xlu0 %1691
        %v1693 = vrcp.pop %v1692
        %v1694 = vmul.f32 %v1689, %v1693
        %v1695 = vpack.c.bf16 %v1694, %v1694
        %1696 = vrot.lane.b32.xlu0 %v1086, 76
        %v1697 = vpop.permute.xlu0 %1696
        %v1700 = vsel %vm1152, %v1695, 0
        %1702 = vmatprep.subr.bf16.mxu0 0
        %1703 = vmatpush1.bf16.msra.mxu0 %v1697
        %1704 = vmatprep.subr.bf16.mxu0 0
        %1705 = vmatpush1.bf16.msra.mxu0 0
        %1706 = vmatprep.subr.bf16.mxu0 0
        %1707 = vmatpush1.bf16.msra.mxu0 0
        %1708 = vmatprep.subr.bf16.mxu0 0
        %1709 = vmatpush1.bf16.msra.mxu0 0
        %1710 = vmatprep.subr.bf16.mxu0 0
        %1711 = vmatpush1.bf16.msra.mxu0 0
        %1712 = vmatprep.subr.bf16.mxu0 0
        %1713 = vmatpush1.bf16.msra.mxu0 0
        %1714 = vmatprep.subr.bf16.mxu0 0
        %1715 = vmatpush1.bf16.msra.mxu0 0
        %1716 = vmatprep.subr.bf16.mxu0 0
        %1717 = vmatpush1.bf16.msra.mxu0 0
        %1718 = vmatprep.subr.bf16.mxu0 0
        %1719 = vmatpush1.bf16.msra.mxu0 0
        %1720 = vmatprep.subr.bf16.mxu0 0
        %1721 = vmatpush1.bf16.msra.mxu0 0
        %1722 = vmatprep.subr.bf16.mxu0 0
        %1723 = vmatpush1.bf16.msra.mxu0 0
        %1724 = vmatprep.subr.bf16.mxu0 0
        %1725 = vmatpush1.bf16.msra.mxu0 0
        %1726 = vmatprep.subr.bf16.mxu0 0
        %1727 = vmatpush1.bf16.msra.mxu0 0
        %1728 = vmatprep.subr.bf16.mxu0 0
        %1729 = vmatpush1.bf16.msra.mxu0 0
        %1730 = vmatprep.subr.bf16.mxu0 0
        %1731 = vmatpush1.bf16.msra.mxu0 0
        %1732 = vmatprep.subr.bf16.mxu0 0
        %1733 = vmatpush1.bf16.msra.mxu0 0
        %1734 = vmatprep.mubr.bf16.mxu0 0
        %1735 = vmatmul.mubr.bf16.gmra.mrb[0].mxu0 %v1700
        %v1736 = vpop.f32.mrb[0].mxu0
        %v1737 = vadd.f32 0.0, %v1736
        %v1738 = vpop.f32.mrb[0].mxu0
        %v1739 = vpop.f32.mrb[0].mxu0
        %v1740 = vpop.f32.mrb[0].mxu0
        %1741 = vdwg.mxu0
        %1742 = vrot.lane.b32.xlu0 %v941, 104
        %v1743 = vpop.permute.xlu0 %1742
        %1744 = vrot.lane.b32.xlu0 %v1086, 104
        %v1745 = vpop.permute.xlu0 %1744
        %v1747 = vsel %vm1087, %v1743, 0
        %v1750 = vsel %vm1087, %v1745, 0
        %1752 = vmatprep.subr.bf16.mxu0 0
        %1753 = vmatpush1.bf16.xpose.msra.mxu0 %v1750
        %1754 = vmatprep.subr.bf16.mxu0 0
        %1755 = vmatpush1.bf16.xpose.msra.mxu0 0
        %1756 = vmatprep.subr.bf16.mxu0 0
        %1757 = vmatpush1.bf16.xpose.msra.mxu0 0
        %1758 = vmatprep.subr.bf16.mxu0 0
        %1759 = vmatpush1.bf16.xpose.msra.mxu0 0
        %1760 = vmatprep.subr.bf16.mxu0 0
        %1761 = vmatpush1.bf16.xpose.msra.mxu0 0
        %1762 = vmatprep.subr.bf16.mxu0 0
        %1763 = vmatpush1.bf16.xpose.msra.mxu0 0
        %1764 = vmatprep.subr.bf16.mxu0 0
        %1765 = vmatpush1.bf16.xpose.msra.mxu0 0
        %1766 = vmatprep.subr.bf16.mxu0 0
        %1767 = vmatpush1.bf16.xpose.msra.mxu0 0
        %1768 = vmatprep.subr.bf16.mxu0 0
        %1769 = vmatpush1.bf16.xpose.msra.mxu0 0
        %1770 = vmatprep.subr.bf16.mxu0 0
        %1771 = vmatpush1.bf16.xpose.msra.mxu0 0
        %1772 = vmatprep.subr.bf16.mxu0 0
        %1773 = vmatpush1.bf16.xpose.msra.mxu0 0
        %1774 = vmatprep.subr.bf16.mxu0 0
        %1775 = vmatpush1.bf16.xpose.msra.mxu0 0
        %1776 = vmatprep.subr.bf16.mxu0 0
        %1777 = vmatpush1.bf16.xpose.msra.mxu0 0
        %1778 = vmatprep.subr.bf16.mxu0 0
        %1779 = vmatpush1.bf16.xpose.msra.mxu0 0
        %1780 = vmatprep.subr.bf16.mxu0 0
        %1781 = vmatpush1.bf16.xpose.msra.mxu0 0
        %1782 = vmatprep.subr.bf16.mxu0 0
        %1783 = vmatpush1.bf16.xpose.msra.mxu0 0
        %1784 = vmatprep.mubr.bf16.mxu0 0
        %1785 = vmatmul.mubr.bf16.gmra.mrb[0].mxu0 %v1747
        %v1786 = vpop.f32.mrb[0].mxu0
        %v1787 = vadd.f32 0.0, %v1786
        %v1788 = vpop.f32.mrb[0].mxu0
        %v1789 = vpop.f32.mrb[0].mxu0
        %v1790 = vpop.f32.mrb[0].mxu0
        %1791 = vdwg.mxu0
        %v1792 = vmul.f32 %v1787, 0.5
        %v1793 = vsel %vm1135, %v1792, -inf
        %1794 = vmax.xlane.f32.xlu0 %v1793
        %v1795 = vpop.xlane.xlu0 %1794
        %v1796 = vsub.f32 %v1792, %v1795
        %v1797 = vmul.f32 %v1796, 1.442695
        %v1798 = vpow.pop %v1797
        %v1799 = vsel %vm1135, %v1798, 0.0
        %1800 = vadd.xlane.f32.xlu0 %v1799
        %v1801 = vpop.xlane.xlu0 %1800
        %v1802 = vrcp.pop %v1801
        %v1803 = vmul.f32 %v1798, %v1802
        %v1804 = vpack.c.bf16 %v1803, %v1803
        %1805 = vrot.lane.b32.xlu0 %v1086, 72
        %v1806 = vpop.permute.xlu0 %1805
        %v1809 = vsel %vm1152, %v1804, 0
        %1811 = vmatprep.subr.bf16.mxu0 0
        %1812 = vmatpush1.bf16.msra.mxu0 %v1806
        %1813 = vmatprep.subr.bf16.mxu0 0
        %1814 = vmatpush1.bf16.msra.mxu0 0
        %1815 = vmatprep.subr.bf16.mxu0 0
        %1816 = vmatpush1.bf16.msra.mxu0 0
        %1817 = vmatprep.subr.bf16.mxu0 0
        %1818 = vmatpush1.bf16.msra.mxu0 0
        %1819 = vmatprep.subr.bf16.mxu0 0
        %1820 = vmatpush1.bf16.msra.mxu0 0
        %1821 = vmatprep.subr.bf16.mxu0 0
        %1822 = vmatpush1.bf16.msra.mxu0 0
        %1823 = vmatprep.subr.bf16.mxu0 0
        %1824 = vmatpush1.bf16.msra.mxu0 0
        %1825 = vmatprep.subr.bf16.mxu0 0
        %1826 = vmatpush1.bf16.msra.mxu0 0
        %1827 = vmatprep.subr.bf16.mxu0 0
        %1828 = vmatpush1.bf16.msra.mxu0 0
        %1829 = vmatprep.subr.bf16.mxu0 0
        %1830 = vmatpush1.bf16.msra.mxu0 0
        %1831 = vmatprep.subr.bf16.mxu0 0
        %1832 = vmatpush1.bf16.msra.mxu0 0
        %1833 = vmatprep.subr.bf16.mxu0 0
        %1834 = vmatpush1.bf16.msra.mxu0 0
        %1835 = vmatprep.subr.bf16.mxu0 0
        %1836 = vmatpush1.bf16.msra.mxu0 0
        %1837 = vmatprep.subr.bf16.mxu0 0
        %1838 = vmatpush1.bf16.msra.mxu0 0
        %1839 = vmatprep.subr.bf16.mxu0 0
        %1840 = vmatpush1.bf16.msra.mxu0 0
        %1841 = vmatprep.subr.bf16.mxu0 0
        %1842 = vmatpush1.bf16.msra.mxu0 0
        %1843 = vmatprep.mubr.bf16.mxu0 0
        %1844 = vmatmul.mubr.bf16.gmra.mrb[0].mxu0 %v1809
        %v1845 = vpop.f32.mrb[0].mxu0
        %v1846 = vadd.f32 0.0, %v1845
        %v1847 = vpop.f32.mrb[0].mxu0
        %v1848 = vpop.f32.mrb[0].mxu0
        %v1849 = vpop.f32.mrb[0].mxu0
        %1850 = vdwg.mxu0
        %1851 = vrot.lane.b32.xlu0 %v941, 100
        %v1852 = vpop.permute.xlu0 %1851
        %1853 = vrot.lane.b32.xlu0 %v1086, 100
        %v1854 = vpop.permute.xlu0 %1853
        %v1856 = vsel %vm1087, %v1852, 0
        %v1859 = vsel %vm1087, %v1854, 0
        %1861 = vmatprep.subr.bf16.mxu0 0
        %1862 = vmatpush1.bf16.xpose.msra.mxu0 %v1859
        %1863 = vmatprep.subr.bf16.mxu0 0
        %1864 = vmatpush1.bf16.xpose.msra.mxu0 0
        %1865 = vmatprep.subr.bf16.mxu0 0
        %1866 = vmatpush1.bf16.xpose.msra.mxu0 0
        %1867 = vmatprep.subr.bf16.mxu0 0
        %1868 = vmatpush1.bf16.xpose.msra.mxu0 0
        %1869 = vmatprep.subr.bf16.mxu0 0
        %1870 = vmatpush1.bf16.xpose.msra.mxu0 0
        %1871 = vmatprep.subr.bf16.mxu0 0
        %1872 = vmatpush1.bf16.xpose.msra.mxu0 0
        %1873 = vmatprep.subr.bf16.mxu0 0
        %1874 = vmatpush1.bf16.xpose.msra.mxu0 0
        %1875 = vmatprep.subr.bf16.mxu0 0
        %1876 = vmatpush1.bf16.xpose.msra.mxu0 0
        %1877 = vmatprep.subr.bf16.mxu0 0
        %1878 = vmatpush1.bf16.xpose.msra.mxu0 0
        %1879 = vmatprep.subr.bf16.mxu0 0
        %1880 = vmatpush1.bf16.xpose.msra.mxu0 0
        %1881 = vmatprep.subr.bf16.mxu0 0
        %1882 = vmatpush1.bf16.xpose.msra.mxu0 0
        %1883 = vmatprep.subr.bf16.mxu0 0
        %1884 = vmatpush1.bf16.xpose.msra.mxu0 0
        %1885 = vmatprep.subr.bf16.mxu0 0
        %1886 = vmatpush1.bf16.xpose.msra.mxu0 0
        %1887 = vmatprep.subr.bf16.mxu0 0
        %1888 = vmatpush1.bf16.xpose.msra.mxu0 0
        %1889 = vmatprep.subr.bf16.mxu0 0
        %1890 = vmatpush1.bf16.xpose.msra.mxu0 0
        %1891 = vmatprep.subr.bf16.mxu0 0
        %1892 = vmatpush1.bf16.xpose.msra.mxu0 0
        %1893 = vmatprep.mubr.bf16.mxu0 0
        %1894 = vmatmul.mubr.bf16.gmra.mrb[0].mxu0 %v1856
        %v1895 = vpop.f32.mrb[0].mxu0
        %v1896 = vadd.f32 0.0, %v1895
        %v1897 = vpop.f32.mrb[0].mxu0
        %v1898 = vpop.f32.mrb[0].mxu0
        %v1899 = vpop.f32.mrb[0].mxu0
        %1900 = vdwg.mxu0
        %v1901 = vmul.f32 %v1896, 0.5
        %v1902 = vsel %vm1135, %v1901, -inf
        %1903 = vmax.xlane.f32.xlu0 %v1902
        %v1904 = vpop.xlane.xlu0 %1903
        %v1905 = vsub.f32 %v1901, %v1904
        %v1906 = vmul.f32 %v1905, 1.442695
        %v1907 = vpow.pop %v1906
        %v1908 = vsel %vm1135, %v1907, 0.0
        %1909 = vadd.xlane.f32.xlu0 %v1908
        %v1910 = vpop.xlane.xlu0 %1909
        %v1911 = vrcp.pop %v1910
        %v1912 = vmul.f32 %v1907, %v1911
        %v1913 = vpack.c.bf16 %v1912, %v1912
        %1914 = vrot.lane.b32.xlu0 %v1086, 68
        %v1915 = vpop.permute.xlu0 %1914
        %v1918 = vsel %vm1152, %v1913, 0
        %1920 = vmatprep.subr.bf16.mxu0 0
        %1921 = vmatpush1.bf16.msra.mxu0 %v1915
        %1922 = vmatprep.subr.bf16.mxu0 0
        %1923 = vmatpush1.bf16.msra.mxu0 0
        %1924 = vmatprep.subr.bf16.mxu0 0
        %1925 = vmatpush1.bf16.msra.mxu0 0
        %1926 = vmatprep.subr.bf16.mxu0 0
        %1927 = vmatpush1.bf16.msra.mxu0 0
        %1928 = vmatprep.subr.bf16.mxu0 0
        %1929 = vmatpush1.bf16.msra.mxu0 0
        %1930 = vmatprep.subr.bf16.mxu0 0
        %1931 = vmatpush1.bf16.msra.mxu0 0
        %1932 = vmatprep.subr.bf16.mxu0 0
        %1933 = vmatpush1.bf16.msra.mxu0 0
        %1934 = vmatprep.subr.bf16.mxu0 0
        %1935 = vmatpush1.bf16.msra.mxu0 0
        %1936 = vmatprep.subr.bf16.mxu0 0
        %1937 = vmatpush1.bf16.msra.mxu0 0
        %1938 = vmatprep.subr.bf16.mxu0 0
        %1939 = vmatpush1.bf16.msra.mxu0 0
        %1940 = vmatprep.subr.bf16.mxu0 0
        %1941 = vmatpush1.bf16.msra.mxu0 0
        %1942 = vmatprep.subr.bf16.mxu0 0
        %1943 = vmatpush1.bf16.msra.mxu0 0
        %1944 = vmatprep.subr.bf16.mxu0 0
        %1945 = vmatpush1.bf16.msra.mxu0 0
        %1946 = vmatprep.subr.bf16.mxu0 0
        %1947 = vmatpush1.bf16.msra.mxu0 0
        %1948 = vmatprep.subr.bf16.mxu0 0
        %1949 = vmatpush1.bf16.msra.mxu0 0
        %1950 = vmatprep.subr.bf16.mxu0 0
        %1951 = vmatpush1.bf16.msra.mxu0 0
        %1952 = vmatprep.mubr.bf16.mxu0 0
        %1953 = vmatmul.mubr.bf16.gmra.mrb[0].mxu0 %v1918
        %v1954 = vpop.f32.mrb[0].mxu0
        %v1955 = vadd.f32 0.0, %v1954
        %v1956 = vpop.f32.mrb[0].mxu0
        %v1957 = vpop.f32.mrb[0].mxu0
        %v1958 = vpop.f32.mrb[0].mxu0
        %1959 = vdwg.mxu0
        %1961 = vrot.lane.b32.xlu0 %v1301, 4
        %v1962 = vpop.permute.xlu0 %1961
        %1965 = vrot.lane.b32.xlu0 %v1410, 8
        %v1966 = vpop.permute.xlu0 %1965
        %1969 = vrot.lane.b32.xlu0 %v1519, 12
        %v1970 = vpop.permute.xlu0 %1969
        %1973 = vrot.lane.b32.xlu0 %v1628, 16
        %v1974 = vpop.permute.xlu0 %1973
        %1977 = vrot.lane.b32.xlu0 %v1737, 20
        %v1978 = vpop.permute.xlu0 %1977
        %1981 = vrot.lane.b32.xlu0 %v1846, 24
        %v1982 = vpop.permute.xlu0 %1981
        %1985 = vrot.lane.b32.xlu0 %v1955, 28
        %v1986 = vpop.permute.xlu0 %1985
        %v1988 = vsel %vm1087, %v1191, %v1962
        %vm1989 = vcmask 64512
        %v1990 = vsel %vm1989, %v1988, %v1966
        %vm1991 = vcmask 97280
        %v1992 = vsel %vm1991, %v1990, %v1970
        %v1993 = vsel %vm1152, %v1992, %v1974
        %vm1994 = vcmask 162816
        %v1995 = vsel %vm1994, %v1993, %v1978
        %vm1996 = vcmask 195584
        %v1997 = vsel %vm1996, %v1995, %v1982
        %vm1998 = vcmask 228352
        %v1999 = vsel %vm1998, %v1997, %v1986
        %v2000 = vpack.c.bf16 %v1999, %v1999
        %v2002 = vlaneseq
        %v2003 = vshrl.u32 %v2002, 7
        %v2004 = vsub.s32 0, %v2003
        %v2005 = vrot.slane %v816, %v2004
        %v2011 = vunpack.c.l.b16 %v812
        %v2012 = vunpack.c.l.b16 %v813
        %v2013 = vunpack.c.l.b16 %v814
        %v2014 = vunpack.c.l.b16 %v815
        %v2015 = vpack.c.b16 %v2012, %v2011
        %v2016 = vpack.c.b16 %v2014, %v2013
        %v2020 = vsel %vm897, %v2000, 0
        %2022 = vmatprep.subr.bf16.mxu0 0
        %2023 = vmatpush1.bf16.msra.mxu0 %v2015
        %2024 = vmatprep.subr.bf16.mxu0 0
        %2025 = vmatpush1.bf16.msra.mxu0 %v2016
        %2026 = vmatprep.subr.bf16.mxu0 0
        %2027 = vmatpush1.bf16.msra.mxu0 0
        %2028 = vmatprep.subr.bf16.mxu0 0
        %2029 = vmatpush1.bf16.msra.mxu0 0
        %2030 = vmatprep.subr.bf16.mxu0 0
        %2031 = vmatpush1.bf16.msra.mxu0 0
        %2032 = vmatprep.subr.bf16.mxu0 0
        %2033 = vmatpush1.bf16.msra.mxu0 0
        %2034 = vmatprep.subr.bf16.mxu0 0
        %2035 = vmatpush1.bf16.msra.mxu0 0
        %2036 = vmatprep.subr.bf16.mxu0 0
        %2037 = vmatpush1.bf16.msra.mxu0 0
        %2038 = vmatprep.subr.bf16.mxu0 0
        %2039 = vmatpush1.bf16.msra.mxu0 0
        %2040 = vmatprep.subr.bf16.mxu0 0
        %2041 = vmatpush1.bf16.msra.mxu0 0
        %2042 = vmatprep.subr.bf16.mxu0 0
        %2043 = vmatpush1.bf16.msra.mxu0 0
        %2044 = vmatprep.subr.bf16.mxu0 0
        %2045 = vmatpush1.bf16.msra.mxu0 0
        %2046 = vmatprep.subr.bf16.mxu0 0
        %2047 = vmatpush1.bf16.msra.mxu0 0
        %2048 = vmatprep.subr.bf16.mxu0 0
        %2049 = vmatpush1.bf16.msra.mxu0 0
        %2050 = vmatprep.subr.bf16.mxu0 0
        %2051 = vmatpush1.bf16.msra.mxu0 0
        %2052 = vmatprep.subr.bf16.mxu0 0
        %2053 = vmatpush1.bf16.msra.mxu0 0
        %2054 = vmatprep.mubr.bf16.mxu0 0
        %2055 = vmatmul.mubr.bf16.gmra.mrb[0].mxu0 %v2020
        %v2056 = vpop.f32.mrb[0].mxu0
        %v2057 = vadd.f32 %v2005, %v2056
        %v2058 = vpop.f32.mrb[0].mxu0
        %v2059 = vpop.f32.mrb[0].mxu0
        %v2060 = vpop.f32.mrb[0].mxu0
        %2061 = vdwg.mxu0
        %v2062 = vadd.f32 %v872, %v2057
        %v2063 = vsel %vm844, %v2062, 0.0
        %2064 = vadd.xlane.f32.xlu0 %v2063
        %v2065 = vpop.xlane.xlu0 %2064
        %v2066 = vmul.f32 %v2065, %v848
        %v2067 = vsub.f32 %v2062, %v2066
        %v2068 = vmul.f32 %v2067, %v2067
        %v2069 = vsel %vm844, %v2068, 0.0
        %2070 = vadd.xlane.f32.xlu0 %v2069
        %v2071 = vpop.xlane.xlu0 %2070
        %v2072 = vmul.f32 %v2071, %v848
        %v2073 = vadd.f32 %v2072, 1e-05
        %v2074 = vrsqrt.pop %v2073
        %v2075 = vmul.f32 %v2067, %v2074
        %v2077 = vlaneseq
        %v2078 = vshrl.u32 %v2077, 7
        %v2079 = vsub.s32 0, %v2078
        %v2080 = vrot.slane %v831, %v2079
        %v2082 = vmul.f32 %v2075, %v2080
        %v2084 = vlaneseq
        %v2085 = vshrl.u32 %v2084, 7
        %v2086 = vsub.s32 0, %v2085
        %v2087 = vrot.slane %v832, %v2086
        %v2089 = vadd.f32 %v2082, %v2087
        %v2090 = vpack.c.bf16 %v2089, %v2089
        %v2092 = vlaneseq
        %v2093 = vshrl.u32 %v2092, 7
        %v2094 = vsub.s32 0, %v2093
        %v2095 = vrot.slane %v821, %v2094
        %v2101 = vunpack.c.l.b16 %v817
        %v2102 = vunpack.c.l.b16 %v818
        %v2103 = vunpack.c.l.b16 %v819
        %v2104 = vunpack.c.l.b16 %v820
        %v2105 = vpack.c.b16 %v2102, %v2101
        %v2106 = vpack.c.b16 %v2104, %v2103
        %v2110 = vsel %vm897, %v2090, 0
        %2112 = vmatprep.subr.bf16.mxu0 0
        %2113 = vmatpush1.bf16.msra.mxu0 %v2105
        %2114 = vmatprep.subr.bf16.mxu0 0
        %2115 = vmatpush1.bf16.msra.mxu0 %v2106
        %2116 = vmatprep.subr.bf16.mxu0 0
        %2117 = vmatpush1.bf16.msra.mxu0 0
        %2118 = vmatprep.subr.bf16.mxu0 0
        %2119 = vmatpush1.bf16.msra.mxu0 0
        %2120 = vmatprep.subr.bf16.mxu0 0
        %2121 = vmatpush1.bf16.msra.mxu0 0
        %2122 = vmatprep.subr.bf16.mxu0 0
        %2123 = vmatpush1.bf16.msra.mxu0 0
        %2124 = vmatprep.subr.bf16.mxu0 0
        %2125 = vmatpush1.bf16.msra.mxu0 0
        %2126 = vmatprep.subr.bf16.mxu0 0
        %2127 = vmatpush1.bf16.msra.mxu0 0
        %2128 = vmatprep.subr.bf16.mxu0 0
        %2129 = vmatpush1.bf16.msra.mxu0 0
        %2130 = vmatprep.subr.bf16.mxu0 0
        %2131 = vmatpush1.bf16.msra.mxu0 0
        %2132 = vmatprep.subr.bf16.mxu0 0
        %2133 = vmatpush1.bf16.msra.mxu0 0
        %2134 = vmatprep.subr.bf16.mxu0 0
        %2135 = vmatpush1.bf16.msra.mxu0 0
        %2136 = vmatprep.subr.bf16.mxu0 0
        %2137 = vmatpush1.bf16.msra.mxu0 0
        %2138 = vmatprep.subr.bf16.mxu0 0
        %2139 = vmatpush1.bf16.msra.mxu0 0
        %2140 = vmatprep.subr.bf16.mxu0 0
        %2141 = vmatpush1.bf16.msra.mxu0 0
        %2142 = vmatprep.subr.bf16.mxu0 0
        %2143 = vmatpush1.bf16.msra.mxu0 0
        %2144 = vmatprep.mubr.bf16.mxu0 0
        %2145 = vmatmul.mubr.bf16.gmra.mrb[0].mxu0 %v2110
        %v2146 = vpop.f32.mrb[0].mxu0
        %v2147 = vadd.f32 %v2095, %v2146
        %v2148 = vpop.f32.mrb[0].mxu0
        %v2149 = vpop.f32.mrb[0].mxu0
        %v2150 = vpop.f32.mrb[0].mxu0
        %2151 = vdwg.mxu0
        %v2152 = vmax.f32 %v2147, 0.0
        %v2153 = vpack.c.bf16 %v2152, %v2152
        %v2155 = vlaneseq
        %v2156 = vshrl.u32 %v2155, 7
        %v2157 = vsub.s32 0, %v2156
        %v2158 = vrot.slane %v830, %v2157
        %v2168 = vunpack.c.l.b16 %v822
        %v2169 = vunpack.c.l.b16 %v823
        %v2170 = vunpack.c.l.b16 %v824
        %v2171 = vunpack.c.l.b16 %v825
        %v2172 = vunpack.c.l.b16 %v826
        %v2173 = vunpack.c.l.b16 %v827
        %v2174 = vunpack.c.l.b16 %v828
        %v2175 = vunpack.c.l.b16 %v829
        %v2176 = vpack.c.b16 %v2169, %v2168
        %v2177 = vpack.c.b16 %v2171, %v2170
        %v2178 = vpack.c.b16 %v2173, %v2172
        %v2179 = vpack.c.b16 %v2175, %v2174
        %vm2184 = vcmask 523264
        %v2186 = vsel %vm2184, %v2153, 0
        %2188 = vmatprep.subr.bf16.mxu0 0
        %2189 = vmatpush1.bf16.msra.mxu0 %v2176
        %2190 = vmatprep.subr.bf16.mxu0 0
        %2191 = vmatpush1.bf16.msra.mxu0 %v2177
        %2192 = vmatprep.subr.bf16.mxu0 0
        %2193 = vmatpush1.bf16.msra.mxu0 %v2178
        %2194 = vmatprep.subr.bf16.mxu0 0
        %2195 = vmatpush1.bf16.msra.mxu0 %v2179
        %2196 = vmatprep.subr.bf16.mxu0 0
        %2197 = vmatpush1.bf16.msra.mxu0 0
        %2198 = vmatprep.subr.bf16.mxu0 0
        %2199 = vmatpush1.bf16.msra.mxu0 0
        %2200 = vmatprep.subr.bf16.mxu0 0
        %2201 = vmatpush1.bf16.msra.mxu0 0
        %2202 = vmatprep.subr.bf16.mxu0 0
        %2203 = vmatpush1.bf16.msra.mxu0 0
        %2204 = vmatprep.subr.bf16.mxu0 0
        %2205 = vmatpush1.bf16.msra.mxu0 0
        %2206 = vmatprep.subr.bf16.mxu0 0
        %2207 = vmatpush1.bf16.msra.mxu0 0
        %2208 = vmatprep.subr.bf16.mxu0 0
        %2209 = vmatpush1.bf16.msra.mxu0 0
        %2210 = vmatprep.subr.bf16.mxu0 0
        %2211 = vmatpush1.bf16.msra.mxu0 0
        %2212 = vmatprep.subr.bf16.mxu0 0
        %2213 = vmatpush1.bf16.msra.mxu0 0
        %2214 = vmatprep.subr.bf16.mxu0 0
        %2215 = vmatpush1.bf16.msra.mxu0 0
        %2216 = vmatprep.subr.bf16.mxu0 0
        %2217 = vmatpush1.bf16.msra.mxu0 0
        %2218 = vmatprep.subr.bf16.mxu0 0
        %2219 = vmatpush1.bf16.msra.mxu0 0
        %2220 = vmatprep.mubr.bf16.mxu0 0
        %2221 = vmatmul.mubr.bf16.gmra.mrb[0].mxu0 %v2186
        %v2222 = vpop.f32.mrb[0].mxu0
        %v2223 = vadd.f32 %v2158, %v2222
        %v2224 = vpop.f32.mrb[0].mxu0
        %v2225 = vpop.f32.mrb[0].mxu0
        %v2226 = vpop.f32.mrb[0].mxu0
        %2227 = vdwg.mxu0
        %v2228 = vadd.f32 %v2089, %v2223
        %v2229 = vsel %vm844, %v2228, 0.0
        %2230 = vadd.xlane.f32.xlu0 %v2229
        %v2231 = vpop.xlane.xlu0 %2230
        %v2232 = vmul.f32 %v2231, %v848
        %v2233 = vsub.f32 %v2228, %v2232
        %v2234 = vmul.f32 %v2233, %v2233
        %v2235 = vsel %vm844, %v2234, 0.0
        %2236 = vadd.xlane.f32.xlu0 %v2235
        %v2237 = vpop.xlane.xlu0 %2236
        %v2238 = vmul.f32 %v2237, %v848
        %v2239 = vadd.f32 %v2238, 1e-05
        %v2240 = vrsqrt.pop %v2239
        %v2241 = vmul.f32 %v2233, %v2240
        %v2243 = vlaneseq
        %v2244 = vshrl.u32 %v2243, 7
        %v2245 = vsub.s32 0, %v2244
        %v2246 = vrot.slane %v833, %v2245
        %v2248 = vmul.f32 %v2241, %v2246
        %v2250 = vlaneseq
        %v2251 = vshrl.u32 %v2250, 7
        %v2252 = vsub.s32 0, %v2251
        %v2253 = vrot.slane %v834, %v2252
        %v2255 = vadd.f32 %v2248, %v2253
        %v2256 = vpack.c.bf16 %v2255, %v2255
        %v2261 = vunpack.c.l.b16 %v835
        %v2262 = vunpack.c.l.b16 %v836
        %v2263 = vunpack.c.l.b16 %v837
        %v2264 = vunpack.c.l.b16 %v838
        %v2265 = vpack.c.b16 %v2262, %v2261
        %v2266 = vpack.c.b16 %v2264, %v2263
        %v2270 = vsel %vm897, %v2256, 0
        %2272 = vmatprep.subr.bf16.mxu0 0
        %2273 = vmatpush1.bf16.msra.mxu0 %v2265
        %2274 = vmatprep.subr.bf16.mxu0 0
        %2275 = vmatpush1.bf16.msra.mxu0 %v2266
        %2276 = vmatprep.subr.bf16.mxu0 0
        %2277 = vmatpush1.bf16.msra.mxu0 0
        %2278 = vmatprep.subr.bf16.mxu0 0
        %2279 = vmatpush1.bf16.msra.mxu0 0
        %2280 = vmatprep.subr.bf16.mxu0 0
        %2281 = vmatpush1.bf16.msra.mxu0 0
        %2282 = vmatprep.subr.bf16.mxu0 0
        %2283 = vmatpush1.bf16.msra.mxu0 0
        %2284 = vmatprep.subr.bf16.mxu0 0
        %2285 = vmatpush1.bf16.msra.mxu0 0
        %2286 = vmatprep.subr.bf16.mxu0 0
        %2287 = vmatpush1.bf16.msra.mxu0 0
        %2288 = vmatprep.subr.bf16.mxu0 0
        %2289 = vmatpush1.bf16.msra.mxu0 0
        %2290 = vmatprep.subr.bf16.mxu0 0
        %2291 = vmatpush1.bf16.msra.mxu0 0
        %2292 = vmatprep.subr.bf16.mxu0 0
        %2293 = vmatpush1.bf16.msra.mxu0 0
        %2294 = vmatprep.subr.bf16.mxu0 0
        %2295 = vmatpush1.bf16.msra.mxu0 0
        %2296 = vmatprep.subr.bf16.mxu0 0
        %2297 = vmatpush1.bf16.msra.mxu0 0
        %2298 = vmatprep.subr.bf16.mxu0 0
        %2299 = vmatpush1.bf16.msra.mxu0 0
        %2300 = vmatprep.subr.bf16.mxu0 0
        %2301 = vmatpush1.bf16.msra.mxu0 0
        %2302 = vmatprep.subr.bf16.mxu0 0
        %2303 = vmatpush1.bf16.msra.mxu0 0
        %2304 = vmatprep.mubr.bf16.mxu0 0
        %2305 = vmatmul.mubr.bf16.gmra.mrb[0].mxu0 %v2270
        %v2306 = vpop.f32.mrb[0].mxu0
        %v2307 = vadd.f32 0.0, %v2306
        %v2308 = vpop.f32.mrb[0].mxu0
        %v2309 = vpop.f32.mrb[0].mxu0
        %v2310 = vpop.f32.mrb[0].mxu0
        %2311 = vdwg.mxu0
        %v2312 = vlaneseq
        %v2313 = vshrl.u32 %v2312, 7
        %v2314 = vlaneseq
        %v2315 = vand.u32 %v2314, 127
        %v2316 = vmul.u32 %v2313, 2
        %vm2317 = vcmp.ge.s32.totalorder %v2315, %v2316
        %v2318 = vadd.s32 %v2313, 1
        %v2319 = vmul.u32 %v2318, 2
        %vm2320 = vcmp.lt.s32.totalorder %v2315, %v2319
        %vm2321 = vmand %vm2317, %vm2320
        %v2322 = vsel %vm2321, %v2307, 0.0
        %vm2323 = vcmask 1045504
        %v2324 = vsel %vm2323, %v2322, 0.0
        %v2325 = vrot.slane %v2324, 4
        %v2326 = vadd.f32 %v2324, %v2325
        %v2327 = vrot.slane %v2326, 2
        %v2328 = vadd.f32 %v2326, %v2327
        %v2329 = vrot.slane %v2328, 1
        %v2330 = vadd.f32 %v2328, %v2329
        %v2331 = vadd.f32 %v2330, %v839
        %2332 = vst [vmem:[%s805] sm:$0x1] %v2331
        %s2333 = sand.u32 %s517, 1
        %s2334 = scalar_lea.sflag [#allocation4], %s2333
        %s2335 = sand.u32 %s517, 1
        %s2336 = scalar_lea.vmem [#allocation19], %s2335
        // Predicated region
        $region149: #{tpu_custom_call.1} parent=107 // pred_check
          %p2337 = pneg %p527
        $region150: #{tpu_custom_call.1} parent=107 // pred_check_branch
          %2339 = sbr.rel (%p2337) target = $region152
        $region151: #{tpu_custom_call.1} parent=107 // pred_region
          %s2341 = ssub.s32 16, 16
          %2342 = vsyncadd %s2334, %s2341
          %s2343 = smul.addr %s42, 16
          %s2344 = scalar_lea.hbm %s22, %s2343
          %s2346 = sshll.u32 %s2336, 4
          %s2347 = int_to_ptr.vmem [resolvable:$true] %s2346
          %2349 = dma.vmem_to_hbm [thread:$0]  %s2347, 16, %s2344, %s2334
        $region152: #{tpu_custom_call.1} parent=107 // pred_fallthru
          _
      $region108: #{tpu_custom_call.1} parent=5 // pred_fallthru
        _
      %p2350 = scmp.le.s32.totalorder 2, %s37
      // Predicated region
      $region153: #{tpu_custom_call.1} parent=5 // pred_check
        %p2351 = pneg %p2350
      $region154: #{tpu_custom_call.1} parent=5 // pred_check_branch
        %2353 = sbr.rel (%p2351) target = $region156
      $region155: #{tpu_custom_call.1} parent=5 // pred_region
        %s2354 = ssub.s32 %s37, 2
        // Predicated region
        $region157: #{tpu_custom_call.1} parent=155 // pred_check
          %p2355 = pneg %p533
        $region158: #{tpu_custom_call.1} parent=155 // pred_check_branch
          %2357 = sbr.rel (%p2355) target = $region160
        $region159: #{tpu_custom_call.1} parent=155 // pred_region
          %s2358 = sand.u32 %s518, 1
          %s2359 = scalar_lea.sflag [#allocation4], %s2358
          %s2360 = sand.u32 %s518, 1
          %s2361 = scalar_lea.vmem [#allocation19], %s2360
          %2362 = dma.done %s2359, 16
        $region160: #{tpu_custom_call.1} parent=155 // pred_fallthru
          _
      $region156: #{tpu_custom_call.1} parent=5 // pred_fallthru
        _
    $region6: #{tpu_custom_call.1} parent=1 // loop_footer
      %s41 = sadd.s32 1, %s37
    $region7: #{tpu_custom_call.1} parent=1 // loop_footer_branch
      %36 = sbr.rel target = $region3
    $region8: #{tpu_custom_call.1} parent=1 // loop_exit
      _
    %2363 = vsyncpa [#allocation3], 1
    %s2364 = scalar_lea.sflag [#allocation3], 1
    %2365 = vsyncpa %s2364, 1
    %2366 = vsyncpa [#allocation6], 1
    %2367 = vsyncpa [#allocation9], 1
    %2368 = vsyncpa [#allocation12], 1
    %2369 = vsyncpa [#allocation15], 1
    %2370 = vsyncpa [#allocation18], 1
    %2371 = vsyncpa [#allocation4], 1
    %s2372 = scalar_lea.sflag [#allocation4], 1
    %2373 = vsyncpa %s2372, 1

// kernel: tpu_custom_call.1
$region0: #{tpu_custom_call.1}
  #allocation0 [shape = 'u32[]', space=smem, size = 0x4, offset = 0x4, fixed_abs, tag = 'smem constant byte address 0x4 - core index']
  #allocation1 [shape = 'u32[144,128]{1,0:T(1,128)}', space=vmem, size = 0x12000, scoped, tag = 'internal scratch']
  %s0 = inlined_call_operand.vmem [shape: bf16[2,16,32], index: 0, kind: input, shape index: {}]
  %s1 = inlined_call_operand.vmem [shape: bf16[32,32], index: 1, kind: input, shape index: {}]
  %s2 = inlined_call_operand.vmem [shape: f32[1,32], index: 2, kind: input, shape index: {}]
  %s3 = inlined_call_operand.hbm [shape: f32[6,32], index: 3, kind: input, shape index: {}]
  %s4 = inlined_call_operand.vmem [shape: bf16[32,32], index: 4, kind: input, shape index: {}]
  %s5 = inlined_call_operand.hbm [shape: f32[1,32], index: 5, kind: input, shape index: {}]
  %s6 = inlined_call_operand.hbm [shape: bf16[32,64], index: 6, kind: input, shape index: {}]
  %s7 = inlined_call_operand.hbm [shape: f32[1,64], index: 7, kind: input, shape index: {}]
  %s8 = inlined_call_operand.hbm [shape: bf16[32,32], index: 8, kind: input, shape index: {}]
  %s9 = inlined_call_operand.hbm [shape: f32[1,32], index: 9, kind: input, shape index: {}]
  %s10 = inlined_call_operand.hbm [shape: f32[1,32], index: 10, kind: input, shape index: {}]
  %s11 = inlined_call_operand.hbm [shape: f32[1,32], index: 11, kind: input, shape index: {}]
  %s12 = inlined_call_operand.hbm [shape: f32[1,32], index: 12, kind: input, shape index: {}]
  %s13 = inlined_call_operand.hbm [shape: f32[1,32], index: 13, kind: input, shape index: {}]
  %s14 = inlined_call_operand.vmem [shape: f32[1,32], index: 14, kind: input, shape index: {}]
  %s15 = inlined_call_operand.vmem [shape: f32[1,32], index: 15, kind: input, shape index: {}]
  %s16 = inlined_call_operand.vmem [shape: bf16[32,64], index: 16, kind: input, shape index: {}]
  %s17 = inlined_call_operand.vmem [shape: f32[1,64], index: 17, kind: input, shape index: {}]
  %s18 = inlined_call_operand.vmem [shape: bf16[64,32], index: 18, kind: input, shape index: {}]
  %s19 = inlined_call_operand.vmem [shape: f32[1,32], index: 19, kind: input, shape index: {}]
  %s20 = inlined_call_operand.vmem [shape: bf16[32,128], index: 20, kind: input, shape index: {}]
  %s21 = inlined_call_operand.vmem [shape: f32[1,128], index: 21, kind: input, shape index: {}]
  %s22 = inlined_call_operand.hbm [shape: f32[2,1,128], index: 22, kind: output, shape index: {}]
  %s23 = sld [smem:[#allocation0]]
  $region161: #{tpu_custom_call.1} parent=0
    _
  %s25 = ssub.s32 1, %s23
  %s26 = scalar_select 0, %s25, %s23
  $region1: #{tpu_custom_call.1} parent=0
    #allocation2 [shape = 'u8[4096]{0}', space=vmem, size = 0x1000, scoped, tag = 'input window, operand 3, single buffered']
    #allocation3 [shape = 's32[2]{0}', space=sflag, size = 0x8, scoped, tag = 'scoped memory for tpu_custom_call.1']
    #allocation4 [shape = 's32[2]{0}', space=sflag, size = 0x8, scoped, tag = 'scoped memory for tpu_custom_call.1']
    #allocation5 [shape = 'u8[512]{0}', space=vmem, size = 0x400, scoped, tag = 'input window, operand 5, single buffered']
    #allocation6 [shape = 's32[1]{0}', space=sflag, size = 0x4, scoped, tag = 'scoped memory for tpu_custom_call.1']
    #allocation7 [shape = 'u8[8192]{0}', space=vmem, size = 0x2000, scoped, tag = 'input window, operand 6, single buffered']
    #allocation8 [shape = 'u8[512]{0}', space=vmem, size = 0x400, scoped, tag = 'input window, operand 7, single buffered']
    #allocation9 [shape = 's32[1]{0}', space=sflag, size = 0x4, scoped, tag = 'scoped memory for tpu_custom_call.1']
    #allocation10 [shape = 'u8[8192]{0}', space=vmem, size = 0x2000, scoped, tag = 'input window, operand 8, single buffered']
    #allocation11 [shape = 'u8[512]{0}', space=vmem, size = 0x400, scoped, tag = 'input window, operand 9, single buffered']
    #allocation12 [shape = 's32[1]{0}', space=sflag, size = 0x4, scoped, tag = 'scoped memory for tpu_custom_call.1']
    #allocation13 [shape = 'u8[512]{0}', space=vmem, size = 0x400, scoped, tag = 'input window, operand 10, single buffered']
    #allocation14 [shape = 'u8[512]{0}', space=vmem, size = 0x400, scoped, tag = 'input window, operand 11, single buffered']
    #allocation15 [shape = 's32[1]{0}', space=sflag, size = 0x4, scoped, tag = 'scoped memory for tpu_custom_call.1']
    #allocation16 [shape = 'u8[512]{0}', space=vmem, size = 0x400, scoped, tag = 'input window, operand 12, single buffered']
    #allocation17 [shape = 'u8[512]{0}', space=vmem, size = 0x400, scoped, tag = 'input window, operand 13, single buffered']
    #allocation18 [shape = 's32[1]{0}', space=sflag, size = 0x4, scoped, tag = 'scoped memory for tpu_custom_call.1']
    #allocation19 [shape = 'u8[1024]{0}', space=vmem, size = 0x400, scoped, tag = 'output window, operand 0']
    %27 = vsyncpa [#allocation3], 0
    %28 = vsyncpa [#allocation6], 0
    %29 = vsyncpa [#allocation9], 0
    %30 = vsyncpa [#allocation12], 0
    %31 = vsyncpa [#allocation15], 0
    %32 = vsyncpa [#allocation18], 0
    %33 = vsyncpa [#allocation4], 0
    %s34 = scalar_lea.sflag [#allocation4], 1
    %35 = vsyncpa %s34, 0
    loop: start=0, step=1, limit=4
    $region2: #{tpu_custom_call.1} parent=1 // loop_pre_header
      _
    $region3: #{tpu_custom_call.1} parent=1 // loop_header
      %s37 = sphi 0, %s41
      %p38 = scmp.ge.s32.totalorder %s37, 4
      %s47 = sphi 0, %s49
      %s50 = sphi 0, %s47
      %s51 = sphi 0, %s50
      %s67 = sphi 0, %s51
      %s71 = sphi 0, %s71
      %s73 = sphi 0, %s71
      %s74 = sphi 0, %s73
      %s88 = sphi 0, %s74
      %s92 = sphi 0, %s92
      %s94 = sphi 0, %s92
      %s95 = sphi 0, %s94
      %s109 = sphi 0, %s95
      %s113 = sphi 0, %s113
      %s115 = sphi 0, %s113
      %s116 = sphi 0, %s115
      %s130 = sphi 0, %s116
      %s134 = sphi 0, %s134
      %s136 = sphi 0, %s134
      %s137 = sphi 0, %s136
      %s151 = sphi 0, %s137
      %s155 = sphi 0, %s155
      %s157 = sphi 0, %s155
      %s158 = sphi 0, %s157
      %s172 = sphi 0, %s158
      %s176 = sphi 0, %s176
      %s178 = sphi 0, %s176
      %s179 = sphi 0, %s178
      %s193 = sphi 0, %s179
      %s197 = sphi 0, %s197
      %s199 = sphi 0, %s197
      %s200 = sphi 0, %s199
      %s214 = sphi 0, %s200
      %s218 = sphi 0, %s218
      %s220 = sphi 0, %s218
      %s221 = sphi 0, %s220
      %s235 = sphi 0, %s221
      %s239 = sphi 0, %s239
      %s241 = sphi 0, %s239
      %s242 = sphi 0, %s241
      %s256 = sphi 0, %s242
      %s260 = sphi 0, %s260
      %s262 = sphi 0, %s260
      %s263 = sphi 0, %s262
      %s277 = sphi 0, %s263
      %s281 = sphi 0, %s281
      %s283 = sphi 0, %s281
      %s284 = sphi 0, %s283
      %s298 = sphi 0, %s284
      %s302 = sphi 0, %s302
      %s304 = sphi 0, %s302
      %s305 = sphi 0, %s304
      %s319 = sphi 0, %s305
      %s323 = sphi 0, %s323
      %s325 = sphi 0, %s323
      %s326 = sphi 0, %s325
      %s340 = sphi 0, %s326
      %s344 = sphi 0, %s344
      %s346 = sphi 0, %s344
      %s347 = sphi 0, %s346
      %s361 = sphi 0, %s347
      %s365 = sphi 0, %s365
      %s367 = sphi 0, %s365
      %s368 = sphi 0, %s367
      %s382 = sphi 0, %s368
      %s386 = sphi 0, %s386
      %s388 = sphi 0, %s386
      %s389 = sphi 0, %s388
      %s403 = sphi 0, %s389
      %s407 = sphi 0, %s407
      %s409 = sphi 0, %s407
      %s410 = sphi 0, %s409
      %s424 = sphi 0, %s410
      %s428 = sphi 0, %s428
      %s430 = sphi 0, %s428
      %s431 = sphi 0, %s430
      %s445 = sphi 0, %s431
      %s449 = sphi 0, %s449
      %s451 = sphi 0, %s449
      %s452 = sphi 0, %s451
      %s466 = sphi 0, %s452
      %s470 = sphi 0, %s470
      %s472 = sphi 0, %s470
      %s473 = sphi 0, %s472
      %s487 = sphi 0, %s473
      %s491 = sphi 0, %s491
      %s493 = sphi 0, %s491
      %s494 = sphi 0, %s493
      %s508 = sphi 0, %s494
      %s514 = sphi 0, %s516
      %s517 = sphi 0, %s514
      %s518 = sphi 0, %s517
      %s534 = sphi 0, %s518
    $region4: #{tpu_custom_call.1} parent=1 // loop_header_branch
      %40 = sbr.rel (%p38) target = $region8
    $region5: #{tpu_custom_call.1} parent=1 // loop_body
      %s42 = ssub.s32 %s37, 1
      %s43 = ssub.s32 %s37, 2
      %s44 = sadd.s32 %s37, 1
      %s45 = ssub.s32 %s37, %s44
      %p46 = scmp.eq.s32.totalorder %s45, 0
      %s48 = sadd.s32 %s47, 1
      %s49 = scalar_select %p46, %s47, %s48
      %p52 = pneg %p46
      %p53 = scmp.eq.s32.totalorder %s37, 1
      %p54 = por %p52, %p53
      %p55 = scmp.ne.s32.totalorder %s47, %s50
      %p56 = scmp.eq.s32.totalorder %s37, 0
      %p57 = por %p55, %p56
      %p58 = scmp.ne.s32.totalorder %s47, %s50
      %p59 = scmp.eq.s32.totalorder %s42, 1
      %p60 = por %p58, %p59
      %p61 = scmp.ne.s32.totalorder %s50, %s51
      %p62 = scmp.eq.s32.totalorder %s42, 0
      %p63 = por %p61, %p62
      %p64 = scmp.ne.s32.totalorder %s50, %s51
      %p65 = scmp.eq.s32.totalorder %s43, 1
      %p66 = por %p64, %p65
      %p68 = scmp.ne.s32.totalorder %s51, %s67
      %p69 = scmp.eq.s32.totalorder %s43, 0
      %p70 = por %p68, %p69
      %s72 = sadd.s32 %s71, 1
      %p75 = scmp.eq.s32.totalorder %s37, 1
      %p76 = scmp.ne.s32.totalorder %s71, %s73
      %p77 = scmp.eq.s32.totalorder %s37, 0
      %p78 = por %p76, %p77
      %p79 = scmp.ne.s32.totalorder %s71, %s73
      %p80 = scmp.eq.s32.totalorder %s42, 1
      %p81 = por %p79, %p80
      %p82 = scmp.ne.s32.totalorder %s73, %s74
      %p83 = scmp.eq.s32.totalorder %s42, 0
      %p84 = por %p82, %p83
      %p85 = scmp.ne.s32.totalorder %s73, %s74
      %p86 = scmp.eq.s32.totalorder %s43, 1
      %p87 = por %p85, %p86
      %p89 = scmp.ne.s32.totalorder %s74, %s88
      %p90 = scmp.eq.s32.totalorder %s43, 0
      %p91 = por %p89, %p90
      %s93 = sadd.s32 %s92, 1
      %p96 = scmp.eq.s32.totalorder %s37, 1
      %p97 = scmp.ne.s32.totalorder %s92, %s94
      %p98 = scmp.eq.s32.totalorder %s37, 0
      %p99 = por %p97, %p98
      %p100 = scmp.ne.s32.totalorder %s92, %s94
      %p101 = scmp.eq.s32.totalorder %s42, 1
      %p102 = por %p100, %p101
      %p103 = scmp.ne.s32.totalorder %s94, %s95
      %p104 = scmp.eq.s32.totalorder %s42, 0
      %p105 = por %p103, %p104
      %p106 = scmp.ne.s32.totalorder %s94, %s95
      %p107 = scmp.eq.s32.totalorder %s43, 1
      %p108 = por %p106, %p107
      %p110 = scmp.ne.s32.totalorder %s95, %s109
      %p111 = scmp.eq.s32.totalorder %s43, 0
      %p112 = por %p110, %p111
      %s114 = sadd.s32 %s113, 1
      %p117 = scmp.eq.s32.totalorder %s37, 1
      %p118 = scmp.ne.s32.totalorder %s113, %s115
      %p119 = scmp.eq.s32.totalorder %s37, 0
      %p120 = por %p118, %p119
      %p121 = scmp.ne.s32.totalorder %s113, %s115
      %p122 = scmp.eq.s32.totalorder %s42, 1
      %p123 = por %p121, %p122
      %p124 = scmp.ne.s32.totalorder %s115, %s116
      %p125 = scmp.eq.s32.totalorder %s42, 0
      %p126 = por %p124, %p125
      %p127 = scmp.ne.s32.totalorder %s115, %s116
      %p128 = scmp.eq.s32.totalorder %s43, 1
      %p129 = por %p127, %p128
      %p131 = scmp.ne.s32.totalorder %s116, %s130
      %p132 = scmp.eq.s32.totalorder %s43, 0
      %p133 = por %p131, %p132
      %s135 = sadd.s32 %s134, 1
      %p138 = scmp.eq.s32.totalorder %s37, 1
      %p139 = scmp.ne.s32.totalorder %s134, %s136
      %p140 = scmp.eq.s32.totalorder %s37, 0
      %p141 = por %p139, %p140
      %p142 = scmp.ne.s32.totalorder %s134, %s136
      %p143 = scmp.eq.s32.totalorder %s42, 1
      %p144 = por %p142, %p143
      %p145 = scmp.ne.s32.totalorder %s136, %s137
      %p146 = scmp.eq.s32.totalorder %s42, 0
      %p147 = por %p145, %p146
      %p148 = scmp.ne.s32.totalorder %s136, %s137
      %p149 = scmp.eq.s32.totalorder %s43, 1
      %p150 = por %p148, %p149
      %p152 = scmp.ne.s32.totalorder %s137, %s151
      %p153 = scmp.eq.s32.totalorder %s43, 0
      %p154 = por %p152, %p153
      %s156 = sadd.s32 %s155, 1
      %p159 = scmp.eq.s32.totalorder %s37, 1
      %p160 = scmp.ne.s32.totalorder %s155, %s157
      %p161 = scmp.eq.s32.totalorder %s37, 0
      %p162 = por %p160, %p161
      %p163 = scmp.ne.s32.totalorder %s155, %s157
      %p164 = scmp.eq.s32.totalorder %s42, 1
      %p165 = por %p163, %p164
      %p166 = scmp.ne.s32.totalorder %s157, %s158
      %p167 = scmp.eq.s32.totalorder %s42, 0
      %p168 = por %p166, %p167
      %p169 = scmp.ne.s32.totalorder %s157, %s158
      %p170 = scmp.eq.s32.totalorder %s43, 1
      %p171 = por %p169, %p170
      %p173 = scmp.ne.s32.totalorder %s158, %s172
      %p174 = scmp.eq.s32.totalorder %s43, 0
      %p175 = por %p173, %p174
      %s177 = sadd.s32 %s176, 1
      %p180 = scmp.eq.s32.totalorder %s37, 1
      %p181 = scmp.ne.s32.totalorder %s176, %s178
      %p182 = scmp.eq.s32.totalorder %s37, 0
      %p183 = por %p181, %p182
      %p184 = scmp.ne.s32.totalorder %s176, %s178
      %p185 = scmp.eq.s32.totalorder %s42, 1
      %p186 = por %p184, %p185
      %p187 = scmp.ne.s32.totalorder %s178, %s179
      %p188 = scmp.eq.s32.totalorder %s42, 0
      %p189 = por %p187, %p188
      %p190 = scmp.ne.s32.totalorder %s178, %s179
      %p191 = scmp.eq.s32.totalorder %s43, 1
      %p192 = por %p190, %p191
      %p194 = scmp.ne.s32.totalorder %s179, %s193
      %p195 = scmp.eq.s32.totalorder %s43, 0
      %p196 = por %p194, %p195
      %s198 = sadd.s32 %s197, 1
      %p201 = scmp.eq.s32.totalorder %s37, 1
      %p202 = scmp.ne.s32.totalorder %s197, %s199
      %p203 = scmp.eq.s32.totalorder %s37, 0
      %p204 = por %p202, %p203
      %p205 = scmp.ne.s32.totalorder %s197, %s199
      %p206 = scmp.eq.s32.totalorder %s42, 1
      %p207 = por %p205, %p206
      %p208 = scmp.ne.s32.totalorder %s199, %s200
      %p209 = scmp.eq.s32.totalorder %s42, 0
      %p210 = por %p208, %p209
      %p211 = scmp.ne.s32.totalorder %s199, %s200
      %p212 = scmp.eq.s32.totalorder %s43, 1
      %p213 = por %p211, %p212
      %p215 = scmp.ne.s32.totalorder %s200, %s214
      %p216 = scmp.eq.s32.totalorder %s43, 0
      %p217 = por %p215, %p216
      %s219 = sadd.s32 %s218, 1
      %p222 = scmp.eq.s32.totalorder %s37, 1
      %p223 = scmp.ne.s32.totalorder %s218, %s220
      %p224 = scmp.eq.s32.totalorder %s37, 0
      %p225 = por %p223, %p224
      %p226 = scmp.ne.s32.totalorder %s218, %s220
      %p227 = scmp.eq.s32.totalorder %s42, 1
      %p228 = por %p226, %p227
      %p229 = scmp.ne.s32.totalorder %s220, %s221
      %p230 = scmp.eq.s32.totalorder %s42, 0
      %p231 = por %p229, %p230
      %p232 = scmp.ne.s32.totalorder %s220, %s221
      %p233 = scmp.eq.s32.totalorder %s43, 1
      %p234 = por %p232, %p233
      %p236 = scmp.ne.s32.totalorder %s221, %s235
      %p237 = scmp.eq.s32.totalorder %s43, 0
      %p238 = por %p236, %p237
      %s240 = sadd.s32 %s239, 1
      %p243 = scmp.eq.s32.totalorder %s37, 1
      %p244 = scmp.ne.s32.totalorder %s239, %s241
      %p245 = scmp.eq.s32.totalorder %s37, 0
      %p246 = por %p244, %p245
      %p247 = scmp.ne.s32.totalorder %s239, %s241
      %p248 = scmp.eq.s32.totalorder %s42, 1
      %p249 = por %p247, %p248
      %p250 = scmp.ne.s32.totalorder %s241, %s242
      %p251 = scmp.eq.s32.totalorder %s42, 0
      %p252 = por %p250, %p251
      %p253 = scmp.ne.s32.totalorder %s241, %s242
      %p254 = scmp.eq.s32.totalorder %s43, 1
      %p255 = por %p253, %p254
      %p257 = scmp.ne.s32.totalorder %s242, %s256
      %p258 = scmp.eq.s32.totalorder %s43, 0
      %p259 = por %p257, %p258
      %s261 = sadd.s32 %s260, 1
      %p264 = scmp.eq.s32.totalorder %s37, 1
      %p265 = scmp.ne.s32.totalorder %s260, %s262
      %p266 = scmp.eq.s32.totalorder %s37, 0
      %p267 = por %p265, %p266
      %p268 = scmp.ne.s32.totalorder %s260, %s262
      %p269 = scmp.eq.s32.totalorder %s42, 1
      %p270 = por %p268, %p269
      %p271 = scmp.ne.s32.totalorder %s262, %s263
      %p272 = scmp.eq.s32.totalorder %s42, 0
      %p273 = por %p271, %p272
      %p274 = scmp.ne.s32.totalorder %s262, %s263
      %p275 = scmp.eq.s32.totalorder %s43, 1
      %p276 = por %p274, %p275
      %p278 = scmp.ne.s32.totalorder %s263, %s277
      %p279 = scmp.eq.s32.totalorder %s43, 0
      %p280 = por %p278, %p279
      %s282 = sadd.s32 %s281, 1
      %p285 = scmp.eq.s32.totalorder %s37, 1
      %p286 = scmp.ne.s32.totalorder %s281, %s283
      %p287 = scmp.eq.s32.totalorder %s37, 0
      %p288 = por %p286, %p287
      %p289 = scmp.ne.s32.totalorder %s281, %s283
      %p290 = scmp.eq.s32.totalorder %s42, 1
      %p291 = por %p289, %p290
      %p292 = scmp.ne.s32.totalorder %s283, %s284
      %p293 = scmp.eq.s32.totalorder %s42, 0
      %p294 = por %p292, %p293
      %p295 = scmp.ne.s32.totalorder %s283, %s284
      %p296 = scmp.eq.s32.totalorder %s43, 1
      %p297 = por %p295, %p296
      %p299 = scmp.ne.s32.totalorder %s284, %s298
      %p300 = scmp.eq.s32.totalorder %s43, 0
      %p301 = por %p299, %p300
      %s303 = sadd.s32 %s302, 1
      %p306 = scmp.eq.s32.totalorder %s37, 1
      %p307 = scmp.ne.s32.totalorder %s302, %s304
      %p308 = scmp.eq.s32.totalorder %s37, 0
      %p309 = por %p307, %p308
      %p310 = scmp.ne.s32.totalorder %s302, %s304
      %p311 = scmp.eq.s32.totalorder %s42, 1
      %p312 = por %p310, %p311
      %p313 = scmp.ne.s32.totalorder %s304, %s305
      %p314 = scmp.eq.s32.totalorder %s42, 0
      %p315 = por %p313, %p314
      %p316 = scmp.ne.s32.totalorder %s304, %s305
      %p317 = scmp.eq.s32.totalorder %s43, 1
      %p318 = por %p316, %p317
      %p320 = scmp.ne.s32.totalorder %s305, %s319
      %p321 = scmp.eq.s32.totalorder %s43, 0
      %p322 = por %p320, %p321
      %s324 = sadd.s32 %s323, 1
      %p327 = scmp.eq.s32.totalorder %s37, 1
      %p328 = scmp.ne.s32.totalorder %s323, %s325
      %p329 = scmp.eq.s32.totalorder %s37, 0
      %p330 = por %p328, %p329
      %p331 = scmp.ne.s32.totalorder %s323, %s325
      %p332 = scmp.eq.s32.totalorder %s42, 1
      %p333 = por %p331, %p332
      %p334 = scmp.ne.s32.totalorder %s325, %s326
      %p335 = scmp.eq.s32.totalorder %s42, 0
      %p336 = por %p334, %p335
      %p337 = scmp.ne.s32.totalorder %s325, %s326
      %p338 = scmp.eq.s32.totalorder %s43, 1
      %p339 = por %p337, %p338
      %p341 = scmp.ne.s32.totalorder %s326, %s340
      %p342 = scmp.eq.s32.totalorder %s43, 0
      %p343 = por %p341, %p342
      %s345 = sadd.s32 %s344, 1
      %p348 = scmp.eq.s32.totalorder %s37, 1
      %p349 = scmp.ne.s32.totalorder %s344, %s346
      %p350 = scmp.eq.s32.totalorder %s37, 0
      %p351 = por %p349, %p350
      %p352 = scmp.ne.s32.totalorder %s344, %s346
      %p353 = scmp.eq.s32.totalorder %s42, 1
      %p354 = por %p352, %p353
      %p355 = scmp.ne.s32.totalorder %s346, %s347
      %p356 = scmp.eq.s32.totalorder %s42, 0
      %p357 = por %p355, %p356
      %p358 = scmp.ne.s32.totalorder %s346, %s347
      %p359 = scmp.eq.s32.totalorder %s43, 1
      %p360 = por %p358, %p359
      %p362 = scmp.ne.s32.totalorder %s347, %s361
      %p363 = scmp.eq.s32.totalorder %s43, 0
      %p364 = por %p362, %p363
      %s366 = sadd.s32 %s365, 1
      %p369 = scmp.eq.s32.totalorder %s37, 1
      %p370 = scmp.ne.s32.totalorder %s365, %s367
      %p371 = scmp.eq.s32.totalorder %s37, 0
      %p372 = por %p370, %p371
      %p373 = scmp.ne.s32.totalorder %s365, %s367
      %p374 = scmp.eq.s32.totalorder %s42, 1
      %p375 = por %p373, %p374
      %p376 = scmp.ne.s32.totalorder %s367, %s368
      %p377 = scmp.eq.s32.totalorder %s42, 0
      %p378 = por %p376, %p377
      %p379 = scmp.ne.s32.totalorder %s367, %s368
      %p380 = scmp.eq.s32.totalorder %s43, 1
      %p381 = por %p379, %p380
      %p383 = scmp.ne.s32.totalorder %s368, %s382
      %p384 = scmp.eq.s32.totalorder %s43, 0
      %p385 = por %p383, %p384
      %s387 = sadd.s32 %s386, 1
      %p390 = scmp.eq.s32.totalorder %s37, 1
      %p391 = scmp.ne.s32.totalorder %s386, %s388
      %p392 = scmp.eq.s32.totalorder %s37, 0
      %p393 = por %p391, %p392
      %p394 = scmp.ne.s32.totalorder %s386, %s388
      %p395 = scmp.eq.s32.totalorder %s42, 1
      %p396 = por %p394, %p395
      %p397 = scmp.ne.s32.totalorder %s388, %s389
      %p398 = scmp.eq.s32.totalorder %s42, 0
      %p399 = por %p397, %p398
      %p400 = scmp.ne.s32.totalorder %s388, %s389
      %p401 = scmp.eq.s32.totalorder %s43, 1
      %p402 = por %p400, %p401
      %p404 = scmp.ne.s32.totalorder %s389, %s403
      %p405 = scmp.eq.s32.totalorder %s43, 0
      %p406 = por %p404, %p405
      %s408 = sadd.s32 %s407, 1
      %p411 = scmp.eq.s32.totalorder %s37, 1
      %p412 = scmp.ne.s32.totalorder %s407, %s409
      %p413 = scmp.eq.s32.totalorder %s37, 0
      %p414 = por %p412, %p413
      %p415 = scmp.ne.s32.totalorder %s407, %s409
      %p416 = scmp.eq.s32.totalorder %s42, 1
      %p417 = por %p415, %p416
      %p418 = scmp.ne.s32.totalorder %s409, %s410
      %p419 = scmp.eq.s32.totalorder %s42, 0
      %p420 = por %p418, %p419
      %p421 = scmp.ne.s32.totalorder %s409, %s410
      %p422 = scmp.eq.s32.totalorder %s43, 1
      %p423 = por %p421, %p422
      %p425 = scmp.ne.s32.totalorder %s410, %s424
      %p426 = scmp.eq.s32.totalorder %s43, 0
      %p427 = por %p425, %p426
      %s429 = sadd.s32 %s428, 1
      %p432 = scmp.eq.s32.totalorder %s37, 1
      %p433 = scmp.ne.s32.totalorder %s428, %s430
      %p434 = scmp.eq.s32.totalorder %s37, 0
      %p435 = por %p433, %p434
      %p436 = scmp.ne.s32.totalorder %s428, %s430
      %p437 = scmp.eq.s32.totalorder %s42, 1
      %p438 = por %p436, %p437
      %p439 = scmp.ne.s32.totalorder %s430, %s431
      %p440 = scmp.eq.s32.totalorder %s42, 0
      %p441 = por %p439, %p440
      %p442 = scmp.ne.s32.totalorder %s430, %s431
      %p443 = scmp.eq.s32.totalorder %s43, 1
      %p444 = por %p442, %p443
      %p446 = scmp.ne.s32.totalorder %s431, %s445
      %p447 = scmp.eq.s32.totalorder %s43, 0
      %p448 = por %p446, %p447
      %s450 = sadd.s32 %s449, 1
      %p453 = scmp.eq.s32.totalorder %s37, 1
      %p454 = scmp.ne.s32.totalorder %s449, %s451
      %p455 = scmp.eq.s32.totalorder %s37, 0
      %p456 = por %p454, %p455
      %p457 = scmp.ne.s32.totalorder %s449, %s451
      %p458 = scmp.eq.s32.totalorder %s42, 1
      %p459 = por %p457, %p458
      %p460 = scmp.ne.s32.totalorder %s451, %s452
      %p461 = scmp.eq.s32.totalorder %s42, 0
      %p462 = por %p460, %p461
      %p463 = scmp.ne.s32.totalorder %s451, %s452
      %p464 = scmp.eq.s32.totalorder %s43, 1
      %p465 = por %p463, %p464
      %p467 = scmp.ne.s32.totalorder %s452, %s466
      %p468 = scmp.eq.s32.totalorder %s43, 0
      %p469 = por %p467, %p468
      %s471 = sadd.s32 %s470, 1
      %p474 = scmp.eq.s32.totalorder %s37, 1
      %p475 = scmp.ne.s32.totalorder %s470, %s472
      %p476 = scmp.eq.s32.totalorder %s37, 0
      %p477 = por %p475, %p476
      %p478 = scmp.ne.s32.totalorder %s470, %s472
      %p479 = scmp.eq.s32.totalorder %s42, 1
      %p480 = por %p478, %p479
      %p481 = scmp.ne.s32.totalorder %s472, %s473
      %p482 = scmp.eq.s32.totalorder %s42, 0
      %p483 = por %p481, %p482
      %p484 = scmp.ne.s32.totalorder %s472, %s473
      %p485 = scmp.eq.s32.totalorder %s43, 1
      %p486 = por %p484, %p485
      %p488 = scmp.ne.s32.totalorder %s473, %s487
      %p489 = scmp.eq.s32.totalorder %s43, 0
      %p490 = por %p488, %p489
      %s492 = sadd.s32 %s491, 1
      %p495 = scmp.eq.s32.totalorder %s37, 1
      %p496 = scmp.ne.s32.totalorder %s491, %s493
      %p497 = scmp.eq.s32.totalorder %s37, 0
      %p498 = por %p496, %p497
      %p499 = scmp.ne.s32.totalorder %s491, %s493
      %p500 = scmp.eq.s32.totalorder %s42, 1
      %p501 = por %p499, %p500
      %p502 = scmp.ne.s32.totalorder %s493, %s494
      %p503 = scmp.eq.s32.totalorder %s42, 0
      %p504 = por %p502, %p503
      %p505 = scmp.ne.s32.totalorder %s493, %s494
      %p506 = scmp.eq.s32.totalorder %s43, 1
      %p507 = por %p505, %p506
      %p509 = scmp.ne.s32.totalorder %s494, %s508
      %p510 = scmp.eq.s32.totalorder %s43, 0
      %p511 = por %p509, %p510
      %s512 = ssub.s32 %s37, %s44
      %p513 = scmp.eq.s32.totalorder %s512, 0
      %s515 = sadd.s32 %s514, 1
      %s516 = scalar_select %p513, %s514, %s515
      %p519 = pneg %p513
      %p520 = scmp.eq.s32.totalorder %s37, 1
      %p521 = por %p519, %p520
      %p522 = scmp.ne.s32.totalorder %s514, %s517
      %p523 = scmp.eq.s32.totalorder %s37, 0
      %p524 = por %p522, %p523
      %p525 = scmp.ne.s32.totalorder %s514, %s517
      %p526 = scmp.eq.s32.totalorder %s42, 1
      %p527 = por %p525, %p526
      %p528 = scmp.ne.s32.totalorder %s517, %s518
      %p529 = scmp.eq.s32.totalorder %s42, 0
      %p530 = por %p528, %p529
      %p531 = scmp.ne.s32.totalorder %s517, %s518
      %p532 = scmp.eq.s32.totalorder %s43, 1
      %p533 = por %p531, %p532
      %p535 = scmp.ne.s32.totalorder %s518, %s534
      %p536 = scmp.eq.s32.totalorder %s43, 0
      %p537 = por %p535, %p536
      %p538 = scmp.le.s32.totalorder 1, %s37
      %p539 = scmp.lt.s32.totalorder %s37, 3
      %p540 = pnand %p538, %p539
      %p541 = pneg %p540
      // Predicated region
      $region9: #{tpu_custom_call.1} parent=5 // pred_check
        _
      $region10: #{tpu_custom_call.1} parent=5 // pred_check_branch
        %543 = sbr.rel (%p540) target = $region12
      $region11: #{tpu_custom_call.1} parent=5 // pred_region
        %s544 = ssub.s32 %s37, 1
        // Predicated region
        $region13: #{tpu_custom_call.1} parent=11 // pred_check
          %p545 = pneg %p84
        $region14: #{tpu_custom_call.1} parent=11 // pred_check_branch
          %547 = sbr.rel (%p545) target = $region16
        $region15: #{tpu_custom_call.1} parent=11 // pred_region
          _
        $region16: #{tpu_custom_call.1} parent=11 // pred_fallthru
          _
        // Predicated region
        $region17: #{tpu_custom_call.1} parent=11 // pred_check
          %p548 = pneg %p105
        $region18: #{tpu_custom_call.1} parent=11 // pred_check_branch
          %550 = sbr.rel (%p548) target = $region20
        $region19: #{tpu_custom_call.1} parent=11 // pred_region
          _
        $region20: #{tpu_custom_call.1} parent=11 // pred_fallthru
          _
        // Predicated region
        $region21: #{tpu_custom_call.1} parent=11 // pred_check
          %p551 = pneg %p126
        $region22: #{tpu_custom_call.1} parent=11 // pred_check_branch
          %553 = sbr.rel (%p551) target = $region24
        $region23: #{tpu_custom_call.1} parent=11 // pred_region
          %s555 = ssub.s32 128, 128
          %556 = vsyncadd [#allocation3], %s555
          %s558 = sshll.u32 [#allocation2], 4
          %s559 = int_to_ptr.vmem [resolvable:$true] %s558
          %561 = dma.hbm_to_vmem [thread:$0]  %s3, 128, %s559, [#allocation3]
        $region24: #{tpu_custom_call.1} parent=11 // pred_fallthru
          _
        // Predicated region
        $region25: #{tpu_custom_call.1} parent=11 // pred_check
          %p562 = pneg %p147
        $region26: #{tpu_custom_call.1} parent=11 // pred_check_branch
          %564 = sbr.rel (%p562) target = $region28
        $region27: #{tpu_custom_call.1} parent=11 // pred_region
          _
        $region28: #{tpu_custom_call.1} parent=11 // pred_fallthru
          _
        // Predicated region
        $region29: #{tpu_custom_call.1} parent=11 // pred_check
          %p565 = pneg %p168
        $region30: #{tpu_custom_call.1} parent=11 // pred_check_branch
          %567 = sbr.rel (%p565) target = $region32
        $region31: #{tpu_custom_call.1} parent=11 // pred_region
          %s569 = ssub.s32 16, 16
          %570 = vsyncadd [#allocation6], %s569
          %s572 = sshll.u32 [#allocation5], 4
          %s573 = int_to_ptr.vmem [resolvable:$true] %s572
          %575 = dma.hbm_to_vmem [thread:$0]  %s5, 16, %s573, [#allocation6]
        $region32: #{tpu_custom_call.1} parent=11 // pred_fallthru
          _
        // Predicated region
        $region33: #{tpu_custom_call.1} parent=11 // pred_check
          %p576 = pneg %p189
        $region34: #{tpu_custom_call.1} parent=11 // pred_check_branch
          %578 = sbr.rel (%p576) target = $region36
        $region35: #{tpu_custom_call.1} parent=11 // pred_region
          %s580 = ssub.s32 256, 256
          %581 = vsyncadd [#allocation6], %s580
          %s582 = sshll.u32 [#allocation7], 4
          %s583 = int_to_ptr.vmem [resolvable:$true] %s582
          %588 = dma.hbm_to_vmem [thread:$0]  %s6, 256, %s583, [#allocation6], 64, 64, 4
        $region36: #{tpu_custom_call.1} parent=11 // pred_fallthru
          _
        // Predicated region
        $region37: #{tpu_custom_call.1} parent=11 // pred_check
          %p589 = pneg %p210
        $region38: #{tpu_custom_call.1} parent=11 // pred_check_branch
          %591 = sbr.rel (%p589) target = $region40
        $region39: #{tpu_custom_call.1} parent=11 // pred_region
          %s593 = ssub.s32 16, 16
          %594 = vsyncadd [#allocation9], %s593
          %s596 = sshll.u32 [#allocation8], 4
          %s597 = int_to_ptr.vmem [resolvable:$true] %s596
          %599 = dma.hbm_to_vmem [thread:$0]  %s7, 16, %s597, [#allocation9]
        $region40: #{tpu_custom_call.1} parent=11 // pred_fallthru
          _
        // Predicated region
        $region41: #{tpu_custom_call.1} parent=11 // pred_check
          %p600 = pneg %p231
        $region42: #{tpu_custom_call.1} parent=11 // pred_check_branch
          %602 = sbr.rel (%p600) target = $region44
        $region43: #{tpu_custom_call.1} parent=11 // pred_region
          %s604 = ssub.s32 256, 256
          %605 = vsyncadd [#allocation9], %s604
          %s606 = sshll.u32 [#allocation10], 4
          %s607 = int_to_ptr.vmem [resolvable:$true] %s606
          %612 = dma.hbm_to_vmem [thread:$0]  %s8, 256, %s607, [#allocation9], 64, 64, 4
        $region44: #{tpu_custom_call.1} parent=11 // pred_fallthru
          _
        // Predicated region
        $region45: #{tpu_custom_call.1} parent=11 // pred_check
          %p613 = pneg %p252
        $region46: #{tpu_custom_call.1} parent=11 // pred_check_branch
          %615 = sbr.rel (%p613) target = $region48
        $region47: #{tpu_custom_call.1} parent=11 // pred_region
          %s617 = ssub.s32 16, 16
          %618 = vsyncadd [#allocation12], %s617
          %s620 = sshll.u32 [#allocation11], 4
          %s621 = int_to_ptr.vmem [resolvable:$true] %s620
          %623 = dma.hbm_to_vmem [thread:$0]  %s9, 16, %s621, [#allocation12]
        $region48: #{tpu_custom_call.1} parent=11 // pred_fallthru
          _
        // Predicated region
        $region49: #{tpu_custom_call.1} parent=11 // pred_check
          %p624 = pneg %p273
        $region50: #{tpu_custom_call.1} parent=11 // pred_check_branch
          %626 = sbr.rel (%p624) target = $region52
        $region51: #{tpu_custom_call.1} parent=11 // pred_region
          %s628 = ssub.s32 16, 16
          %629 = vsyncadd [#allocation12], %s628
          %s631 = sshll.u32 [#allocation13], 4
          %s632 = int_to_ptr.vmem [resolvable:$true] %s631
          %634 = dma.hbm_to_vmem [thread:$0]  %s10, 16, %s632, [#allocation12]
        $region52: #{tpu_custom_call.1} parent=11 // pred_fallthru
          _
        // Predicated region
        $region53: #{tpu_custom_call.1} parent=11 // pred_check
          %p635 = pneg %p294
        $region54: #{tpu_custom_call.1} parent=11 // pred_check_branch
          %637 = sbr.rel (%p635) target = $region56
        $region55: #{tpu_custom_call.1} parent=11 // pred_region
          %s639 = ssub.s32 16, 16
          %640 = vsyncadd [#allocation15], %s639
          %s642 = sshll.u32 [#allocation14], 4
          %s643 = int_to_ptr.vmem [resolvable:$true] %s642
          %645 = dma.hbm_to_vmem [thread:$0]  %s11, 16, %s643, [#allocation15]
        $region56: #{tpu_custom_call.1} parent=11 // pred_fallthru
          _
        // Predicated region
        $region57: #{tpu_custom_call.1} parent=11 // pred_check
          %p646 = pneg %p315
        $region58: #{tpu_custom_call.1} parent=11 // pred_check_branch
          %648 = sbr.rel (%p646) target = $region60
        $region59: #{tpu_custom_call.1} parent=11 // pred_region
          %s650 = ssub.s32 16, 16
          %651 = vsyncadd [#allocation15], %s650
          %s653 = sshll.u32 [#allocation16], 4
          %s654 = int_to_ptr.vmem [resolvable:$true] %s653
          %656 = dma.hbm_to_vmem [thread:$0]  %s12, 16, %s654, [#allocation15]
        $region60: #{tpu_custom_call.1} parent=11 // pred_fallthru
          _
        // Predicated region
        $region61: #{tpu_custom_call.1} parent=11 // pred_check
          %p657 = pneg %p336
        $region62: #{tpu_custom_call.1} parent=11 // pred_check_branch
          %659 = sbr.rel (%p657) target = $region64
        $region63: #{tpu_custom_call.1} parent=11 // pred_region
          %s661 = ssub.s32 16, 16
          %662 = vsyncadd [#allocation18], %s661
          %s664 = sshll.u32 [#allocation17], 4
          %s665 = int_to_ptr.vmem [resolvable:$true] %s664
          %667 = dma.hbm_to_vmem [thread:$0]  %s13, 16, %s665, [#allocation18]
        $region64: #{tpu_custom_call.1} parent=11 // pred_fallthru
          _
        // Predicated region
        $region65: #{tpu_custom_call.1} parent=11 // pred_check
          %p668 = pneg %p357
        $region66: #{tpu_custom_call.1} parent=11 // pred_check_branch
          %670 = sbr.rel (%p668) target = $region68
        $region67: #{tpu_custom_call.1} parent=11 // pred_region
          _
        $region68: #{tpu_custom_call.1} parent=11 // pred_fallthru
          _
        // Predicated region
        $region69: #{tpu_custom_call.1} parent=11 // pred_check
          %p671 = pneg %p378
        $region70: #{tpu_custom_call.1} parent=11 // pred_check_branch
          %673 = sbr.rel (%p671) target = $region72
        $region71: #{tpu_custom_call.1} parent=11 // pred_region
          _
        $region72: #{tpu_custom_call.1} parent=11 // pred_fallthru
          _
        // Predicated region
        $region73: #{tpu_custom_call.1} parent=11 // pred_check
          %p674 = pneg %p399
        $region74: #{tpu_custom_call.1} parent=11 // pred_check_branch
          %676 = sbr.rel (%p674) target = $region76
        $region75: #{tpu_custom_call.1} parent=11 // pred_region
          _
        $region76: #{tpu_custom_call.1} parent=11 // pred_fallthru
          _
        // Predicated region
        $region77: #{tpu_custom_call.1} parent=11 // pred_check
          %p677 = pneg %p420
        $region78: #{tpu_custom_call.1} parent=11 // pred_check_branch
          %679 = sbr.rel (%p677) target = $region80
        $region79: #{tpu_custom_call.1} parent=11 // pred_region
          _
        $region80: #{tpu_custom_call.1} parent=11 // pred_fallthru
          _
        // Predicated region
        $region81: #{tpu_custom_call.1} parent=11 // pred_check
          %p680 = pneg %p441
        $region82: #{tpu_custom_call.1} parent=11 // pred_check_branch
          %682 = sbr.rel (%p680) target = $region84
        $region83: #{tpu_custom_call.1} parent=11 // pred_region
          _
        $region84: #{tpu_custom_call.1} parent=11 // pred_fallthru
          _
        // Predicated region
        $region85: #{tpu_custom_call.1} parent=11 // pred_check
          %p683 = pneg %p462
        $region86: #{tpu_custom_call.1} parent=11 // pred_check_branch
          %685 = sbr.rel (%p683) target = $region88
        $region87: #{tpu_custom_call.1} parent=11 // pred_region
          _
        $region88: #{tpu_custom_call.1} parent=11 // pred_fallthru
          _
        // Predicated region
        $region89: #{tpu_custom_call.1} parent=11 // pred_check
          %p686 = pneg %p483
        $region90: #{tpu_custom_call.1} parent=11 // pred_check_branch
          %688 = sbr.rel (%p686) target = $region92
        $region91: #{tpu_custom_call.1} parent=11 // pred_region
          _
        $region92: #{tpu_custom_call.1} parent=11 // pred_fallthru
          _
        // Predicated region
        $region93: #{tpu_custom_call.1} parent=11 // pred_check
          %p689 = pneg %p504
        $region94: #{tpu_custom_call.1} parent=11 // pred_check_branch
          %691 = sbr.rel (%p689) target = $region96
        $region95: #{tpu_custom_call.1} parent=11 // pred_region
          _
        $region96: #{tpu_custom_call.1} parent=11 // pred_fallthru
          _
      $region12: #{tpu_custom_call.1} parent=5 // pred_fallthru
        _
      %p692 = scmp.lt.s32.totalorder %s37, 2
      // Predicated region
      $region97: #{tpu_custom_call.1} parent=5 // pred_check
        %p693 = pneg %p692
      $region98: #{tpu_custom_call.1} parent=5 // pred_check_branch
        %695 = sbr.rel (%p693) target = $region100
      $region99: #{tpu_custom_call.1} parent=5 // pred_region
        // Predicated region
        $region101: #{tpu_custom_call.1} parent=99 // pred_check
          %p696 = pneg %p57
        $region102: #{tpu_custom_call.1} parent=99 // pred_check_branch
          %698 = sbr.rel (%p696) target = $region104
        $region103: #{tpu_custom_call.1} parent=99 // pred_region
          %p699 = scmp.lt.s32.totalorder %s37, 1
          %s700 = scalar_select %p699, %s37, 1
          %s701 = smul.addr %s700, 2
          %s702 = smul.addr %s701, 4
          %s703 = scalar_lea.vmem %s0, %s702
        $region104: #{tpu_custom_call.1} parent=99 // pred_fallthru
          _
      $region100: #{tpu_custom_call.1} parent=5 // pred_fallthru
        _
      %p704 = scmp.le.s32.totalorder 1, %s37
      %p705 = scmp.lt.s32.totalorder %s37, 3
      %p706 = pnand %p704, %p705
      %p707 = pneg %p706
      // Predicated region
      $region105: #{tpu_custom_call.1} parent=5 // pred_check
        _
      $region106: #{tpu_custom_call.1} parent=5 // pred_check_branch
        %709 = sbr.rel (%p706) target = $region108
      $region107: #{tpu_custom_call.1} parent=5 // pred_region
        %s710 = ssub.s32 %s37, 1
        // Predicated region
        $region109: #{tpu_custom_call.1} parent=107 // pred_check
          %p711 = pneg %p126
        $region110: #{tpu_custom_call.1} parent=107 // pred_check_branch
          %713 = sbr.rel (%p711) target = $region112
        $region111: #{tpu_custom_call.1} parent=107 // pred_region
          %714 = dma.done [#allocation3], 128
        $region112: #{tpu_custom_call.1} parent=107 // pred_fallthru
          _
        // Predicated region
        $region113: #{tpu_custom_call.1} parent=107 // pred_check
          %p715 = pneg %p168
        $region114: #{tpu_custom_call.1} parent=107 // pred_check_branch
          %717 = sbr.rel (%p715) target = $region116
        $region115: #{tpu_custom_call.1} parent=107 // pred_region
          %718 = dma.done [#allocation6], 16
        $region116: #{tpu_custom_call.1} parent=107 // pred_fallthru
          _
        // Predicated region
        $region117: #{tpu_custom_call.1} parent=107 // pred_check
          %p719 = pneg %p189
        $region118: #{tpu_custom_call.1} parent=107 // pred_check_branch
          %721 = sbr.rel (%p719) target = $region120
        $region119: #{tpu_custom_call.1} parent=107 // pred_region
          %722 = dma.done [#allocation6], 256
        $region120: #{tpu_custom_call.1} parent=107 // pred_fallthru
          _
        // Predicated region
        $region121: #{tpu_custom_call.1} parent=107 // pred_check
          %p723 = pneg %p210
        $region122: #{tpu_custom_call.1} parent=107 // pred_check_branch
          %725 = sbr.rel (%p723) target = $region124
        $region123: #{tpu_custom_call.1} parent=107 // pred_region
          %726 = dma.done [#allocation9], 16
        $region124: #{tpu_custom_call.1} parent=107 // pred_fallthru
          _
        // Predicated region
        $region125: #{tpu_custom_call.1} parent=107 // pred_check
          %p727 = pneg %p231
        $region126: #{tpu_custom_call.1} parent=107 // pred_check_branch
          %729 = sbr.rel (%p727) target = $region128
        $region127: #{tpu_custom_call.1} parent=107 // pred_region
          %730 = dma.done [#allocation9], 256
        $region128: #{tpu_custom_call.1} parent=107 // pred_fallthru
          _
        // Predicated region
        $region129: #{tpu_custom_call.1} parent=107 // pred_check
          %p731 = pneg %p252
        $region130: #{tpu_custom_call.1} parent=107 // pred_check_branch
          %733 = sbr.rel (%p731) target = $region132
        $region131: #{tpu_custom_call.1} parent=107 // pred_region
          %734 = dma.done [#allocation12], 16
        $region132: #{tpu_custom_call.1} parent=107 // pred_fallthru
          _
        // Predicated region
        $region133: #{tpu_custom_call.1} parent=107 // pred_check
          %p735 = pneg %p273
        $region134: #{tpu_custom_call.1} parent=107 // pred_check_branch
          %737 = sbr.rel (%p735) target = $region136
        $region135: #{tpu_custom_call.1} parent=107 // pred_region
          %738 = dma.done [#allocation12], 16
        $region136: #{tpu_custom_call.1} parent=107 // pred_fallthru
          _
        // Predicated region
        $region137: #{tpu_custom_call.1} parent=107 // pred_check
          %p739 = pneg %p294
        $region138: #{tpu_custom_call.1} parent=107 // pred_check_branch
          %741 = sbr.rel (%p739) target = $region140
        $region139: #{tpu_custom_call.1} parent=107 // pred_region
          %742 = dma.done [#allocation15], 16
        $region140: #{tpu_custom_call.1} parent=107 // pred_fallthru
          _
        // Predicated region
        $region141: #{tpu_custom_call.1} parent=107 // pred_check
          %p743 = pneg %p315
        $region142: #{tpu_custom_call.1} parent=107 // pred_check_branch
          %745 = sbr.rel (%p743) target = $region144
        $region143: #{tpu_custom_call.1} parent=107 // pred_region
          %746 = dma.done [#allocation15], 16
        $region144: #{tpu_custom_call.1} parent=107 // pred_fallthru
          _
        // Predicated region
        $region145: #{tpu_custom_call.1} parent=107 // pred_check
          %p747 = pneg %p336
        $region146: #{tpu_custom_call.1} parent=107 // pred_check_branch
          %749 = sbr.rel (%p747) target = $region148
        $region147: #{tpu_custom_call.1} parent=107 // pred_region
          %750 = dma.done [#allocation18], 16
        $region148: #{tpu_custom_call.1} parent=107 // pred_fallthru
          _
        %p751 = scmp.lt.s32.totalorder %s42, 1
        %s752 = scalar_select %p751, %s42, 1
        %s753 = smul.addr %s752, 2
        %s754 = smul.addr %s753, 4
        %s755 = scalar_lea.vmem %s0, %s754
        %p756 = pneg %p63
        %p757 = pneg %p60
        %p758 = pneg %p84
        %p759 = pneg %p81
        %p760 = pneg %p105
        %p761 = pneg %p102
        %p762 = pneg %p126
        %p763 = pneg %p123
        %p764 = pneg %p147
        %p765 = pneg %p144
        %p766 = pneg %p168
        %p767 = pneg %p165
        %p768 = pneg %p189
        %p769 = pneg %p186
        %p770 = pneg %p210
        %p771 = pneg %p207
        %p772 = pneg %p231
        %p773 = pneg %p228
        %p774 = pneg %p252
        %p775 = pneg %p249
        %p776 = pneg %p273
        %p777 = pneg %p270
        %p778 = pneg %p294
        %p779 = pneg %p291
        %p780 = pneg %p315
        %p781 = pneg %p312
        %p782 = pneg %p336
        %p783 = pneg %p333
        %p784 = pneg %p357
        %p785 = pneg %p354
        %p786 = pneg %p378
        %p787 = pneg %p375
        %p788 = pneg %p399
        %p789 = pneg %p396
        %p790 = pneg %p420
        %p791 = pneg %p417
        %p792 = pneg %p441
        %p793 = pneg %p438
        %p794 = pneg %p462
        %p795 = pneg %p459
        %p796 = pneg %p483
        %p797 = pneg %p480
        %p798 = pneg %p504
        %p799 = pneg %p501
        %p800 = pneg %p530
        %p801 = pneg %p527
        %s802 = sand.u32 %s517, 1
        %s803 = scalar_lea.sflag [#allocation4], %s802
        %s804 = sand.u32 %s517, 1
        %s805 = scalar_lea.vmem [#allocation19], %s804
        %p806 = scmp.lt.s32.totalorder %s42, 1
        %s807 = scalar_select %p806, %s42, 1
        %s808 = smul.addr %s807, 2
        %s809 = smul.addr %s808, 4
        %s810 = scalar_lea.vmem %s0, %s809
        %v812 = vld [vmem:[#allocation10] sm:$0xf]
        %v813 = vld [vmem:[#allocation10 + $0x4] sm:$0xf]
        %v814 = vld [vmem:[#allocation10 + $0x8] sm:$0xf]
        %v815 = vld [vmem:[#allocation10 + $0xc] sm:$0xf]
        %v816 = vld [vmem:[#allocation11] sm:$0x1]
        %v817 = vld [vmem:[%s16] sm:$0xf]
        %v818 = vld [vmem:[%s16 + $0x4] sm:$0xf]
        %v819 = vld [vmem:[%s16 + $0x8] sm:$0xf]
        %v820 = vld [vmem:[%s16 + $0xc] sm:$0xf]
        %v821 = vld [vmem:[%s17] sm:$0x1]
        %v822 = vld [vmem:[%s18] sm:$0xf]
        %v823 = vld [vmem:[%s18 + $0x4] sm:$0xf]
        %v824 = vld [vmem:[%s18 + $0x8] sm:$0xf]
        %v825 = vld [vmem:[%s18 + $0xc] sm:$0xf]
        %v826 = vld [vmem:[%s18 + $0x10] sm:$0xf]
        %v827 = vld [vmem:[%s18 + $0x14] sm:$0xf]
        %v828 = vld [vmem:[%s18 + $0x18] sm:$0xf]
        %v829 = vld [vmem:[%s18 + $0x1c] sm:$0xf]
        %v830 = vld [vmem:[%s19] sm:$0x1]
        %v831 = vld [vmem:[#allocation16] sm:$0x1]
        %v832 = vld [vmem:[#allocation17] sm:$0x1]
        %v833 = vld [vmem:[%s14] sm:$0x1]
        %v834 = vld [vmem:[%s15] sm:$0x1]
        %v835 = vld [vmem:[%s20] sm:$0xf]
        %v836 = vld [vmem:[%s20 + $0x4] sm:$0xf]
        %v837 = vld [vmem:[%s20 + $0x8] sm:$0xf]
        %v838 = vld [vmem:[%s20 + $0xc] sm:$0xf]
        %v839 = vld [vmem:[%s21] sm:$0x1]
        %v840 = vld [vmem:[#allocation2] sm:$0x3f]
        %v841 = vadd.f32 %v840, %v840
        %v842 = vld [vmem:[#allocation13] sm:$0x1]
        %v843 = vld [vmem:[#allocation14] sm:$0x1]
        %vm844 = vcmask 259072
        %v845 = vsel %vm844, %v841, 0.0
        %846 = vadd.xlane.f32.xlu0 %v845
        %v847 = vpop.xlane.xlu0 %846
        %v848 = vrcp.pop 32.0
        %v849 = vmul.f32 %v847, %v848
        %v850 = vsub.f32 %v841, %v849
        %v851 = vmul.f32 %v850, %v850
        %v852 = vsel %vm844, %v851, 0.0
        %853 = vadd.xlane.f32.xlu0 %v852
        %v854 = vpop.xlane.xlu0 %853
        %v855 = vmul.f32 %v854, %v848
        %v856 = vadd.f32 %v855, 1e-05
        %v857 = vrsqrt.pop %v856
        %v858 = vmul.f32 %v850, %v857
        %v860 = vlaneseq
        %v861 = vshrl.u32 %v860, 7
        %v862 = vsub.s32 0, %v861
        %v863 = vrot.slane %v842, %v862
        %v865 = vmul.f32 %v858, %v863
        %v867 = vlaneseq
        %v868 = vshrl.u32 %v867, 7
        %v869 = vsub.s32 0, %v868
        %v870 = vrot.slane %v843, %v869
        %v872 = vadd.f32 %v865, %v870
        %v873 = vpack.c.bf16 %v872, %v872
        %v874 = vld [vmem:[%s4] sm:$0xf]
        %v875 = vld [vmem:[%s4 + $0x4] sm:$0xf]
        %v876 = vld [vmem:[%s4 + $0x8] sm:$0xf]
        %v877 = vld [vmem:[%s4 + $0xc] sm:$0xf]
        %v878 = vld [vmem:[#allocation5] sm:$0x1]
        %v880 = vlaneseq
        %v881 = vshrl.u32 %v880, 7
        %v882 = vsub.s32 0, %v881
        %v883 = vrot.slane %v878, %v882
        %v889 = vunpack.c.l.b16 %v874
        %v890 = vunpack.c.l.b16 %v875
        %v891 = vunpack.c.l.b16 %v876
        %v892 = vunpack.c.l.b16 %v877
        %v893 = vpack.c.b16 %v890, %v889
        %v894 = vpack.c.b16 %v892, %v891
        %vm897 = vcmask 261120
        %v899 = vsel %vm897, %v873, 0
        %901 = vmatprep.subr.bf16.mxu0 0
        %902 = vmatpush1.bf16.msra.mxu0 %v893
        %903 = vmatprep.subr.bf16.mxu0 0
        %904 = vmatpush1.bf16.msra.mxu0 %v894
        %905 = vmatprep.subr.bf16.mxu0 0
        %906 = vmatpush1.bf16.msra.mxu0 0
        %907 = vmatprep.subr.bf16.mxu0 0
        %908 = vmatpush1.bf16.msra.mxu0 0
        %909 = vmatprep.subr.bf16.mxu0 0
        %910 = vmatpush1.bf16.msra.mxu0 0
        %911 = vmatprep.subr.bf16.mxu0 0
        %912 = vmatpush1.bf16.msra.mxu0 0
        %913 = vmatprep.subr.bf16.mxu0 0
        %914 = vmatpush1.bf16.msra.mxu0 0
        %915 = vmatprep.subr.bf16.mxu0 0
        %916 = vmatpush1.bf16.msra.mxu0 0
        %917 = vmatprep.subr.bf16.mxu0 0
        %918 = vmatpush1.bf16.msra.mxu0 0
        %919 = vmatprep.subr.bf16.mxu0 0
        %920 = vmatpush1.bf16.msra.mxu0 0
        %921 = vmatprep.subr.bf16.mxu0 0
        %922 = vmatpush1.bf16.msra.mxu0 0
        %923 = vmatprep.subr.bf16.mxu0 0
        %924 = vmatpush1.bf16.msra.mxu0 0
        %925 = vmatprep.subr.bf16.mxu0 0
        %926 = vmatpush1.bf16.msra.mxu0 0
        %927 = vmatprep.subr.bf16.mxu0 0
        %928 = vmatpush1.bf16.msra.mxu0 0
        %929 = vmatprep.subr.bf16.mxu0 0
        %930 = vmatpush1.bf16.msra.mxu0 0
        %931 = vmatprep.subr.bf16.mxu0 0
        %932 = vmatpush1.bf16.msra.mxu0 0
        %933 = vmatprep.mubr.bf16.mxu0 0
        %934 = vmatmul.mubr.bf16.gmra.mrb[0].mxu0 %v899
        %v935 = vpop.f32.mrb[0].mxu0
        %v936 = vadd.f32 %v883, %v935
        %v937 = vpop.f32.mrb[0].mxu0
        %v938 = vpop.f32.mrb[0].mxu0
        %v939 = vpop.f32.mrb[0].mxu0
        %940 = vdwg.mxu0
        %v941 = vpack.c.bf16 %v936, %v936
        %v942 = vld [vmem:[%s810] sm:$0xf]
        %v943 = vld [vmem:[%s810 + $0x4] sm:$0xf]
        %v944 = vld [vmem:[%s1] sm:$0xf]
        %v945 = vld [vmem:[%s1 + $0x4] sm:$0xf]
        %v946 = vld [vmem:[%s1 + $0x8] sm:$0xf]
        %v947 = vld [vmem:[%s1 + $0xc] sm:$0xf]
        %v948 = vld [vmem:[%s2] sm:$0x1]
        %v950 = vlaneseq
        %v951 = vshrl.u32 %v950, 7
        %v952 = vsub.s32 0, %v951
        %v953 = vrot.slane %v948, %v952
        %v957 = vunpack.c.l.b16 %v942
        %v958 = vunpack.c.l.b16 %v943
        %v959 = vpack.c.b16 %v958, %v957
        %v964 = vunpack.c.l.b16 %v944
        %v965 = vunpack.c.l.b16 %v945
        %v966 = vunpack.c.l.b16 %v946
        %v967 = vunpack.c.l.b16 %v947
        %v968 = vpack.c.b16 %v965, %v964
        %v969 = vpack.c.b16 %v967, %v966
        %v973 = vsel %vm897, %v959, 0
        %975 = vmatprep.subr.bf16.mxu0 0
        %976 = vmatpush1.bf16.msra.mxu0 %v968
        %977 = vmatprep.subr.bf16.mxu0 0
        %978 = vmatpush1.bf16.msra.mxu0 %v969
        %979 = vmatprep.subr.bf16.mxu0 0
        %980 = vmatpush1.bf16.msra.mxu0 0
        %981 = vmatprep.subr.bf16.mxu0 0
        %982 = vmatpush1.bf16.msra.mxu0 0
        %983 = vmatprep.subr.bf16.mxu0 0
        %984 = vmatpush1.bf16.msra.mxu0 0
        %985 = vmatprep.subr.bf16.mxu0 0
        %986 = vmatpush1.bf16.msra.mxu0 0
        %987 = vmatprep.subr.bf16.mxu0 0
        %988 = vmatpush1.bf16.msra.mxu0 0
        %989 = vmatprep.subr.bf16.mxu0 0
        %990 = vmatpush1.bf16.msra.mxu0 0
        %991 = vmatprep.subr.bf16.mxu0 0
        %992 = vmatpush1.bf16.msra.mxu0 0
        %993 = vmatprep.subr.bf16.mxu0 0
        %994 = vmatpush1.bf16.msra.mxu0 0
        %995 = vmatprep.subr.bf16.mxu0 0
        %996 = vmatpush1.bf16.msra.mxu0 0
        %997 = vmatprep.subr.bf16.mxu0 0
        %998 = vmatpush1.bf16.msra.mxu0 0
        %999 = vmatprep.subr.bf16.mxu0 0
        %1000 = vmatpush1.bf16.msra.mxu0 0
        %1001 = vmatprep.subr.bf16.mxu0 0
        %1002 = vmatpush1.bf16.msra.mxu0 0
        %1003 = vmatprep.subr.bf16.mxu0 0
        %1004 = vmatpush1.bf16.msra.mxu0 0
        %1005 = vmatprep.subr.bf16.mxu0 0
        %1006 = vmatpush1.bf16.msra.mxu0 0
        %1007 = vmatprep.mubr.bf16.mxu0 0
        %1008 = vmatmul.mubr.bf16.gmra.mrb[0].mxu0 %v973
        %v1009 = vpop.f32.mrb[0].mxu0
        %v1010 = vadd.f32 %v953, %v1009
        %v1011 = vpop.f32.mrb[0].mxu0
        %v1012 = vpop.f32.mrb[0].mxu0
        %v1013 = vadd.f32 %v953, %v1012
        %v1014 = vpop.f32.mrb[0].mxu0
        %1015 = vdwg.mxu0
        %v1016 = vmax.f32 %v1010, 0.0
        %v1017 = vmax.f32 %v1013, 0.0
        %v1018 = vpack.c.bf16 %v1017, %v1016
        %v1019 = vld [vmem:[#allocation7] sm:$0xf]
        %v1020 = vld [vmem:[#allocation7 + $0x4] sm:$0xf]
        %v1021 = vld [vmem:[#allocation7 + $0x8] sm:$0xf]
        %v1022 = vld [vmem:[#allocation7 + $0xc] sm:$0xf]
        %v1023 = vld [vmem:[#allocation8] sm:$0x1]
        %v1025 = vlaneseq
        %v1026 = vshrl.u32 %v1025, 7
        %v1027 = vsub.s32 0, %v1026
        %v1028 = vrot.slane %v1023, %v1027
        %v1034 = vunpack.c.l.b16 %v1019
        %v1035 = vunpack.c.l.b16 %v1020
        %v1036 = vunpack.c.l.b16 %v1021
        %v1037 = vunpack.c.l.b16 %v1022
        %v1038 = vpack.c.b16 %v1035, %v1034
        %v1039 = vpack.c.b16 %v1037, %v1036
        %v1043 = vsel %vm897, %v1018, 0
        %1045 = vmatprep.subr.bf16.mxu0 0
        %1046 = vmatpush1.bf16.msra.mxu0 %v1038
        %1047 = vmatprep.subr.bf16.mxu0 0
        %1048 = vmatpush1.bf16.msra.mxu0 %v1039
        %1049 = vmatprep.subr.bf16.mxu0 0
        %1050 = vmatpush1.bf16.msra.mxu0 0
        %1051 = vmatprep.subr.bf16.mxu0 0
        %1052 = vmatpush1.bf16.msra.mxu0 0
        %1053 = vmatprep.subr.bf16.mxu0 0
        %1054 = vmatpush1.bf16.msra.mxu0 0
        %1055 = vmatprep.subr.bf16.mxu0 0
        %1056 = vmatpush1.bf16.msra.mxu0 0
        %1057 = vmatprep.subr.bf16.mxu0 0
        %1058 = vmatpush1.bf16.msra.mxu0 0
        %1059 = vmatprep.subr.bf16.mxu0 0
        %1060 = vmatpush1.bf16.msra.mxu0 0
        %1061 = vmatprep.subr.bf16.mxu0 0
        %1062 = vmatpush1.bf16.msra.mxu0 0
        %1063 = vmatprep.subr.bf16.mxu0 0
        %1064 = vmatpush1.bf16.msra.mxu0 0
        %1065 = vmatprep.subr.bf16.mxu0 0
        %1066 = vmatpush1.bf16.msra.mxu0 0
        %1067 = vmatprep.subr.bf16.mxu0 0
        %1068 = vmatpush1.bf16.msra.mxu0 0
        %1069 = vmatprep.subr.bf16.mxu0 0
        %1070 = vmatpush1.bf16.msra.mxu0 0
        %1071 = vmatprep.subr.bf16.mxu0 0
        %1072 = vmatpush1.bf16.msra.mxu0 0
        %1073 = vmatprep.subr.bf16.mxu0 0
        %1074 = vmatpush1.bf16.msra.mxu0 0
        %1075 = vmatprep.subr.bf16.mxu0 0
        %1076 = vmatpush1.bf16.msra.mxu0 0
        %1077 = vmatprep.mubr.bf16.mxu0 0
        %1078 = vmatmul.mubr.bf16.gmra.mrb[0].mxu0 %v1043
        %v1079 = vpop.f32.mrb[0].mxu0
        %v1080 = vadd.f32 %v1028, %v1079
        %v1081 = vpop.f32.mrb[0].mxu0
        %v1082 = vpop.f32.mrb[0].mxu0
        %v1083 = vadd.f32 %v1028, %v1082
        %v1084 = vpop.f32.mrb[0].mxu0
        %1085 = vdwg.mxu0
        %v1086 = vpack.c.bf16 %v1083, %v1080
        %vm1087 = vcmask 31744
        %v1089 = vsel %vm1087, %v941, 0
        %v1092 = vsel %vm1087, %v1086, 0
        %1094 = vmatprep.subr.bf16.mxu0 0
        %1095 = vmatpush1.bf16.xpose.msra.mxu0 %v1092
        %1096 = vmatprep.subr.bf16.mxu0 0
        %1097 = vmatpush1.bf16.xpose.msra.mxu0 0
        %1098 = vmatprep.subr.bf16.mxu0 0
        %1099 = vmatpush1.bf16.xpose.msra.mxu0 0
        %1100 = vmatprep.subr.bf16.mxu0 0
        %1101 = vmatpush1.bf16.xpose.msra.mxu0 0
        %1102 = vmatprep.subr.bf16.mxu0 0
        %1103 = vmatpush1.bf16.xpose.msra.mxu0 0
        %1104 = vmatprep.subr.bf16.mxu0 0
        %1105 = vmatpush1.bf16.xpose.msra.mxu0 0
        %1106 = vmatprep.subr.bf16.mxu0 0
        %1107 = vmatpush1.bf16.xpose.msra.mxu0 0
        %1108 = vmatprep.subr.bf16.mxu0 0
        %1109 = vmatpush1.bf16.xpose.msra.mxu0 0
        %1110 = vmatprep.subr.bf16.mxu0 0
        %1111 = vmatpush1.bf16.xpose.msra.mxu0 0
        %1112 = vmatprep.subr.bf16.mxu0 0
        %1113 = vmatpush1.bf16.xpose.msra.mxu0 0
        %1114 = vmatprep.subr.bf16.mxu0 0
        %1115 = vmatpush1.bf16.xpose.msra.mxu0 0
        %1116 = vmatprep.subr.bf16.mxu0 0
        %1117 = vmatpush1.bf16.xpose.msra.mxu0 0
        %1118 = vmatprep.subr.bf16.mxu0 0
        %1119 = vmatpush1.bf16.xpose.msra.mxu0 0
        %1120 = vmatprep.subr.bf16.mxu0 0
        %1121 = vmatpush1.bf16.xpose.msra.mxu0 0
        %1122 = vmatprep.subr.bf16.mxu0 0
        %1123 = vmatpush1.bf16.xpose.msra.mxu0 0
        %1124 = vmatprep.subr.bf16.mxu0 0
        %1125 = vmatpush1.bf16.xpose.msra.mxu0 0
        %1126 = vmatprep.mubr.bf16.mxu0 0
        %1127 = vmatmul.mubr.bf16.gmra.mrb[0].mxu0 %v1089
        %v1128 = vpop.f32.mrb[0].mxu0
        %v1129 = vadd.f32 0.0, %v1128
        %v1130 = vpop.f32.mrb[0].mxu0
        %v1131 = vpop.f32.mrb[0].mxu0
        %v1132 = vpop.f32.mrb[0].mxu0
        %1133 = vdwg.mxu0
        %v1134 = vmul.f32 %v1129, 0.5
        %vm1135 = vcmask 128000
        %v1136 = vsel %vm1135, %v1134, -inf
        %1137 = vmax.xlane.f32.xlu0 %v1136
        %v1138 = vpop.xlane.xlu0 %1137
        %v1139 = vsub.f32 %v1134, %v1138
        %v1140 = vmul.f32 %v1139, 1.442695
        %v1141 = vpow.pop %v1140
        %v1142 = vsel %vm1135, %v1141, 0.0
        %1143 = vadd.xlane.f32.xlu0 %v1142
        %v1144 = vpop.xlane.xlu0 %1143
        %v1145 = vrcp.pop %v1144
        %v1146 = vmul.f32 %v1141, %v1145
        %v1147 = vpack.c.bf16 %v1146, %v1146
        %1149 = vrot.lane.b32.xlu0 %v1086, 96
        %v1150 = vpop.permute.xlu0 %1149
        %vm1152 = vcmask 130048
        %v1154 = vsel %vm1152, %v1147, 0
        %1156 = vmatprep.subr.bf16.mxu0 0
        %1157 = vmatpush1.bf16.msra.mxu0 %v1150
        %1158 = vmatprep.subr.bf16.mxu0 0
        %1159 = vmatpush1.bf16.msra.mxu0 0
        %1160 = vmatprep.subr.bf16.mxu0 0
        %1161 = vmatpush1.bf16.msra.mxu0 0
        %1162 = vmatprep.subr.bf16.mxu0 0
        %1163 = vmatpush1.bf16.msra.mxu0 0
        %1164 = vmatprep.subr.bf16.mxu0 0
        %1165 = vmatpush1.bf16.msra.mxu0 0
        %1166 = vmatprep.subr.bf16.mxu0 0
        %1167 = vmatpush1.bf16.msra.mxu0 0
        %1168 = vmatprep.subr.bf16.mxu0 0
        %1169 = vmatpush1.bf16.msra.mxu0 0
        %1170 = vmatprep.subr.bf16.mxu0 0
        %1171 = vmatpush1.bf16.msra.mxu0 0
        %1172 = vmatprep.subr.bf16.mxu0 0
        %1173 = vmatpush1.bf16.msra.mxu0 0
        %1174 = vmatprep.subr.bf16.mxu0 0
        %1175 = vmatpush1.bf16.msra.mxu0 0
        %1176 = vmatprep.subr.bf16.mxu0 0
        %1177 = vmatpush1.bf16.msra.mxu0 0
        %1178 = vmatprep.subr.bf16.mxu0 0
        %1179 = vmatpush1.bf16.msra.mxu0 0
        %1180 = vmatprep.subr.bf16.mxu0 0
        %1181 = vmatpush1.bf16.msra.mxu0 0
        %1182 = vmatprep.subr.bf16.mxu0 0
        %1183 = vmatpush1.bf16.msra.mxu0 0
        %1184 = vmatprep.subr.bf16.mxu0 0
        %1185 = vmatpush1.bf16.msra.mxu0 0
        %1186 = vmatprep.subr.bf16.mxu0 0
        %1187 = vmatpush1.bf16.msra.mxu0 0
        %1188 = vmatprep.mubr.bf16.mxu0 0
        %1189 = vmatmul.mubr.bf16.gmra.mrb[0].mxu0 %v1154
        %v1190 = vpop.f32.mrb[0].mxu0
        %v1191 = vadd.f32 0.0, %v1190
        %v1192 = vpop.f32.mrb[0].mxu0
        %v1193 = vpop.f32.mrb[0].mxu0
        %v1194 = vpop.f32.mrb[0].mxu0
        %1195 = vdwg.mxu0
        %1197 = vrot.lane.b32.xlu0 %v941, 124
        %v1198 = vpop.permute.xlu0 %1197
        %1199 = vrot.lane.b32.xlu0 %v1086, 124
        %v1200 = vpop.permute.xlu0 %1199
        %v1202 = vsel %vm1087, %v1198, 0
        %v1205 = vsel %vm1087, %v1200, 0
        %1207 = vmatprep.subr.bf16.mxu0 0
        %1208 = vmatpush1.bf16.xpose.msra.mxu0 %v1205
        %1209 = vmatprep.subr.bf16.mxu0 0
        %1210 = vmatpush1.bf16.xpose.msra.mxu0 0
        %1211 = vmatprep.subr.bf16.mxu0 0
        %1212 = vmatpush1.bf16.xpose.msra.mxu0 0
        %1213 = vmatprep.subr.bf16.mxu0 0
        %1214 = vmatpush1.bf16.xpose.msra.mxu0 0
        %1215 = vmatprep.subr.bf16.mxu0 0
        %1216 = vmatpush1.bf16.xpose.msra.mxu0 0
        %1217 = vmatprep.subr.bf16.mxu0 0
        %1218 = vmatpush1.bf16.xpose.msra.mxu0 0
        %1219 = vmatprep.subr.bf16.mxu0 0
        %1220 = vmatpush1.bf16.xpose.msra.mxu0 0
        %1221 = vmatprep.subr.bf16.mxu0 0
        %1222 = vmatpush1.bf16.xpose.msra.mxu0 0
        %1223 = vmatprep.subr.bf16.mxu0 0
        %1224 = vmatpush1.bf16.xpose.msra.mxu0 0
        %1225 = vmatprep.subr.bf16.mxu0 0
        %1226 = vmatpush1.bf16.xpose.msra.mxu0 0
        %1227 = vmatprep.subr.bf16.mxu0 0
        %1228 = vmatpush1.bf16.xpose.msra.mxu0 0
        %1229 = vmatprep.subr.bf16.mxu0 0
        %1230 = vmatpush1.bf16.xpose.msra.mxu0 0
        %1231 = vmatprep.subr.bf16.mxu0 0
        %1232 = vmatpush1.bf16.xpose.msra.mxu0 0
        %1233 = vmatprep.subr.bf16.mxu0 0
        %1234 = vmatpush1.bf16.xpose.msra.mxu0 0
        %1235 = vmatprep.subr.bf16.mxu0 0
        %1236 = vmatpush1.bf16.xpose.msra.mxu0 0
        %1237 = vmatprep.subr.bf16.mxu0 0
        %1238 = vmatpush1.bf16.xpose.msra.mxu0 0
        %1239 = vmatprep.mubr.bf16.mxu0 0
        %1240 = vmatmul.mubr.bf16.gmra.mrb[0].mxu0 %v1202
        %v1241 = vpop.f32.mrb[0].mxu0
        %v1242 = vadd.f32 0.0, %v1241
        %v1243 = vpop.f32.mrb[0].mxu0
        %v1244 = vpop.f32.mrb[0].mxu0
        %v1245 = vpop.f32.mrb[0].mxu0
        %1246 = vdwg.mxu0
        %v1247 = vmul.f32 %v1242, 0.5
        %v1248 = vsel %vm1135, %v1247, -inf
        %1249 = vmax.xlane.f32.xlu0 %v1248
        %v1250 = vpop.xlane.xlu0 %1249
        %v1251 = vsub.f32 %v1247, %v1250
        %v1252 = vmul.f32 %v1251, 1.442695
        %v1253 = vpow.pop %v1252
        %v1254 = vsel %vm1135, %v1253, 0.0
        %1255 = vadd.xlane.f32.xlu0 %v1254
        %v1256 = vpop.xlane.xlu0 %1255
        %v1257 = vrcp.pop %v1256
        %v1258 = vmul.f32 %v1253, %v1257
        %v1259 = vpack.c.bf16 %v1258, %v1258
        %1260 = vrot.lane.b32.xlu0 %v1086, 92
        %v1261 = vpop.permute.xlu0 %1260
        %v1264 = vsel %vm1152, %v1259, 0
        %1266 = vmatprep.subr.bf16.mxu0 0
        %1267 = vmatpush1.bf16.msra.mxu0 %v1261
        %1268 = vmatprep.subr.bf16.mxu0 0
        %1269 = vmatpush1.bf16.msra.mxu0 0
        %1270 = vmatprep.subr.bf16.mxu0 0
        %1271 = vmatpush1.bf16.msra.mxu0 0
        %1272 = vmatprep.subr.bf16.mxu0 0
        %1273 = vmatpush1.bf16.msra.mxu0 0
        %1274 = vmatprep.subr.bf16.mxu0 0
        %1275 = vmatpush1.bf16.msra.mxu0 0
        %1276 = vmatprep.subr.bf16.mxu0 0
        %1277 = vmatpush1.bf16.msra.mxu0 0
        %1278 = vmatprep.subr.bf16.mxu0 0
        %1279 = vmatpush1.bf16.msra.mxu0 0
        %1280 = vmatprep.subr.bf16.mxu0 0
        %1281 = vmatpush1.bf16.msra.mxu0 0
        %1282 = vmatprep.subr.bf16.mxu0 0
        %1283 = vmatpush1.bf16.msra.mxu0 0
        %1284 = vmatprep.subr.bf16.mxu0 0
        %1285 = vmatpush1.bf16.msra.mxu0 0
        %1286 = vmatprep.subr.bf16.mxu0 0
        %1287 = vmatpush1.bf16.msra.mxu0 0
        %1288 = vmatprep.subr.bf16.mxu0 0
        %1289 = vmatpush1.bf16.msra.mxu0 0
        %1290 = vmatprep.subr.bf16.mxu0 0
        %1291 = vmatpush1.bf16.msra.mxu0 0
        %1292 = vmatprep.subr.bf16.mxu0 0
        %1293 = vmatpush1.bf16.msra.mxu0 0
        %1294 = vmatprep.subr.bf16.mxu0 0
        %1295 = vmatpush1.bf16.msra.mxu0 0
        %1296 = vmatprep.subr.bf16.mxu0 0
        %1297 = vmatpush1.bf16.msra.mxu0 0
        %1298 = vmatprep.mubr.bf16.mxu0 0
        %1299 = vmatmul.mubr.bf16.gmra.mrb[0].mxu0 %v1264
        %v1300 = vpop.f32.mrb[0].mxu0
        %v1301 = vadd.f32 0.0, %v1300
        %v1302 = vpop.f32.mrb[0].mxu0
        %v1303 = vpop.f32.mrb[0].mxu0
        %v1304 = vpop.f32.mrb[0].mxu0
        %1305 = vdwg.mxu0
        %1306 = vrot.lane.b32.xlu0 %v941, 120
        %v1307 = vpop.permute.xlu0 %1306
        %1308 = vrot.lane.b32.xlu0 %v1086, 120
        %v1309 = vpop.permute.xlu0 %1308
        %v1311 = vsel %vm1087, %v1307, 0
        %v1314 = vsel %vm1087, %v1309, 0
        %1316 = vmatprep.subr.bf16.mxu0 0
        %1317 = vmatpush1.bf16.xpose.msra.mxu0 %v1314
        %1318 = vmatprep.subr.bf16.mxu0 0
        %1319 = vmatpush1.bf16.xpose.msra.mxu0 0
        %1320 = vmatprep.subr.bf16.mxu0 0
        %1321 = vmatpush1.bf16.xpose.msra.mxu0 0
        %1322 = vmatprep.subr.bf16.mxu0 0
        %1323 = vmatpush1.bf16.xpose.msra.mxu0 0
        %1324 = vmatprep.subr.bf16.mxu0 0
        %1325 = vmatpush1.bf16.xpose.msra.mxu0 0
        %1326 = vmatprep.subr.bf16.mxu0 0
        %1327 = vmatpush1.bf16.xpose.msra.mxu0 0
        %1328 = vmatprep.subr.bf16.mxu0 0
        %1329 = vmatpush1.bf16.xpose.msra.mxu0 0
        %1330 = vmatprep.subr.bf16.mxu0 0
        %1331 = vmatpush1.bf16.xpose.msra.mxu0 0
        %1332 = vmatprep.subr.bf16.mxu0 0
        %1333 = vmatpush1.bf16.xpose.msra.mxu0 0
        %1334 = vmatprep.subr.bf16.mxu0 0
        %1335 = vmatpush1.bf16.xpose.msra.mxu0 0
        %1336 = vmatprep.subr.bf16.mxu0 0
        %1337 = vmatpush1.bf16.xpose.msra.mxu0 0
        %1338 = vmatprep.subr.bf16.mxu0 0
        %1339 = vmatpush1.bf16.xpose.msra.mxu0 0
        %1340 = vmatprep.subr.bf16.mxu0 0
        %1341 = vmatpush1.bf16.xpose.msra.mxu0 0
        %1342 = vmatprep.subr.bf16.mxu0 0
        %1343 = vmatpush1.bf16.xpose.msra.mxu0 0
        %1344 = vmatprep.subr.bf16.mxu0 0
        %1345 = vmatpush1.bf16.xpose.msra.mxu0 0
        %1346 = vmatprep.subr.bf16.mxu0 0
        %1347 = vmatpush1.bf16.xpose.msra.mxu0 0
        %1348 = vmatprep.mubr.bf16.mxu0 0
        %1349 = vmatmul.mubr.bf16.gmra.mrb[0].mxu0 %v1311
        %v1350 = vpop.f32.mrb[0].mxu0
        %v1351 = vadd.f32 0.0, %v1350
        %v1352 = vpop.f32.mrb[0].mxu0
        %v1353 = vpop.f32.mrb[0].mxu0
        %v1354 = vpop.f32.mrb[0].mxu0
        %1355 = vdwg.mxu0
        %v1356 = vmul.f32 %v1351, 0.5
        %v1357 = vsel %vm1135, %v1356, -inf
        %1358 = vmax.xlane.f32.xlu0 %v1357
        %v1359 = vpop.xlane.xlu0 %1358
        %v1360 = vsub.f32 %v1356, %v1359
        %v1361 = vmul.f32 %v1360, 1.442695
        %v1362 = vpow.pop %v1361
        %v1363 = vsel %vm1135, %v1362, 0.0
        %1364 = vadd.xlane.f32.xlu0 %v1363
        %v1365 = vpop.xlane.xlu0 %1364
        %v1366 = vrcp.pop %v1365
        %v1367 = vmul.f32 %v1362, %v1366
        %v1368 = vpack.c.bf16 %v1367, %v1367
        %1369 = vrot.lane.b32.xlu0 %v1086, 88
        %v1370 = vpop.permute.xlu0 %1369
        %v1373 = vsel %vm1152, %v1368, 0
        %1375 = vmatprep.subr.bf16.mxu0 0
        %1376 = vmatpush1.bf16.msra.mxu0 %v1370
        %1377 = vmatprep.subr.bf16.mxu0 0
        %1378 = vmatpush1.bf16.msra.mxu0 0
        %1379 = vmatprep.subr.bf16.mxu0 0
        %1380 = vmatpush1.bf16.msra.mxu0 0
        %1381 = vmatprep.subr.bf16.mxu0 0
        %1382 = vmatpush1.bf16.msra.mxu0 0
        %1383 = vmatprep.subr.bf16.mxu0 0
        %1384 = vmatpush1.bf16.msra.mxu0 0
        %1385 = vmatprep.subr.bf16.mxu0 0
        %1386 = vmatpush1.bf16.msra.mxu0 0
        %1387 = vmatprep.subr.bf16.mxu0 0
        %1388 = vmatpush1.bf16.msra.mxu0 0
        %1389 = vmatprep.subr.bf16.mxu0 0
        %1390 = vmatpush1.bf16.msra.mxu0 0
        %1391 = vmatprep.subr.bf16.mxu0 0
        %1392 = vmatpush1.bf16.msra.mxu0 0
        %1393 = vmatprep.subr.bf16.mxu0 0
        %1394 = vmatpush1.bf16.msra.mxu0 0
        %1395 = vmatprep.subr.bf16.mxu0 0
        %1396 = vmatpush1.bf16.msra.mxu0 0
        %1397 = vmatprep.subr.bf16.mxu0 0
        %1398 = vmatpush1.bf16.msra.mxu0 0
        %1399 = vmatprep.subr.bf16.mxu0 0
        %1400 = vmatpush1.bf16.msra.mxu0 0
        %1401 = vmatprep.subr.bf16.mxu0 0
        %1402 = vmatpush1.bf16.msra.mxu0 0
        %1403 = vmatprep.subr.bf16.mxu0 0
        %1404 = vmatpush1.bf16.msra.mxu0 0
        %1405 = vmatprep.subr.bf16.mxu0 0
        %1406 = vmatpush1.bf16.msra.mxu0 0
        %1407 = vmatprep.mubr.bf16.mxu0 0
        %1408 = vmatmul.mubr.bf16.gmra.mrb[0].mxu0 %v1373
        %v1409 = vpop.f32.mrb[0].mxu0
        %v1410 = vadd.f32 0.0, %v1409
        %v1411 = vpop.f32.mrb[0].mxu0
        %v1412 = vpop.f32.mrb[0].mxu0
        %v1413 = vpop.f32.mrb[0].mxu0
        %1414 = vdwg.mxu0
        %1415 = vrot.lane.b32.xlu0 %v941, 116
        %v1416 = vpop.permute.xlu0 %1415
        %1417 = vrot.lane.b32.xlu0 %v1086, 116
        %v1418 = vpop.permute.xlu0 %1417
        %v1420 = vsel %vm1087, %v1416, 0
        %v1423 = vsel %vm1087, %v1418, 0
        %1425 = vmatprep.subr.bf16.mxu0 0
        %1426 = vmatpush1.bf16.xpose.msra.mxu0 %v1423
        %1427 = vmatprep.subr.bf16.mxu0 0
        %1428 = vmatpush1.bf16.xpose.msra.mxu0 0
        %1429 = vmatprep.subr.bf16.mxu0 0
        %1430 = vmatpush1.bf16.xpose.msra.mxu0 0
        %1431 = vmatprep.subr.bf16.mxu0 0
        %1432 = vmatpush1.bf16.xpose.msra.mxu0 0
        %1433 = vmatprep.subr.bf16.mxu0 0
        %1434 = vmatpush1.bf16.xpose.msra.mxu0 0
        %1435 = vmatprep.subr.bf16.mxu0 0
        %1436 = vmatpush1.bf16.xpose.msra.mxu0 0
        %1437 = vmatprep.subr.bf16.mxu0 0
        %1438 = vmatpush1.bf16.xpose.msra.mxu0 0
        %1439 = vmatprep.subr.bf16.mxu0 0
        %1440 = vmatpush1.bf16.xpose.msra.mxu0 0
        %1441 = vmatprep.subr.bf16.mxu0 0
        %1442 = vmatpush1.bf16.xpose.msra.mxu0 0
        %1443 = vmatprep.subr.bf16.mxu0 0
        %1444 = vmatpush1.bf16.xpose.msra.mxu0 0
        %1445 = vmatprep.subr.bf16.mxu0 0
        %1446 = vmatpush1.bf16.xpose.msra.mxu0 0
        %1447 = vmatprep.subr.bf16.mxu0 0
        %1448 = vmatpush1.bf16.xpose.msra.mxu0 0
        %1449 = vmatprep.subr.bf16.mxu0 0
        %1450 = vmatpush1.bf16.xpose.msra.mxu0 0
        %1451 = vmatprep.subr.bf16.mxu0 0
        %1452 = vmatpush1.bf16.xpose.msra.mxu0 0
        %1453 = vmatprep.subr.bf16.mxu0 0
        %1454 = vmatpush1.bf16.xpose.msra.mxu0 0
        %1455 = vmatprep.subr.bf16.mxu0 0
        %1456 = vmatpush1.bf16.xpose.msra.mxu0 0
        %1457 = vmatprep.mubr.bf16.mxu0 0
        %1458 = vmatmul.mubr.bf16.gmra.mrb[0].mxu0 %v1420
        %v1459 = vpop.f32.mrb[0].mxu0
        %v1460 = vadd.f32 0.0, %v1459
        %v1461 = vpop.f32.mrb[0].mxu0
        %v1462 = vpop.f32.mrb[0].mxu0
        %v1463 = vpop.f32.mrb[0].mxu0
        %1464 = vdwg.mxu0
        %v1465 = vmul.f32 %v1460, 0.5
        %v1466 = vsel %vm1135, %v1465, -inf
        %1467 = vmax.xlane.f32.xlu0 %v1466
        %v1468 = vpop.xlane.xlu0 %1467
        %v1469 = vsub.f32 %v1465, %v1468
        %v1470 = vmul.f32 %v1469, 1.442695
        %v1471 = vpow.pop %v1470
        %v1472 = vsel %vm1135, %v1471, 0.0
        %1473 = vadd.xlane.f32.xlu0 %v1472
        %v1474 = vpop.xlane.xlu0 %1473
        %v1475 = vrcp.pop %v1474
        %v1476 = vmul.f32 %v1471, %v1475
        %v1477 = vpack.c.bf16 %v1476, %v1476
        %1478 = vrot.lane.b32.xlu0 %v1086, 84
        %v1479 = vpop.permute.xlu0 %1478
        %v1482 = vsel %vm1152, %v1477, 0
        %1484 = vmatprep.subr.bf16.mxu0 0
        %1485 = vmatpush1.bf16.msra.mxu0 %v1479
        %1486 = vmatprep.subr.bf16.mxu0 0
        %1487 = vmatpush1.bf16.msra.mxu0 0
        %1488 = vmatprep.subr.bf16.mxu0 0
        %1489 = vmatpush1.bf16.msra.mxu0 0
        %1490 = vmatprep.subr.bf16.mxu0 0
        %1491 = vmatpush1.bf16.msra.mxu0 0
        %1492 = vmatprep.subr.bf16.mxu0 0
        %1493 = vmatpush1.bf16.msra.mxu0 0
        %1494 = vmatprep.subr.bf16.mxu0 0
        %1495 = vmatpush1.bf16.msra.mxu0 0
        %1496 = vmatprep.subr.bf16.mxu0 0
        %1497 = vmatpush1.bf16.msra.mxu0 0
        %1498 = vmatprep.subr.bf16.mxu0 0
        %1499 = vmatpush1.bf16.msra.mxu0 0
        %1500 = vmatprep.subr.bf16.mxu0 0
        %1501 = vmatpush1.bf16.msra.mxu0 0
        %1502 = vmatprep.subr.bf16.mxu0 0
        %1503 = vmatpush1.bf16.msra.mxu0 0
        %1504 = vmatprep.subr.bf16.mxu0 0
        %1505 = vmatpush1.bf16.msra.mxu0 0
        %1506 = vmatprep.subr.bf16.mxu0 0
        %1507 = vmatpush1.bf16.msra.mxu0 0
        %1508 = vmatprep.subr.bf16.mxu0 0
        %1509 = vmatpush1.bf16.msra.mxu0 0
        %1510 = vmatprep.subr.bf16.mxu0 0
        %1511 = vmatpush1.bf16.msra.mxu0 0
        %1512 = vmatprep.subr.bf16.mxu0 0
        %1513 = vmatpush1.bf16.msra.mxu0 0
        %1514 = vmatprep.subr.bf16.mxu0 0
        %1515 = vmatpush1.bf16.msra.mxu0 0
        %1516 = vmatprep.mubr.bf16.mxu0 0
        %1517 = vmatmul.mubr.bf16.gmra.mrb[0].mxu0 %v1482
        %v1518 = vpop.f32.mrb[0].mxu0
        %v1519 = vadd.f32 0.0, %v1518
        %v1520 = vpop.f32.mrb[0].mxu0
        %v1521 = vpop.f32.mrb[0].mxu0
        %v1522 = vpop.f32.mrb[0].mxu0
        %1523 = vdwg.mxu0
        %1524 = vrot.lane.b32.xlu0 %v941, 112
        %v1525 = vpop.permute.xlu0 %1524
        %1526 = vrot.lane.b32.xlu0 %v1086, 112
        %v1527 = vpop.permute.xlu0 %1526
        %v1529 = vsel %vm1087, %v1525, 0
        %v1532 = vsel %vm1087, %v1527, 0
        %1534 = vmatprep.subr.bf16.mxu0 0
        %1535 = vmatpush1.bf16.xpose.msra.mxu0 %v1532
        %1536 = vmatprep.subr.bf16.mxu0 0
        %1537 = vmatpush1.bf16.xpose.msra.mxu0 0
        %1538 = vmatprep.subr.bf16.mxu0 0
        %1539 = vmatpush1.bf16.xpose.msra.mxu0 0
        %1540 = vmatprep.subr.bf16.mxu0 0
        %1541 = vmatpush1.bf16.xpose.msra.mxu0 0
        %1542 = vmatprep.subr.bf16.mxu0 0
        %1543 = vmatpush1.bf16.xpose.msra.mxu0 0
        %1544 = vmatprep.subr.bf16.mxu0 0
        %1545 = vmatpush1.bf16.xpose.msra.mxu0 0
        %1546 = vmatprep.subr.bf16.mxu0 0
        %1547 = vmatpush1.bf16.xpose.msra.mxu0 0
        %1548 = vmatprep.subr.bf16.mxu0 0
        %1549 = vmatpush1.bf16.xpose.msra.mxu0 0
        %1550 = vmatprep.subr.bf16.mxu0 0
        %1551 = vmatpush1.bf16.xpose.msra.mxu0 0
        %1552 = vmatprep.subr.bf16.mxu0 0
        %1553 = vmatpush1.bf16.xpose.msra.mxu0 0
        %1554 = vmatprep.subr.bf16.mxu0 0
        %1555 = vmatpush1.bf16.xpose.msra.mxu0 0
        %1556 = vmatprep.subr.bf16.mxu0 0
        %1557 = vmatpush1.bf16.xpose.msra.mxu0 0
        %1558 = vmatprep.subr.bf16.mxu0 0
        %1559 = vmatpush1.bf16.xpose.msra.mxu0 0
        %1560 = vmatprep.subr.bf16.mxu0 0
        %1561 = vmatpush1.bf16.xpose.msra.mxu0 0
        %1562 = vmatprep.subr.bf16.mxu0 0
        %1563 = vmatpush1.bf16.xpose.msra.mxu0 0
        %1564 = vmatprep.subr.bf16.mxu0 0
        %1565 = vmatpush1.bf16.xpose.msra.mxu0 0
        %1566 = vmatprep.mubr.bf16.mxu0 0
        %1567 = vmatmul.mubr.bf16.gmra.mrb[0].mxu0 %v1529
        %v1568 = vpop.f32.mrb[0].mxu0
        %v1569 = vadd.f32 0.0, %v1568
        %v1570 = vpop.f32.mrb[0].mxu0
        %v1571 = vpop.f32.mrb[0].mxu0
        %v1572 = vpop.f32.mrb[0].mxu0
        %1573 = vdwg.mxu0
        %v1574 = vmul.f32 %v1569, 0.5
        %v1575 = vsel %vm1135, %v1574, -inf
        %1576 = vmax.xlane.f32.xlu0 %v1575
        %v1577 = vpop.xlane.xlu0 %1576
        %v1578 = vsub.f32 %v1574, %v1577
        %v1579 = vmul.f32 %v1578, 1.442695
        %v1580 = vpow.pop %v1579
        %v1581 = vsel %vm1135, %v1580, 0.0
        %1582 = vadd.xlane.f32.xlu0 %v1581
        %v1583 = vpop.xlane.xlu0 %1582
        %v1584 = vrcp.pop %v1583
        %v1585 = vmul.f32 %v1580, %v1584
        %v1586 = vpack.c.bf16 %v1585, %v1585
        %1587 = vrot.lane.b32.xlu0 %v1086, 80
        %v1588 = vpop.permute.xlu0 %1587
        %v1591 = vsel %vm1152, %v1586, 0
        %1593 = vmatprep.subr.bf16.mxu0 0
        %1594 = vmatpush1.bf16.msra.mxu0 %v1588
        %1595 = vmatprep.subr.bf16.mxu0 0
        %1596 = vmatpush1.bf16.msra.mxu0 0
        %1597 = vmatprep.subr.bf16.mxu0 0
        %1598 = vmatpush1.bf16.msra.mxu0 0
        %1599 = vmatprep.subr.bf16.mxu0 0
        %1600 = vmatpush1.bf16.msra.mxu0 0
        %1601 = vmatprep.subr.bf16.mxu0 0
        %1602 = vmatpush1.bf16.msra.mxu0 0
        %1603 = vmatprep.subr.bf16.mxu0 0
        %1604 = vmatpush1.bf16.msra.mxu0 0
        %1605 = vmatprep.subr.bf16.mxu0 0
        %1606 = vmatpush1.bf16.msra.mxu0 0
        %1607 = vmatprep.subr.bf16.mxu0 0
        %1608 = vmatpush1.bf16.msra.mxu0 0
        %1609 = vmatprep.subr.bf16.mxu0 0
        %1610 = vmatpush1.bf16.msra.mxu0 0
        %1611 = vmatprep.subr.bf16.mxu0 0
        %1612 = vmatpush1.bf16.msra.mxu0 0
        %1613 = vmatprep.subr.bf16.mxu0 0
        %1614 = vmatpush1.bf16.msra.mxu0 0
        %1615 = vmatprep.subr.bf16.mxu0 0
        %1616 = vmatpush1.bf16.msra.mxu0 0
        %1617 = vmatprep.subr.bf16.mxu0 0
        %1618 = vmatpush1.bf16.msra.mxu0 0
        %1619 = vmatprep.subr.bf16.mxu0 0
        %1620 = vmatpush1.bf16.msra.mxu0 0
        %1621 = vmatprep.subr.bf16.mxu0 0
        %1622 = vmatpush1.bf16.msra.mxu0 0
        %1623 = vmatprep.subr.bf16.mxu0 0
        %1624 = vmatpush1.bf16.msra.mxu0 0
        %1625 = vmatprep.mubr.bf16.mxu0 0
        %1626 = vmatmul.mubr.bf16.gmra.mrb[0].mxu0 %v1591
        %v1627 = vpop.f32.mrb[0].mxu0
        %v1628 = vadd.f32 0.0, %v1627
        %v1629 = vpop.f32.mrb[0].mxu0
        %v1630 = vpop.f32.mrb[0].mxu0
        %v1631 = vpop.f32.mrb[0].mxu0
        %1632 = vdwg.mxu0
        %1633 = vrot.lane.b32.xlu0 %v941, 108
        %v1634 = vpop.permute.xlu0 %1633
        %1635 = vrot.lane.b32.xlu0 %v1086, 108
        %v1636 = vpop.permute.xlu0 %1635
        %v1638 = vsel %vm1087, %v1634, 0
        %v1641 = vsel %vm1087, %v1636, 0
        %1643 = vmatprep.subr.bf16.mxu0 0
        %1644 = vmatpush1.bf16.xpose.msra.mxu0 %v1641
        %1645 = vmatprep.subr.bf16.mxu0 0
        %1646 = vmatpush1.bf16.xpose.msra.mxu0 0
        %1647 = vmatprep.subr.bf16.mxu0 0
        %1648 = vmatpush1.bf16.xpose.msra.mxu0 0
        %1649 = vmatprep.subr.bf16.mxu0 0
        %1650 = vmatpush1.bf16.xpose.msra.mxu0 0
        %1651 = vmatprep.subr.bf16.mxu0 0
        %1652 = vmatpush1.bf16.xpose.msra.mxu0 0
        %1653 = vmatprep.subr.bf16.mxu0 0
        %1654 = vmatpush1.bf16.xpose.msra.mxu0 0
        %1655 = vmatprep.subr.bf16.mxu0 0
        %1656 = vmatpush1.bf16.xpose.msra.mxu0 0
        %1657 = vmatprep.subr.bf16.mxu0 0
        %1658 = vmatpush1.bf16.xpose.msra.mxu0 0
        %1659 = vmatprep.subr.bf16.mxu0 0
        %1660 = vmatpush1.bf16.xpose.msra.mxu0 0
        %1661 = vmatprep.subr.bf16.mxu0 0
        %1662 = vmatpush1.bf16.xpose.msra.mxu0 0
        %1663 = vmatprep.subr.bf16.mxu0 0
        %1664 = vmatpush1.bf16.xpose.msra.mxu0 0
        %1665 = vmatprep.subr.bf16.mxu0 0
        %1666 = vmatpush1.bf16.xpose.msra.mxu0 0
        %1667 = vmatprep.subr.bf16.mxu0 0
        %1668 = vmatpush1.bf16.xpose.msra.mxu0 0
        %1669 = vmatprep.subr.bf16.mxu0 0
        %1670 = vmatpush1.bf16.xpose.msra.mxu0 0
        %1671 = vmatprep.subr.bf16.mxu0 0
        %1672 = vmatpush1.bf16.xpose.msra.mxu0 0
        %1673 = vmatprep.subr.bf16.mxu0 0
        %1674 = vmatpush1.bf16.xpose.msra.mxu0 0
        %1675 = vmatprep.mubr.bf16.mxu0 0
        %1676 = vmatmul.mubr.bf16.gmra.mrb[0].mxu0 %v1638
        %v1677 = vpop.f32.mrb[0].mxu0
        %v1678 = vadd.f32 0.0, %v1677
        %v1679 = vpop.f32.mrb[0].mxu0
        %v1680 = vpop.f32.mrb[0].mxu0
        %v1681 = vpop.f32.mrb[0].mxu0
        %1682 = vdwg.mxu0
        %v1683 = vmul.f32 %v1678, 0.5
        %v1684 = vsel %vm1135, %v1683, -inf
        %1685 = vmax.xlane.f32.xlu0 %v1684
        %v1686 = vpop.xlane.xlu0 %1685
        %v1687 = vsub.f32 %v1683, %v1686
        %v1688 = vmul.f32 %v1687, 1.442695
        %v1689 = vpow.pop %v1688
        %v1690 = vsel %vm1135, %v1689, 0.0
        %1691 = vadd.xlane.f32.xlu0 %v1690
        %v1692 = vpop.xlane.xlu0 %1691
        %v1693 = vrcp.pop %v1692
        %v1694 = vmul.f32 %v1689, %v1693
        %v1695 = vpack.c.bf16 %v1694, %v1694
        %1696 = vrot.lane.b32.xlu0 %v1086, 76
        %v1697 = vpop.permute.xlu0 %1696
        %v1700 = vsel %vm1152, %v1695, 0
        %1702 = vmatprep.subr.bf16.mxu0 0
        %1703 = vmatpush1.bf16.msra.mxu0 %v1697
        %1704 = vmatprep.subr.bf16.mxu0 0
        %1705 = vmatpush1.bf16.msra.mxu0 0
        %1706 = vmatprep.subr.bf16.mxu0 0
        %1707 = vmatpush1.bf16.msra.mxu0 0
        %1708 = vmatprep.subr.bf16.mxu0 0
        %1709 = vmatpush1.bf16.msra.mxu0 0
        %1710 = vmatprep.subr.bf16.mxu0 0
        %1711 = vmatpush1.bf16.msra.mxu0 0
        %1712 = vmatprep.subr.bf16.mxu0 0
        %1713 = vmatpush1.bf16.msra.mxu0 0
        %1714 = vmatprep.subr.bf16.mxu0 0
        %1715 = vmatpush1.bf16.msra.mxu0 0
        %1716 = vmatprep.subr.bf16.mxu0 0
        %1717 = vmatpush1.bf16.msra.mxu0 0
        %1718 = vmatprep.subr.bf16.mxu0 0
        %1719 = vmatpush1.bf16.msra.mxu0 0
        %1720 = vmatprep.subr.bf16.mxu0 0
        %1721 = vmatpush1.bf16.msra.mxu0 0
        %1722 = vmatprep.subr.bf16.mxu0 0
        %1723 = vmatpush1.bf16.msra.mxu0 0
        %1724 = vmatprep.subr.bf16.mxu0 0
        %1725 = vmatpush1.bf16.msra.mxu0 0
        %1726 = vmatprep.subr.bf16.mxu0 0
        %1727 = vmatpush1.bf16.msra.mxu0 0
        %1728 = vmatprep.subr.bf16.mxu0 0
        %1729 = vmatpush1.bf16.msra.mxu0 0
        %1730 = vmatprep.subr.bf16.mxu0 0
        %1731 = vmatpush1.bf16.msra.mxu0 0
        %1732 = vmatprep.subr.bf16.mxu0 0
        %1733 = vmatpush1.bf16.msra.mxu0 0
        %1734 = vmatprep.mubr.bf16.mxu0 0
        %1735 = vmatmul.mubr.bf16.gmra.mrb[0].mxu0 %v1700
        %v1736 = vpop.f32.mrb[0].mxu0
        %v1737 = vadd.f32 0.0, %v1736
        %v1738 = vpop.f32.mrb[0].mxu0
        %v1739 = vpop.f32.mrb[0].mxu0
        %v1740 = vpop.f32.mrb[0].mxu0
        %1741 = vdwg.mxu0
        %1742 = vrot.lane.b32.xlu0 %v941, 104
        %v1743 = vpop.permute.xlu0 %1742
        %1744 = vrot.lane.b32.xlu0 %v1086, 104
        %v1745 = vpop.permute.xlu0 %1744
        %v1747 = vsel %vm1087, %v1743, 0
        %v1750 = vsel %vm1087, %v1745, 0
        %1752 = vmatprep.subr.bf16.mxu0 0
        %1753 = vmatpush1.bf16.xpose.msra.mxu0 %v1750
        %1754 = vmatprep.subr.bf16.mxu0 0
        %1755 = vmatpush1.bf16.xpose.msra.mxu0 0
        %1756 = vmatprep.subr.bf16.mxu0 0
        %1757 = vmatpush1.bf16.xpose.msra.mxu0 0
        %1758 = vmatprep.subr.bf16.mxu0 0
        %1759 = vmatpush1.bf16.xpose.msra.mxu0 0
        %1760 = vmatprep.subr.bf16.mxu0 0
        %1761 = vmatpush1.bf16.xpose.msra.mxu0 0
        %1762 = vmatprep.subr.bf16.mxu0 0
        %1763 = vmatpush1.bf16.xpose.msra.mxu0 0
        %1764 = vmatprep.subr.bf16.mxu0 0
        %1765 = vmatpush1.bf16.xpose.msra.mxu0 0
        %1766 = vmatprep.subr.bf16.mxu0 0
        %1767 = vmatpush1.bf16.xpose.msra.mxu0 0
        %1768 = vmatprep.subr.bf16.mxu0 0
        %1769 = vmatpush1.bf16.xpose.msra.mxu0 0
        %1770 = vmatprep.subr.bf16.mxu0 0
        %1771 = vmatpush1.bf16.xpose.msra.mxu0 0
        %1772 = vmatprep.subr.bf16.mxu0 0
        %1773 = vmatpush1.bf16.xpose.msra.mxu0 0
        %1774 = vmatprep.subr.bf16.mxu0 0
        %1775 = vmatpush1.bf16.xpose.msra.mxu0 0
        %1776 = vmatprep.subr.bf16.mxu0 0
        %1777 = vmatpush1.bf16.xpose.msra.mxu0 0
        %1778 = vmatprep.subr.bf16.mxu0 0
        %1779 = vmatpush1.bf16.xpose.msra.mxu0 0
        %1780 = vmatprep.subr.bf16.mxu0 0
        %1781 = vmatpush1.bf16.xpose.msra.mxu0 0
        %1782 = vmatprep.subr.bf16.mxu0 0
        %1783 = vmatpush1.bf16.xpose.msra.mxu0 0
        %1784 = vmatprep.mubr.bf16.mxu0 0
        %1785 = vmatmul.mubr.bf16.gmra.mrb[0].mxu0 %v1747
        %v1786 = vpop.f32.mrb[0].mxu0
        %v1787 = vadd.f32 0.0, %v1786
        %v1788 = vpop.f32.mrb[0].mxu0
        %v1789 = vpop.f32.mrb[0].mxu0
        %v1790 = vpop.f32.mrb[0].mxu0
        %1791 = vdwg.mxu0
        %v1792 = vmul.f32 %v1787, 0.5
        %v1793 = vsel %vm1135, %v1792, -inf
        %1794 = vmax.xlane.f32.xlu0 %v1793
        %v1795 = vpop.xlane.xlu0 %1794
        %v1796 = vsub.f32 %v1792, %v1795
        %v1797 = vmul.f32 %v1796, 1.442695
        %v1798 = vpow.pop %v1797
        %v1799 = vsel %vm1135, %v1798, 0.0
        %1800 = vadd.xlane.f32.xlu0 %v1799
        %v1801 = vpop.xlane.xlu0 %1800
        %v1802 = vrcp.pop %v1801
        %v1803 = vmul.f32 %v1798, %v1802
        %v1804 = vpack.c.bf16 %v1803, %v1803
        %1805 = vrot.lane.b32.xlu0 %v1086, 72
        %v1806 = vpop.permute.xlu0 %1805
        %v1809 = vsel %vm1152, %v1804, 0
        %1811 = vmatprep.subr.bf16.mxu0 0
        %1812 = vmatpush1.bf16.msra.mxu0 %v1806
        %1813 = vmatprep.subr.bf16.mxu0 0
        %1814 = vmatpush1.bf16.msra.mxu0 0
        %1815 = vmatprep.subr.bf16.mxu0 0
        %1816 = vmatpush1.bf16.msra.mxu0 0
        %1817 = vmatprep.subr.bf16.mxu0 0
        %1818 = vmatpush1.bf16.msra.mxu0 0
        %1819 = vmatprep.subr.bf16.mxu0 0
        %1820 = vmatpush1.bf16.msra.mxu0 0
        %1821 = vmatprep.subr.bf16.mxu0 0
        %1822 = vmatpush1.bf16.msra.mxu0 0
        %1823 = vmatprep.subr.bf16.mxu0 0
        %1824 = vmatpush1.bf16.msra.mxu0 0
        %1825 = vmatprep.subr.bf16.mxu0 0
        %1826 = vmatpush1.bf16.msra.mxu0 0
        %1827 = vmatprep.subr.bf16.mxu0 0
        %1828 = vmatpush1.bf16.msra.mxu0 0
        %1829 = vmatprep.subr.bf16.mxu0 0
        %1830 = vmatpush1.bf16.msra.mxu0 0
        %1831 = vmatprep.subr.bf16.mxu0 0
        %1832 = vmatpush1.bf16.msra.mxu0 0
        %1833 = vmatprep.subr.bf16.mxu0 0
        %1834 = vmatpush1.bf16.msra.mxu0 0
        %1835 = vmatprep.subr.bf16.mxu0 0
        %1836 = vmatpush1.bf16.msra.mxu0 0
        %1837 = vmatprep.subr.bf16.mxu0 0
        %1838 = vmatpush1.bf16.msra.mxu0 0
        %1839 = vmatprep.subr.bf16.mxu0 0
        %1840 = vmatpush1.bf16.msra.mxu0 0
        %1841 = vmatprep.subr.bf16.mxu0 0
        %1842 = vmatpush1.bf16.msra.mxu0 0
        %1843 = vmatprep.mubr.bf16.mxu0 0
        %1844 = vmatmul.mubr.bf16.gmra.mrb[0].mxu0 %v1809
        %v1845 = vpop.f32.mrb[0].mxu0
        %v1846 = vadd.f32 0.0, %v1845
        %v1847 = vpop.f32.mrb[0].mxu0
        %v1848 = vpop.f32.mrb[0].mxu0
        %v1849 = vpop.f32.mrb[0].mxu0
        %1850 = vdwg.mxu0
        %1851 = vrot.lane.b32.xlu0 %v941, 100
        %v1852 = vpop.permute.xlu0 %1851
        %1853 = vrot.lane.b32.xlu0 %v1086, 100
        %v1854 = vpop.permute.xlu0 %1853
        %v1856 = vsel %vm1087, %v1852, 0
        %v1859 = vsel %vm1087, %v1854, 0
        %1861 = vmatprep.subr.bf16.mxu0 0
        %1862 = vmatpush1.bf16.xpose.msra.mxu0 %v1859
        %1863 = vmatprep.subr.bf16.mxu0 0
        %1864 = vmatpush1.bf16.xpose.msra.mxu0 0
        %1865 = vmatprep.subr.bf16.mxu0 0
        %1866 = vmatpush1.bf16.xpose.msra.mxu0 0
        %1867 = vmatprep.subr.bf16.mxu0 0
        %1868 = vmatpush1.bf16.xpose.msra.mxu0 0
        %1869 = vmatprep.subr.bf16.mxu0 0
        %1870 = vmatpush1.bf16.xpose.msra.mxu0 0
        %1871 = vmatprep.subr.bf16.mxu0 0
        %1872 = vmatpush1.bf16.xpose.msra.mxu0 0
        %1873 = vmatprep.subr.bf16.mxu0 0
        %1874 = vmatpush1.bf16.xpose.msra.mxu0 0
        %1875 = vmatprep.subr.bf16.mxu0 0
        %1876 = vmatpush1.bf16.xpose.msra.mxu0 0
        %1877 = vmatprep.subr.bf16.mxu0 0
        %1878 = vmatpush1.bf16.xpose.msra.mxu0 0
        %1879 = vmatprep.subr.bf16.mxu0 0
        %1880 = vmatpush1.bf16.xpose.msra.mxu0 0
        %1881 = vmatprep.subr.bf16.mxu0 0
        %1882 = vmatpush1.bf16.xpose.msra.mxu0 0
        %1883 = vmatprep.subr.bf16.mxu0 0
        %1884 = vmatpush1.bf16.xpose.msra.mxu0 0
        %1885 = vmatprep.subr.bf16.mxu0 0
        %1886 = vmatpush1.bf16.xpose.msra.mxu0 0
        %1887 = vmatprep.subr.bf16.mxu0 0
        %1888 = vmatpush1.bf16.xpose.msra.mxu0 0
        %1889 = vmatprep.subr.bf16.mxu0 0
        %1890 = vmatpush1.bf16.xpose.msra.mxu0 0
        %1891 = vmatprep.subr.bf16.mxu0 0
        %1892 = vmatpush1.bf16.xpose.msra.mxu0 0
        %1893 = vmatprep.mubr.bf16.mxu0 0
        %1894 = vmatmul.mubr.bf16.gmra.mrb[0].mxu0 %v1856
        %v1895 = vpop.f32.mrb[0].mxu0
        %v1896 = vadd.f32 0.0, %v1895
        %v1897 = vpop.f32.mrb[0].mxu0
        %v1898 = vpop.f32.mrb[0].mxu0
        %v1899 = vpop.f32.mrb[0].mxu0
        %1900 = vdwg.mxu0
        %v1901 = vmul.f32 %v1896, 0.5
        %v1902 = vsel %vm1135, %v1901, -inf
        %1903 = vmax.xlane.f32.xlu0 %v1902
        %v1904 = vpop.xlane.xlu0 %1903
        %v1905 = vsub.f32 %v1901, %v1904
        %v1906 = vmul.f32 %v1905, 1.442695
        %v1907 = vpow.pop %v1906
        %v1908 = vsel %vm1135, %v1907, 0.0
        %1909 = vadd.xlane.f32.xlu0 %v1908
        %v1910 = vpop.xlane.xlu0 %1909
        %v1911 = vrcp.pop %v1910
        %v1912 = vmul.f32 %v1907, %v1911
        %v1913 = vpack.c.bf16 %v1912, %v1912
        %1914 = vrot.lane.b32.xlu0 %v1086, 68
        %v1915 = vpop.permute.xlu0 %1914
        %v1918 = vsel %vm1152, %v1913, 0
        %1920 = vmatprep.subr.bf16.mxu0 0
        %1921 = vmatpush1.bf16.msra.mxu0 %v1915
        %1922 = vmatprep.subr.bf16.mxu0 0
        %1923 = vmatpush1.bf16.msra.mxu0 0
        %1924 = vmatprep.subr.bf16.mxu0 0
        %1925 = vmatpush1.bf16.msra.mxu0 0
        %1926 = vmatprep.subr.bf16.mxu0 0
        %1927 = vmatpush1.bf16.msra.mxu0 0
        %1928 = vmatprep.subr.bf16.mxu0 0
        %1929 = vmatpush1.bf16.msra.mxu0 0
        %1930 = vmatprep.subr.bf16.mxu0 0
        %1931 = vmatpush1.bf16.msra.mxu0 0
        %1932 = vmatprep.subr.bf16.mxu0 0
        %1933 = vmatpush1.bf16.msra.mxu0 0
        %1934 = vmatprep.subr.bf16.mxu0 0
        %1935 = vmatpush1.bf16.msra.mxu0 0
        %1936 = vmatprep.subr.bf16.mxu0 0
        %1937 = vmatpush1.bf16.msra.mxu0 0
        %1938 = vmatprep.subr.bf16.mxu0 0
        %1939 = vmatpush1.bf16.msra.mxu0 0
        %1940 = vmatprep.subr.bf16.mxu0 0
        %1941 = vmatpush1.bf16.msra.mxu0 0
        %1942 = vmatprep.subr.bf16.mxu0 0
        %1943 = vmatpush1.bf16.msra.mxu0 0
        %1944 = vmatprep.subr.bf16.mxu0 0
        %1945 = vmatpush1.bf16.msra.mxu0 0
        %1946 = vmatprep.subr.bf16.mxu0 0
        %1947 = vmatpush1.bf16.msra.mxu0 0
        %1948 = vmatprep.subr.bf16.mxu0 0
        %1949 = vmatpush1.bf16.msra.mxu0 0
        %1950 = vmatprep.subr.bf16.mxu0 0
        %1951 = vmatpush1.bf16.msra.mxu0 0
        %1952 = vmatprep.mubr.bf16.mxu0 0
        %1953 = vmatmul.mubr.bf16.gmra.mrb[0].mxu0 %v1918
        %v1954 = vpop.f32.mrb[0].mxu0
        %v1955 = vadd.f32 0.0, %v1954
        %v1956 = vpop.f32.mrb[0].mxu0
        %v1957 = vpop.f32.mrb[0].mxu0
        %v1958 = vpop.f32.mrb[0].mxu0
        %1959 = vdwg.mxu0
        %1961 = vrot.lane.b32.xlu0 %v1301, 4
        %v1962 = vpop.permute.xlu0 %1961
        %1965 = vrot.lane.b32.xlu0 %v1410, 8
        %v1966 = vpop.permute.xlu0 %1965
        %1969 = vrot.lane.b32.xlu0 %v1519, 12
        %v1970 = vpop.permute.xlu0 %1969
        %1973 = vrot.lane.b32.xlu0 %v1628, 16
        %v1974 = vpop.permute.xlu0 %1973
        %1977 = vrot.lane.b32.xlu0 %v1737, 20
        %v1978 = vpop.permute.xlu0 %1977
        %1981 = vrot.lane.b32.xlu0 %v1846, 24
        %v1982 = vpop.permute.xlu0 %1981
        %1985 = vrot.lane.b32.xlu0 %v1955, 28
        %v1986 = vpop.permute.xlu0 %1985
        %v1988 = vsel %vm1087, %v1191, %v1962
        %vm1989 = vcmask 64512
        %v1990 = vsel %vm1989, %v1988, %v1966
        %vm1991 = vcmask 97280
        %v1992 = vsel %vm1991, %v1990, %v1970
        %v1993 = vsel %vm1152, %v1992, %v1974
        %vm1994 = vcmask 162816
        %v1995 = vsel %vm1994, %v1993, %v1978
        %vm1996 = vcmask 195584
        %v1997 = vsel %vm1996, %v1995, %v1982
        %vm1998 = vcmask 228352
        %v1999 = vsel %vm1998, %v1997, %v1986
        %v2000 = vpack.c.bf16 %v1999, %v1999
        %v2002 = vlaneseq
        %v2003 = vshrl.u32 %v2002, 7
        %v2004 = vsub.s32 0, %v2003
        %v2005 = vrot.slane %v816, %v2004
        %v2011 = vunpack.c.l.b16 %v812
        %v2012 = vunpack.c.l.b16 %v813
        %v2013 = vunpack.c.l.b16 %v814
        %v2014 = vunpack.c.l.b16 %v815
        %v2015 = vpack.c.b16 %v2012, %v2011
        %v2016 = vpack.c.b16 %v2014, %v2013
        %v2020 = vsel %vm897, %v2000, 0
        %2022 = vmatprep.subr.bf16.mxu0 0
        %2023 = vmatpush1.bf16.msra.mxu0 %v2015
        %2024 = vmatprep.subr.bf16.mxu0 0
        %2025 = vmatpush1.bf16.msra.mxu0 %v2016
        %2026 = vmatprep.subr.bf16.mxu0 0
        %2027 = vmatpush1.bf16.msra.mxu0 0
        %2028 = vmatprep.subr.bf16.mxu0 0
        %2029 = vmatpush1.bf16.msra.mxu0 0
        %2030 = vmatprep.subr.bf16.mxu0 0
        %2031 = vmatpush1.bf16.msra.mxu0 0
        %2032 = vmatprep.subr.bf16.mxu0 0
        %2033 = vmatpush1.bf16.msra.mxu0 0
        %2034 = vmatprep.subr.bf16.mxu0 0
        %2035 = vmatpush1.bf16.msra.mxu0 0
        %2036 = vmatprep.subr.bf16.mxu0 0
        %2037 = vmatpush1.bf16.msra.mxu0 0
        %2038 = vmatprep.subr.bf16.mxu0 0
        %2039 = vmatpush1.bf16.msra.mxu0 0
        %2040 = vmatprep.subr.bf16.mxu0 0
        %2041 = vmatpush1.bf16.msra.mxu0 0
        %2042 = vmatprep.subr.bf16.mxu0 0
        %2043 = vmatpush1.bf16.msra.mxu0 0
        %2044 = vmatprep.subr.bf16.mxu0 0
        %2045 = vmatpush1.bf16.msra.mxu0 0
        %2046 = vmatprep.subr.bf16.mxu0 0
        %2047 = vmatpush1.bf16.msra.mxu0 0
        %2048 = vmatprep.subr.bf16.mxu0 0
        %2049 = vmatpush1.bf16.msra.mxu0 0
        %2050 = vmatprep.subr.bf16.mxu0 0
        %2051 = vmatpush1.bf16.msra.mxu0 0
        %2052 = vmatprep.subr.bf16.mxu0 0
        %2053 = vmatpush1.bf16.msra.mxu0 0
        %2054 = vmatprep.mubr.bf16.mxu0 0
        %2055 = vmatmul.mubr.bf16.gmra.mrb[0].mxu0 %v2020
        %v2056 = vpop.f32.mrb[0].mxu0
        %v2057 = vadd.f32 %v2005, %v2056
        %v2058 = vpop.f32.mrb[0].mxu0
        %v2059 = vpop.f32.mrb[0].mxu0
        %v2060 = vpop.f32.mrb[0].mxu0
        %2061 = vdwg.mxu0
        %v2062 = vadd.f32 %v872, %v2057
        %v2063 = vsel %vm844, %v2062, 0.0
        %2064 = vadd.xlane.f32.xlu0 %v2063
        %v2065 = vpop.xlane.xlu0 %2064
        %v2066 = vmul.f32 %v2065, %v848
        %v2067 = vsub.f32 %v2062, %v2066
        %v2068 = vmul.f32 %v2067, %v2067
        %v2069 = vsel %vm844, %v2068, 0.0
        %2070 = vadd.xlane.f32.xlu0 %v2069
        %v2071 = vpop.xlane.xlu0 %2070
        %v2072 = vmul.f32 %v2071, %v848
        %v2073 = vadd.f32 %v2072, 1e-05
        %v2074 = vrsqrt.pop %v2073
        %v2075 = vmul.f32 %v2067, %v2074
        %v2077 = vlaneseq
        %v2078 = vshrl.u32 %v2077, 7
        %v2079 = vsub.s32 0, %v2078
        %v2080 = vrot.slane %v831, %v2079
        %v2082 = vmul.f32 %v2075, %v2080
        %v2084 = vlaneseq
        %v2085 = vshrl.u32 %v2084, 7
        %v2086 = vsub.s32 0, %v2085
        %v2087 = vrot.slane %v832, %v2086
        %v2089 = vadd.f32 %v2082, %v2087
        %v2090 = vpack.c.bf16 %v2089, %v2089
        %v2092 = vlaneseq
        %v2093 = vshrl.u32 %v2092, 7
        %v2094 = vsub.s32 0, %v2093
        %v2095 = vrot.slane %v821, %v2094
        %v2101 = vunpack.c.l.b16 %v817
        %v2102 = vunpack.c.l.b16 %v818
        %v2103 = vunpack.c.l.b16 %v819
        %v2104 = vunpack.c.l.b16 %v820
        %v2105 = vpack.c.b16 %v2102, %v2101
        %v2106 = vpack.c.b16 %v2104, %v2103
        %v2110 = vsel %vm897, %v2090, 0
        %2112 = vmatprep.subr.bf16.mxu0 0
        %2113 = vmatpush1.bf16.msra.mxu0 %v2105
        %2114 = vmatprep.subr.bf16.mxu0 0
        %2115 = vmatpush1.bf16.msra.mxu0 %v2106
        %2116 = vmatprep.subr.bf16.mxu0 0
        %2117 = vmatpush1.bf16.msra.mxu0 0
        %2118 = vmatprep.subr.bf16.mxu0 0
        %2119 = vmatpush1.bf16.msra.mxu0 0
        %2120 = vmatprep.subr.bf16.mxu0 0
        %2121 = vmatpush1.bf16.msra.mxu0 0
        %2122 = vmatprep.subr.bf16.mxu0 0
        %2123 = vmatpush1.bf16.msra.mxu0 0
        %2124 = vmatprep.subr.bf16.mxu0 0
        %2125 = vmatpush1.bf16.msra.mxu0 0
        %2126 = vmatprep.subr.bf16.mxu0 0
        %2127 = vmatpush1.bf16.msra.mxu0 0
        %2128 = vmatprep.subr.bf16.mxu0 0
        %2129 = vmatpush1.bf16.msra.mxu0 0
        %2130 = vmatprep.subr.bf16.mxu0 0
        %2131 = vmatpush1.bf16.msra.mxu0 0
        %2132 = vmatprep.subr.bf16.mxu0 0
        %2133 = vmatpush1.bf16.msra.mxu0 0
        %2134 = vmatprep.subr.bf16.mxu0 0
        %2135 = vmatpush1.bf16.msra.mxu0 0
        %2136 = vmatprep.subr.bf16.mxu0 0
        %2137 = vmatpush1.bf16.msra.mxu0 0
        %2138 = vmatprep.subr.bf16.mxu0 0
        %2139 = vmatpush1.bf16.msra.mxu0 0
        %2140 = vmatprep.subr.bf16.mxu0 0
        %2141 = vmatpush1.bf16.msra.mxu0 0
        %2142 = vmatprep.subr.bf16.mxu0 0
        %2143 = vmatpush1.bf16.msra.mxu0 0
        %2144 = vmatprep.mubr.bf16.mxu0 0
        %2145 = vmatmul.mubr.bf16.gmra.mrb[0].mxu0 %v2110
        %v2146 = vpop.f32.mrb[0].mxu0
        %v2147 = vadd.f32 %v2095, %v2146
        %v2148 = vpop.f32.mrb[0].mxu0
        %v2149 = vpop.f32.mrb[0].mxu0
        %v2150 = vpop.f32.mrb[0].mxu0
        %2151 = vdwg.mxu0
        %v2152 = vmax.f32 %v2147, 0.0
        %v2153 = vpack.c.bf16 %v2152, %v2152
        %v2155 = vlaneseq
        %v2156 = vshrl.u32 %v2155, 7
        %v2157 = vsub.s32 0, %v2156
        %v2158 = vrot.slane %v830, %v2157
        %v2168 = vunpack.c.l.b16 %v822
        %v2169 = vunpack.c.l.b16 %v823
        %v2170 = vunpack.c.l.b16 %v824
        %v2171 = vunpack.c.l.b16 %v825
        %v2172 = vunpack.c.l.b16 %v826
        %v2173 = vunpack.c.l.b16 %v827
        %v2174 = vunpack.c.l.b16 %v828
        %v2175 = vunpack.c.l.b16 %v829
        %v2176 = vpack.c.b16 %v2169, %v2168
        %v2177 = vpack.c.b16 %v2171, %v2170
        %v2178 = vpack.c.b16 %v2173, %v2172
        %v2179 = vpack.c.b16 %v2175, %v2174
        %vm2184 = vcmask 523264
        %v2186 = vsel %vm2184, %v2153, 0
        %2188 = vmatprep.subr.bf16.mxu0 0
        %2189 = vmatpush1.bf16.msra.mxu0 %v2176
        %2190 = vmatprep.subr.bf16.mxu0 0
        %2191 = vmatpush1.bf16.msra.mxu0 %v2177
        %2192 = vmatprep.subr.bf16.mxu0 0
        %2193 = vmatpush1.bf16.msra.mxu0 %v2178
        %2194 = vmatprep.subr.bf16.mxu0 0
        %2195 = vmatpush1.bf16.msra.mxu0 %v2179
        %2196 = vmatprep.subr.bf16.mxu0 0
        %2197 = vmatpush1.bf16.msra.mxu0 0
        %2198 = vmatprep.subr.bf16.mxu0 0
        %2199 = vmatpush1.bf16.msra.mxu0 0
        %2200 = vmatprep.subr.bf16.mxu0 0
        %2201 = vmatpush1.bf16.msra.mxu0 0
        %2202 = vmatprep.subr.bf16.mxu0 0
        %2203 = vmatpush1.bf16.msra.mxu0 0
        %2204 = vmatprep.subr.bf16.mxu0 0
        %2205 = vmatpush1.bf16.msra.mxu0 0
        %2206 = vmatprep.subr.bf16.mxu0 0
        %2207 = vmatpush1.bf16.msra.mxu0 0
        %2208 = vmatprep.subr.bf16.mxu0 0
        %2209 = vmatpush1.bf16.msra.mxu0 0
        %2210 = vmatprep.subr.bf16.mxu0 0
        %2211 = vmatpush1.bf16.msra.mxu0 0
        %2212 = vmatprep.subr.bf16.mxu0 0
        %2213 = vmatpush1.bf16.msra.mxu0 0
        %2214 = vmatprep.subr.bf16.mxu0 0
        %2215 = vmatpush1.bf16.msra.mxu0 0
        %2216 = vmatprep.subr.bf16.mxu0 0
        %2217 = vmatpush1.bf16.msra.mxu0 0
        %2218 = vmatprep.subr.bf16.mxu0 0
        %2219 = vmatpush1.bf16.msra.mxu0 0
        %2220 = vmatprep.mubr.bf16.mxu0 0
        %2221 = vmatmul.mubr.bf16.gmra.mrb[0].mxu0 %v2186
        %v2222 = vpop.f32.mrb[0].mxu0
        %v2223 = vadd.f32 %v2158, %v2222
        %v2224 = vpop.f32.mrb[0].mxu0
        %v2225 = vpop.f32.mrb[0].mxu0
        %v2226 = vpop.f32.mrb[0].mxu0
        %2227 = vdwg.mxu0
        %v2228 = vadd.f32 %v2089, %v2223
        %v2229 = vsel %vm844, %v2228, 0.0
        %2230 = vadd.xlane.f32.xlu0 %v2229
        %v2231 = vpop.xlane.xlu0 %2230
        %v2232 = vmul.f32 %v2231, %v848
        %v2233 = vsub.f32 %v2228, %v2232
        %v2234 = vmul.f32 %v2233, %v2233
        %v2235 = vsel %vm844, %v2234, 0.0
        %2236 = vadd.xlane.f32.xlu0 %v2235
        %v2237 = vpop.xlane.xlu0 %2236
        %v2238 = vmul.f32 %v2237, %v848
        %v2239 = vadd.f32 %v2238, 1e-05
        %v2240 = vrsqrt.pop %v2239
        %v2241 = vmul.f32 %v2233, %v2240
        %v2243 = vlaneseq
        %v2244 = vshrl.u32 %v2243, 7
        %v2245 = vsub.s32 0, %v2244
        %v2246 = vrot.slane %v833, %v2245
        %v2248 = vmul.f32 %v2241, %v2246
        %v2250 = vlaneseq
        %v2251 = vshrl.u32 %v2250, 7
        %v2252 = vsub.s32 0, %v2251
        %v2253 = vrot.slane %v834, %v2252
        %v2255 = vadd.f32 %v2248, %v2253
        %v2256 = vpack.c.bf16 %v2255, %v2255
        %v2261 = vunpack.c.l.b16 %v835
        %v2262 = vunpack.c.l.b16 %v836
        %v2263 = vunpack.c.l.b16 %v837
        %v2264 = vunpack.c.l.b16 %v838
        %v2265 = vpack.c.b16 %v2262, %v2261
        %v2266 = vpack.c.b16 %v2264, %v2263
        %v2270 = vsel %vm897, %v2256, 0
        %2272 = vmatprep.subr.bf16.mxu0 0
        %2273 = vmatpush1.bf16.msra.mxu0 %v2265
        %2274 = vmatprep.subr.bf16.mxu0 0
        %2275 = vmatpush1.bf16.msra.mxu0 %v2266
        %2276 = vmatprep.subr.bf16.mxu0 0
        %2277 = vmatpush1.bf16.msra.mxu0 0
        %2278 = vmatprep.subr.bf16.mxu0 0
        %2279 = vmatpush1.bf16.msra.mxu0 0
        %2280 = vmatprep.subr.bf16.mxu0 0
        %2281 = vmatpush1.bf16.msra.mxu0 0
        %2282 = vmatprep.subr.bf16.mxu0 0
        %2283 = vmatpush1.bf16.msra.mxu0 0
        %2284 = vmatprep.subr.bf16.mxu0 0
        %2285 = vmatpush1.bf16.msra.mxu0 0
        %2286 = vmatprep.subr.bf16.mxu0 0
        %2287 = vmatpush1.bf16.msra.mxu0 0
        %2288 = vmatprep.subr.bf16.mxu0 0
        %2289 = vmatpush1.bf16.msra.mxu0 0
        %2290 = vmatprep.subr.bf16.mxu0 0
        %2291 = vmatpush1.bf16.msra.mxu0 0
        %2292 = vmatprep.subr.bf16.mxu0 0
        %2293 = vmatpush1.bf16.msra.mxu0 0
        %2294 = vmatprep.subr.bf16.mxu0 0
        %2295 = vmatpush1.bf16.msra.mxu0 0
        %2296 = vmatprep.subr.bf16.mxu0 0
        %2297 = vmatpush1.bf16.msra.mxu0 0
        %2298 = vmatprep.subr.bf16.mxu0 0
        %2299 = vmatpush1.bf16.msra.mxu0 0
        %2300 = vmatprep.subr.bf16.mxu0 0
        %2301 = vmatpush1.bf16.msra.mxu0 0
        %2302 = vmatprep.subr.bf16.mxu0 0
        %2303 = vmatpush1.bf16.msra.mxu0 0
        %2304 = vmatprep.mubr.bf16.mxu0 0
        %2305 = vmatmul.mubr.bf16.gmra.mrb[0].mxu0 %v2270
        %v2306 = vpop.f32.mrb[0].mxu0
        %v2307 = vadd.f32 0.0, %v2306
        %v2308 = vpop.f32.mrb[0].mxu0
        %v2309 = vpop.f32.mrb[0].mxu0
        %v2310 = vpop.f32.mrb[0].mxu0
        %2311 = vdwg.mxu0
        %v2312 = vlaneseq
        %v2313 = vshrl.u32 %v2312, 7
        %v2314 = vlaneseq
        %v2315 = vand.u32 %v2314, 127
        %v2316 = vmul.u32 %v2313, 2
        %vm2317 = vcmp.ge.s32.totalorder %v2315, %v2316
        %v2318 = vadd.s32 %v2313, 1
        %v2319 = vmul.u32 %v2318, 2
        %vm2320 = vcmp.lt.s32.totalorder %v2315, %v2319
        %vm2321 = vmand %vm2317, %vm2320
        %v2322 = vsel %vm2321, %v2307, 0.0
        %vm2323 = vcmask 1045504
        %v2324 = vsel %vm2323, %v2322, 0.0
        %v2325 = vrot.slane %v2324, 4
        %v2326 = vadd.f32 %v2324, %v2325
        %v2327 = vrot.slane %v2326, 2
        %v2328 = vadd.f32 %v2326, %v2327
        %v2329 = vrot.slane %v2328, 1
        %v2330 = vadd.f32 %v2328, %v2329
        %v2331 = vadd.f32 %v2330, %v839
        %2332 = vst [vmem:[%s805] sm:$0x1] %v2331
        %s2333 = sand.u32 %s517, 1
        %s2334 = scalar_lea.sflag [#allocation4], %s2333
        %s2335 = sand.u32 %s517, 1
        %s2336 = scalar_lea.vmem [#allocation19], %s2335
        // Predicated region
        $region149: #{tpu_custom_call.1} parent=107 // pred_check
          %p2337 = pneg %p527
        $region150: #{tpu_custom_call.1} parent=107 // pred_check_branch
          %2339 = sbr.rel (%p2337) target = $region152
        $region151: #{tpu_custom_call.1} parent=107 // pred_region
          %s2341 = ssub.s32 16, 16
          %2342 = vsyncadd %s2334, %s2341
          %s2343 = smul.addr %s42, 16
          %s2344 = scalar_lea.hbm %s22, %s2343
          %s2346 = sshll.u32 %s2336, 4
          %s2347 = int_to_ptr.vmem [resolvable:$true] %s2346
          %2349 = dma.vmem_to_hbm [thread:$0]  %s2347, 16, %s2344, %s2334
        $region152: #{tpu_custom_call.1} parent=107 // pred_fallthru
          _
      $region108: #{tpu_custom_call.1} parent=5 // pred_fallthru
        _
      %p2350 = scmp.le.s32.totalorder 2, %s37
      // Predicated region
      $region153: #{tpu_custom_call.1} parent=5 // pred_check
        %p2351 = pneg %p2350
      $region154: #{tpu_custom_call.1} parent=5 // pred_check_branch
        %2353 = sbr.rel (%p2351) target = $region156
      $region155: #{tpu_custom_call.1} parent=5 // pred_region
        %s2354 = ssub.s32 %s37, 2
        // Predicated region
        $region157: #{tpu_custom_call.1} parent=155 // pred_check
          %p2355 = pneg %p533
        $region158: #{tpu_custom_call.1} parent=155 // pred_check_branch
          %2357 = sbr.rel (%p2355) target = $region160
        $region159: #{tpu_custom_call.1} parent=155 // pred_region
          %s2358 = sand.u32 %s518, 1
          %s2359 = scalar_lea.sflag [#allocation4], %s2358
          %s2360 = sand.u32 %s518, 1
          %s2361 = scalar_lea.vmem [#allocation19], %s2360
          %2362 = dma.done %s2359, 16
        $region160: #{tpu_custom_call.1} parent=155 // pred_fallthru
          _
      $region156: #{tpu_custom_call.1} parent=5 // pred_fallthru
        _
    $region6: #{tpu_custom_call.1} parent=1 // loop_footer
      %s41 = sadd.s32 1, %s37
    $region7: #{tpu_custom_call.1} parent=1 // loop_footer_branch
      %36 = sbr.rel target = $region3
    $region8: #{tpu_custom_call.1} parent=1 // loop_exit
      _
    %2363 = vsyncpa [#allocation3], 1
    %s2364 = scalar_lea.sflag [#allocation3], 1
    %2365 = vsyncpa %s2364, 1
    %2366 = vsyncpa [#allocation6], 1
    %2367 = vsyncpa [#allocation9], 1
    %2368 = vsyncpa [#allocation12], 1
    %2369 = vsyncpa [#allocation15], 1
    %2370 = vsyncpa [#allocation18], 1
    %2371 = vsyncpa [#allocation4], 1
    %s2372 = scalar_lea.sflag [#allocation4], 1
    %2373 = vsyncpa %s2372, 1

</llo_original>
